<compile_context>
chip_gen: v5e
topology: v5e:2x2
jax: 0.10.0
libtpu: 0.0.40
codegen_flags: <defaults>
</compile_context>

<pallas_src>
import functools

import jax
import jax.numpy as jnp
import numpy as np
from jax import lax
from jax.experimental import pallas as pl
from jax.experimental.pallas import tpu as pltpu

NEG = -1e30        # finite "-inf" sentinel (Python float -> jaxpr literal)
GROUP = 16         # samples per grid step (2 sublane groups interleaved for ILP)
L_PAD = 128        # padded extended-label length (lanes); requires 2*S+1 <= 128


def _ctc_kernel(inlen_ref, tgtlen_ref,      # scalar prefetch (SMEM): (N_pad,) int32
                lp_ref, lab_ref,            # inputs  (VMEM): (Tc, GROUP, C), (GROUP, L_PAD)
                out_ref,                    # output  (VMEM): (GROUP, 128)
                e_ref, alpha_ref):          # scratch (VMEM): (Tc, GROUP, L_PAD), (GROUP, L_PAD)
    g = pl.program_id(0)
    tc = pl.program_id(1)
    n_tc = pl.num_programs(1)
    t_chunk, group, num_classes = lp_ref.shape
    _, l_pad = lab_ref.shape

    # ---- per-sample lengths from prefetched SMEM scalars -> per-sublane vectors
    sub = lax.broadcasted_iota(jnp.int32, (group, l_pad), 0)
    lane = lax.broadcasted_iota(jnp.int32, (group, l_pad), 1)
    base = g * group
    t_n = jnp.zeros((group, l_pad), jnp.int32)
    s_n = jnp.zeros((group, l_pad), jnp.int32)
    t_group = inlen_ref[base]
    for s in range(group):
        il = inlen_ref[base + s]
        tl = tgtlen_ref[base + s]
        t_n = jnp.where(sub == s, il, t_n)
        s_n = jnp.where(sub == s, tl, s_n)
        t_group = jnp.maximum(t_group, il)

    l_valid = 2 * s_n + 1                      # extended label length per sample
    valid = lane < l_valid

    labels = lab_ref[...]                                  # (GROUP, 128) int32
    labels_m2 = pltpu.roll(labels, shift=2, axis=1)        # labels[l-2] (wrap masked by lane>=2)
    skip_ok = (labels != 0) & (labels != labels_m2) & (lane >= 2)

    t0 = tc * t_chunk                                      # global time of chunk start

    # ---- emissions for this chunk: e[t, n, l] = lp[t, n, labels[n, l]]
    # One minimal (Tc, C) x (C, 128) gather matmul per sample; skipped entirely
    # once every sample of the group has finished.
    @pl.when(t0 < t_group)
    def _compute_emissions():
        class_iota = lax.broadcasted_iota(jnp.int32, (num_classes, l_pad), 0)
        for s in range(group):
            onehot_s = (class_iota == lab_ref[pl.ds(s, 1), :]).astype(jnp.float32)
            lp_s = lp_ref[:, s, :]                          # (Tc, C) per-sample slice
            em_s = lax.dot_general(
                lp_s, onehot_s, (((1,), (0,)), ((), ())),
                precision=jax.lax.Precision.HIGHEST,        # exact gather (no bf16 demotion)
                preferred_element_type=jnp.float32)         # (Tc, 128)
            e_ref[:, s, :] = em_s

    # ---- alpha init at global t == 0 (first chunk of this group) ------------
    @pl.when(tc == 0)
    def _init_alpha():
        e0 = e_ref[0]                                       # (GROUP, 128)
        a0 = jnp.where((lane == 0) | ((lane == 1) & (l_valid > 1)), e0, NEG)
        alpha_ref[...] = jnp.where(valid, a0, NEG)

    # ---- forward recursion over this chunk (per-sublane ragged-length mask) --
    t_lo = jnp.where(tc == 0, 1, 0).astype(jnp.int32)
    t_hi = jnp.maximum(jnp.minimum(t_group - t0, t_chunk), 0).astype(jnp.int32)

    def body(tt, alpha):
        e_t = e_ref[tt]                                     # (GROUP, 128)
        a1 = jnp.where(lane >= 1, pltpu.roll(alpha, shift=1, axis=1), NEG)
        a2 = jnp.where(skip_ok, pltpu.roll(alpha, shift=2, axis=1), NEG)
        m = jnp.maximum(jnp.maximum(alpha, a1), a2)
        lse = m + jnp.log(jnp.exp(alpha - m) + jnp.exp(a1 - m) + jnp.exp(a2 - m))
        new_alpha = jnp.where(valid, lse + e_t, NEG)
        return jnp.where(t0 + tt < t_n, new_alpha, alpha)

    alpha = lax.fori_loop(t_lo, t_hi, body, alpha_ref[...])
    alpha_ref[...] = alpha

    # ---- finalize: per-sample NLL = -logsumexp(alpha[L-1], alpha[L-2]) -------
    @pl.when(tc == n_tc - 1)
    def _finalize():
        picked = jnp.where((lane == l_valid - 1) | (lane == l_valid - 2), alpha, NEG)
        m = jnp.max(picked, axis=-1, keepdims=True)          # (GROUP, 1)
        ll = m + jnp.log(jnp.sum(jnp.exp(picked - m), axis=-1, keepdims=True))
        out_ref[...] = jnp.broadcast_to(-ll, out_ref.shape)  # lane-dense (GROUP, 128)


def _pick_time_chunk(T, C):
    """Keep the double-buffered lp chunk ~<= 8 MiB (fits all generations)."""
    per_t_bytes = GROUP * C * 4
    tc = (8 * 1024 * 1024) // max(2 * per_t_bytes, 1)
    tc = int(max(8, min(128, tc)))
    return max(1, min(tc, T))


@functools.partial(jax.jit, static_argnames=("blank",))
def ctc_loss_with_label_priors(log_probs_tnc, targets, input_lengths,
                               target_lengths, blank=0):
    """Forward pass of CTCLossWithLabelPriors (sum-reduced CTC NLL)."""
    assert blank == 0, "kernel is specialized for blank=0 (module default)"
    T, N, C = log_probs_tnc.shape
    S = targets.shape[1]
    assert 2 * S + 1 <= L_PAD

    G = (N + GROUP - 1) // GROUP
    N_pad = G * GROUP
    Tc = _pick_time_chunk(T, C)
    n_tc = (T + Tc - 1) // Tc
    T_pad = n_tc * Tc

    lp = log_probs_tnc.astype(jnp.float32)
    tgt = targets.astype(jnp.int32)
    il = input_lengths.astype(jnp.int32)
    tl = target_lengths.astype(jnp.int32)

    lp = jnp.pad(lp, ((0, T_pad - T), (0, N_pad - N), (0, 0)))
    tgt = jnp.pad(tgt, ((0, N_pad - N), (0, 0)))
    il = jnp.pad(il, (0, N_pad - N), constant_values=1)
    tl = jnp.pad(tl, (0, N_pad - N))

    # CTC extended-label rows: blank, t1, blank, t2, ..., blank (blank=0)
    ext_labels = jnp.zeros((N_pad, L_PAD), jnp.int32)
    ext_labels = ext_labels.at[:, 1:2 * S + 1:2].set(tgt)

    grid_spec = pltpu.PrefetchScalarGridSpec(
        num_scalar_prefetch=2,
        grid=(G, n_tc),
        in_specs=[
            # (T_pad, N_pad, C) indexed directly -- no host transpose
            pl.BlockSpec((Tc, GROUP, C), lambda g, t, il_r, tl_r: (t, g, 0)),
            pl.BlockSpec((GROUP, L_PAD), lambda g, t, il_r, tl_r: (g, 0)),
        ],
        out_specs=pl.BlockSpec((GROUP, 128), lambda g, t, il_r, tl_r: (g, 0)),
        scratch_shapes=[
            pltpu.VMEM((Tc, GROUP, L_PAD), jnp.float32),   # per-chunk emissions
            pltpu.VMEM((GROUP, L_PAD), jnp.float32),       # alpha carried across chunks
        ],
    )

    out = pl.pallas_call(
        _ctc_kernel,
        out_shape=jax.ShapeDtypeStruct((N_pad, 128), jnp.float32),
        grid_spec=grid_spec,
        compiler_params=pltpu.CompilerParams(
            dimension_semantics=("parallel", "arbitrary"),
            vmem_limit_bytes=48 * 1024 * 1024),
    )(il, tl, lp, ext_labels)

    per_sample_nll = out[:N, 0]
    return jnp.sum(per_sample_nll)            # reduction='sum'


def _ctc_reference(log_probs_tnc, targets, input_lengths, target_lengths,
                   blank=0):
    """Pure-numpy CTC NLL (sum over batch) for validation."""
    lp = np.asarray(log_probs_tnc, dtype=np.float64)
    _, N, _ = lp.shape
    total = 0.0
    for n in range(N):
        t_n = int(input_lengths[n])
        s_n = int(target_lengths[n])
        tgt = np.asarray(targets[n][:s_n])
        L = 2 * s_n + 1
        ext = np.zeros(L, dtype=np.int64)
        ext[1::2] = tgt
        neg = -1e30
        alpha = np.full(L, neg)
        alpha[0] = lp[0, n, blank]
        if L > 1:
            alpha[1] = lp[0, n, ext[1]]
        for t in range(1, t_n):
            new = np.full(L, neg)
            for l in range(L):
                cands = [alpha[l]]
                if l >= 1:
                    cands.append(alpha[l - 1])
                if l >= 2 and ext[l] != blank and ext[l] != ext[l - 2]:
                    cands.append(alpha[l - 2])
                m = max(cands)
                new[l] = m + np.log(sum(np.exp(c - m) for c in cands)) \
                    + lp[t, n, ext[l]]
            alpha = new
        cands = [alpha[L - 1]] + ([alpha[L - 2]] if L >= 2 else [])
        m = max(cands)
        total += -(m + np.log(sum(np.exp(c - m) for c in cands)))
    return total


if __name__ == "__main__":
    T, N, C, S = 32, 6, 32, 8      # N=6 exercises the pad-to-GROUP path

    key = jax.random.PRNGKey(0)
    k_logits, k_targets = jax.random.split(key)

    logits = jax.random.normal(k_logits, (T, N, C), dtype=jnp.float32)
    log_probs = jax.nn.log_softmax(logits, axis=-1)          # (T, N, C)
    targets = jax.random.randint(k_targets, (N, S), 1, C, dtype=jnp.int32)
    input_lengths = jnp.array([32, 28, 20, 16, 12, 9], dtype=jnp.int32)
    target_lengths = jnp.array([8, 6, 5, 3, 4, 2], dtype=jnp.int32)

    loss = ctc_loss_with_label_priors(log_probs, targets, input_lengths,
                                      target_lengths, blank=0)
    loss = jax.block_until_ready(loss)

    ref = _ctc_reference(np.asarray(log_probs), np.asarray(targets),
                         np.asarray(input_lengths), np.asarray(target_lengths))
    # float32 forward vs float64 reference (k2 uses use_double_scores=True)
    assert np.allclose(float(loss), ref, rtol=2e-3, atol=1e-2), (float(loss), ref)

    print("KERNEL_OK")
</pallas_src>

<mosaic_0001>
module attributes {stable_mosaic.version = 11 : i64} {
  func.func @_ctc_kernel(%arg0: i32, %arg1: i32, %arg2: memref<16xi32, #tpu.memory_space<smem>>, %arg3: memref<16xi32, #tpu.memory_space<smem>>, %arg4: memref<32x16x32xf32, #tpu.memory_space<vmem>>, %arg5: memref<16x128xi32, #tpu.memory_space<vmem>>, %arg6: memref<16x128xf32, #tpu.memory_space<vmem>>, %arg7: memref<32x16x128xf32, #tpu.memory_space<vmem>>, %arg8: memref<16x128xf32, #tpu.memory_space<vmem>>) attributes {dimension_semantics = [#tpu.dimension_semantics<parallel>, #tpu.dimension_semantics<arbitrary>], iteration_bounds = array<i64: 1, 1>, scalar_prefetch = 2 : i64, scratch_operands = 2 : i64, tpu.core_type = #tpu.core_type<tc>, window_params = [{transform_indices = @transform_0, window_bounds = array<i64: 32, 16, 32>}, {transform_indices = @transform_1, window_bounds = array<i64: 16, 128>}, {transform_indices = @transform_2, window_bounds = array<i64: 16, 128>}]} {
    %0 = tpu.iota {dimensions = array<i32: 0>} : vector<16x128xi32>
    %1 = tpu.iota {dimensions = array<i32: 1>} : vector<16x128xi32>
    %c16_i32 = arith.constant 16 : i32
    %2 = arith.muli %arg0, %c16_i32 : i32
    %c0_i32 = arith.constant 0 : i32
    %3 = vector.broadcast %c0_i32 : i32 to vector<16x128xi32>
    %c0_i32_0 = arith.constant 0 : i32
    %4 = vector.broadcast %c0_i32_0 : i32 to vector<16x128xi32>
    %5 = arith.index_cast %2 : i32 to index
    %6 = memref.load %arg2[%5] : memref<16xi32, #tpu.memory_space<smem>>
    %c0_i32_1 = arith.constant 0 : i32
    %7 = arith.addi %2, %c0_i32_1 : i32
    %8 = arith.index_cast %7 : i32 to index
    %9 = memref.load %arg2[%8] : memref<16xi32, #tpu.memory_space<smem>>
    %c0_i32_2 = arith.constant 0 : i32
    %10 = arith.addi %2, %c0_i32_2 : i32
    %11 = arith.index_cast %10 : i32 to index
    %12 = memref.load %arg3[%11] : memref<16xi32, #tpu.memory_space<smem>>
    %c0_i32_3 = arith.constant 0 : i32
    %13 = vector.broadcast %c0_i32_3 : i32 to vector<16x128xi32>
    %14 = arith.cmpi eq, %0, %13 : vector<16x128xi32>
    %15 = vector.broadcast %9 : i32 to vector<16x128xi32>
    %16 = arith.select %14, %15, %3 : vector<16x128xi1>, vector<16x128xi32>
    %c0_i32_4 = arith.constant 0 : i32
    %17 = vector.broadcast %c0_i32_4 : i32 to vector<16x128xi32>
    %18 = arith.cmpi eq, %0, %17 : vector<16x128xi32>
    %19 = vector.broadcast %12 : i32 to vector<16x128xi32>
    %20 = arith.select %18, %19, %4 : vector<16x128xi1>, vector<16x128xi32>
    %21 = arith.maxsi %6, %9 : i32
    %c1_i32 = arith.constant 1 : i32
    %22 = arith.addi %2, %c1_i32 : i32
    %23 = arith.index_cast %22 : i32 to index
    %24 = memref.load %arg2[%23] : memref<16xi32, #tpu.memory_space<smem>>
    %c1_i32_5 = arith.constant 1 : i32
    %25 = arith.addi %2, %c1_i32_5 : i32
    %26 = arith.index_cast %25 : i32 to index
    %27 = memref.load %arg3[%26] : memref<16xi32, #tpu.memory_space<smem>>
    %c1_i32_6 = arith.constant 1 : i32
    %28 = vector.broadcast %c1_i32_6 : i32 to vector<16x128xi32>
    %29 = arith.cmpi eq, %0, %28 : vector<16x128xi32>
    %30 = vector.broadcast %24 : i32 to vector<16x128xi32>
    %31 = arith.select %29, %30, %16 : vector<16x128xi1>, vector<16x128xi32>
    %c1_i32_7 = arith.constant 1 : i32
    %32 = vector.broadcast %c1_i32_7 : i32 to vector<16x128xi32>
    %33 = arith.cmpi eq, %0, %32 : vector<16x128xi32>
    %34 = vector.broadcast %27 : i32 to vector<16x128xi32>
    %35 = arith.select %33, %34, %20 : vector<16x128xi1>, vector<16x128xi32>
    %36 = arith.maxsi %21, %24 : i32
    %c2_i32 = arith.constant 2 : i32
    %37 = arith.addi %2, %c2_i32 : i32
    %38 = arith.index_cast %37 : i32 to index
    %39 = memref.load %arg2[%38] : memref<16xi32, #tpu.memory_space<smem>>
    %c2_i32_8 = arith.constant 2 : i32
    %40 = arith.addi %2, %c2_i32_8 : i32
    %41 = arith.index_cast %40 : i32 to index
    %42 = memref.load %arg3[%41] : memref<16xi32, #tpu.memory_space<smem>>
    %c2_i32_9 = arith.constant 2 : i32
    %43 = vector.broadcast %c2_i32_9 : i32 to vector<16x128xi32>
    %44 = arith.cmpi eq, %0, %43 : vector<16x128xi32>
    %45 = vector.broadcast %39 : i32 to vector<16x128xi32>
    %46 = arith.select %44, %45, %31 : vector<16x128xi1>, vector<16x128xi32>
    %c2_i32_10 = arith.constant 2 : i32
    %47 = vector.broadcast %c2_i32_10 : i32 to vector<16x128xi32>
    %48 = arith.cmpi eq, %0, %47 : vector<16x128xi32>
    %49 = vector.broadcast %42 : i32 to vector<16x128xi32>
    %50 = arith.select %48, %49, %35 : vector<16x128xi1>, vector<16x128xi32>
    %51 = arith.maxsi %36, %39 : i32
    %c3_i32 = arith.constant 3 : i32
    %52 = arith.addi %2, %c3_i32 : i32
    %53 = arith.index_cast %52 : i32 to index
    %54 = memref.load %arg2[%53] : memref<16xi32, #tpu.memory_space<smem>>
    %c3_i32_11 = arith.constant 3 : i32
    %55 = arith.addi %2, %c3_i32_11 : i32
    %56 = arith.index_cast %55 : i32 to index
    %57 = memref.load %arg3[%56] : memref<16xi32, #tpu.memory_space<smem>>
    %c3_i32_12 = arith.constant 3 : i32
    %58 = vector.broadcast %c3_i32_12 : i32 to vector<16x128xi32>
    %59 = arith.cmpi eq, %0, %58 : vector<16x128xi32>
    %60 = vector.broadcast %54 : i32 to vector<16x128xi32>
    %61 = arith.select %59, %60, %46 : vector<16x128xi1>, vector<16x128xi32>
    %c3_i32_13 = arith.constant 3 : i32
    %62 = vector.broadcast %c3_i32_13 : i32 to vector<16x128xi32>
    %63 = arith.cmpi eq, %0, %62 : vector<16x128xi32>
    %64 = vector.broadcast %57 : i32 to vector<16x128xi32>
    %65 = arith.select %63, %64, %50 : vector<16x128xi1>, vector<16x128xi32>
    %66 = arith.maxsi %51, %54 : i32
    %c4_i32 = arith.constant 4 : i32
    %67 = arith.addi %2, %c4_i32 : i32
    %68 = arith.index_cast %67 : i32 to index
    %69 = memref.load %arg2[%68] : memref<16xi32, #tpu.memory_space<smem>>
    %c4_i32_14 = arith.constant 4 : i32
    %70 = arith.addi %2, %c4_i32_14 : i32
    %71 = arith.index_cast %70 : i32 to index
    %72 = memref.load %arg3[%71] : memref<16xi32, #tpu.memory_space<smem>>
    %c4_i32_15 = arith.constant 4 : i32
    %73 = vector.broadcast %c4_i32_15 : i32 to vector<16x128xi32>
    %74 = arith.cmpi eq, %0, %73 : vector<16x128xi32>
    %75 = vector.broadcast %69 : i32 to vector<16x128xi32>
    %76 = arith.select %74, %75, %61 : vector<16x128xi1>, vector<16x128xi32>
    %c4_i32_16 = arith.constant 4 : i32
    %77 = vector.broadcast %c4_i32_16 : i32 to vector<16x128xi32>
    %78 = arith.cmpi eq, %0, %77 : vector<16x128xi32>
    %79 = vector.broadcast %72 : i32 to vector<16x128xi32>
    %80 = arith.select %78, %79, %65 : vector<16x128xi1>, vector<16x128xi32>
    %81 = arith.maxsi %66, %69 : i32
    %c5_i32 = arith.constant 5 : i32
    %82 = arith.addi %2, %c5_i32 : i32
    %83 = arith.index_cast %82 : i32 to index
    %84 = memref.load %arg2[%83] : memref<16xi32, #tpu.memory_space<smem>>
    %c5_i32_17 = arith.constant 5 : i32
    %85 = arith.addi %2, %c5_i32_17 : i32
    %86 = arith.index_cast %85 : i32 to index
    %87 = memref.load %arg3[%86] : memref<16xi32, #tpu.memory_space<smem>>
    %c5_i32_18 = arith.constant 5 : i32
    %88 = vector.broadcast %c5_i32_18 : i32 to vector<16x128xi32>
    %89 = arith.cmpi eq, %0, %88 : vector<16x128xi32>
    %90 = vector.broadcast %84 : i32 to vector<16x128xi32>
    %91 = arith.select %89, %90, %76 : vector<16x128xi1>, vector<16x128xi32>
    %c5_i32_19 = arith.constant 5 : i32
    %92 = vector.broadcast %c5_i32_19 : i32 to vector<16x128xi32>
    %93 = arith.cmpi eq, %0, %92 : vector<16x128xi32>
    %94 = vector.broadcast %87 : i32 to vector<16x128xi32>
    %95 = arith.select %93, %94, %80 : vector<16x128xi1>, vector<16x128xi32>
    %96 = arith.maxsi %81, %84 : i32
    %c6_i32 = arith.constant 6 : i32
    %97 = arith.addi %2, %c6_i32 : i32
    %98 = arith.index_cast %97 : i32 to index
    %99 = memref.load %arg2[%98] : memref<16xi32, #tpu.memory_space<smem>>
    %c6_i32_20 = arith.constant 6 : i32
    %100 = arith.addi %2, %c6_i32_20 : i32
    %101 = arith.index_cast %100 : i32 to index
    %102 = memref.load %arg3[%101] : memref<16xi32, #tpu.memory_space<smem>>
    %c6_i32_21 = arith.constant 6 : i32
    %103 = vector.broadcast %c6_i32_21 : i32 to vector<16x128xi32>
    %104 = arith.cmpi eq, %0, %103 : vector<16x128xi32>
    %105 = vector.broadcast %99 : i32 to vector<16x128xi32>
    %106 = arith.select %104, %105, %91 : vector<16x128xi1>, vector<16x128xi32>
    %c6_i32_22 = arith.constant 6 : i32
    %107 = vector.broadcast %c6_i32_22 : i32 to vector<16x128xi32>
    %108 = arith.cmpi eq, %0, %107 : vector<16x128xi32>
    %109 = vector.broadcast %102 : i32 to vector<16x128xi32>
    %110 = arith.select %108, %109, %95 : vector<16x128xi1>, vector<16x128xi32>
    %111 = arith.maxsi %96, %99 : i32
    %c7_i32 = arith.constant 7 : i32
    %112 = arith.addi %2, %c7_i32 : i32
    %113 = arith.index_cast %112 : i32 to index
    %114 = memref.load %arg2[%113] : memref<16xi32, #tpu.memory_space<smem>>
    %c7_i32_23 = arith.constant 7 : i32
    %115 = arith.addi %2, %c7_i32_23 : i32
    %116 = arith.index_cast %115 : i32 to index
    %117 = memref.load %arg3[%116] : memref<16xi32, #tpu.memory_space<smem>>
    %c7_i32_24 = arith.constant 7 : i32
    %118 = vector.broadcast %c7_i32_24 : i32 to vector<16x128xi32>
    %119 = arith.cmpi eq, %0, %118 : vector<16x128xi32>
    %120 = vector.broadcast %114 : i32 to vector<16x128xi32>
    %121 = arith.select %119, %120, %106 : vector<16x128xi1>, vector<16x128xi32>
    %c7_i32_25 = arith.constant 7 : i32
    %122 = vector.broadcast %c7_i32_25 : i32 to vector<16x128xi32>
    %123 = arith.cmpi eq, %0, %122 : vector<16x128xi32>
    %124 = vector.broadcast %117 : i32 to vector<16x128xi32>
    %125 = arith.select %123, %124, %110 : vector<16x128xi1>, vector<16x128xi32>
    %126 = arith.maxsi %111, %114 : i32
    %c8_i32 = arith.constant 8 : i32
    %127 = arith.addi %2, %c8_i32 : i32
    %128 = arith.index_cast %127 : i32 to index
    %129 = memref.load %arg2[%128] : memref<16xi32, #tpu.memory_space<smem>>
    %c8_i32_26 = arith.constant 8 : i32
    %130 = arith.addi %2, %c8_i32_26 : i32
    %131 = arith.index_cast %130 : i32 to index
    %132 = memref.load %arg3[%131] : memref<16xi32, #tpu.memory_space<smem>>
    %c8_i32_27 = arith.constant 8 : i32
    %133 = vector.broadcast %c8_i32_27 : i32 to vector<16x128xi32>
    %134 = arith.cmpi eq, %0, %133 : vector<16x128xi32>
    %135 = vector.broadcast %129 : i32 to vector<16x128xi32>
    %136 = arith.select %134, %135, %121 : vector<16x128xi1>, vector<16x128xi32>
    %c8_i32_28 = arith.constant 8 : i32
    %137 = vector.broadcast %c8_i32_28 : i32 to vector<16x128xi32>
    %138 = arith.cmpi eq, %0, %137 : vector<16x128xi32>
    %139 = vector.broadcast %132 : i32 to vector<16x128xi32>
    %140 = arith.select %138, %139, %125 : vector<16x128xi1>, vector<16x128xi32>
    %141 = arith.maxsi %126, %129 : i32
    %c9_i32 = arith.constant 9 : i32
    %142 = arith.addi %2, %c9_i32 : i32
    %143 = arith.index_cast %142 : i32 to index
    %144 = memref.load %arg2[%143] : memref<16xi32, #tpu.memory_space<smem>>
    %c9_i32_29 = arith.constant 9 : i32
    %145 = arith.addi %2, %c9_i32_29 : i32
    %146 = arith.index_cast %145 : i32 to index
    %147 = memref.load %arg3[%146] : memref<16xi32, #tpu.memory_space<smem>>
    %c9_i32_30 = arith.constant 9 : i32
    %148 = vector.broadcast %c9_i32_30 : i32 to vector<16x128xi32>
    %149 = arith.cmpi eq, %0, %148 : vector<16x128xi32>
    %150 = vector.broadcast %144 : i32 to vector<16x128xi32>
    %151 = arith.select %149, %150, %136 : vector<16x128xi1>, vector<16x128xi32>
    %c9_i32_31 = arith.constant 9 : i32
    %152 = vector.broadcast %c9_i32_31 : i32 to vector<16x128xi32>
    %153 = arith.cmpi eq, %0, %152 : vector<16x128xi32>
    %154 = vector.broadcast %147 : i32 to vector<16x128xi32>
    %155 = arith.select %153, %154, %140 : vector<16x128xi1>, vector<16x128xi32>
    %156 = arith.maxsi %141, %144 : i32
    %c10_i32 = arith.constant 10 : i32
    %157 = arith.addi %2, %c10_i32 : i32
    %158 = arith.index_cast %157 : i32 to index
    %159 = memref.load %arg2[%158] : memref<16xi32, #tpu.memory_space<smem>>
    %c10_i32_32 = arith.constant 10 : i32
    %160 = arith.addi %2, %c10_i32_32 : i32
    %161 = arith.index_cast %160 : i32 to index
    %162 = memref.load %arg3[%161] : memref<16xi32, #tpu.memory_space<smem>>
    %c10_i32_33 = arith.constant 10 : i32
    %163 = vector.broadcast %c10_i32_33 : i32 to vector<16x128xi32>
    %164 = arith.cmpi eq, %0, %163 : vector<16x128xi32>
    %165 = vector.broadcast %159 : i32 to vector<16x128xi32>
    %166 = arith.select %164, %165, %151 : vector<16x128xi1>, vector<16x128xi32>
    %c10_i32_34 = arith.constant 10 : i32
    %167 = vector.broadcast %c10_i32_34 : i32 to vector<16x128xi32>
    %168 = arith.cmpi eq, %0, %167 : vector<16x128xi32>
    %169 = vector.broadcast %162 : i32 to vector<16x128xi32>
    %170 = arith.select %168, %169, %155 : vector<16x128xi1>, vector<16x128xi32>
    %171 = arith.maxsi %156, %159 : i32
    %c11_i32 = arith.constant 11 : i32
    %172 = arith.addi %2, %c11_i32 : i32
    %173 = arith.index_cast %172 : i32 to index
    %174 = memref.load %arg2[%173] : memref<16xi32, #tpu.memory_space<smem>>
    %c11_i32_35 = arith.constant 11 : i32
    %175 = arith.addi %2, %c11_i32_35 : i32
    %176 = arith.index_cast %175 : i32 to index
    %177 = memref.load %arg3[%176] : memref<16xi32, #tpu.memory_space<smem>>
    %c11_i32_36 = arith.constant 11 : i32
    %178 = vector.broadcast %c11_i32_36 : i32 to vector<16x128xi32>
    %179 = arith.cmpi eq, %0, %178 : vector<16x128xi32>
    %180 = vector.broadcast %174 : i32 to vector<16x128xi32>
    %181 = arith.select %179, %180, %166 : vector<16x128xi1>, vector<16x128xi32>
    %c11_i32_37 = arith.constant 11 : i32
    %182 = vector.broadcast %c11_i32_37 : i32 to vector<16x128xi32>
    %183 = arith.cmpi eq, %0, %182 : vector<16x128xi32>
    %184 = vector.broadcast %177 : i32 to vector<16x128xi32>
    %185 = arith.select %183, %184, %170 : vector<16x128xi1>, vector<16x128xi32>
    %186 = arith.maxsi %171, %174 : i32
    %c12_i32 = arith.constant 12 : i32
    %187 = arith.addi %2, %c12_i32 : i32
    %188 = arith.index_cast %187 : i32 to index
    %189 = memref.load %arg2[%188] : memref<16xi32, #tpu.memory_space<smem>>
    %c12_i32_38 = arith.constant 12 : i32
    %190 = arith.addi %2, %c12_i32_38 : i32
    %191 = arith.index_cast %190 : i32 to index
    %192 = memref.load %arg3[%191] : memref<16xi32, #tpu.memory_space<smem>>
    %c12_i32_39 = arith.constant 12 : i32
    %193 = vector.broadcast %c12_i32_39 : i32 to vector<16x128xi32>
    %194 = arith.cmpi eq, %0, %193 : vector<16x128xi32>
    %195 = vector.broadcast %189 : i32 to vector<16x128xi32>
    %196 = arith.select %194, %195, %181 : vector<16x128xi1>, vector<16x128xi32>
    %c12_i32_40 = arith.constant 12 : i32
    %197 = vector.broadcast %c12_i32_40 : i32 to vector<16x128xi32>
    %198 = arith.cmpi eq, %0, %197 : vector<16x128xi32>
    %199 = vector.broadcast %192 : i32 to vector<16x128xi32>
    %200 = arith.select %198, %199, %185 : vector<16x128xi1>, vector<16x128xi32>
    %201 = arith.maxsi %186, %189 : i32
    %c13_i32 = arith.constant 13 : i32
    %202 = arith.addi %2, %c13_i32 : i32
    %203 = arith.index_cast %202 : i32 to index
    %204 = memref.load %arg2[%203] : memref<16xi32, #tpu.memory_space<smem>>
    %c13_i32_41 = arith.constant 13 : i32
    %205 = arith.addi %2, %c13_i32_41 : i32
    %206 = arith.index_cast %205 : i32 to index
    %207 = memref.load %arg3[%206] : memref<16xi32, #tpu.memory_space<smem>>
    %c13_i32_42 = arith.constant 13 : i32
    %208 = vector.broadcast %c13_i32_42 : i32 to vector<16x128xi32>
    %209 = arith.cmpi eq, %0, %208 : vector<16x128xi32>
    %210 = vector.broadcast %204 : i32 to vector<16x128xi32>
    %211 = arith.select %209, %210, %196 : vector<16x128xi1>, vector<16x128xi32>
    %c13_i32_43 = arith.constant 13 : i32
    %212 = vector.broadcast %c13_i32_43 : i32 to vector<16x128xi32>
    %213 = arith.cmpi eq, %0, %212 : vector<16x128xi32>
    %214 = vector.broadcast %207 : i32 to vector<16x128xi32>
    %215 = arith.select %213, %214, %200 : vector<16x128xi1>, vector<16x128xi32>
    %216 = arith.maxsi %201, %204 : i32
    %c14_i32 = arith.constant 14 : i32
    %217 = arith.addi %2, %c14_i32 : i32
    %218 = arith.index_cast %217 : i32 to index
    %219 = memref.load %arg2[%218] : memref<16xi32, #tpu.memory_space<smem>>
    %c14_i32_44 = arith.constant 14 : i32
    %220 = arith.addi %2, %c14_i32_44 : i32
    %221 = arith.index_cast %220 : i32 to index
    %222 = memref.load %arg3[%221] : memref<16xi32, #tpu.memory_space<smem>>
    %c14_i32_45 = arith.constant 14 : i32
    %223 = vector.broadcast %c14_i32_45 : i32 to vector<16x128xi32>
    %224 = arith.cmpi eq, %0, %223 : vector<16x128xi32>
    %225 = vector.broadcast %219 : i32 to vector<16x128xi32>
    %226 = arith.select %224, %225, %211 : vector<16x128xi1>, vector<16x128xi32>
    %c14_i32_46 = arith.constant 14 : i32
    %227 = vector.broadcast %c14_i32_46 : i32 to vector<16x128xi32>
    %228 = arith.cmpi eq, %0, %227 : vector<16x128xi32>
    %229 = vector.broadcast %222 : i32 to vector<16x128xi32>
    %230 = arith.select %228, %229, %215 : vector<16x128xi1>, vector<16x128xi32>
    %231 = arith.maxsi %216, %219 : i32
    %c15_i32 = arith.constant 15 : i32
    %232 = arith.addi %2, %c15_i32 : i32
    %233 = arith.index_cast %232 : i32 to index
    %234 = memref.load %arg2[%233] : memref<16xi32, #tpu.memory_space<smem>>
    %c15_i32_47 = arith.constant 15 : i32
    %235 = arith.addi %2, %c15_i32_47 : i32
    %236 = arith.index_cast %235 : i32 to index
    %237 = memref.load %arg3[%236] : memref<16xi32, #tpu.memory_space<smem>>
    %c15_i32_48 = arith.constant 15 : i32
    %238 = vector.broadcast %c15_i32_48 : i32 to vector<16x128xi32>
    %239 = arith.cmpi eq, %0, %238 : vector<16x128xi32>
    %240 = vector.broadcast %234 : i32 to vector<16x128xi32>
    %241 = arith.select %239, %240, %226 : vector<16x128xi1>, vector<16x128xi32>
    %c15_i32_49 = arith.constant 15 : i32
    %242 = vector.broadcast %c15_i32_49 : i32 to vector<16x128xi32>
    %243 = arith.cmpi eq, %0, %242 : vector<16x128xi32>
    %244 = vector.broadcast %237 : i32 to vector<16x128xi32>
    %245 = arith.select %243, %244, %230 : vector<16x128xi1>, vector<16x128xi32>
    %246 = arith.maxsi %231, %234 : i32
    %c2_i32_50 = arith.constant 2 : i32
    %247 = vector.broadcast %c2_i32_50 : i32 to vector<16x128xi32>
    %248 = arith.muli %247, %245 : vector<16x128xi32>
    %c1_i32_51 = arith.constant 1 : i32
    %249 = vector.broadcast %c1_i32_51 : i32 to vector<16x128xi32>
    %250 = arith.addi %248, %249 : vector<16x128xi32>
    %251 = arith.cmpi slt, %1, %250 : vector<16x128xi32>
    %c0 = arith.constant 0 : index
    %c0_52 = arith.constant 0 : index
    %252 = vector.load %arg5[%c0, %c0_52] : memref<16x128xi32, #tpu.memory_space<vmem>>, vector<16x128xi32>
    %c2_i32_53 = arith.constant 2 : i32
    %253 = tpu.dynamic_rotate %252 by %c2_i32_53 dim 1 : vector<16x128xi32>, i32 -> vector<16x128xi32>
    %c0_i32_54 = arith.constant 0 : i32
    %254 = vector.broadcast %c0_i32_54 : i32 to vector<16x128xi32>
    %255 = arith.cmpi ne, %252, %254 : vector<16x128xi32>
    %256 = arith.cmpi ne, %252, %253 : vector<16x128xi32>
    %257 = arith.andi %255, %256 : vector<16x128xi1>
    %c2_i32_55 = arith.constant 2 : i32
    %258 = vector.broadcast %c2_i32_55 : i32 to vector<16x128xi32>
    %259 = arith.cmpi sge, %1, %258 : vector<16x128xi32>
    %260 = arith.andi %257, %259 : vector<16x128xi1>
    %c32_i32 = arith.constant 32 : i32
    %261 = arith.muli %arg1, %c32_i32 : i32
    %262 = arith.cmpi slt, %261, %246 : i32
    %263 = arith.extui %262 : i1 to i32
    %c0_i32_56 = arith.constant 0 : i32
    %264 = arith.cmpi ne, %263, %c0_i32_56 : i32
    scf.if %264 {
      %281 = tpu.iota {dimensions = array<i32: 0>} : vector<32x128xi32>
      %c0_71 = arith.constant 0 : index
      %c0_72 = arith.constant 0 : index
      %282 = vector.load %arg5[%c0_71, %c0_72] : memref<16x128xi32, #tpu.memory_space<vmem>>, vector<1x128xi32>
      %283 = vector.broadcast %282 : vector<1x128xi32> to vector<32x128xi32>
      %284 = arith.cmpi eq, %281, %283 : vector<32x128xi32>
      %285 = arith.extui %284 : vector<32x128xi1> to vector<32x128xi32>
      %286 = arith.sitofp %285 : vector<32x128xi32> to vector<32x128xf32>
      %c0_73 = arith.constant 0 : index
      %c0_74 = arith.constant 0 : index
      %c0_75 = arith.constant 0 : index
      %287 = vector.load %arg4[%c0_73, %c0_74, %c0_75] : memref<32x16x32xf32, #tpu.memory_space<vmem>>, vector<32x1x32xf32>
      %288 = vector.shape_cast %287 : vector<32x1x32xf32> to vector<32x32xf32>
      %cst = arith.constant dense<0.000000e+00> : vector<32x128xf32>
      %289 = tpu.matmul %288, %286, %cst {dimension_numbers = #tpu.dot_dimension_numbers<[1], [0], [0], [1], [0, 0, 1, 1], [], []>, precision = #tpu.contract_precision<fp32>} : vector<32x32xf32>, vector<32x128xf32>, vector<32x128xf32> -> vector<32x128xf32>
      %c0_76 = arith.constant 0 : index
      %c0_77 = arith.constant 0 : index
      %c0_78 = arith.constant 0 : index
      %290 = vector.load %arg7[%c0_76, %c0_77, %c0_78] : memref<32x16x128xf32, #tpu.memory_space<vmem>>, vector<32x1x128xf32>
      %291 = vector.shape_cast %290 : vector<32x1x128xf32> to vector<32x128xf32>
      %292 = vector.shape_cast %289 : vector<32x128xf32> to vector<32x1x128xf32>
      tpu.vector_store %arg7[%c0_76, %c0_77, %c0_78], %292 {strides = array<i32>} : memref<32x16x128xf32, #tpu.memory_space<vmem>>, vector<32x1x128xf32>,
      %c1 = arith.constant 1 : index
      %c0_79 = arith.constant 0 : index
      %293 = vector.load %arg5[%c1, %c0_79] : memref<16x128xi32, #tpu.memory_space<vmem>>, vector<1x128xi32>
      %294 = vector.broadcast %293 : vector<1x128xi32> to vector<32x128xi32>
      %295 = arith.cmpi eq, %281, %294 : vector<32x128xi32>
      %296 = arith.extui %295 : vector<32x128xi1> to vector<32x128xi32>
      %297 = arith.sitofp %296 : vector<32x128xi32> to vector<32x128xf32>
      %c0_80 = arith.constant 0 : index
      %c1_81 = arith.constant 1 : index
      %c0_82 = arith.constant 0 : index
      %298 = vector.load %arg4[%c0_80, %c1_81, %c0_82] : memref<32x16x32xf32, #tpu.memory_space<vmem>>, vector<32x1x32xf32>
      %299 = vector.shape_cast %298 : vector<32x1x32xf32> to vector<32x32xf32>
      %cst_83 = arith.constant dense<0.000000e+00> : vector<32x128xf32>
      %300 = tpu.matmul %299, %297, %cst_83 {dimension_numbers = #tpu.dot_dimension_numbers<[1], [0], [0], [1], [0, 0, 1, 1], [], []>, precision = #tpu.contract_precision<fp32>} : vector<32x32xf32>, vector<32x128xf32>, vector<32x128xf32> -> vector<32x128xf32>
      %c0_84 = arith.constant 0 : index
      %c1_85 = arith.constant 1 : index
      %c0_86 = arith.constant 0 : index
      %301 = vector.load %arg7[%c0_84, %c1_85, %c0_86] : memref<32x16x128xf32, #tpu.memory_space<vmem>>, vector<32x1x128xf32>
      %302 = vector.shape_cast %301 : vector<32x1x128xf32> to vector<32x128xf32>
      %303 = vector.shape_cast %300 : vector<32x128xf32> to vector<32x1x128xf32>
      tpu.vector_store %arg7[%c0_84, %c1_85, %c0_86], %303 {strides = array<i32>} : memref<32x16x128xf32, #tpu.memory_space<vmem>>, vector<32x1x128xf32>,
      %c2 = arith.constant 2 : index
      %c0_87 = arith.constant 0 : index
      %304 = vector.load %arg5[%c2, %c0_87] : memref<16x128xi32, #tpu.memory_space<vmem>>, vector<1x128xi32>
      %305 = vector.broadcast %304 : vector<1x128xi32> to vector<32x128xi32>
      %306 = arith.cmpi eq, %281, %305 : vector<32x128xi32>
      %307 = arith.extui %306 : vector<32x128xi1> to vector<32x128xi32>
      %308 = arith.sitofp %307 : vector<32x128xi32> to vector<32x128xf32>
      %c0_88 = arith.constant 0 : index
      %c2_89 = arith.constant 2 : index
      %c0_90 = arith.constant 0 : index
      %309 = vector.load %arg4[%c0_88, %c2_89, %c0_90] : memref<32x16x32xf32, #tpu.memory_space<vmem>>, vector<32x1x32xf32>
      %310 = vector.shape_cast %309 : vector<32x1x32xf32> to vector<32x32xf32>
      %cst_91 = arith.constant dense<0.000000e+00> : vector<32x128xf32>
      %311 = tpu.matmul %310, %308, %cst_91 {dimension_numbers = #tpu.dot_dimension_numbers<[1], [0], [0], [1], [0, 0, 1, 1], [], []>, precision = #tpu.contract_precision<fp32>} : vector<32x32xf32>, vector<32x128xf32>, vector<32x128xf32> -> vector<32x128xf32>
      %c0_92 = arith.constant 0 : index
      %c2_93 = arith.constant 2 : index
      %c0_94 = arith.constant 0 : index
      %312 = vector.load %arg7[%c0_92, %c2_93, %c0_94] : memref<32x16x128xf32, #tpu.memory_space<vmem>>, vector<32x1x128xf32>
      %313 = vector.shape_cast %312 : vector<32x1x128xf32> to vector<32x128xf32>
      %314 = vector.shape_cast %311 : vector<32x128xf32> to vector<32x1x128xf32>
      tpu.vector_store %arg7[%c0_92, %c2_93, %c0_94], %314 {strides = array<i32>} : memref<32x16x128xf32, #tpu.memory_space<vmem>>, vector<32x1x128xf32>,
      %c3 = arith.constant 3 : index
      %c0_95 = arith.constant 0 : index
      %315 = vector.load %arg5[%c3, %c0_95] : memref<16x128xi32, #tpu.memory_space<vmem>>, vector<1x128xi32>
      %316 = vector.broadcast %315 : vector<1x128xi32> to vector<32x128xi32>
      %317 = arith.cmpi eq, %281, %316 : vector<32x128xi32>
      %318 = arith.extui %317 : vector<32x128xi1> to vector<32x128xi32>
      %319 = arith.sitofp %318 : vector<32x128xi32> to vector<32x128xf32>
      %c0_96 = arith.constant 0 : index
      %c3_97 = arith.constant 3 : index
      %c0_98 = arith.constant 0 : index
      %320 = vector.load %arg4[%c0_96, %c3_97, %c0_98] : memref<32x16x32xf32, #tpu.memory_space<vmem>>, vector<32x1x32xf32>
      %321 = vector.shape_cast %320 : vector<32x1x32xf32> to vector<32x32xf32>
      %cst_99 = arith.constant dense<0.000000e+00> : vector<32x128xf32>
      %322 = tpu.matmul %321, %319, %cst_99 {dimension_numbers = #tpu.dot_dimension_numbers<[1], [0], [0], [1], [0, 0, 1, 1], [], []>, precision = #tpu.contract_precision<fp32>} : vector<32x32xf32>, vector<32x128xf32>, vector<32x128xf32> -> vector<32x128xf32>
      %c0_100 = arith.constant 0 : index
      %c3_101 = arith.constant 3 : index
      %c0_102 = arith.constant 0 : index
      %323 = vector.load %arg7[%c0_100, %c3_101, %c0_102] : memref<32x16x128xf32, #tpu.memory_space<vmem>>, vector<32x1x128xf32>
      %324 = vector.shape_cast %323 : vector<32x1x128xf32> to vector<32x128xf32>
      %325 = vector.shape_cast %322 : vector<32x128xf32> to vector<32x1x128xf32>
      tpu.vector_store %arg7[%c0_100, %c3_101, %c0_102], %325 {strides = array<i32>} : memref<32x16x128xf32, #tpu.memory_space<vmem>>, vector<32x1x128xf32>,
      %c4 = arith.constant 4 : index
      %c0_103 = arith.constant 0 : index
      %326 = vector.load %arg5[%c4, %c0_103] : memref<16x128xi32, #tpu.memory_space<vmem>>, vector<1x128xi32>
      %327 = vector.broadcast %326 : vector<1x128xi32> to vector<32x128xi32>
      %328 = arith.cmpi eq, %281, %327 : vector<32x128xi32>
      %329 = arith.extui %328 : vector<32x128xi1> to vector<32x128xi32>
      %330 = arith.sitofp %329 : vector<32x128xi32> to vector<32x128xf32>
      %c0_104 = arith.constant 0 : index
      %c4_105 = arith.constant 4 : index
      %c0_106 = arith.constant 0 : index
      %331 = vector.load %arg4[%c0_104, %c4_105, %c0_106] : memref<32x16x32xf32, #tpu.memory_space<vmem>>, vector<32x1x32xf32>
      %332 = vector.shape_cast %331 : vector<32x1x32xf32> to vector<32x32xf32>
      %cst_107 = arith.constant dense<0.000000e+00> : vector<32x128xf32>
      %333 = tpu.matmul %332, %330, %cst_107 {dimension_numbers = #tpu.dot_dimension_numbers<[1], [0], [0], [1], [0, 0, 1, 1], [], []>, precision = #tpu.contract_precision<fp32>} : vector<32x32xf32>, vector<32x128xf32>, vector<32x128xf32> -> vector<32x128xf32>
      %c0_108 = arith.constant 0 : index
      %c4_109 = arith.constant 4 : index
      %c0_110 = arith.constant 0 : index
      %334 = vector.load %arg7[%c0_108, %c4_109, %c0_110] : memref<32x16x128xf32, #tpu.memory_space<vmem>>, vector<32x1x128xf32>
      %335 = vector.shape_cast %334 : vector<32x1x128xf32> to vector<32x128xf32>
      %336 = vector.shape_cast %333 : vector<32x128xf32> to vector<32x1x128xf32>
      tpu.vector_store %arg7[%c0_108, %c4_109, %c0_110], %336 {strides = array<i32>} : memref<32x16x128xf32, #tpu.memory_space<vmem>>, vector<32x1x128xf32>,
      %c5 = arith.constant 5 : index
      %c0_111 = arith.constant 0 : index
      %337 = vector.load %arg5[%c5, %c0_111] : memref<16x128xi32, #tpu.memory_space<vmem>>, vector<1x128xi32>
      %338 = vector.broadcast %337 : vector<1x128xi32> to vector<32x128xi32>
      %339 = arith.cmpi eq, %281, %338 : vector<32x128xi32>
      %340 = arith.extui %339 : vector<32x128xi1> to vector<32x128xi32>
      %341 = arith.sitofp %340 : vector<32x128xi32> to vector<32x128xf32>
      %c0_112 = arith.constant 0 : index
      %c5_113 = arith.constant 5 : index
      %c0_114 = arith.constant 0 : index
      %342 = vector.load %arg4[%c0_112, %c5_113, %c0_114] : memref<32x16x32xf32, #tpu.memory_space<vmem>>, vector<32x1x32xf32>
      %343 = vector.shape_cast %342 : vector<32x1x32xf32> to vector<32x32xf32>
      %cst_115 = arith.constant dense<0.000000e+00> : vector<32x128xf32>
      %344 = tpu.matmul %343, %341, %cst_115 {dimension_numbers = #tpu.dot_dimension_numbers<[1], [0], [0], [1], [0, 0, 1, 1], [], []>, precision = #tpu.contract_precision<fp32>} : vector<32x32xf32>, vector<32x128xf32>, vector<32x128xf32> -> vector<32x128xf32>
      %c0_116 = arith.constant 0 : index
      %c5_117 = arith.constant 5 : index
      %c0_118 = arith.constant 0 : index
      %345 = vector.load %arg7[%c0_116, %c5_117, %c0_118] : memref<32x16x128xf32, #tpu.memory_space<vmem>>, vector<32x1x128xf32>
      %346 = vector.shape_cast %345 : vector<32x1x128xf32> to vector<32x128xf32>
      %347 = vector.shape_cast %344 : vector<32x128xf32> to vector<32x1x128xf32>
      tpu.vector_store %arg7[%c0_116, %c5_117, %c0_118], %347 {strides = array<i32>} : memref<32x16x128xf32, #tpu.memory_space<vmem>>, vector<32x1x128xf32>,
      %c6 = arith.constant 6 : index
      %c0_119 = arith.constant 0 : index
      %348 = vector.load %arg5[%c6, %c0_119] : memref<16x128xi32, #tpu.memory_space<vmem>>, vector<1x128xi32>
      %349 = vector.broadcast %348 : vector<1x128xi32> to vector<32x128xi32>
      %350 = arith.cmpi eq, %281, %349 : vector<32x128xi32>
      %351 = arith.extui %350 : vector<32x128xi1> to vector<32x128xi32>
      %352 = arith.sitofp %351 : vector<32x128xi32> to vector<32x128xf32>
      %c0_120 = arith.constant 0 : index
      %c6_121 = arith.constant 6 : index
      %c0_122 = arith.constant 0 : index
      %353 = vector.load %arg4[%c0_120, %c6_121, %c0_122] : memref<32x16x32xf32, #tpu.memory_space<vmem>>, vector<32x1x32xf32>
      %354 = vector.shape_cast %353 : vector<32x1x32xf32> to vector<32x32xf32>
      %cst_123 = arith.constant dense<0.000000e+00> : vector<32x128xf32>
      %355 = tpu.matmul %354, %352, %cst_123 {dimension_numbers = #tpu.dot_dimension_numbers<[1], [0], [0], [1], [0, 0, 1, 1], [], []>, precision = #tpu.contract_precision<fp32>} : vector<32x32xf32>, vector<32x128xf32>, vector<32x128xf32> -> vector<32x128xf32>
      %c0_124 = arith.constant 0 : index
      %c6_125 = arith.constant 6 : index
      %c0_126 = arith.constant 0 : index
      %356 = vector.load %arg7[%c0_124, %c6_125, %c0_126] : memref<32x16x128xf32, #tpu.memory_space<vmem>>, vector<32x1x128xf32>
      %357 = vector.shape_cast %356 : vector<32x1x128xf32> to vector<32x128xf32>
      %358 = vector.shape_cast %355 : vector<32x128xf32> to vector<32x1x128xf32>
      tpu.vector_store %arg7[%c0_124, %c6_125, %c0_126], %358 {strides = array<i32>} : memref<32x16x128xf32, #tpu.memory_space<vmem>>, vector<32x1x128xf32>,
      %c7 = arith.constant 7 : index
      %c0_127 = arith.constant 0 : index
      %359 = vector.load %arg5[%c7, %c0_127] : memref<16x128xi32, #tpu.memory_space<vmem>>, vector<1x128xi32>
      %360 = vector.broadcast %359 : vector<1x128xi32> to vector<32x128xi32>
      %361 = arith.cmpi eq, %281, %360 : vector<32x128xi32>
      %362 = arith.extui %361 : vector<32x128xi1> to vector<32x128xi32>
      %363 = arith.sitofp %362 : vector<32x128xi32> to vector<32x128xf32>
      %c0_128 = arith.constant 0 : index
      %c7_129 = arith.constant 7 : index
      %c0_130 = arith.constant 0 : index
      %364 = vector.load %arg4[%c0_128, %c7_129, %c0_130] : memref<32x16x32xf32, #tpu.memory_space<vmem>>, vector<32x1x32xf32>
      %365 = vector.shape_cast %364 : vector<32x1x32xf32> to vector<32x32xf32>
      %cst_131 = arith.constant dense<0.000000e+00> : vector<32x128xf32>
      %366 = tpu.matmul %365, %363, %cst_131 {dimension_numbers = #tpu.dot_dimension_numbers<[1], [0], [0], [1], [0, 0, 1, 1], [], []>, precision = #tpu.contract_precision<fp32>} : vector<32x32xf32>, vector<32x128xf32>, vector<32x128xf32> -> vector<32x128xf32>
      %c0_132 = arith.constant 0 : index
      %c7_133 = arith.constant 7 : index
      %c0_134 = arith.constant 0 : index
      %367 = vector.load %arg7[%c0_132, %c7_133, %c0_134] : memref<32x16x128xf32, #tpu.memory_space<vmem>>, vector<32x1x128xf32>
      %368 = vector.shape_cast %367 : vector<32x1x128xf32> to vector<32x128xf32>
      %369 = vector.shape_cast %366 : vector<32x128xf32> to vector<32x1x128xf32>
      tpu.vector_store %arg7[%c0_132, %c7_133, %c0_134], %369 {strides = array<i32>} : memref<32x16x128xf32, #tpu.memory_space<vmem>>, vector<32x1x128xf32>,
      %c8 = arith.constant 8 : index
      %c0_135 = arith.constant 0 : index
      %370 = vector.load %arg5[%c8, %c0_135] : memref<16x128xi32, #tpu.memory_space<vmem>>, vector<1x128xi32>
      %371 = vector.broadcast %370 : vector<1x128xi32> to vector<32x128xi32>
      %372 = arith.cmpi eq, %281, %371 : vector<32x128xi32>
      %373 = arith.extui %372 : vector<32x128xi1> to vector<32x128xi32>
      %374 = arith.sitofp %373 : vector<32x128xi32> to vector<32x128xf32>
      %c0_136 = arith.constant 0 : index
      %c8_137 = arith.constant 8 : index
      %c0_138 = arith.constant 0 : index
      %375 = vector.load %arg4[%c0_136, %c8_137, %c0_138] : memref<32x16x32xf32, #tpu.memory_space<vmem>>, vector<32x1x32xf32>
      %376 = vector.shape_cast %375 : vector<32x1x32xf32> to vector<32x32xf32>
      %cst_139 = arith.constant dense<0.000000e+00> : vector<32x128xf32>
      %377 = tpu.matmul %376, %374, %cst_139 {dimension_numbers = #tpu.dot_dimension_numbers<[1], [0], [0], [1], [0, 0, 1, 1], [], []>, precision = #tpu.contract_precision<fp32>} : vector<32x32xf32>, vector<32x128xf32>, vector<32x128xf32> -> vector<32x128xf32>
      %c0_140 = arith.constant 0 : index
      %c8_141 = arith.constant 8 : index
      %c0_142 = arith.constant 0 : index
      %378 = vector.load %arg7[%c0_140, %c8_141, %c0_142] : memref<32x16x128xf32, #tpu.memory_space<vmem>>, vector<32x1x128xf32>
      %379 = vector.shape_cast %378 : vector<32x1x128xf32> to vector<32x128xf32>
      %380 = vector.shape_cast %377 : vector<32x128xf32> to vector<32x1x128xf32>
      tpu.vector_store %arg7[%c0_140, %c8_141, %c0_142], %380 {strides = array<i32>} : memref<32x16x128xf32, #tpu.memory_space<vmem>>, vector<32x1x128xf32>,
      %c9 = arith.constant 9 : index
      %c0_143 = arith.constant 0 : index
      %381 = vector.load %arg5[%c9, %c0_143] : memref<16x128xi32, #tpu.memory_space<vmem>>, vector<1x128xi32>
      %382 = vector.broadcast %381 : vector<1x128xi32> to vector<32x128xi32>
      %383 = arith.cmpi eq, %281, %382 : vector<32x128xi32>
      %384 = arith.extui %383 : vector<32x128xi1> to vector<32x128xi32>
      %385 = arith.sitofp %384 : vector<32x128xi32> to vector<32x128xf32>
      %c0_144 = arith.constant 0 : index
      %c9_145 = arith.constant 9 : index
      %c0_146 = arith.constant 0 : index
      %386 = vector.load %arg4[%c0_144, %c9_145, %c0_146] : memref<32x16x32xf32, #tpu.memory_space<vmem>>, vector<32x1x32xf32>
      %387 = vector.shape_cast %386 : vector<32x1x32xf32> to vector<32x32xf32>
      %cst_147 = arith.constant dense<0.000000e+00> : vector<32x128xf32>
      %388 = tpu.matmul %387, %385, %cst_147 {dimension_numbers = #tpu.dot_dimension_numbers<[1], [0], [0], [1], [0, 0, 1, 1], [], []>, precision = #tpu.contract_precision<fp32>} : vector<32x32xf32>, vector<32x128xf32>, vector<32x128xf32> -> vector<32x128xf32>
      %c0_148 = arith.constant 0 : index
      %c9_149 = arith.constant 9 : index
      %c0_150 = arith.constant 0 : index
      %389 = vector.load %arg7[%c0_148, %c9_149, %c0_150] : memref<32x16x128xf32, #tpu.memory_space<vmem>>, vector<32x1x128xf32>
      %390 = vector.shape_cast %389 : vector<32x1x128xf32> to vector<32x128xf32>
      %391 = vector.shape_cast %388 : vector<32x128xf32> to vector<32x1x128xf32>
      tpu.vector_store %arg7[%c0_148, %c9_149, %c0_150], %391 {strides = array<i32>} : memref<32x16x128xf32, #tpu.memory_space<vmem>>, vector<32x1x128xf32>,
      %c10 = arith.constant 10 : index
      %c0_151 = arith.constant 0 : index
      %392 = vector.load %arg5[%c10, %c0_151] : memref<16x128xi32, #tpu.memory_space<vmem>>, vector<1x128xi32>
      %393 = vector.broadcast %392 : vector<1x128xi32> to vector<32x128xi32>
      %394 = arith.cmpi eq, %281, %393 : vector<32x128xi32>
      %395 = arith.extui %394 : vector<32x128xi1> to vector<32x128xi32>
      %396 = arith.sitofp %395 : vector<32x128xi32> to vector<32x128xf32>
      %c0_152 = arith.constant 0 : index
      %c10_153 = arith.constant 10 : index
      %c0_154 = arith.constant 0 : index
      %397 = vector.load %arg4[%c0_152, %c10_153, %c0_154] : memref<32x16x32xf32, #tpu.memory_space<vmem>>, vector<32x1x32xf32>
      %398 = vector.shape_cast %397 : vector<32x1x32xf32> to vector<32x32xf32>
      %cst_155 = arith.constant dense<0.000000e+00> : vector<32x128xf32>
      %399 = tpu.matmul %398, %396, %cst_155 {dimension_numbers = #tpu.dot_dimension_numbers<[1], [0], [0], [1], [0, 0, 1, 1], [], []>, precision = #tpu.contract_precision<fp32>} : vector<32x32xf32>, vector<32x128xf32>, vector<32x128xf32> -> vector<32x128xf32>
      %c0_156 = arith.constant 0 : index
      %c10_157 = arith.constant 10 : index
      %c0_158 = arith.constant 0 : index
      %400 = vector.load %arg7[%c0_156, %c10_157, %c0_158] : memref<32x16x128xf32, #tpu.memory_space<vmem>>, vector<32x1x128xf32>
      %401 = vector.shape_cast %400 : vector<32x1x128xf32> to vector<32x128xf32>
      %402 = vector.shape_cast %399 : vector<32x128xf32> to vector<32x1x128xf32>
      tpu.vector_store %arg7[%c0_156, %c10_157, %c0_158], %402 {strides = array<i32>} : memref<32x16x128xf32, #tpu.memory_space<vmem>>, vector<32x1x128xf32>,
      %c11 = arith.constant 11 : index
      %c0_159 = arith.constant 0 : index
      %403 = vector.load %arg5[%c11, %c0_159] : memref<16x128xi32, #tpu.memory_space<vmem>>, vector<1x128xi32>
      %404 = vector.broadcast %403 : vector<1x128xi32> to vector<32x128xi32>
      %405 = arith.cmpi eq, %281, %404 : vector<32x128xi32>
      %406 = arith.extui %405 : vector<32x128xi1> to vector<32x128xi32>
      %407 = arith.sitofp %406 : vector<32x128xi32> to vector<32x128xf32>
      %c0_160 = arith.constant 0 : index
      %c11_161 = arith.constant 11 : index
      %c0_162 = arith.constant 0 : index
      %408 = vector.load %arg4[%c0_160, %c11_161, %c0_162] : memref<32x16x32xf32, #tpu.memory_space<vmem>>, vector<32x1x32xf32>
      %409 = vector.shape_cast %408 : vector<32x1x32xf32> to vector<32x32xf32>
      %cst_163 = arith.constant dense<0.000000e+00> : vector<32x128xf32>
      %410 = tpu.matmul %409, %407, %cst_163 {dimension_numbers = #tpu.dot_dimension_numbers<[1], [0], [0], [1], [0, 0, 1, 1], [], []>, precision = #tpu.contract_precision<fp32>} : vector<32x32xf32>, vector<32x128xf32>, vector<32x128xf32> -> vector<32x128xf32>
      %c0_164 = arith.constant 0 : index
      %c11_165 = arith.constant 11 : index
      %c0_166 = arith.constant 0 : index
      %411 = vector.load %arg7[%c0_164, %c11_165, %c0_166] : memref<32x16x128xf32, #tpu.memory_space<vmem>>, vector<32x1x128xf32>
      %412 = vector.shape_cast %411 : vector<32x1x128xf32> to vector<32x128xf32>
      %413 = vector.shape_cast %410 : vector<32x128xf32> to vector<32x1x128xf32>
      tpu.vector_store %arg7[%c0_164, %c11_165, %c0_166], %413 {strides = array<i32>} : memref<32x16x128xf32, #tpu.memory_space<vmem>>, vector<32x1x128xf32>,
      %c12 = arith.constant 12 : index
      %c0_167 = arith.constant 0 : index
      %414 = vector.load %arg5[%c12, %c0_167] : memref<16x128xi32, #tpu.memory_space<vmem>>, vector<1x128xi32>
      %415 = vector.broadcast %414 : vector<1x128xi32> to vector<32x128xi32>
      %416 = arith.cmpi eq, %281, %415 : vector<32x128xi32>
      %417 = arith.extui %416 : vector<32x128xi1> to vector<32x128xi32>
      %418 = arith.sitofp %417 : vector<32x128xi32> to vector<32x128xf32>
      %c0_168 = arith.constant 0 : index
      %c12_169 = arith.constant 12 : index
      %c0_170 = arith.constant 0 : index
      %419 = vector.load %arg4[%c0_168, %c12_169, %c0_170] : memref<32x16x32xf32, #tpu.memory_space<vmem>>, vector<32x1x32xf32>
      %420 = vector.shape_cast %419 : vector<32x1x32xf32> to vector<32x32xf32>
      %cst_171 = arith.constant dense<0.000000e+00> : vector<32x128xf32>
      %421 = tpu.matmul %420, %418, %cst_171 {dimension_numbers = #tpu.dot_dimension_numbers<[1], [0], [0], [1], [0, 0, 1, 1], [], []>, precision = #tpu.contract_precision<fp32>} : vector<32x32xf32>, vector<32x128xf32>, vector<32x128xf32> -> vector<32x128xf32>
      %c0_172 = arith.constant 0 : index
      %c12_173 = arith.constant 12 : index
      %c0_174 = arith.constant 0 : index
      %422 = vector.load %arg7[%c0_172, %c12_173, %c0_174] : memref<32x16x128xf32, #tpu.memory_space<vmem>>, vector<32x1x128xf32>
      %423 = vector.shape_cast %422 : vector<32x1x128xf32> to vector<32x128xf32>
      %424 = vector.shape_cast %421 : vector<32x128xf32> to vector<32x1x128xf32>
      tpu.vector_store %arg7[%c0_172, %c12_173, %c0_174], %424 {strides = array<i32>} : memref<32x16x128xf32, #tpu.memory_space<vmem>>, vector<32x1x128xf32>,
      %c13 = arith.constant 13 : index
      %c0_175 = arith.constant 0 : index
      %425 = vector.load %arg5[%c13, %c0_175] : memref<16x128xi32, #tpu.memory_space<vmem>>, vector<1x128xi32>
      %426 = vector.broadcast %425 : vector<1x128xi32> to vector<32x128xi32>
      %427 = arith.cmpi eq, %281, %426 : vector<32x128xi32>
      %428 = arith.extui %427 : vector<32x128xi1> to vector<32x128xi32>
      %429 = arith.sitofp %428 : vector<32x128xi32> to vector<32x128xf32>
      %c0_176 = arith.constant 0 : index
      %c13_177 = arith.constant 13 : index
      %c0_178 = arith.constant 0 : index
      %430 = vector.load %arg4[%c0_176, %c13_177, %c0_178] : memref<32x16x32xf32, #tpu.memory_space<vmem>>, vector<32x1x32xf32>
      %431 = vector.shape_cast %430 : vector<32x1x32xf32> to vector<32x32xf32>
      %cst_179 = arith.constant dense<0.000000e+00> : vector<32x128xf32>
      %432 = tpu.matmul %431, %429, %cst_179 {dimension_numbers = #tpu.dot_dimension_numbers<[1], [0], [0], [1], [0, 0, 1, 1], [], []>, precision = #tpu.contract_precision<fp32>} : vector<32x32xf32>, vector<32x128xf32>, vector<32x128xf32> -> vector<32x128xf32>
      %c0_180 = arith.constant 0 : index
      %c13_181 = arith.constant 13 : index
      %c0_182 = arith.constant 0 : index
      %433 = vector.load %arg7[%c0_180, %c13_181, %c0_182] : memref<32x16x128xf32, #tpu.memory_space<vmem>>, vector<32x1x128xf32>
      %434 = vector.shape_cast %433 : vector<32x1x128xf32> to vector<32x128xf32>
      %435 = vector.shape_cast %432 : vector<32x128xf32> to vector<32x1x128xf32>
      tpu.vector_store %arg7[%c0_180, %c13_181, %c0_182], %435 {strides = array<i32>} : memref<32x16x128xf32, #tpu.memory_space<vmem>>, vector<32x1x128xf32>,
      %c14 = arith.constant 14 : index
      %c0_183 = arith.constant 0 : index
      %436 = vector.load %arg5[%c14, %c0_183] : memref<16x128xi32, #tpu.memory_space<vmem>>, vector<1x128xi32>
      %437 = vector.broadcast %436 : vector<1x128xi32> to vector<32x128xi32>
      %438 = arith.cmpi eq, %281, %437 : vector<32x128xi32>
      %439 = arith.extui %438 : vector<32x128xi1> to vector<32x128xi32>
      %440 = arith.sitofp %439 : vector<32x128xi32> to vector<32x128xf32>
      %c0_184 = arith.constant 0 : index
      %c14_185 = arith.constant 14 : index
      %c0_186 = arith.constant 0 : index
      %441 = vector.load %arg4[%c0_184, %c14_185, %c0_186] : memref<32x16x32xf32, #tpu.memory_space<vmem>>, vector<32x1x32xf32>
      %442 = vector.shape_cast %441 : vector<32x1x32xf32> to vector<32x32xf32>
      %cst_187 = arith.constant dense<0.000000e+00> : vector<32x128xf32>
      %443 = tpu.matmul %442, %440, %cst_187 {dimension_numbers = #tpu.dot_dimension_numbers<[1], [0], [0], [1], [0, 0, 1, 1], [], []>, precision = #tpu.contract_precision<fp32>} : vector<32x32xf32>, vector<32x128xf32>, vector<32x128xf32> -> vector<32x128xf32>
      %c0_188 = arith.constant 0 : index
      %c14_189 = arith.constant 14 : index
      %c0_190 = arith.constant 0 : index
      %444 = vector.load %arg7[%c0_188, %c14_189, %c0_190] : memref<32x16x128xf32, #tpu.memory_space<vmem>>, vector<32x1x128xf32>
      %445 = vector.shape_cast %444 : vector<32x1x128xf32> to vector<32x128xf32>
      %446 = vector.shape_cast %443 : vector<32x128xf32> to vector<32x1x128xf32>
      tpu.vector_store %arg7[%c0_188, %c14_189, %c0_190], %446 {strides = array<i32>} : memref<32x16x128xf32, #tpu.memory_space<vmem>>, vector<32x1x128xf32>,
      %c15 = arith.constant 15 : index
      %c0_191 = arith.constant 0 : index
      %447 = vector.load %arg5[%c15, %c0_191] : memref<16x128xi32, #tpu.memory_space<vmem>>, vector<1x128xi32>
      %448 = vector.broadcast %447 : vector<1x128xi32> to vector<32x128xi32>
      %449 = arith.cmpi eq, %281, %448 : vector<32x128xi32>
      %450 = arith.extui %449 : vector<32x128xi1> to vector<32x128xi32>
      %451 = arith.sitofp %450 : vector<32x128xi32> to vector<32x128xf32>
      %c0_192 = arith.constant 0 : index
      %c15_193 = arith.constant 15 : index
      %c0_194 = arith.constant 0 : index
      %452 = vector.load %arg4[%c0_192, %c15_193, %c0_194] : memref<32x16x32xf32, #tpu.memory_space<vmem>>, vector<32x1x32xf32>
      %453 = vector.shape_cast %452 : vector<32x1x32xf32> to vector<32x32xf32>
      %cst_195 = arith.constant dense<0.000000e+00> : vector<32x128xf32>
      %454 = tpu.matmul %453, %451, %cst_195 {dimension_numbers = #tpu.dot_dimension_numbers<[1], [0], [0], [1], [0, 0, 1, 1], [], []>, precision = #tpu.contract_precision<fp32>} : vector<32x32xf32>, vector<32x128xf32>, vector<32x128xf32> -> vector<32x128xf32>
      %c0_196 = arith.constant 0 : index
      %c15_197 = arith.constant 15 : index
      %c0_198 = arith.constant 0 : index
      %455 = vector.load %arg7[%c0_196, %c15_197, %c0_198] : memref<32x16x128xf32, #tpu.memory_space<vmem>>, vector<32x1x128xf32>
      %456 = vector.shape_cast %455 : vector<32x1x128xf32> to vector<32x128xf32>
      %457 = vector.shape_cast %454 : vector<32x128xf32> to vector<32x1x128xf32>
      tpu.vector_store %arg7[%c0_196, %c15_197, %c0_198], %457 {strides = array<i32>} : memref<32x16x128xf32, #tpu.memory_space<vmem>>, vector<32x1x128xf32>,
    } else {
    }
    %c0_i32_57 = arith.constant 0 : i32
    %265 = arith.cmpi eq, %arg1, %c0_i32_57 : i32
    %266 = arith.extui %265 : i1 to i32
    %c0_i32_58 = arith.constant 0 : i32
    %267 = arith.cmpi ne, %266, %c0_i32_58 : i32
    scf.if %267 {
      %c0_71 = arith.constant 0 : index
      %c0_72 = arith.constant 0 : index
      %c0_73 = arith.constant 0 : index
      %281 = vector.load %arg7[%c0_71, %c0_72, %c0_73] : memref<32x16x128xf32, #tpu.memory_space<vmem>>, vector<1x16x128xf32>
      %282 = vector.shape_cast %281 : vector<1x16x128xf32> to vector<16x128xf32>
      %c0_i32_74 = arith.constant 0 : i32
      %283 = vector.broadcast %c0_i32_74 : i32 to vector<16x128xi32>
      %284 = arith.cmpi eq, %1, %283 : vector<16x128xi32>
      %c1_i32_75 = arith.constant 1 : i32
      %285 = vector.broadcast %c1_i32_75 : i32 to vector<16x128xi32>
      %286 = arith.cmpi eq, %1, %285 : vector<16x128xi32>
      %c1_i32_76 = arith.constant 1 : i32
      %287 = vector.broadcast %c1_i32_76 : i32 to vector<16x128xi32>
      %288 = arith.cmpi sgt, %250, %287 : vector<16x128xi32>
      %289 = arith.andi %286, %288 : vector<16x128xi1>
      %290 = arith.ori %284, %289 : vector<16x128xi1>
      %cst = arith.constant -1.000000e+30 : f32
      %291 = vector.broadcast %cst : f32 to vector<16x128xf32>
      %292 = arith.select %290, %282, %291 : vector<16x128xi1>, vector<16x128xf32>
      %cst_77 = arith.constant -1.000000e+30 : f32
      %293 = vector.broadcast %cst_77 : f32 to vector<16x128xf32>
      %294 = arith.select %251, %292, %293 : vector<16x128xi1>, vector<16x128xf32>
      %c0_78 = arith.constant 0 : index
      %c0_79 = arith.constant 0 : index
      %295 = vector.load %arg8[%c0_78, %c0_79] : memref<16x128xf32, #tpu.memory_space<vmem>>, vector<16x128xf32>
      tpu.vector_store %arg8[%c0_78, %c0_79], %294 {strides = array<i32>} : memref<16x128xf32, #tpu.memory_space<vmem>>, vector<16x128xf32>,
    } else {
    }
    %c0_i32_59 = arith.constant 0 : i32
    %268 = arith.cmpi eq, %arg1, %c0_i32_59 : i32
    %c1_i32_60 = arith.constant 1 : i32
    %c0_i32_61 = arith.constant 0 : i32
    %269 = arith.select %268, %c1_i32_60, %c0_i32_61 : i32
    %270 = arith.subi %246, %261 : i32
    %c32_i32_62 = arith.constant 32 : i32
    %271 = arith.minsi %270, %c32_i32_62 : i32
    %c0_i32_63 = arith.constant 0 : i32
    %272 = arith.maxsi %271, %c0_i32_63 : i32
    %c0_64 = arith.constant 0 : index
    %c0_65 = arith.constant 0 : index
    %273 = vector.load %arg8[%c0_64, %c0_65] : memref<16x128xf32, #tpu.memory_space<vmem>>, vector<16x128xf32>
    %274 = arith.subi %272, %269 : i32
    %275 = arith.addi %269, %274 : i32
    %c1_i32_66 = arith.constant 1 : i32
    %276 = scf.for %arg9 = %269 to %275 step %c1_i32_66 iter_args(%arg10 = %273) -> (vector<16x128xf32>)  : i32 {
      %281 = arith.index_cast %arg9 : i32 to index
      %c0_71 = arith.constant 0 : index
      %c0_72 = arith.constant 0 : index
      %282 = vector.load %arg7[%281, %c0_71, %c0_72] : memref<32x16x128xf32, #tpu.memory_space<vmem>>, vector<1x16x128xf32>
      %283 = vector.shape_cast %282 : vector<1x16x128xf32> to vector<16x128xf32>
      %c1_i32_73 = arith.constant 1 : i32
      %284 = vector.broadcast %c1_i32_73 : i32 to vector<16x128xi32>
      %285 = arith.cmpi sge, %1, %284 : vector<16x128xi32>
      %c1_i32_74 = arith.constant 1 : i32
      %286 = tpu.dynamic_rotate %arg10 by %c1_i32_74 dim 1 : vector<16x128xf32>, i32 -> vector<16x128xf32>
      %cst = arith.constant -1.000000e+30 : f32
      %287 = vector.broadcast %cst : f32 to vector<16x128xf32>
      %288 = arith.select %285, %286, %287 : vector<16x128xi1>, vector<16x128xf32>
      %c2_i32_75 = arith.constant 2 : i32
      %289 = tpu.dynamic_rotate %arg10 by %c2_i32_75 dim 1 : vector<16x128xf32>, i32 -> vector<16x128xf32>
      %cst_76 = arith.constant -1.000000e+30 : f32
      %290 = vector.broadcast %cst_76 : f32 to vector<16x128xf32>
      %291 = arith.select %260, %289, %290 : vector<16x128xi1>, vector<16x128xf32>
      %292 = arith.maximumf %arg10, %288 : vector<16x128xf32>
      %293 = arith.maximumf %292, %291 : vector<16x128xf32>
      %294 = arith.subf %arg10, %293 : vector<16x128xf32>
      %295 = math.exp %294 : vector<16x128xf32>
      %296 = arith.subf %288, %293 : vector<16x128xf32>
      %297 = math.exp %296 : vector<16x128xf32>
      %298 = arith.addf %295, %297 : vector<16x128xf32>
      %299 = arith.subf %291, %293 : vector<16x128xf32>
      %300 = math.exp %299 : vector<16x128xf32>
      %301 = arith.addf %298, %300 : vector<16x128xf32>
      %302 = math.log %301 : vector<16x128xf32>
      %303 = arith.addf %293, %302 : vector<16x128xf32>
      %304 = arith.addf %303, %283 : vector<16x128xf32>
      %cst_77 = arith.constant -1.000000e+30 : f32
      %305 = vector.broadcast %cst_77 : f32 to vector<16x128xf32>
      %306 = arith.select %251, %304, %305 : vector<16x128xi1>, vector<16x128xf32>
      %307 = arith.addi %261, %arg9 : i32
      %308 = vector.broadcast %307 : i32 to vector<16x128xi32>
      %309 = arith.cmpi slt, %308, %241 : vector<16x128xi32>
      %310 = arith.select %309, %306, %arg10 : vector<16x128xi1>, vector<16x128xf32>
      scf.yield %310 : vector<16x128xf32>
    }
    %c0_67 = arith.constant 0 : index
    %c0_68 = arith.constant 0 : index
    %277 = vector.load %arg8[%c0_67, %c0_68] : memref<16x128xf32, #tpu.memory_space<vmem>>, vector<16x128xf32>
    tpu.vector_store %arg8[%c0_67, %c0_68], %276 {strides = array<i32>} : memref<16x128xf32, #tpu.memory_space<vmem>>, vector<16x128xf32>,
    %c0_i32_69 = arith.constant 0 : i32
    %278 = arith.cmpi eq, %arg1, %c0_i32_69 : i32
    %279 = arith.extui %278 : i1 to i32
    %c0_i32_70 = arith.constant 0 : i32
    %280 = arith.cmpi ne, %279, %c0_i32_70 : i32
    scf.if %280 {
      %c1_i32_71 = arith.constant 1 : i32
      %281 = vector.broadcast %c1_i32_71 : i32 to vector<16x128xi32>
      %282 = arith.subi %250, %281 : vector<16x128xi32>
      %283 = arith.cmpi eq, %1, %282 : vector<16x128xi32>
      %c2_i32_72 = arith.constant 2 : i32
      %284 = vector.broadcast %c2_i32_72 : i32 to vector<16x128xi32>
      %285 = arith.subi %250, %284 : vector<16x128xi32>
      %286 = arith.cmpi eq, %1, %285 : vector<16x128xi32>
      %287 = arith.ori %283, %286 : vector<16x128xi1>
      %cst = arith.constant -1.000000e+30 : f32
      %288 = vector.broadcast %cst : f32 to vector<16x128xf32>
      %289 = arith.select %287, %276, %288 : vector<16x128xi1>, vector<16x128xf32>
      %cst_73 = arith.constant dense<0xFF800000> : vector<16xf32>
      %290 = vector.multi_reduction <maximumf>, %289, %cst_73 [1] : vector<16x128xf32> to vector<16xf32>
      %291 = vector.shape_cast %290 : vector<16xf32> to vector<16x1xf32>
      %292 = vector.broadcast %291 : vector<16x1xf32> to vector<16x128xf32>
      %293 = arith.subf %289, %292 : vector<16x128xf32>
      %294 = math.exp %293 : vector<16x128xf32>
      %cst_74 = arith.constant dense<0.000000e+00> : vector<16xf32>
      %295 = vector.multi_reduction <add>, %294, %cst_74 [1] : vector<16x128xf32> to vector<16xf32>
      %296 = vector.shape_cast %295 : vector<16xf32> to vector<16x1xf32>
      %297 = math.log %296 : vector<16x1xf32>
      %298 = arith.addf %291, %297 : vector<16x1xf32>
      %cst_75 = arith.constant 0.000000e+00 : f32
      %299 = vector.broadcast %cst_75 : f32 to vector<16x1xf32>
      %300 = arith.subf %299, %298 : vector<16x1xf32>
      %301 = vector.shape_cast %300 : vector<16x1xf32> to vector<16x1xf32>
      %302 = vector.broadcast %301 : vector<16x1xf32> to vector<16x128xf32>
      %c0_76 = arith.constant 0 : index
      %c0_77 = arith.constant 0 : index
      %303 = vector.load %arg6[%c0_76, %c0_77] : memref<16x128xf32, #tpu.memory_space<vmem>>, vector<16x128xf32>
      tpu.vector_store %arg6[%c0_76, %c0_77], %302 {strides = array<i32>} : memref<16x128xf32, #tpu.memory_space<vmem>>, vector<16x128xf32>,
    } else {
    }
    return
  }
  func.func @transform_0(%arg0: i32, %arg1: i32, %arg2: memref<16xi32, #tpu.memory_space<smem>>, %arg3: memref<16xi32, #tpu.memory_space<smem>>) -> (i32, i32, i32) {
    %c0_i32 = arith.constant 0 : i32
    %c0_i32_0 = arith.constant 0 : i32
    return %arg1, %arg0, %c0_i32 : i32, i32, i32
  }
  func.func @transform_1(%arg0: i32, %arg1: i32, %arg2: memref<16xi32, #tpu.memory_space<smem>>, %arg3: memref<16xi32, #tpu.memory_space<smem>>) -> (i32, i32) {
    %c0_i32 = arith.constant 0 : i32
    %c0_i32_0 = arith.constant 0 : i32
    return %arg0, %c0_i32 : i32, i32
  }
  func.func @transform_2(%arg0: i32, %arg1: i32, %arg2: memref<16xi32, #tpu.memory_space<smem>>, %arg3: memref<16xi32, #tpu.memory_space<smem>>) -> (i32, i32) {
    %c0_i32 = arith.constant 0 : i32
    %c0_i32_0 = arith.constant 0 : i32
    return %arg0, %c0_i32 : i32, i32
  }
}

</mosaic_0001>

<llo_original>
// kernel: ctc_loss_with_label_priors.1
$region0: #{ctc_loss_with_label_priors.1}
  #allocation0 [shape = 'u32[]', space=smem, size = 0x4, offset = 0x4, fixed_abs, tag = 'smem constant byte address 0x4 - core index']
  #allocation1 [shape = 'u32[72,128]{1,0:T(1,128)}', space=vmem, size = 0x9000, scoped, tag = 'internal scratch']
  #allocation2 [shape = 'f32[32,16,128]{2,1,0:T(8,128)}', space=vmem, size = 0x40000, scoped, tag = 'scratch operand']
  #allocation3 [shape = 'f32[16,128]{1,0:T(8,128)}', space=vmem, size = 0x2000, scoped, tag = 'scratch operand']
  #allocation4 [shape = 's32[1]{0}', space=sflag, size = 0x4, scoped, tag = 'scoped memory for ctc_loss_with_label_priors.1']
  #allocation5 [shape = 'u8[512]{0}', space=smem, size = 0x200, scoped, tag = 'prefetched SMEM operand 0']
  #allocation6 [shape = 'u8[512]{0}', space=smem, size = 0x200, scoped, tag = 'prefetched SMEM operand 1']
  %s0 = inlined_call_operand.vmem [shape: s32[16], index: 0, kind: input, shape index: {}]
  %s1 = inlined_call_operand.vmem [shape: s32[16], index: 1, kind: input, shape index: {}]
  %s2 = inlined_call_operand.vmem [shape: f32[32,16,32], index: 2, kind: input, shape index: {}]
  %s3 = inlined_call_operand.vmem [shape: s32[16,128], index: 3, kind: input, shape index: {}]
  %s4 = inlined_call_operand.vmem [shape: f32[16,128], index: 4, kind: output, shape index: {}]
  %s5 = sld [smem:[#allocation0]]
  $region37: #{ctc_loss_with_label_priors.1} parent=0
    _
  %s7 = ssub.s32 1, %s5
  %s8 = scalar_select 0, %s7, %s5
  %s10 = sshll.u32 %s0, 4
  %s11 = int_to_ptr.vmem [resolvable:$true] %s10
  %13 = dma.vmem_to_smem %s11, 16, [#allocation5], [#allocation4]
  %s15 = sshll.u32 %s1, 4
  %s16 = int_to_ptr.vmem [resolvable:$true] %s15
  %18 = dma.vmem_to_smem %s16, 16, [#allocation6], [#allocation4]
  %20 = dma.done [#allocation4], 32
  %21 = sfence
  // Predicated region
  $region2: #{ctc_loss_with_label_priors.1} parent=0 // pred_check
    _
  $region3: #{ctc_loss_with_label_priors.1} parent=0 // pred_check_branch
    %23 = sbr.rel (0) target = $region5
  $region4: #{ctc_loss_with_label_priors.1} parent=0 // pred_region
    _
  $region5: #{ctc_loss_with_label_priors.1} parent=0 // pred_fallthru
    _
  // Predicated region
  $region6: #{ctc_loss_with_label_priors.1} parent=0 // pred_check
    _
  $region7: #{ctc_loss_with_label_priors.1} parent=0 // pred_check_branch
    %25 = sbr.rel (0) target = $region9
  $region8: #{ctc_loss_with_label_priors.1} parent=0 // pred_region
    _
  $region9: #{ctc_loss_with_label_priors.1} parent=0 // pred_fallthru
    _
  %v26 = vlaneseq
  %v27 = vshrl.u32 %v26, 7
  %v28 = vadd.s32 %v27, 8
  %v29 = vlaneseq
  %v30 = vand.u32 %v29, 127
  %s31 = smul.u32 0, 16
  %s32 = sld [smem:[#allocation5 + %s31]]
  %s33 = sld [smem:[#allocation6 + %s31]]
  %vm34 = vcmp.eq.s32.totalorder %v27, 0
  %vm35 = vcmp.eq.s32.totalorder %v28, 0
  %v36 = vstv %s32
  %v37 = vsel %vm34, %v36, 0
  %v38 = vsel %vm35, %v36, 0
  %v39 = vstv %s33
  %v40 = vsel %vm34, %v39, 0
  %v41 = vsel %vm35, %v39, 0
  %s42 = sadd.s32 %s31, 1
  %s43 = sld [smem:[#allocation5 + %s42]]
  %s44 = sld [smem:[#allocation6 + %s42]]
  %vm45 = vcmp.eq.s32.totalorder %v27, 1
  %vm46 = vcmp.eq.s32.totalorder %v28, 1
  %v47 = vstv %s43
  %v48 = vsel %vm45, %v47, %v37
  %v49 = vsel %vm46, %v47, %v38
  %v50 = vstv %s44
  %v51 = vsel %vm45, %v50, %v40
  %v52 = vsel %vm46, %v50, %v41
  %p53 = scmp.gt.s32.totalorder %s32, %s43
  %s54 = scalar_select %p53, %s32, %s43
  %s55 = sadd.s32 %s31, 2
  %s56 = sld [smem:[#allocation5 + %s55]]
  %s57 = sld [smem:[#allocation6 + %s55]]
  %vm58 = vcmp.eq.s32.totalorder %v27, 2
  %vm59 = vcmp.eq.s32.totalorder %v28, 2
  %v60 = vstv %s56
  %v61 = vsel %vm58, %v60, %v48
  %v62 = vsel %vm59, %v60, %v49
  %v63 = vstv %s57
  %v64 = vsel %vm58, %v63, %v51
  %v65 = vsel %vm59, %v63, %v52
  %p66 = scmp.gt.s32.totalorder %s54, %s56
  %s67 = scalar_select %p66, %s54, %s56
  %s68 = sadd.s32 %s31, 3
  %s69 = sld [smem:[#allocation5 + %s68]]
  %s70 = sld [smem:[#allocation6 + %s68]]
  %vm71 = vcmp.eq.s32.totalorder %v27, 3
  %vm72 = vcmp.eq.s32.totalorder %v28, 3
  %v73 = vstv %s69
  %v74 = vsel %vm71, %v73, %v61
  %v75 = vsel %vm72, %v73, %v62
  %v76 = vstv %s70
  %v77 = vsel %vm71, %v76, %v64
  %v78 = vsel %vm72, %v76, %v65
  %p79 = scmp.gt.s32.totalorder %s67, %s69
  %s80 = scalar_select %p79, %s67, %s69
  %s81 = sadd.s32 %s31, 4
  %s82 = sld [smem:[#allocation5 + %s81]]
  %s83 = sld [smem:[#allocation6 + %s81]]
  %vm84 = vcmp.eq.s32.totalorder %v27, 4
  %vm85 = vcmp.eq.s32.totalorder %v28, 4
  %v86 = vstv %s82
  %v87 = vsel %vm84, %v86, %v74
  %v88 = vsel %vm85, %v86, %v75
  %v89 = vstv %s83
  %v90 = vsel %vm84, %v89, %v77
  %v91 = vsel %vm85, %v89, %v78
  %p92 = scmp.gt.s32.totalorder %s80, %s82
  %s93 = scalar_select %p92, %s80, %s82
  %s94 = sadd.s32 %s31, 5
  %s95 = sld [smem:[#allocation5 + %s94]]
  %s96 = sld [smem:[#allocation6 + %s94]]
  %vm97 = vcmp.eq.s32.totalorder %v27, 5
  %vm98 = vcmp.eq.s32.totalorder %v28, 5
  %v99 = vstv %s95
  %v100 = vsel %vm97, %v99, %v87
  %v101 = vsel %vm98, %v99, %v88
  %v102 = vstv %s96
  %v103 = vsel %vm97, %v102, %v90
  %v104 = vsel %vm98, %v102, %v91
  %p105 = scmp.gt.s32.totalorder %s93, %s95
  %s106 = scalar_select %p105, %s93, %s95
  %s107 = sadd.s32 %s31, 6
  %s108 = sld [smem:[#allocation5 + %s107]]
  %s109 = sld [smem:[#allocation6 + %s107]]
  %vm110 = vcmp.eq.s32.totalorder %v27, 6
  %vm111 = vcmp.eq.s32.totalorder %v28, 6
  %v112 = vstv %s108
  %v113 = vsel %vm110, %v112, %v100
  %v114 = vsel %vm111, %v112, %v101
  %v115 = vstv %s109
  %v116 = vsel %vm110, %v115, %v103
  %v117 = vsel %vm111, %v115, %v104
  %p118 = scmp.gt.s32.totalorder %s106, %s108
  %s119 = scalar_select %p118, %s106, %s108
  %s120 = sadd.s32 %s31, 7
  %s121 = sld [smem:[#allocation5 + %s120]]
  %s122 = sld [smem:[#allocation6 + %s120]]
  %vm123 = vcmp.eq.s32.totalorder %v27, 7
  %vm124 = vcmp.eq.s32.totalorder %v28, 7
  %v125 = vstv %s121
  %v126 = vsel %vm123, %v125, %v113
  %v127 = vsel %vm124, %v125, %v114
  %v128 = vstv %s122
  %v129 = vsel %vm123, %v128, %v116
  %v130 = vsel %vm124, %v128, %v117
  %p131 = scmp.gt.s32.totalorder %s119, %s121
  %s132 = scalar_select %p131, %s119, %s121
  %s133 = sadd.s32 %s31, 8
  %s134 = sld [smem:[#allocation5 + %s133]]
  %s135 = sld [smem:[#allocation6 + %s133]]
  %vm136 = vcmp.eq.s32.totalorder %v27, 8
  %vm137 = vcmp.eq.s32.totalorder %v28, 8
  %v138 = vstv %s134
  %v139 = vsel %vm136, %v138, %v126
  %v140 = vsel %vm137, %v138, %v127
  %v141 = vstv %s135
  %v142 = vsel %vm136, %v141, %v129
  %v143 = vsel %vm137, %v141, %v130
  %p144 = scmp.gt.s32.totalorder %s132, %s134
  %s145 = scalar_select %p144, %s132, %s134
  %s146 = sadd.s32 %s31, 9
  %s147 = sld [smem:[#allocation5 + %s146]]
  %s148 = sld [smem:[#allocation6 + %s146]]
  %vm149 = vcmp.eq.s32.totalorder %v27, 9
  %vm150 = vcmp.eq.s32.totalorder %v28, 9
  %v151 = vstv %s147
  %v152 = vsel %vm149, %v151, %v139
  %v153 = vsel %vm150, %v151, %v140
  %v154 = vstv %s148
  %v155 = vsel %vm149, %v154, %v142
  %v156 = vsel %vm150, %v154, %v143
  %p157 = scmp.gt.s32.totalorder %s145, %s147
  %s158 = scalar_select %p157, %s145, %s147
  %s159 = sadd.s32 %s31, 10
  %s160 = sld [smem:[#allocation5 + %s159]]
  %s161 = sld [smem:[#allocation6 + %s159]]
  %vm162 = vcmp.eq.s32.totalorder %v27, 10
  %vm163 = vcmp.eq.s32.totalorder %v28, 10
  %v164 = vstv %s160
  %v165 = vsel %vm162, %v164, %v152
  %v166 = vsel %vm163, %v164, %v153
  %v167 = vstv %s161
  %v168 = vsel %vm162, %v167, %v155
  %v169 = vsel %vm163, %v167, %v156
  %p170 = scmp.gt.s32.totalorder %s158, %s160
  %s171 = scalar_select %p170, %s158, %s160
  %s172 = sadd.s32 %s31, 11
  %s173 = sld [smem:[#allocation5 + %s172]]
  %s174 = sld [smem:[#allocation6 + %s172]]
  %vm175 = vcmp.eq.s32.totalorder %v27, 11
  %vm176 = vcmp.eq.s32.totalorder %v28, 11
  %v177 = vstv %s173
  %v178 = vsel %vm175, %v177, %v165
  %v179 = vsel %vm176, %v177, %v166
  %v180 = vstv %s174
  %v181 = vsel %vm175, %v180, %v168
  %v182 = vsel %vm176, %v180, %v169
  %p183 = scmp.gt.s32.totalorder %s171, %s173
  %s184 = scalar_select %p183, %s171, %s173
  %s185 = sadd.s32 %s31, 12
  %s186 = sld [smem:[#allocation5 + %s185]]
  %s187 = sld [smem:[#allocation6 + %s185]]
  %vm188 = vcmp.eq.s32.totalorder %v27, 12
  %vm189 = vcmp.eq.s32.totalorder %v28, 12
  %v190 = vstv %s186
  %v191 = vsel %vm188, %v190, %v178
  %v192 = vsel %vm189, %v190, %v179
  %v193 = vstv %s187
  %v194 = vsel %vm188, %v193, %v181
  %v195 = vsel %vm189, %v193, %v182
  %p196 = scmp.gt.s32.totalorder %s184, %s186
  %s197 = scalar_select %p196, %s184, %s186
  %s198 = sadd.s32 %s31, 13
  %s199 = sld [smem:[#allocation5 + %s198]]
  %s200 = sld [smem:[#allocation6 + %s198]]
  %vm201 = vcmp.eq.s32.totalorder %v27, 13
  %vm202 = vcmp.eq.s32.totalorder %v28, 13
  %v203 = vstv %s199
  %v204 = vsel %vm201, %v203, %v191
  %v205 = vsel %vm202, %v203, %v192
  %v206 = vstv %s200
  %v207 = vsel %vm201, %v206, %v194
  %v208 = vsel %vm202, %v206, %v195
  %p209 = scmp.gt.s32.totalorder %s197, %s199
  %s210 = scalar_select %p209, %s197, %s199
  %s211 = sadd.s32 %s31, 14
  %s212 = sld [smem:[#allocation5 + %s211]]
  %s213 = sld [smem:[#allocation6 + %s211]]
  %vm214 = vcmp.eq.s32.totalorder %v27, 14
  %vm215 = vcmp.eq.s32.totalorder %v28, 14
  %v216 = vstv %s212
  %v217 = vsel %vm214, %v216, %v204
  %v218 = vsel %vm215, %v216, %v205
  %v219 = vstv %s213
  %v220 = vsel %vm214, %v219, %v207
  %v221 = vsel %vm215, %v219, %v208
  %p222 = scmp.gt.s32.totalorder %s210, %s212
  %s223 = scalar_select %p222, %s210, %s212
  %s224 = sadd.s32 %s31, 15
  %s225 = sld [smem:[#allocation5 + %s224]]
  %s226 = sld [smem:[#allocation6 + %s224]]
  %vm227 = vcmp.eq.s32.totalorder %v27, 15
  %vm228 = vcmp.eq.s32.totalorder %v28, 15
  %v229 = vstv %s225
  %v230 = vsel %vm227, %v229, %v217
  %v231 = vsel %vm228, %v229, %v218
  %v232 = vstv %s226
  %v233 = vsel %vm227, %v232, %v220
  %v234 = vsel %vm228, %v232, %v221
  %p235 = scmp.gt.s32.totalorder %s223, %s225
  %s236 = scalar_select %p235, %s223, %s225
  %v237 = vmul.u32 %v233, 2
  %v238 = vmul.u32 %v234, 2
  %v239 = vadd.s32 %v237, 1
  %v240 = vadd.s32 %v238, 1
  %vm241 = vcmp.lt.s32.totalorder %v30, %v239
  %vm242 = vcmp.lt.s32.totalorder %v30, %v240
  %v243 = vld [vmem:[%s3] sm:$0xff]
  %v244 = vld [vmem:[%s3 + $0x8] sm:$0xff]
  %245 = vrot.lane.b32.xlu0 %v243, 2
  %v246 = vpop.permute.xlu0 %245
  %247 = vrot.lane.b32.xlu0 %v244, 2
  %v248 = vpop.permute.xlu0 %247
  %vm249 = vcmp.ne.s32.totalorder %v243, 0
  %vm250 = vcmp.ne.s32.totalorder %v244, 0
  %vm251 = vcmp.ne.s32.totalorder %v243, %v246
  %vm252 = vcmp.ne.s32.totalorder %v244, %v248
  %vm253 = vmand %vm249, %vm251
  %vm254 = vmand %vm250, %vm252
  %vm255 = vcmp.ge.s32.totalorder %v30, 2
  %vm256 = vmand %vm253, %vm255
  %vm257 = vmand %vm254, %vm255
  %s258 = smul.u32 0, 32
  %p259 = scmp.lt.s32.totalorder %s258, %s236
  // Predicated region
  $region10: #{ctc_loss_with_label_priors.1} parent=0 // pred_check
    %p260 = pneg %p259
  $region11: #{ctc_loss_with_label_priors.1} parent=0 // pred_check_branch
    %262 = sbr.rel (%p260) target = $region13
  $region12: #{ctc_loss_with_label_priors.1} parent=0 // pred_region
    %v263 = vadd.s32 %v27, 16
    %v264 = vadd.s32 %v27, 24
    %v265 = vld [vmem:[%s3] sm:$0x1]
    %v266 = vperm.slane %v265, 0
    %vm267 = vcmp.eq.s32.totalorder %v27, %v266
    %vm268 = vcmp.eq.s32.totalorder %v28, %v266
    %vm269 = vcmp.eq.s32.totalorder %v263, %v266
    %vm270 = vcmp.eq.s32.totalorder %v264, %v266
    %v271 = vsel %vm267, 1, 0
    %v272 = vsel %vm268, 1, 0
    %v273 = vsel %vm269, 1, 0
    %v274 = vsel %vm270, 1, 0
    %v275 = vcvt.s32.f32 %v271
    %v276 = vcvt.s32.f32 %v272
    %v277 = vcvt.s32.f32 %v273
    %v278 = vcvt.s32.f32 %v274
    %v279 = vld [vmem:[%s2] sm:$0x1]
    %v280 = vld [vmem:[%s2 + $0x10] sm:$0x1]
    %v281 = vld [vmem:[%s2 + $0x20] sm:$0x1]
    %v282 = vld [vmem:[%s2 + $0x30] sm:$0x1]
    %v283 = vld [vmem:[%s2 + $0x40] sm:$0x1]
    %v284 = vld [vmem:[%s2 + $0x50] sm:$0x1]
    %v285 = vld [vmem:[%s2 + $0x60] sm:$0x1]
    %v286 = vld [vmem:[%s2 + $0x70] sm:$0x1]
    %v287 = vld [vmem:[%s2 + $0x80] sm:$0x1]
    %v288 = vld [vmem:[%s2 + $0x90] sm:$0x1]
    %v289 = vld [vmem:[%s2 + $0xa0] sm:$0x1]
    %v290 = vld [vmem:[%s2 + $0xb0] sm:$0x1]
    %v291 = vld [vmem:[%s2 + $0xc0] sm:$0x1]
    %v292 = vld [vmem:[%s2 + $0xd0] sm:$0x1]
    %v293 = vld [vmem:[%s2 + $0xe0] sm:$0x1]
    %v294 = vld [vmem:[%s2 + $0xf0] sm:$0x1]
    %v295 = vld [vmem:[%s2 + $0x100] sm:$0x1]
    %v296 = vld [vmem:[%s2 + $0x110] sm:$0x1]
    %v297 = vld [vmem:[%s2 + $0x120] sm:$0x1]
    %v298 = vld [vmem:[%s2 + $0x130] sm:$0x1]
    %v299 = vld [vmem:[%s2 + $0x140] sm:$0x1]
    %v300 = vld [vmem:[%s2 + $0x150] sm:$0x1]
    %v301 = vld [vmem:[%s2 + $0x160] sm:$0x1]
    %v302 = vld [vmem:[%s2 + $0x170] sm:$0x1]
    %v303 = vld [vmem:[%s2 + $0x180] sm:$0x1]
    %v304 = vld [vmem:[%s2 + $0x190] sm:$0x1]
    %v305 = vld [vmem:[%s2 + $0x1a0] sm:$0x1]
    %v306 = vld [vmem:[%s2 + $0x1b0] sm:$0x1]
    %v307 = vld [vmem:[%s2 + $0x1c0] sm:$0x1]
    %v308 = vld [vmem:[%s2 + $0x1d0] sm:$0x1]
    %v309 = vld [vmem:[%s2 + $0x1e0] sm:$0x1]
    %v310 = vld [vmem:[%s2 + $0x1f0] sm:$0x1]
    %v343 = vrot.slane %v280, 7
    %vm344 = vcmask 1041409
    %v345 = vsel %vm344, %v343, %v279
    %v346 = vrot.slane %v281, 6
    %vm347 = vcmask 1042434
    %v348 = vsel %vm347, %v346, %v345
    %v349 = vrot.slane %v282, 5
    %vm350 = vcmask 1043459
    %v351 = vsel %vm350, %v349, %v348
    %v352 = vrot.slane %v283, 4
    %vm353 = vcmask 1044484
    %v354 = vsel %vm353, %v352, %v351
    %v355 = vrot.slane %v284, 3
    %vm356 = vcmask 1045509
    %v357 = vsel %vm356, %v355, %v354
    %v358 = vrot.slane %v285, 2
    %vm359 = vcmask 1046534
    %v360 = vsel %vm359, %v358, %v357
    %v361 = vrot.slane %v286, 1
    %vm362 = vcmask 1047559
    %v363 = vsel %vm362, %v361, %v360
    %v364 = vrot.slane %v288, 7
    %v365 = vsel %vm344, %v364, %v287
    %v366 = vrot.slane %v289, 6
    %v367 = vsel %vm347, %v366, %v365
    %v368 = vrot.slane %v290, 5
    %v369 = vsel %vm350, %v368, %v367
    %v370 = vrot.slane %v291, 4
    %v371 = vsel %vm353, %v370, %v369
    %v372 = vrot.slane %v292, 3
    %v373 = vsel %vm356, %v372, %v371
    %v374 = vrot.slane %v293, 2
    %v375 = vsel %vm359, %v374, %v373
    %v376 = vrot.slane %v294, 1
    %v377 = vsel %vm362, %v376, %v375
    %v378 = vrot.slane %v296, 7
    %v379 = vsel %vm344, %v378, %v295
    %v380 = vrot.slane %v297, 6
    %v381 = vsel %vm347, %v380, %v379
    %v382 = vrot.slane %v298, 5
    %v383 = vsel %vm350, %v382, %v381
    %v384 = vrot.slane %v299, 4
    %v385 = vsel %vm353, %v384, %v383
    %v386 = vrot.slane %v300, 3
    %v387 = vsel %vm356, %v386, %v385
    %v388 = vrot.slane %v301, 2
    %v389 = vsel %vm359, %v388, %v387
    %v390 = vrot.slane %v302, 1
    %v391 = vsel %vm362, %v390, %v389
    %v392 = vrot.slane %v304, 7
    %v393 = vsel %vm344, %v392, %v303
    %v394 = vrot.slane %v305, 6
    %v395 = vsel %vm347, %v394, %v393
    %v396 = vrot.slane %v306, 5
    %v397 = vsel %vm350, %v396, %v395
    %v398 = vrot.slane %v307, 4
    %v399 = vsel %vm353, %v398, %v397
    %v400 = vrot.slane %v308, 3
    %v401 = vsel %vm356, %v400, %v399
    %v402 = vrot.slane %v309, 2
    %v403 = vsel %vm359, %v402, %v401
    %v404 = vrot.slane %v310, 1
    %v405 = vsel %vm362, %v404, %v403
    %vm406 = vcmask 261120
    %v407 = vsel %vm406, %v363, 0
    %v409 = vsel %vm406, %v377, 0
    %v411 = vsel %vm406, %v391, 0
    %v413 = vsel %vm406, %v405, 0
    %415 = vmatpush.msra.mxu0 0.0
    %416 = vmatpush.msra.mxu0 0.0
    %417 = vmatpush.msra.mxu0 0.0
    %418 = vmatpush.msra.mxu0 0.0
    %419 = vmatpush.msra.mxu0 0.0
    %420 = vmatpush.msra.mxu0 0.0
    %421 = vmatpush.msra.mxu0 0.0
    %422 = vmatpush.msra.mxu0 0.0
    %423 = vmatpush.msra.mxu0 0.0
    %424 = vmatpush.msra.mxu0 0.0
    %425 = vmatpush.msra.mxu0 0.0
    %426 = vmatpush.msra.mxu0 0.0
    %v427 = vand.u32 %v278, 4294901760
    %428 = vmatpush.msra.mxu0 %v427
    %v429 = vand.u32 %v277, 4294901760
    %430 = vmatpush.msra.mxu0 %v429
    %v431 = vand.u32 %v276, 4294901760
    %432 = vmatpush.msra.mxu0 %v431
    %v433 = vand.u32 %v275, 4294901760
    %434 = vmatpush.msra.mxu0 %v433
    %v435 = vand.u32 %v407, 4294901760
    %v436 = vsub.f32 %v407, %v435
    %v437 = vand.u32 %v436, 4294901760
    %v438 = vsub.f32 %v436, %v437
    %v439 = vand.u32 %v438, 4294901760
    %440 = vmatmul.f32.gmra.mxu0 %v439
    %v441 = vpop.f32.mrf.mxu0
    %v442 = vadd.f32 0.0, %v441
    %v443 = vand.u32 %v409, 4294901760
    %v444 = vsub.f32 %v409, %v443
    %v445 = vand.u32 %v444, 4294901760
    %v446 = vsub.f32 %v444, %v445
    %v447 = vand.u32 %v446, 4294901760
    %448 = vmatmul.f32.gmra.mxu0 %v447
    %v449 = vpop.f32.mrf.mxu0
    %v450 = vadd.f32 0.0, %v449
    %v451 = vand.u32 %v411, 4294901760
    %v452 = vsub.f32 %v411, %v451
    %v453 = vand.u32 %v452, 4294901760
    %v454 = vsub.f32 %v452, %v453
    %v455 = vand.u32 %v454, 4294901760
    %456 = vmatmul.f32.gmra.mxu0 %v455
    %v457 = vpop.f32.mrf.mxu0
    %v458 = vadd.f32 0.0, %v457
    %v459 = vand.u32 %v413, 4294901760
    %v460 = vsub.f32 %v413, %v459
    %v461 = vand.u32 %v460, 4294901760
    %v462 = vsub.f32 %v460, %v461
    %v463 = vand.u32 %v462, 4294901760
    %464 = vmatmul.f32.gmra.mxu0 %v463
    %v465 = vpop.f32.mrf.mxu0
    %v466 = vadd.f32 0.0, %v465
    %467 = vdwg.mxu0
    %468 = vmatpush.msra.mxu0 0.0
    %469 = vmatpush.msra.mxu0 0.0
    %470 = vmatpush.msra.mxu0 0.0
    %471 = vmatpush.msra.mxu0 0.0
    %472 = vmatpush.msra.mxu0 0.0
    %473 = vmatpush.msra.mxu0 0.0
    %474 = vmatpush.msra.mxu0 0.0
    %475 = vmatpush.msra.mxu0 0.0
    %476 = vmatpush.msra.mxu0 0.0
    %477 = vmatpush.msra.mxu0 0.0
    %478 = vmatpush.msra.mxu0 0.0
    %479 = vmatpush.msra.mxu0 0.0
    %v480 = vand.u32 %v278, 4294901760
    %v481 = vsub.f32 %v278, %v480
    %v482 = vand.u32 %v481, 4294901760
    %v483 = vsub.f32 %v481, %v482
    %v484 = vand.u32 %v483, 4294901760
    %485 = vmatpush.msra.mxu0 %v484
    %v486 = vand.u32 %v277, 4294901760
    %v487 = vsub.f32 %v277, %v486
    %v488 = vand.u32 %v487, 4294901760
    %v489 = vsub.f32 %v487, %v488
    %v490 = vand.u32 %v489, 4294901760
    %491 = vmatpush.msra.mxu0 %v490
    %v492 = vand.u32 %v276, 4294901760
    %v493 = vsub.f32 %v276, %v492
    %v494 = vand.u32 %v493, 4294901760
    %v495 = vsub.f32 %v493, %v494
    %v496 = vand.u32 %v495, 4294901760
    %497 = vmatpush.msra.mxu0 %v496
    %v498 = vand.u32 %v275, 4294901760
    %v499 = vsub.f32 %v275, %v498
    %v500 = vand.u32 %v499, 4294901760
    %v501 = vsub.f32 %v499, %v500
    %v502 = vand.u32 %v501, 4294901760
    %503 = vmatpush.msra.mxu0 %v502
    %v504 = vand.u32 %v407, 4294901760
    %505 = vmatmul.f32.gmra.mxu0 %v504
    %v506 = vpop.f32.mrf.mxu0
    %v507 = vadd.f32 %v442, %v506
    %v508 = vand.u32 %v409, 4294901760
    %509 = vmatmul.f32.gmra.mxu0 %v508
    %v510 = vpop.f32.mrf.mxu0
    %v511 = vadd.f32 %v450, %v510
    %v512 = vand.u32 %v411, 4294901760
    %513 = vmatmul.f32.gmra.mxu0 %v512
    %v514 = vpop.f32.mrf.mxu0
    %v515 = vadd.f32 %v458, %v514
    %v516 = vand.u32 %v413, 4294901760
    %517 = vmatmul.f32.gmra.mxu0 %v516
    %v518 = vpop.f32.mrf.mxu0
    %v519 = vadd.f32 %v466, %v518
    %520 = vdwg.mxu0
    %521 = vmatpush.msra.mxu0 0.0
    %522 = vmatpush.msra.mxu0 0.0
    %523 = vmatpush.msra.mxu0 0.0
    %524 = vmatpush.msra.mxu0 0.0
    %525 = vmatpush.msra.mxu0 0.0
    %526 = vmatpush.msra.mxu0 0.0
    %527 = vmatpush.msra.mxu0 0.0
    %528 = vmatpush.msra.mxu0 0.0
    %529 = vmatpush.msra.mxu0 0.0
    %530 = vmatpush.msra.mxu0 0.0
    %531 = vmatpush.msra.mxu0 0.0
    %532 = vmatpush.msra.mxu0 0.0
    %v533 = vand.u32 %v278, 4294901760
    %v534 = vsub.f32 %v278, %v533
    %535 = vmatpush.msra.mxu0 %v534
    %v536 = vand.u32 %v277, 4294901760
    %v537 = vsub.f32 %v277, %v536
    %538 = vmatpush.msra.mxu0 %v537
    %v539 = vand.u32 %v276, 4294901760
    %v540 = vsub.f32 %v276, %v539
    %541 = vmatpush.msra.mxu0 %v540
    %v542 = vand.u32 %v275, 4294901760
    %v543 = vsub.f32 %v275, %v542
    %544 = vmatpush.msra.mxu0 %v543
    %v545 = vand.u32 %v407, 4294901760
    %v546 = vsub.f32 %v407, %v545
    %547 = vmatmul.f32.gmra.mxu0 %v546
    %v548 = vpop.f32.mrf.mxu0
    %v549 = vadd.f32 %v507, %v548
    %v550 = vand.u32 %v409, 4294901760
    %v551 = vsub.f32 %v409, %v550
    %552 = vmatmul.f32.gmra.mxu0 %v551
    %v553 = vpop.f32.mrf.mxu0
    %v554 = vadd.f32 %v511, %v553
    %v555 = vand.u32 %v411, 4294901760
    %v556 = vsub.f32 %v411, %v555
    %557 = vmatmul.f32.gmra.mxu0 %v556
    %v558 = vpop.f32.mrf.mxu0
    %v559 = vadd.f32 %v515, %v558
    %v560 = vand.u32 %v413, 4294901760
    %v561 = vsub.f32 %v413, %v560
    %562 = vmatmul.f32.gmra.mxu0 %v561
    %v563 = vpop.f32.mrf.mxu0
    %v564 = vadd.f32 %v519, %v563
    %565 = vdwg.mxu0
    %566 = vmatpush.msra.mxu0 0.0
    %567 = vmatpush.msra.mxu0 0.0
    %568 = vmatpush.msra.mxu0 0.0
    %569 = vmatpush.msra.mxu0 0.0
    %570 = vmatpush.msra.mxu0 0.0
    %571 = vmatpush.msra.mxu0 0.0
    %572 = vmatpush.msra.mxu0 0.0
    %573 = vmatpush.msra.mxu0 0.0
    %574 = vmatpush.msra.mxu0 0.0
    %575 = vmatpush.msra.mxu0 0.0
    %576 = vmatpush.msra.mxu0 0.0
    %577 = vmatpush.msra.mxu0 0.0
    %v578 = vand.u32 %v278, 4294901760
    %579 = vmatpush.msra.mxu0 %v578
    %v580 = vand.u32 %v277, 4294901760
    %581 = vmatpush.msra.mxu0 %v580
    %v582 = vand.u32 %v276, 4294901760
    %583 = vmatpush.msra.mxu0 %v582
    %v584 = vand.u32 %v275, 4294901760
    %585 = vmatpush.msra.mxu0 %v584
    %v586 = vand.u32 %v407, 4294901760
    %v587 = vsub.f32 %v407, %v586
    %v588 = vand.u32 %v587, 4294901760
    %589 = vmatmul.f32.gmra.mxu0 %v588
    %v590 = vpop.f32.mrf.mxu0
    %v591 = vadd.f32 %v549, %v590
    %v592 = vand.u32 %v409, 4294901760
    %v593 = vsub.f32 %v409, %v592
    %v594 = vand.u32 %v593, 4294901760
    %595 = vmatmul.f32.gmra.mxu0 %v594
    %v596 = vpop.f32.mrf.mxu0
    %v597 = vadd.f32 %v554, %v596
    %v598 = vand.u32 %v411, 4294901760
    %v599 = vsub.f32 %v411, %v598
    %v600 = vand.u32 %v599, 4294901760
    %601 = vmatmul.f32.gmra.mxu0 %v600
    %v602 = vpop.f32.mrf.mxu0
    %v603 = vadd.f32 %v559, %v602
    %v604 = vand.u32 %v413, 4294901760
    %v605 = vsub.f32 %v413, %v604
    %v606 = vand.u32 %v605, 4294901760
    %607 = vmatmul.f32.gmra.mxu0 %v606
    %v608 = vpop.f32.mrf.mxu0
    %v609 = vadd.f32 %v564, %v608
    %610 = vdwg.mxu0
    %611 = vmatpush.msra.mxu0 0.0
    %612 = vmatpush.msra.mxu0 0.0
    %613 = vmatpush.msra.mxu0 0.0
    %614 = vmatpush.msra.mxu0 0.0
    %615 = vmatpush.msra.mxu0 0.0
    %616 = vmatpush.msra.mxu0 0.0
    %617 = vmatpush.msra.mxu0 0.0
    %618 = vmatpush.msra.mxu0 0.0
    %619 = vmatpush.msra.mxu0 0.0
    %620 = vmatpush.msra.mxu0 0.0
    %621 = vmatpush.msra.mxu0 0.0
    %622 = vmatpush.msra.mxu0 0.0
    %v623 = vand.u32 %v278, 4294901760
    %v624 = vsub.f32 %v278, %v623
    %v625 = vand.u32 %v624, 4294901760
    %626 = vmatpush.msra.mxu0 %v625
    %v627 = vand.u32 %v277, 4294901760
    %v628 = vsub.f32 %v277, %v627
    %v629 = vand.u32 %v628, 4294901760
    %630 = vmatpush.msra.mxu0 %v629
    %v631 = vand.u32 %v276, 4294901760
    %v632 = vsub.f32 %v276, %v631
    %v633 = vand.u32 %v632, 4294901760
    %634 = vmatpush.msra.mxu0 %v633
    %v635 = vand.u32 %v275, 4294901760
    %v636 = vsub.f32 %v275, %v635
    %v637 = vand.u32 %v636, 4294901760
    %638 = vmatpush.msra.mxu0 %v637
    %v639 = vand.u32 %v407, 4294901760
    %640 = vmatmul.f32.gmra.mxu0 %v639
    %v641 = vpop.f32.mrf.mxu0
    %v642 = vadd.f32 %v591, %v641
    %v643 = vand.u32 %v409, 4294901760
    %644 = vmatmul.f32.gmra.mxu0 %v643
    %v645 = vpop.f32.mrf.mxu0
    %v646 = vadd.f32 %v597, %v645
    %v647 = vand.u32 %v411, 4294901760
    %648 = vmatmul.f32.gmra.mxu0 %v647
    %v649 = vpop.f32.mrf.mxu0
    %v650 = vadd.f32 %v603, %v649
    %v651 = vand.u32 %v413, 4294901760
    %652 = vmatmul.f32.gmra.mxu0 %v651
    %v653 = vpop.f32.mrf.mxu0
    %v654 = vadd.f32 %v609, %v653
    %655 = vdwg.mxu0
    %656 = vmatpush.msra.mxu0 0.0
    %657 = vmatpush.msra.mxu0 0.0
    %658 = vmatpush.msra.mxu0 0.0
    %659 = vmatpush.msra.mxu0 0.0
    %660 = vmatpush.msra.mxu0 0.0
    %661 = vmatpush.msra.mxu0 0.0
    %662 = vmatpush.msra.mxu0 0.0
    %663 = vmatpush.msra.mxu0 0.0
    %664 = vmatpush.msra.mxu0 0.0
    %665 = vmatpush.msra.mxu0 0.0
    %666 = vmatpush.msra.mxu0 0.0
    %667 = vmatpush.msra.mxu0 0.0
    %v668 = vand.u32 %v278, 4294901760
    %669 = vmatpush.msra.mxu0 %v668
    %v670 = vand.u32 %v277, 4294901760
    %671 = vmatpush.msra.mxu0 %v670
    %v672 = vand.u32 %v276, 4294901760
    %673 = vmatpush.msra.mxu0 %v672
    %v674 = vand.u32 %v275, 4294901760
    %675 = vmatpush.msra.mxu0 %v674
    %v676 = vand.u32 %v407, 4294901760
    %677 = vmatmul.f32.gmra.mxu0 %v676
    %v678 = vpop.f32.mrf.mxu0
    %v679 = vadd.f32 %v642, %v678
    %v680 = vand.u32 %v409, 4294901760
    %681 = vmatmul.f32.gmra.mxu0 %v680
    %v682 = vpop.f32.mrf.mxu0
    %v683 = vadd.f32 %v646, %v682
    %v684 = vand.u32 %v411, 4294901760
    %685 = vmatmul.f32.gmra.mxu0 %v684
    %v686 = vpop.f32.mrf.mxu0
    %v687 = vadd.f32 %v650, %v686
    %v688 = vand.u32 %v413, 4294901760
    %689 = vmatmul.f32.gmra.mxu0 %v688
    %v690 = vpop.f32.mrf.mxu0
    %v691 = vadd.f32 %v654, %v690
    %692 = vdwg.mxu0
    %v697 = vrot.slane %v679, 1
    %v698 = vrot.slane %v679, 2
    %v699 = vrot.slane %v679, 3
    %v700 = vrot.slane %v679, 4
    %v701 = vrot.slane %v679, 5
    %v702 = vrot.slane %v679, 6
    %v703 = vrot.slane %v679, 7
    %v704 = vrot.slane %v683, 1
    %v705 = vrot.slane %v683, 2
    %v706 = vrot.slane %v683, 3
    %v707 = vrot.slane %v683, 4
    %v708 = vrot.slane %v683, 5
    %v709 = vrot.slane %v683, 6
    %v710 = vrot.slane %v683, 7
    %v711 = vrot.slane %v687, 1
    %v712 = vrot.slane %v687, 2
    %v713 = vrot.slane %v687, 3
    %v714 = vrot.slane %v687, 4
    %v715 = vrot.slane %v687, 5
    %v716 = vrot.slane %v687, 6
    %v717 = vrot.slane %v687, 7
    %v718 = vrot.slane %v691, 1
    %v719 = vrot.slane %v691, 2
    %v720 = vrot.slane %v691, 3
    %v721 = vrot.slane %v691, 4
    %v722 = vrot.slane %v691, 5
    %v723 = vrot.slane %v691, 6
    %v724 = vrot.slane %v691, 7
    %753 = vst [vmem:[#allocation2] sm:$0x1] %v679
    %754 = vst [vmem:[#allocation2 + $0x10] sm:$0x1] %v697
    %755 = vst [vmem:[#allocation2 + $0x20] sm:$0x1] %v698
    %756 = vst [vmem:[#allocation2 + $0x30] sm:$0x1] %v699
    %757 = vst [vmem:[#allocation2 + $0x40] sm:$0x1] %v700
    %758 = vst [vmem:[#allocation2 + $0x50] sm:$0x1] %v701
    %759 = vst [vmem:[#allocation2 + $0x60] sm:$0x1] %v702
    %760 = vst [vmem:[#allocation2 + $0x70] sm:$0x1] %v703
    %761 = vst [vmem:[#allocation2 + $0x80] sm:$0x1] %v683
    %762 = vst [vmem:[#allocation2 + $0x90] sm:$0x1] %v704
    %763 = vst [vmem:[#allocation2 + $0xa0] sm:$0x1] %v705
    %764 = vst [vmem:[#allocation2 + $0xb0] sm:$0x1] %v706
    %765 = vst [vmem:[#allocation2 + $0xc0] sm:$0x1] %v707
    %766 = vst [vmem:[#allocation2 + $0xd0] sm:$0x1] %v708
    %767 = vst [vmem:[#allocation2 + $0xe0] sm:$0x1] %v709
    %768 = vst [vmem:[#allocation2 + $0xf0] sm:$0x1] %v710
    %769 = vst [vmem:[#allocation2 + $0x100] sm:$0x1] %v687
    %770 = vst [vmem:[#allocation2 + $0x110] sm:$0x1] %v711
    %771 = vst [vmem:[#allocation2 + $0x120] sm:$0x1] %v712
    %772 = vst [vmem:[#allocation2 + $0x130] sm:$0x1] %v713
    %773 = vst [vmem:[#allocation2 + $0x140] sm:$0x1] %v714
    %774 = vst [vmem:[#allocation2 + $0x150] sm:$0x1] %v715
    %775 = vst [vmem:[#allocation2 + $0x160] sm:$0x1] %v716
    %776 = vst [vmem:[#allocation2 + $0x170] sm:$0x1] %v717
    %777 = vst [vmem:[#allocation2 + $0x180] sm:$0x1] %v691
    %778 = vst [vmem:[#allocation2 + $0x190] sm:$0x1] %v718
    %779 = vst [vmem:[#allocation2 + $0x1a0] sm:$0x1] %v719
    %780 = vst [vmem:[#allocation2 + $0x1b0] sm:$0x1] %v720
    %781 = vst [vmem:[#allocation2 + $0x1c0] sm:$0x1] %v721
    %782 = vst [vmem:[#allocation2 + $0x1d0] sm:$0x1] %v722
    %783 = vst [vmem:[#allocation2 + $0x1e0] sm:$0x1] %v723
    %784 = vst [vmem:[#allocation2 + $0x1f0] sm:$0x1] %v724
    %v785 = vld [vmem:[%s3 + $0x1] sm:$0x1]
    %v786 = vperm.slane %v785, 0
    %vm787 = vcmp.eq.s32.totalorder %v27, %v786
    %vm788 = vcmp.eq.s32.totalorder %v28, %v786
    %vm789 = vcmp.eq.s32.totalorder %v263, %v786
    %vm790 = vcmp.eq.s32.totalorder %v264, %v786
    %v791 = vsel %vm787, 1, 0
    %v792 = vsel %vm788, 1, 0
    %v793 = vsel %vm789, 1, 0
    %v794 = vsel %vm790, 1, 0
    %v795 = vcvt.s32.f32 %v791
    %v796 = vcvt.s32.f32 %v792
    %v797 = vcvt.s32.f32 %v793
    %v798 = vcvt.s32.f32 %v794
    %v799 = vld [vmem:[%s2 + $0x1] sm:$0x1]
    %v800 = vld [vmem:[%s2 + $0x11] sm:$0x1]
    %v801 = vld [vmem:[%s2 + $0x21] sm:$0x1]
    %v802 = vld [vmem:[%s2 + $0x31] sm:$0x1]
    %v803 = vld [vmem:[%s2 + $0x41] sm:$0x1]
    %v804 = vld [vmem:[%s2 + $0x51] sm:$0x1]
    %v805 = vld [vmem:[%s2 + $0x61] sm:$0x1]
    %v806 = vld [vmem:[%s2 + $0x71] sm:$0x1]
    %v807 = vld [vmem:[%s2 + $0x81] sm:$0x1]
    %v808 = vld [vmem:[%s2 + $0x91] sm:$0x1]
    %v809 = vld [vmem:[%s2 + $0xa1] sm:$0x1]
    %v810 = vld [vmem:[%s2 + $0xb1] sm:$0x1]
    %v811 = vld [vmem:[%s2 + $0xc1] sm:$0x1]
    %v812 = vld [vmem:[%s2 + $0xd1] sm:$0x1]
    %v813 = vld [vmem:[%s2 + $0xe1] sm:$0x1]
    %v814 = vld [vmem:[%s2 + $0xf1] sm:$0x1]
    %v815 = vld [vmem:[%s2 + $0x101] sm:$0x1]
    %v816 = vld [vmem:[%s2 + $0x111] sm:$0x1]
    %v817 = vld [vmem:[%s2 + $0x121] sm:$0x1]
    %v818 = vld [vmem:[%s2 + $0x131] sm:$0x1]
    %v819 = vld [vmem:[%s2 + $0x141] sm:$0x1]
    %v820 = vld [vmem:[%s2 + $0x151] sm:$0x1]
    %v821 = vld [vmem:[%s2 + $0x161] sm:$0x1]
    %v822 = vld [vmem:[%s2 + $0x171] sm:$0x1]
    %v823 = vld [vmem:[%s2 + $0x181] sm:$0x1]
    %v824 = vld [vmem:[%s2 + $0x191] sm:$0x1]
    %v825 = vld [vmem:[%s2 + $0x1a1] sm:$0x1]
    %v826 = vld [vmem:[%s2 + $0x1b1] sm:$0x1]
    %v827 = vld [vmem:[%s2 + $0x1c1] sm:$0x1]
    %v828 = vld [vmem:[%s2 + $0x1d1] sm:$0x1]
    %v829 = vld [vmem:[%s2 + $0x1e1] sm:$0x1]
    %v830 = vld [vmem:[%s2 + $0x1f1] sm:$0x1]
    %v863 = vrot.slane %v800, 7
    %v864 = vsel %vm344, %v863, %v799
    %v865 = vrot.slane %v801, 6
    %v866 = vsel %vm347, %v865, %v864
    %v867 = vrot.slane %v802, 5
    %v868 = vsel %vm350, %v867, %v866
    %v869 = vrot.slane %v803, 4
    %v870 = vsel %vm353, %v869, %v868
    %v871 = vrot.slane %v804, 3
    %v872 = vsel %vm356, %v871, %v870
    %v873 = vrot.slane %v805, 2
    %v874 = vsel %vm359, %v873, %v872
    %v875 = vrot.slane %v806, 1
    %v876 = vsel %vm362, %v875, %v874
    %v877 = vrot.slane %v808, 7
    %v878 = vsel %vm344, %v877, %v807
    %v879 = vrot.slane %v809, 6
    %v880 = vsel %vm347, %v879, %v878
    %v881 = vrot.slane %v810, 5
    %v882 = vsel %vm350, %v881, %v880
    %v883 = vrot.slane %v811, 4
    %v884 = vsel %vm353, %v883, %v882
    %v885 = vrot.slane %v812, 3
    %v886 = vsel %vm356, %v885, %v884
    %v887 = vrot.slane %v813, 2
    %v888 = vsel %vm359, %v887, %v886
    %v889 = vrot.slane %v814, 1
    %v890 = vsel %vm362, %v889, %v888
    %v891 = vrot.slane %v816, 7
    %v892 = vsel %vm344, %v891, %v815
    %v893 = vrot.slane %v817, 6
    %v894 = vsel %vm347, %v893, %v892
    %v895 = vrot.slane %v818, 5
    %v896 = vsel %vm350, %v895, %v894
    %v897 = vrot.slane %v819, 4
    %v898 = vsel %vm353, %v897, %v896
    %v899 = vrot.slane %v820, 3
    %v900 = vsel %vm356, %v899, %v898
    %v901 = vrot.slane %v821, 2
    %v902 = vsel %vm359, %v901, %v900
    %v903 = vrot.slane %v822, 1
    %v904 = vsel %vm362, %v903, %v902
    %v905 = vrot.slane %v824, 7
    %v906 = vsel %vm344, %v905, %v823
    %v907 = vrot.slane %v825, 6
    %v908 = vsel %vm347, %v907, %v906
    %v909 = vrot.slane %v826, 5
    %v910 = vsel %vm350, %v909, %v908
    %v911 = vrot.slane %v827, 4
    %v912 = vsel %vm353, %v911, %v910
    %v913 = vrot.slane %v828, 3
    %v914 = vsel %vm356, %v913, %v912
    %v915 = vrot.slane %v829, 2
    %v916 = vsel %vm359, %v915, %v914
    %v917 = vrot.slane %v830, 1
    %v918 = vsel %vm362, %v917, %v916
    %v919 = vsel %vm406, %v876, 0
    %v921 = vsel %vm406, %v890, 0
    %v923 = vsel %vm406, %v904, 0
    %v925 = vsel %vm406, %v918, 0
    %927 = vmatpush.msra.mxu0 0.0
    %928 = vmatpush.msra.mxu0 0.0
    %929 = vmatpush.msra.mxu0 0.0
    %930 = vmatpush.msra.mxu0 0.0
    %931 = vmatpush.msra.mxu0 0.0
    %932 = vmatpush.msra.mxu0 0.0
    %933 = vmatpush.msra.mxu0 0.0
    %934 = vmatpush.msra.mxu0 0.0
    %935 = vmatpush.msra.mxu0 0.0
    %936 = vmatpush.msra.mxu0 0.0
    %937 = vmatpush.msra.mxu0 0.0
    %938 = vmatpush.msra.mxu0 0.0
    %v939 = vand.u32 %v798, 4294901760
    %940 = vmatpush.msra.mxu0 %v939
    %v941 = vand.u32 %v797, 4294901760
    %942 = vmatpush.msra.mxu0 %v941
    %v943 = vand.u32 %v796, 4294901760
    %944 = vmatpush.msra.mxu0 %v943
    %v945 = vand.u32 %v795, 4294901760
    %946 = vmatpush.msra.mxu0 %v945
    %v947 = vand.u32 %v919, 4294901760
    %v948 = vsub.f32 %v919, %v947
    %v949 = vand.u32 %v948, 4294901760
    %v950 = vsub.f32 %v948, %v949
    %v951 = vand.u32 %v950, 4294901760
    %952 = vmatmul.f32.gmra.mxu0 %v951
    %v953 = vpop.f32.mrf.mxu0
    %v954 = vadd.f32 0.0, %v953
    %v955 = vand.u32 %v921, 4294901760
    %v956 = vsub.f32 %v921, %v955
    %v957 = vand.u32 %v956, 4294901760
    %v958 = vsub.f32 %v956, %v957
    %v959 = vand.u32 %v958, 4294901760
    %960 = vmatmul.f32.gmra.mxu0 %v959
    %v961 = vpop.f32.mrf.mxu0
    %v962 = vadd.f32 0.0, %v961
    %v963 = vand.u32 %v923, 4294901760
    %v964 = vsub.f32 %v923, %v963
    %v965 = vand.u32 %v964, 4294901760
    %v966 = vsub.f32 %v964, %v965
    %v967 = vand.u32 %v966, 4294901760
    %968 = vmatmul.f32.gmra.mxu0 %v967
    %v969 = vpop.f32.mrf.mxu0
    %v970 = vadd.f32 0.0, %v969
    %v971 = vand.u32 %v925, 4294901760
    %v972 = vsub.f32 %v925, %v971
    %v973 = vand.u32 %v972, 4294901760
    %v974 = vsub.f32 %v972, %v973
    %v975 = vand.u32 %v974, 4294901760
    %976 = vmatmul.f32.gmra.mxu0 %v975
    %v977 = vpop.f32.mrf.mxu0
    %v978 = vadd.f32 0.0, %v977
    %979 = vdwg.mxu0
    %980 = vmatpush.msra.mxu0 0.0
    %981 = vmatpush.msra.mxu0 0.0
    %982 = vmatpush.msra.mxu0 0.0
    %983 = vmatpush.msra.mxu0 0.0
    %984 = vmatpush.msra.mxu0 0.0
    %985 = vmatpush.msra.mxu0 0.0
    %986 = vmatpush.msra.mxu0 0.0
    %987 = vmatpush.msra.mxu0 0.0
    %988 = vmatpush.msra.mxu0 0.0
    %989 = vmatpush.msra.mxu0 0.0
    %990 = vmatpush.msra.mxu0 0.0
    %991 = vmatpush.msra.mxu0 0.0
    %v992 = vand.u32 %v798, 4294901760
    %v993 = vsub.f32 %v798, %v992
    %v994 = vand.u32 %v993, 4294901760
    %v995 = vsub.f32 %v993, %v994
    %v996 = vand.u32 %v995, 4294901760
    %997 = vmatpush.msra.mxu0 %v996
    %v998 = vand.u32 %v797, 4294901760
    %v999 = vsub.f32 %v797, %v998
    %v1000 = vand.u32 %v999, 4294901760
    %v1001 = vsub.f32 %v999, %v1000
    %v1002 = vand.u32 %v1001, 4294901760
    %1003 = vmatpush.msra.mxu0 %v1002
    %v1004 = vand.u32 %v796, 4294901760
    %v1005 = vsub.f32 %v796, %v1004
    %v1006 = vand.u32 %v1005, 4294901760
    %v1007 = vsub.f32 %v1005, %v1006
    %v1008 = vand.u32 %v1007, 4294901760
    %1009 = vmatpush.msra.mxu0 %v1008
    %v1010 = vand.u32 %v795, 4294901760
    %v1011 = vsub.f32 %v795, %v1010
    %v1012 = vand.u32 %v1011, 4294901760
    %v1013 = vsub.f32 %v1011, %v1012
    %v1014 = vand.u32 %v1013, 4294901760
    %1015 = vmatpush.msra.mxu0 %v1014
    %v1016 = vand.u32 %v919, 4294901760
    %1017 = vmatmul.f32.gmra.mxu0 %v1016
    %v1018 = vpop.f32.mrf.mxu0
    %v1019 = vadd.f32 %v954, %v1018
    %v1020 = vand.u32 %v921, 4294901760
    %1021 = vmatmul.f32.gmra.mxu0 %v1020
    %v1022 = vpop.f32.mrf.mxu0
    %v1023 = vadd.f32 %v962, %v1022
    %v1024 = vand.u32 %v923, 4294901760
    %1025 = vmatmul.f32.gmra.mxu0 %v1024
    %v1026 = vpop.f32.mrf.mxu0
    %v1027 = vadd.f32 %v970, %v1026
    %v1028 = vand.u32 %v925, 4294901760
    %1029 = vmatmul.f32.gmra.mxu0 %v1028
    %v1030 = vpop.f32.mrf.mxu0
    %v1031 = vadd.f32 %v978, %v1030
    %1032 = vdwg.mxu0
    %1033 = vmatpush.msra.mxu0 0.0
    %1034 = vmatpush.msra.mxu0 0.0
    %1035 = vmatpush.msra.mxu0 0.0
    %1036 = vmatpush.msra.mxu0 0.0
    %1037 = vmatpush.msra.mxu0 0.0
    %1038 = vmatpush.msra.mxu0 0.0
    %1039 = vmatpush.msra.mxu0 0.0
    %1040 = vmatpush.msra.mxu0 0.0
    %1041 = vmatpush.msra.mxu0 0.0
    %1042 = vmatpush.msra.mxu0 0.0
    %1043 = vmatpush.msra.mxu0 0.0
    %1044 = vmatpush.msra.mxu0 0.0
    %v1045 = vand.u32 %v798, 4294901760
    %v1046 = vsub.f32 %v798, %v1045
    %1047 = vmatpush.msra.mxu0 %v1046
    %v1048 = vand.u32 %v797, 4294901760
    %v1049 = vsub.f32 %v797, %v1048
    %1050 = vmatpush.msra.mxu0 %v1049
    %v1051 = vand.u32 %v796, 4294901760
    %v1052 = vsub.f32 %v796, %v1051
    %1053 = vmatpush.msra.mxu0 %v1052
    %v1054 = vand.u32 %v795, 4294901760
    %v1055 = vsub.f32 %v795, %v1054
    %1056 = vmatpush.msra.mxu0 %v1055
    %v1057 = vand.u32 %v919, 4294901760
    %v1058 = vsub.f32 %v919, %v1057
    %1059 = vmatmul.f32.gmra.mxu0 %v1058
    %v1060 = vpop.f32.mrf.mxu0
    %v1061 = vadd.f32 %v1019, %v1060
    %v1062 = vand.u32 %v921, 4294901760
    %v1063 = vsub.f32 %v921, %v1062
    %1064 = vmatmul.f32.gmra.mxu0 %v1063
    %v1065 = vpop.f32.mrf.mxu0
    %v1066 = vadd.f32 %v1023, %v1065
    %v1067 = vand.u32 %v923, 4294901760
    %v1068 = vsub.f32 %v923, %v1067
    %1069 = vmatmul.f32.gmra.mxu0 %v1068
    %v1070 = vpop.f32.mrf.mxu0
    %v1071 = vadd.f32 %v1027, %v1070
    %v1072 = vand.u32 %v925, 4294901760
    %v1073 = vsub.f32 %v925, %v1072
    %1074 = vmatmul.f32.gmra.mxu0 %v1073
    %v1075 = vpop.f32.mrf.mxu0
    %v1076 = vadd.f32 %v1031, %v1075
    %1077 = vdwg.mxu0
    %1078 = vmatpush.msra.mxu0 0.0
    %1079 = vmatpush.msra.mxu0 0.0
    %1080 = vmatpush.msra.mxu0 0.0
    %1081 = vmatpush.msra.mxu0 0.0
    %1082 = vmatpush.msra.mxu0 0.0
    %1083 = vmatpush.msra.mxu0 0.0
    %1084 = vmatpush.msra.mxu0 0.0
    %1085 = vmatpush.msra.mxu0 0.0
    %1086 = vmatpush.msra.mxu0 0.0
    %1087 = vmatpush.msra.mxu0 0.0
    %1088 = vmatpush.msra.mxu0 0.0
    %1089 = vmatpush.msra.mxu0 0.0
    %v1090 = vand.u32 %v798, 4294901760
    %1091 = vmatpush.msra.mxu0 %v1090
    %v1092 = vand.u32 %v797, 4294901760
    %1093 = vmatpush.msra.mxu0 %v1092
    %v1094 = vand.u32 %v796, 4294901760
    %1095 = vmatpush.msra.mxu0 %v1094
    %v1096 = vand.u32 %v795, 4294901760
    %1097 = vmatpush.msra.mxu0 %v1096
    %v1098 = vand.u32 %v919, 4294901760
    %v1099 = vsub.f32 %v919, %v1098
    %v1100 = vand.u32 %v1099, 4294901760
    %1101 = vmatmul.f32.gmra.mxu0 %v1100
    %v1102 = vpop.f32.mrf.mxu0
    %v1103 = vadd.f32 %v1061, %v1102
    %v1104 = vand.u32 %v921, 4294901760
    %v1105 = vsub.f32 %v921, %v1104
    %v1106 = vand.u32 %v1105, 4294901760
    %1107 = vmatmul.f32.gmra.mxu0 %v1106
    %v1108 = vpop.f32.mrf.mxu0
    %v1109 = vadd.f32 %v1066, %v1108
    %v1110 = vand.u32 %v923, 4294901760
    %v1111 = vsub.f32 %v923, %v1110
    %v1112 = vand.u32 %v1111, 4294901760
    %1113 = vmatmul.f32.gmra.mxu0 %v1112
    %v1114 = vpop.f32.mrf.mxu0
    %v1115 = vadd.f32 %v1071, %v1114
    %v1116 = vand.u32 %v925, 4294901760
    %v1117 = vsub.f32 %v925, %v1116
    %v1118 = vand.u32 %v1117, 4294901760
    %1119 = vmatmul.f32.gmra.mxu0 %v1118
    %v1120 = vpop.f32.mrf.mxu0
    %v1121 = vadd.f32 %v1076, %v1120
    %1122 = vdwg.mxu0
    %1123 = vmatpush.msra.mxu0 0.0
    %1124 = vmatpush.msra.mxu0 0.0
    %1125 = vmatpush.msra.mxu0 0.0
    %1126 = vmatpush.msra.mxu0 0.0
    %1127 = vmatpush.msra.mxu0 0.0
    %1128 = vmatpush.msra.mxu0 0.0
    %1129 = vmatpush.msra.mxu0 0.0
    %1130 = vmatpush.msra.mxu0 0.0
    %1131 = vmatpush.msra.mxu0 0.0
    %1132 = vmatpush.msra.mxu0 0.0
    %1133 = vmatpush.msra.mxu0 0.0
    %1134 = vmatpush.msra.mxu0 0.0
    %v1135 = vand.u32 %v798, 4294901760
    %v1136 = vsub.f32 %v798, %v1135
    %v1137 = vand.u32 %v1136, 4294901760
    %1138 = vmatpush.msra.mxu0 %v1137
    %v1139 = vand.u32 %v797, 4294901760
    %v1140 = vsub.f32 %v797, %v1139
    %v1141 = vand.u32 %v1140, 4294901760
    %1142 = vmatpush.msra.mxu0 %v1141
    %v1143 = vand.u32 %v796, 4294901760
    %v1144 = vsub.f32 %v796, %v1143
    %v1145 = vand.u32 %v1144, 4294901760
    %1146 = vmatpush.msra.mxu0 %v1145
    %v1147 = vand.u32 %v795, 4294901760
    %v1148 = vsub.f32 %v795, %v1147
    %v1149 = vand.u32 %v1148, 4294901760
    %1150 = vmatpush.msra.mxu0 %v1149
    %v1151 = vand.u32 %v919, 4294901760
    %1152 = vmatmul.f32.gmra.mxu0 %v1151
    %v1153 = vpop.f32.mrf.mxu0
    %v1154 = vadd.f32 %v1103, %v1153
    %v1155 = vand.u32 %v921, 4294901760
    %1156 = vmatmul.f32.gmra.mxu0 %v1155
    %v1157 = vpop.f32.mrf.mxu0
    %v1158 = vadd.f32 %v1109, %v1157
    %v1159 = vand.u32 %v923, 4294901760
    %1160 = vmatmul.f32.gmra.mxu0 %v1159
    %v1161 = vpop.f32.mrf.mxu0
    %v1162 = vadd.f32 %v1115, %v1161
    %v1163 = vand.u32 %v925, 4294901760
    %1164 = vmatmul.f32.gmra.mxu0 %v1163
    %v1165 = vpop.f32.mrf.mxu0
    %v1166 = vadd.f32 %v1121, %v1165
    %1167 = vdwg.mxu0
    %1168 = vmatpush.msra.mxu0 0.0
    %1169 = vmatpush.msra.mxu0 0.0
    %1170 = vmatpush.msra.mxu0 0.0
    %1171 = vmatpush.msra.mxu0 0.0
    %1172 = vmatpush.msra.mxu0 0.0
    %1173 = vmatpush.msra.mxu0 0.0
    %1174 = vmatpush.msra.mxu0 0.0
    %1175 = vmatpush.msra.mxu0 0.0
    %1176 = vmatpush.msra.mxu0 0.0
    %1177 = vmatpush.msra.mxu0 0.0
    %1178 = vmatpush.msra.mxu0 0.0
    %1179 = vmatpush.msra.mxu0 0.0
    %v1180 = vand.u32 %v798, 4294901760
    %1181 = vmatpush.msra.mxu0 %v1180
    %v1182 = vand.u32 %v797, 4294901760
    %1183 = vmatpush.msra.mxu0 %v1182
    %v1184 = vand.u32 %v796, 4294901760
    %1185 = vmatpush.msra.mxu0 %v1184
    %v1186 = vand.u32 %v795, 4294901760
    %1187 = vmatpush.msra.mxu0 %v1186
    %v1188 = vand.u32 %v919, 4294901760
    %1189 = vmatmul.f32.gmra.mxu0 %v1188
    %v1190 = vpop.f32.mrf.mxu0
    %v1191 = vadd.f32 %v1154, %v1190
    %v1192 = vand.u32 %v921, 4294901760
    %1193 = vmatmul.f32.gmra.mxu0 %v1192
    %v1194 = vpop.f32.mrf.mxu0
    %v1195 = vadd.f32 %v1158, %v1194
    %v1196 = vand.u32 %v923, 4294901760
    %1197 = vmatmul.f32.gmra.mxu0 %v1196
    %v1198 = vpop.f32.mrf.mxu0
    %v1199 = vadd.f32 %v1162, %v1198
    %v1200 = vand.u32 %v925, 4294901760
    %1201 = vmatmul.f32.gmra.mxu0 %v1200
    %v1202 = vpop.f32.mrf.mxu0
    %v1203 = vadd.f32 %v1166, %v1202
    %1204 = vdwg.mxu0
    %v1209 = vrot.slane %v1191, 1
    %v1210 = vrot.slane %v1191, 2
    %v1211 = vrot.slane %v1191, 3
    %v1212 = vrot.slane %v1191, 4
    %v1213 = vrot.slane %v1191, 5
    %v1214 = vrot.slane %v1191, 6
    %v1215 = vrot.slane %v1191, 7
    %v1216 = vrot.slane %v1195, 1
    %v1217 = vrot.slane %v1195, 2
    %v1218 = vrot.slane %v1195, 3
    %v1219 = vrot.slane %v1195, 4
    %v1220 = vrot.slane %v1195, 5
    %v1221 = vrot.slane %v1195, 6
    %v1222 = vrot.slane %v1195, 7
    %v1223 = vrot.slane %v1199, 1
    %v1224 = vrot.slane %v1199, 2
    %v1225 = vrot.slane %v1199, 3
    %v1226 = vrot.slane %v1199, 4
    %v1227 = vrot.slane %v1199, 5
    %v1228 = vrot.slane %v1199, 6
    %v1229 = vrot.slane %v1199, 7
    %v1230 = vrot.slane %v1203, 1
    %v1231 = vrot.slane %v1203, 2
    %v1232 = vrot.slane %v1203, 3
    %v1233 = vrot.slane %v1203, 4
    %v1234 = vrot.slane %v1203, 5
    %v1235 = vrot.slane %v1203, 6
    %v1236 = vrot.slane %v1203, 7
    %1265 = vst [vmem:[#allocation2 + $0x1] sm:$0x1] %v1191
    %1266 = vst [vmem:[#allocation2 + $0x11] sm:$0x1] %v1209
    %1267 = vst [vmem:[#allocation2 + $0x21] sm:$0x1] %v1210
    %1268 = vst [vmem:[#allocation2 + $0x31] sm:$0x1] %v1211
    %1269 = vst [vmem:[#allocation2 + $0x41] sm:$0x1] %v1212
    %1270 = vst [vmem:[#allocation2 + $0x51] sm:$0x1] %v1213
    %1271 = vst [vmem:[#allocation2 + $0x61] sm:$0x1] %v1214
    %1272 = vst [vmem:[#allocation2 + $0x71] sm:$0x1] %v1215
    %1273 = vst [vmem:[#allocation2 + $0x81] sm:$0x1] %v1195
    %1274 = vst [vmem:[#allocation2 + $0x91] sm:$0x1] %v1216
    %1275 = vst [vmem:[#allocation2 + $0xa1] sm:$0x1] %v1217
    %1276 = vst [vmem:[#allocation2 + $0xb1] sm:$0x1] %v1218
    %1277 = vst [vmem:[#allocation2 + $0xc1] sm:$0x1] %v1219
    %1278 = vst [vmem:[#allocation2 + $0xd1] sm:$0x1] %v1220
    %1279 = vst [vmem:[#allocation2 + $0xe1] sm:$0x1] %v1221
    %1280 = vst [vmem:[#allocation2 + $0xf1] sm:$0x1] %v1222
    %1281 = vst [vmem:[#allocation2 + $0x101] sm:$0x1] %v1199
    %1282 = vst [vmem:[#allocation2 + $0x111] sm:$0x1] %v1223
    %1283 = vst [vmem:[#allocation2 + $0x121] sm:$0x1] %v1224
    %1284 = vst [vmem:[#allocation2 + $0x131] sm:$0x1] %v1225
    %1285 = vst [vmem:[#allocation2 + $0x141] sm:$0x1] %v1226
    %1286 = vst [vmem:[#allocation2 + $0x151] sm:$0x1] %v1227
    %1287 = vst [vmem:[#allocation2 + $0x161] sm:$0x1] %v1228
    %1288 = vst [vmem:[#allocation2 + $0x171] sm:$0x1] %v1229
    %1289 = vst [vmem:[#allocation2 + $0x181] sm:$0x1] %v1203
    %1290 = vst [vmem:[#allocation2 + $0x191] sm:$0x1] %v1230
    %1291 = vst [vmem:[#allocation2 + $0x1a1] sm:$0x1] %v1231
    %1292 = vst [vmem:[#allocation2 + $0x1b1] sm:$0x1] %v1232
    %1293 = vst [vmem:[#allocation2 + $0x1c1] sm:$0x1] %v1233
    %1294 = vst [vmem:[#allocation2 + $0x1d1] sm:$0x1] %v1234
    %1295 = vst [vmem:[#allocation2 + $0x1e1] sm:$0x1] %v1235
    %1296 = vst [vmem:[#allocation2 + $0x1f1] sm:$0x1] %v1236
    %v1297 = vld [vmem:[%s3 + $0x2] sm:$0x1]
    %v1298 = vperm.slane %v1297, 0
    %vm1299 = vcmp.eq.s32.totalorder %v27, %v1298
    %vm1300 = vcmp.eq.s32.totalorder %v28, %v1298
    %vm1301 = vcmp.eq.s32.totalorder %v263, %v1298
    %vm1302 = vcmp.eq.s32.totalorder %v264, %v1298
    %v1303 = vsel %vm1299, 1, 0
    %v1304 = vsel %vm1300, 1, 0
    %v1305 = vsel %vm1301, 1, 0
    %v1306 = vsel %vm1302, 1, 0
    %v1307 = vcvt.s32.f32 %v1303
    %v1308 = vcvt.s32.f32 %v1304
    %v1309 = vcvt.s32.f32 %v1305
    %v1310 = vcvt.s32.f32 %v1306
    %v1311 = vld [vmem:[%s2 + $0x2] sm:$0x1]
    %v1312 = vld [vmem:[%s2 + $0x12] sm:$0x1]
    %v1313 = vld [vmem:[%s2 + $0x22] sm:$0x1]
    %v1314 = vld [vmem:[%s2 + $0x32] sm:$0x1]
    %v1315 = vld [vmem:[%s2 + $0x42] sm:$0x1]
    %v1316 = vld [vmem:[%s2 + $0x52] sm:$0x1]
    %v1317 = vld [vmem:[%s2 + $0x62] sm:$0x1]
    %v1318 = vld [vmem:[%s2 + $0x72] sm:$0x1]
    %v1319 = vld [vmem:[%s2 + $0x82] sm:$0x1]
    %v1320 = vld [vmem:[%s2 + $0x92] sm:$0x1]
    %v1321 = vld [vmem:[%s2 + $0xa2] sm:$0x1]
    %v1322 = vld [vmem:[%s2 + $0xb2] sm:$0x1]
    %v1323 = vld [vmem:[%s2 + $0xc2] sm:$0x1]
    %v1324 = vld [vmem:[%s2 + $0xd2] sm:$0x1]
    %v1325 = vld [vmem:[%s2 + $0xe2] sm:$0x1]
    %v1326 = vld [vmem:[%s2 + $0xf2] sm:$0x1]
    %v1327 = vld [vmem:[%s2 + $0x102] sm:$0x1]
    %v1328 = vld [vmem:[%s2 + $0x112] sm:$0x1]
    %v1329 = vld [vmem:[%s2 + $0x122] sm:$0x1]
    %v1330 = vld [vmem:[%s2 + $0x132] sm:$0x1]
    %v1331 = vld [vmem:[%s2 + $0x142] sm:$0x1]
    %v1332 = vld [vmem:[%s2 + $0x152] sm:$0x1]
    %v1333 = vld [vmem:[%s2 + $0x162] sm:$0x1]
    %v1334 = vld [vmem:[%s2 + $0x172] sm:$0x1]
    %v1335 = vld [vmem:[%s2 + $0x182] sm:$0x1]
    %v1336 = vld [vmem:[%s2 + $0x192] sm:$0x1]
    %v1337 = vld [vmem:[%s2 + $0x1a2] sm:$0x1]
    %v1338 = vld [vmem:[%s2 + $0x1b2] sm:$0x1]
    %v1339 = vld [vmem:[%s2 + $0x1c2] sm:$0x1]
    %v1340 = vld [vmem:[%s2 + $0x1d2] sm:$0x1]
    %v1341 = vld [vmem:[%s2 + $0x1e2] sm:$0x1]
    %v1342 = vld [vmem:[%s2 + $0x1f2] sm:$0x1]
    %v1375 = vrot.slane %v1312, 7
    %v1376 = vsel %vm344, %v1375, %v1311
    %v1377 = vrot.slane %v1313, 6
    %v1378 = vsel %vm347, %v1377, %v1376
    %v1379 = vrot.slane %v1314, 5
    %v1380 = vsel %vm350, %v1379, %v1378
    %v1381 = vrot.slane %v1315, 4
    %v1382 = vsel %vm353, %v1381, %v1380
    %v1383 = vrot.slane %v1316, 3
    %v1384 = vsel %vm356, %v1383, %v1382
    %v1385 = vrot.slane %v1317, 2
    %v1386 = vsel %vm359, %v1385, %v1384
    %v1387 = vrot.slane %v1318, 1
    %v1388 = vsel %vm362, %v1387, %v1386
    %v1389 = vrot.slane %v1320, 7
    %v1390 = vsel %vm344, %v1389, %v1319
    %v1391 = vrot.slane %v1321, 6
    %v1392 = vsel %vm347, %v1391, %v1390
    %v1393 = vrot.slane %v1322, 5
    %v1394 = vsel %vm350, %v1393, %v1392
    %v1395 = vrot.slane %v1323, 4
    %v1396 = vsel %vm353, %v1395, %v1394
    %v1397 = vrot.slane %v1324, 3
    %v1398 = vsel %vm356, %v1397, %v1396
    %v1399 = vrot.slane %v1325, 2
    %v1400 = vsel %vm359, %v1399, %v1398
    %v1401 = vrot.slane %v1326, 1
    %v1402 = vsel %vm362, %v1401, %v1400
    %v1403 = vrot.slane %v1328, 7
    %v1404 = vsel %vm344, %v1403, %v1327
    %v1405 = vrot.slane %v1329, 6
    %v1406 = vsel %vm347, %v1405, %v1404
    %v1407 = vrot.slane %v1330, 5
    %v1408 = vsel %vm350, %v1407, %v1406
    %v1409 = vrot.slane %v1331, 4
    %v1410 = vsel %vm353, %v1409, %v1408
    %v1411 = vrot.slane %v1332, 3
    %v1412 = vsel %vm356, %v1411, %v1410
    %v1413 = vrot.slane %v1333, 2
    %v1414 = vsel %vm359, %v1413, %v1412
    %v1415 = vrot.slane %v1334, 1
    %v1416 = vsel %vm362, %v1415, %v1414
    %v1417 = vrot.slane %v1336, 7
    %v1418 = vsel %vm344, %v1417, %v1335
    %v1419 = vrot.slane %v1337, 6
    %v1420 = vsel %vm347, %v1419, %v1418
    %v1421 = vrot.slane %v1338, 5
    %v1422 = vsel %vm350, %v1421, %v1420
    %v1423 = vrot.slane %v1339, 4
    %v1424 = vsel %vm353, %v1423, %v1422
    %v1425 = vrot.slane %v1340, 3
    %v1426 = vsel %vm356, %v1425, %v1424
    %v1427 = vrot.slane %v1341, 2
    %v1428 = vsel %vm359, %v1427, %v1426
    %v1429 = vrot.slane %v1342, 1
    %v1430 = vsel %vm362, %v1429, %v1428
    %v1431 = vsel %vm406, %v1388, 0
    %v1433 = vsel %vm406, %v1402, 0
    %v1435 = vsel %vm406, %v1416, 0
    %v1437 = vsel %vm406, %v1430, 0
    %1439 = vmatpush.msra.mxu0 0.0
    %1440 = vmatpush.msra.mxu0 0.0
    %1441 = vmatpush.msra.mxu0 0.0
    %1442 = vmatpush.msra.mxu0 0.0
    %1443 = vmatpush.msra.mxu0 0.0
    %1444 = vmatpush.msra.mxu0 0.0
    %1445 = vmatpush.msra.mxu0 0.0
    %1446 = vmatpush.msra.mxu0 0.0
    %1447 = vmatpush.msra.mxu0 0.0
    %1448 = vmatpush.msra.mxu0 0.0
    %1449 = vmatpush.msra.mxu0 0.0
    %1450 = vmatpush.msra.mxu0 0.0
    %v1451 = vand.u32 %v1310, 4294901760
    %1452 = vmatpush.msra.mxu0 %v1451
    %v1453 = vand.u32 %v1309, 4294901760
    %1454 = vmatpush.msra.mxu0 %v1453
    %v1455 = vand.u32 %v1308, 4294901760
    %1456 = vmatpush.msra.mxu0 %v1455
    %v1457 = vand.u32 %v1307, 4294901760
    %1458 = vmatpush.msra.mxu0 %v1457
    %v1459 = vand.u32 %v1431, 4294901760
    %v1460 = vsub.f32 %v1431, %v1459
    %v1461 = vand.u32 %v1460, 4294901760
    %v1462 = vsub.f32 %v1460, %v1461
    %v1463 = vand.u32 %v1462, 4294901760
    %1464 = vmatmul.f32.gmra.mxu0 %v1463
    %v1465 = vpop.f32.mrf.mxu0
    %v1466 = vadd.f32 0.0, %v1465
    %v1467 = vand.u32 %v1433, 4294901760
    %v1468 = vsub.f32 %v1433, %v1467
    %v1469 = vand.u32 %v1468, 4294901760
    %v1470 = vsub.f32 %v1468, %v1469
    %v1471 = vand.u32 %v1470, 4294901760
    %1472 = vmatmul.f32.gmra.mxu0 %v1471
    %v1473 = vpop.f32.mrf.mxu0
    %v1474 = vadd.f32 0.0, %v1473
    %v1475 = vand.u32 %v1435, 4294901760
    %v1476 = vsub.f32 %v1435, %v1475
    %v1477 = vand.u32 %v1476, 4294901760
    %v1478 = vsub.f32 %v1476, %v1477
    %v1479 = vand.u32 %v1478, 4294901760
    %1480 = vmatmul.f32.gmra.mxu0 %v1479
    %v1481 = vpop.f32.mrf.mxu0
    %v1482 = vadd.f32 0.0, %v1481
    %v1483 = vand.u32 %v1437, 4294901760
    %v1484 = vsub.f32 %v1437, %v1483
    %v1485 = vand.u32 %v1484, 4294901760
    %v1486 = vsub.f32 %v1484, %v1485
    %v1487 = vand.u32 %v1486, 4294901760
    %1488 = vmatmul.f32.gmra.mxu0 %v1487
    %v1489 = vpop.f32.mrf.mxu0
    %v1490 = vadd.f32 0.0, %v1489
    %1491 = vdwg.mxu0
    %1492 = vmatpush.msra.mxu0 0.0
    %1493 = vmatpush.msra.mxu0 0.0
    %1494 = vmatpush.msra.mxu0 0.0
    %1495 = vmatpush.msra.mxu0 0.0
    %1496 = vmatpush.msra.mxu0 0.0
    %1497 = vmatpush.msra.mxu0 0.0
    %1498 = vmatpush.msra.mxu0 0.0
    %1499 = vmatpush.msra.mxu0 0.0
    %1500 = vmatpush.msra.mxu0 0.0
    %1501 = vmatpush.msra.mxu0 0.0
    %1502 = vmatpush.msra.mxu0 0.0
    %1503 = vmatpush.msra.mxu0 0.0
    %v1504 = vand.u32 %v1310, 4294901760
    %v1505 = vsub.f32 %v1310, %v1504
    %v1506 = vand.u32 %v1505, 4294901760
    %v1507 = vsub.f32 %v1505, %v1506
    %v1508 = vand.u32 %v1507, 4294901760
    %1509 = vmatpush.msra.mxu0 %v1508
    %v1510 = vand.u32 %v1309, 4294901760
    %v1511 = vsub.f32 %v1309, %v1510
    %v1512 = vand.u32 %v1511, 4294901760
    %v1513 = vsub.f32 %v1511, %v1512
    %v1514 = vand.u32 %v1513, 4294901760
    %1515 = vmatpush.msra.mxu0 %v1514
    %v1516 = vand.u32 %v1308, 4294901760
    %v1517 = vsub.f32 %v1308, %v1516
    %v1518 = vand.u32 %v1517, 4294901760
    %v1519 = vsub.f32 %v1517, %v1518
    %v1520 = vand.u32 %v1519, 4294901760
    %1521 = vmatpush.msra.mxu0 %v1520
    %v1522 = vand.u32 %v1307, 4294901760
    %v1523 = vsub.f32 %v1307, %v1522
    %v1524 = vand.u32 %v1523, 4294901760
    %v1525 = vsub.f32 %v1523, %v1524
    %v1526 = vand.u32 %v1525, 4294901760
    %1527 = vmatpush.msra.mxu0 %v1526
    %v1528 = vand.u32 %v1431, 4294901760
    %1529 = vmatmul.f32.gmra.mxu0 %v1528
    %v1530 = vpop.f32.mrf.mxu0
    %v1531 = vadd.f32 %v1466, %v1530
    %v1532 = vand.u32 %v1433, 4294901760
    %1533 = vmatmul.f32.gmra.mxu0 %v1532
    %v1534 = vpop.f32.mrf.mxu0
    %v1535 = vadd.f32 %v1474, %v1534
    %v1536 = vand.u32 %v1435, 4294901760
    %1537 = vmatmul.f32.gmra.mxu0 %v1536
    %v1538 = vpop.f32.mrf.mxu0
    %v1539 = vadd.f32 %v1482, %v1538
    %v1540 = vand.u32 %v1437, 4294901760
    %1541 = vmatmul.f32.gmra.mxu0 %v1540
    %v1542 = vpop.f32.mrf.mxu0
    %v1543 = vadd.f32 %v1490, %v1542
    %1544 = vdwg.mxu0
    %1545 = vmatpush.msra.mxu0 0.0
    %1546 = vmatpush.msra.mxu0 0.0
    %1547 = vmatpush.msra.mxu0 0.0
    %1548 = vmatpush.msra.mxu0 0.0
    %1549 = vmatpush.msra.mxu0 0.0
    %1550 = vmatpush.msra.mxu0 0.0
    %1551 = vmatpush.msra.mxu0 0.0
    %1552 = vmatpush.msra.mxu0 0.0
    %1553 = vmatpush.msra.mxu0 0.0
    %1554 = vmatpush.msra.mxu0 0.0
    %1555 = vmatpush.msra.mxu0 0.0
    %1556 = vmatpush.msra.mxu0 0.0
    %v1557 = vand.u32 %v1310, 4294901760
    %v1558 = vsub.f32 %v1310, %v1557
    %1559 = vmatpush.msra.mxu0 %v1558
    %v1560 = vand.u32 %v1309, 4294901760
    %v1561 = vsub.f32 %v1309, %v1560
    %1562 = vmatpush.msra.mxu0 %v1561
    %v1563 = vand.u32 %v1308, 4294901760
    %v1564 = vsub.f32 %v1308, %v1563
    %1565 = vmatpush.msra.mxu0 %v1564
    %v1566 = vand.u32 %v1307, 4294901760
    %v1567 = vsub.f32 %v1307, %v1566
    %1568 = vmatpush.msra.mxu0 %v1567
    %v1569 = vand.u32 %v1431, 4294901760
    %v1570 = vsub.f32 %v1431, %v1569
    %1571 = vmatmul.f32.gmra.mxu0 %v1570
    %v1572 = vpop.f32.mrf.mxu0
    %v1573 = vadd.f32 %v1531, %v1572
    %v1574 = vand.u32 %v1433, 4294901760
    %v1575 = vsub.f32 %v1433, %v1574
    %1576 = vmatmul.f32.gmra.mxu0 %v1575
    %v1577 = vpop.f32.mrf.mxu0
    %v1578 = vadd.f32 %v1535, %v1577
    %v1579 = vand.u32 %v1435, 4294901760
    %v1580 = vsub.f32 %v1435, %v1579
    %1581 = vmatmul.f32.gmra.mxu0 %v1580
    %v1582 = vpop.f32.mrf.mxu0
    %v1583 = vadd.f32 %v1539, %v1582
    %v1584 = vand.u32 %v1437, 4294901760
    %v1585 = vsub.f32 %v1437, %v1584
    %1586 = vmatmul.f32.gmra.mxu0 %v1585
    %v1587 = vpop.f32.mrf.mxu0
    %v1588 = vadd.f32 %v1543, %v1587
    %1589 = vdwg.mxu0
    %1590 = vmatpush.msra.mxu0 0.0
    %1591 = vmatpush.msra.mxu0 0.0
    %1592 = vmatpush.msra.mxu0 0.0
    %1593 = vmatpush.msra.mxu0 0.0
    %1594 = vmatpush.msra.mxu0 0.0
    %1595 = vmatpush.msra.mxu0 0.0
    %1596 = vmatpush.msra.mxu0 0.0
    %1597 = vmatpush.msra.mxu0 0.0
    %1598 = vmatpush.msra.mxu0 0.0
    %1599 = vmatpush.msra.mxu0 0.0
    %1600 = vmatpush.msra.mxu0 0.0
    %1601 = vmatpush.msra.mxu0 0.0
    %v1602 = vand.u32 %v1310, 4294901760
    %1603 = vmatpush.msra.mxu0 %v1602
    %v1604 = vand.u32 %v1309, 4294901760
    %1605 = vmatpush.msra.mxu0 %v1604
    %v1606 = vand.u32 %v1308, 4294901760
    %1607 = vmatpush.msra.mxu0 %v1606
    %v1608 = vand.u32 %v1307, 4294901760
    %1609 = vmatpush.msra.mxu0 %v1608
    %v1610 = vand.u32 %v1431, 4294901760
    %v1611 = vsub.f32 %v1431, %v1610
    %v1612 = vand.u32 %v1611, 4294901760
    %1613 = vmatmul.f32.gmra.mxu0 %v1612
    %v1614 = vpop.f32.mrf.mxu0
    %v1615 = vadd.f32 %v1573, %v1614
    %v1616 = vand.u32 %v1433, 4294901760
    %v1617 = vsub.f32 %v1433, %v1616
    %v1618 = vand.u32 %v1617, 4294901760
    %1619 = vmatmul.f32.gmra.mxu0 %v1618
    %v1620 = vpop.f32.mrf.mxu0
    %v1621 = vadd.f32 %v1578, %v1620
    %v1622 = vand.u32 %v1435, 4294901760
    %v1623 = vsub.f32 %v1435, %v1622
    %v1624 = vand.u32 %v1623, 4294901760
    %1625 = vmatmul.f32.gmra.mxu0 %v1624
    %v1626 = vpop.f32.mrf.mxu0
    %v1627 = vadd.f32 %v1583, %v1626
    %v1628 = vand.u32 %v1437, 4294901760
    %v1629 = vsub.f32 %v1437, %v1628
    %v1630 = vand.u32 %v1629, 4294901760
    %1631 = vmatmul.f32.gmra.mxu0 %v1630
    %v1632 = vpop.f32.mrf.mxu0
    %v1633 = vadd.f32 %v1588, %v1632
    %1634 = vdwg.mxu0
    %1635 = vmatpush.msra.mxu0 0.0
    %1636 = vmatpush.msra.mxu0 0.0
    %1637 = vmatpush.msra.mxu0 0.0
    %1638 = vmatpush.msra.mxu0 0.0
    %1639 = vmatpush.msra.mxu0 0.0
    %1640 = vmatpush.msra.mxu0 0.0
    %1641 = vmatpush.msra.mxu0 0.0
    %1642 = vmatpush.msra.mxu0 0.0
    %1643 = vmatpush.msra.mxu0 0.0
    %1644 = vmatpush.msra.mxu0 0.0
    %1645 = vmatpush.msra.mxu0 0.0
    %1646 = vmatpush.msra.mxu0 0.0
    %v1647 = vand.u32 %v1310, 4294901760
    %v1648 = vsub.f32 %v1310, %v1647
    %v1649 = vand.u32 %v1648, 4294901760
    %1650 = vmatpush.msra.mxu0 %v1649
    %v1651 = vand.u32 %v1309, 4294901760
    %v1652 = vsub.f32 %v1309, %v1651
    %v1653 = vand.u32 %v1652, 4294901760
    %1654 = vmatpush.msra.mxu0 %v1653
    %v1655 = vand.u32 %v1308, 4294901760
    %v1656 = vsub.f32 %v1308, %v1655
    %v1657 = vand.u32 %v1656, 4294901760
    %1658 = vmatpush.msra.mxu0 %v1657
    %v1659 = vand.u32 %v1307, 4294901760
    %v1660 = vsub.f32 %v1307, %v1659
    %v1661 = vand.u32 %v1660, 4294901760
    %1662 = vmatpush.msra.mxu0 %v1661
    %v1663 = vand.u32 %v1431, 4294901760
    %1664 = vmatmul.f32.gmra.mxu0 %v1663
    %v1665 = vpop.f32.mrf.mxu0
    %v1666 = vadd.f32 %v1615, %v1665
    %v1667 = vand.u32 %v1433, 4294901760
    %1668 = vmatmul.f32.gmra.mxu0 %v1667
    %v1669 = vpop.f32.mrf.mxu0
    %v1670 = vadd.f32 %v1621, %v1669
    %v1671 = vand.u32 %v1435, 4294901760
    %1672 = vmatmul.f32.gmra.mxu0 %v1671
    %v1673 = vpop.f32.mrf.mxu0
    %v1674 = vadd.f32 %v1627, %v1673
    %v1675 = vand.u32 %v1437, 4294901760
    %1676 = vmatmul.f32.gmra.mxu0 %v1675
    %v1677 = vpop.f32.mrf.mxu0
    %v1678 = vadd.f32 %v1633, %v1677
    %1679 = vdwg.mxu0
    %1680 = vmatpush.msra.mxu0 0.0
    %1681 = vmatpush.msra.mxu0 0.0
    %1682 = vmatpush.msra.mxu0 0.0
    %1683 = vmatpush.msra.mxu0 0.0
    %1684 = vmatpush.msra.mxu0 0.0
    %1685 = vmatpush.msra.mxu0 0.0
    %1686 = vmatpush.msra.mxu0 0.0
    %1687 = vmatpush.msra.mxu0 0.0
    %1688 = vmatpush.msra.mxu0 0.0
    %1689 = vmatpush.msra.mxu0 0.0
    %1690 = vmatpush.msra.mxu0 0.0
    %1691 = vmatpush.msra.mxu0 0.0
    %v1692 = vand.u32 %v1310, 4294901760
    %1693 = vmatpush.msra.mxu0 %v1692
    %v1694 = vand.u32 %v1309, 4294901760
    %1695 = vmatpush.msra.mxu0 %v1694
    %v1696 = vand.u32 %v1308, 4294901760
    %1697 = vmatpush.msra.mxu0 %v1696
    %v1698 = vand.u32 %v1307, 4294901760
    %1699 = vmatpush.msra.mxu0 %v1698
    %v1700 = vand.u32 %v1431, 4294901760
    %1701 = vmatmul.f32.gmra.mxu0 %v1700
    %v1702 = vpop.f32.mrf.mxu0
    %v1703 = vadd.f32 %v1666, %v1702
    %v1704 = vand.u32 %v1433, 4294901760
    %1705 = vmatmul.f32.gmra.mxu0 %v1704
    %v1706 = vpop.f32.mrf.mxu0
    %v1707 = vadd.f32 %v1670, %v1706
    %v1708 = vand.u32 %v1435, 4294901760
    %1709 = vmatmul.f32.gmra.mxu0 %v1708
    %v1710 = vpop.f32.mrf.mxu0
    %v1711 = vadd.f32 %v1674, %v1710
    %v1712 = vand.u32 %v1437, 4294901760
    %1713 = vmatmul.f32.gmra.mxu0 %v1712
    %v1714 = vpop.f32.mrf.mxu0
    %v1715 = vadd.f32 %v1678, %v1714
    %1716 = vdwg.mxu0
    %v1721 = vrot.slane %v1703, 1
    %v1722 = vrot.slane %v1703, 2
    %v1723 = vrot.slane %v1703, 3
    %v1724 = vrot.slane %v1703, 4
    %v1725 = vrot.slane %v1703, 5
    %v1726 = vrot.slane %v1703, 6
    %v1727 = vrot.slane %v1703, 7
    %v1728 = vrot.slane %v1707, 1
    %v1729 = vrot.slane %v1707, 2
    %v1730 = vrot.slane %v1707, 3
    %v1731 = vrot.slane %v1707, 4
    %v1732 = vrot.slane %v1707, 5
    %v1733 = vrot.slane %v1707, 6
    %v1734 = vrot.slane %v1707, 7
    %v1735 = vrot.slane %v1711, 1
    %v1736 = vrot.slane %v1711, 2
    %v1737 = vrot.slane %v1711, 3
    %v1738 = vrot.slane %v1711, 4
    %v1739 = vrot.slane %v1711, 5
    %v1740 = vrot.slane %v1711, 6
    %v1741 = vrot.slane %v1711, 7
    %v1742 = vrot.slane %v1715, 1
    %v1743 = vrot.slane %v1715, 2
    %v1744 = vrot.slane %v1715, 3
    %v1745 = vrot.slane %v1715, 4
    %v1746 = vrot.slane %v1715, 5
    %v1747 = vrot.slane %v1715, 6
    %v1748 = vrot.slane %v1715, 7
    %1777 = vst [vmem:[#allocation2 + $0x2] sm:$0x1] %v1703
    %1778 = vst [vmem:[#allocation2 + $0x12] sm:$0x1] %v1721
    %1779 = vst [vmem:[#allocation2 + $0x22] sm:$0x1] %v1722
    %1780 = vst [vmem:[#allocation2 + $0x32] sm:$0x1] %v1723
    %1781 = vst [vmem:[#allocation2 + $0x42] sm:$0x1] %v1724
    %1782 = vst [vmem:[#allocation2 + $0x52] sm:$0x1] %v1725
    %1783 = vst [vmem:[#allocation2 + $0x62] sm:$0x1] %v1726
    %1784 = vst [vmem:[#allocation2 + $0x72] sm:$0x1] %v1727
    %1785 = vst [vmem:[#allocation2 + $0x82] sm:$0x1] %v1707
    %1786 = vst [vmem:[#allocation2 + $0x92] sm:$0x1] %v1728
    %1787 = vst [vmem:[#allocation2 + $0xa2] sm:$0x1] %v1729
    %1788 = vst [vmem:[#allocation2 + $0xb2] sm:$0x1] %v1730
    %1789 = vst [vmem:[#allocation2 + $0xc2] sm:$0x1] %v1731
    %1790 = vst [vmem:[#allocation2 + $0xd2] sm:$0x1] %v1732
    %1791 = vst [vmem:[#allocation2 + $0xe2] sm:$0x1] %v1733
    %1792 = vst [vmem:[#allocation2 + $0xf2] sm:$0x1] %v1734
    %1793 = vst [vmem:[#allocation2 + $0x102] sm:$0x1] %v1711
    %1794 = vst [vmem:[#allocation2 + $0x112] sm:$0x1] %v1735
    %1795 = vst [vmem:[#allocation2 + $0x122] sm:$0x1] %v1736
    %1796 = vst [vmem:[#allocation2 + $0x132] sm:$0x1] %v1737
    %1797 = vst [vmem:[#allocation2 + $0x142] sm:$0x1] %v1738
    %1798 = vst [vmem:[#allocation2 + $0x152] sm:$0x1] %v1739
    %1799 = vst [vmem:[#allocation2 + $0x162] sm:$0x1] %v1740
    %1800 = vst [vmem:[#allocation2 + $0x172] sm:$0x1] %v1741
    %1801 = vst [vmem:[#allocation2 + $0x182] sm:$0x1] %v1715
    %1802 = vst [vmem:[#allocation2 + $0x192] sm:$0x1] %v1742
    %1803 = vst [vmem:[#allocation2 + $0x1a2] sm:$0x1] %v1743
    %1804 = vst [vmem:[#allocation2 + $0x1b2] sm:$0x1] %v1744
    %1805 = vst [vmem:[#allocation2 + $0x1c2] sm:$0x1] %v1745
    %1806 = vst [vmem:[#allocation2 + $0x1d2] sm:$0x1] %v1746
    %1807 = vst [vmem:[#allocation2 + $0x1e2] sm:$0x1] %v1747
    %1808 = vst [vmem:[#allocation2 + $0x1f2] sm:$0x1] %v1748
    %v1809 = vld [vmem:[%s3 + $0x3] sm:$0x1]
    %v1810 = vperm.slane %v1809, 0
    %vm1811 = vcmp.eq.s32.totalorder %v27, %v1810
    %vm1812 = vcmp.eq.s32.totalorder %v28, %v1810
    %vm1813 = vcmp.eq.s32.totalorder %v263, %v1810
    %vm1814 = vcmp.eq.s32.totalorder %v264, %v1810
    %v1815 = vsel %vm1811, 1, 0
    %v1816 = vsel %vm1812, 1, 0
    %v1817 = vsel %vm1813, 1, 0
    %v1818 = vsel %vm1814, 1, 0
    %v1819 = vcvt.s32.f32 %v1815
    %v1820 = vcvt.s32.f32 %v1816
    %v1821 = vcvt.s32.f32 %v1817
    %v1822 = vcvt.s32.f32 %v1818
    %v1823 = vld [vmem:[%s2 + $0x3] sm:$0x1]
    %v1824 = vld [vmem:[%s2 + $0x13] sm:$0x1]
    %v1825 = vld [vmem:[%s2 + $0x23] sm:$0x1]
    %v1826 = vld [vmem:[%s2 + $0x33] sm:$0x1]
    %v1827 = vld [vmem:[%s2 + $0x43] sm:$0x1]
    %v1828 = vld [vmem:[%s2 + $0x53] sm:$0x1]
    %v1829 = vld [vmem:[%s2 + $0x63] sm:$0x1]
    %v1830 = vld [vmem:[%s2 + $0x73] sm:$0x1]
    %v1831 = vld [vmem:[%s2 + $0x83] sm:$0x1]
    %v1832 = vld [vmem:[%s2 + $0x93] sm:$0x1]
    %v1833 = vld [vmem:[%s2 + $0xa3] sm:$0x1]
    %v1834 = vld [vmem:[%s2 + $0xb3] sm:$0x1]
    %v1835 = vld [vmem:[%s2 + $0xc3] sm:$0x1]
    %v1836 = vld [vmem:[%s2 + $0xd3] sm:$0x1]
    %v1837 = vld [vmem:[%s2 + $0xe3] sm:$0x1]
    %v1838 = vld [vmem:[%s2 + $0xf3] sm:$0x1]
    %v1839 = vld [vmem:[%s2 + $0x103] sm:$0x1]
    %v1840 = vld [vmem:[%s2 + $0x113] sm:$0x1]
    %v1841 = vld [vmem:[%s2 + $0x123] sm:$0x1]
    %v1842 = vld [vmem:[%s2 + $0x133] sm:$0x1]
    %v1843 = vld [vmem:[%s2 + $0x143] sm:$0x1]
    %v1844 = vld [vmem:[%s2 + $0x153] sm:$0x1]
    %v1845 = vld [vmem:[%s2 + $0x163] sm:$0x1]
    %v1846 = vld [vmem:[%s2 + $0x173] sm:$0x1]
    %v1847 = vld [vmem:[%s2 + $0x183] sm:$0x1]
    %v1848 = vld [vmem:[%s2 + $0x193] sm:$0x1]
    %v1849 = vld [vmem:[%s2 + $0x1a3] sm:$0x1]
    %v1850 = vld [vmem:[%s2 + $0x1b3] sm:$0x1]
    %v1851 = vld [vmem:[%s2 + $0x1c3] sm:$0x1]
    %v1852 = vld [vmem:[%s2 + $0x1d3] sm:$0x1]
    %v1853 = vld [vmem:[%s2 + $0x1e3] sm:$0x1]
    %v1854 = vld [vmem:[%s2 + $0x1f3] sm:$0x1]
    %v1887 = vrot.slane %v1824, 7
    %v1888 = vsel %vm344, %v1887, %v1823
    %v1889 = vrot.slane %v1825, 6
    %v1890 = vsel %vm347, %v1889, %v1888
    %v1891 = vrot.slane %v1826, 5
    %v1892 = vsel %vm350, %v1891, %v1890
    %v1893 = vrot.slane %v1827, 4
    %v1894 = vsel %vm353, %v1893, %v1892
    %v1895 = vrot.slane %v1828, 3
    %v1896 = vsel %vm356, %v1895, %v1894
    %v1897 = vrot.slane %v1829, 2
    %v1898 = vsel %vm359, %v1897, %v1896
    %v1899 = vrot.slane %v1830, 1
    %v1900 = vsel %vm362, %v1899, %v1898
    %v1901 = vrot.slane %v1832, 7
    %v1902 = vsel %vm344, %v1901, %v1831
    %v1903 = vrot.slane %v1833, 6
    %v1904 = vsel %vm347, %v1903, %v1902
    %v1905 = vrot.slane %v1834, 5
    %v1906 = vsel %vm350, %v1905, %v1904
    %v1907 = vrot.slane %v1835, 4
    %v1908 = vsel %vm353, %v1907, %v1906
    %v1909 = vrot.slane %v1836, 3
    %v1910 = vsel %vm356, %v1909, %v1908
    %v1911 = vrot.slane %v1837, 2
    %v1912 = vsel %vm359, %v1911, %v1910
    %v1913 = vrot.slane %v1838, 1
    %v1914 = vsel %vm362, %v1913, %v1912
    %v1915 = vrot.slane %v1840, 7
    %v1916 = vsel %vm344, %v1915, %v1839
    %v1917 = vrot.slane %v1841, 6
    %v1918 = vsel %vm347, %v1917, %v1916
    %v1919 = vrot.slane %v1842, 5
    %v1920 = vsel %vm350, %v1919, %v1918
    %v1921 = vrot.slane %v1843, 4
    %v1922 = vsel %vm353, %v1921, %v1920
    %v1923 = vrot.slane %v1844, 3
    %v1924 = vsel %vm356, %v1923, %v1922
    %v1925 = vrot.slane %v1845, 2
    %v1926 = vsel %vm359, %v1925, %v1924
    %v1927 = vrot.slane %v1846, 1
    %v1928 = vsel %vm362, %v1927, %v1926
    %v1929 = vrot.slane %v1848, 7
    %v1930 = vsel %vm344, %v1929, %v1847
    %v1931 = vrot.slane %v1849, 6
    %v1932 = vsel %vm347, %v1931, %v1930
    %v1933 = vrot.slane %v1850, 5
    %v1934 = vsel %vm350, %v1933, %v1932
    %v1935 = vrot.slane %v1851, 4
    %v1936 = vsel %vm353, %v1935, %v1934
    %v1937 = vrot.slane %v1852, 3
    %v1938 = vsel %vm356, %v1937, %v1936
    %v1939 = vrot.slane %v1853, 2
    %v1940 = vsel %vm359, %v1939, %v1938
    %v1941 = vrot.slane %v1854, 1
    %v1942 = vsel %vm362, %v1941, %v1940
    %v1943 = vsel %vm406, %v1900, 0
    %v1945 = vsel %vm406, %v1914, 0
    %v1947 = vsel %vm406, %v1928, 0
    %v1949 = vsel %vm406, %v1942, 0
    %1951 = vmatpush.msra.mxu0 0.0
    %1952 = vmatpush.msra.mxu0 0.0
    %1953 = vmatpush.msra.mxu0 0.0
    %1954 = vmatpush.msra.mxu0 0.0
    %1955 = vmatpush.msra.mxu0 0.0
    %1956 = vmatpush.msra.mxu0 0.0
    %1957 = vmatpush.msra.mxu0 0.0
    %1958 = vmatpush.msra.mxu0 0.0
    %1959 = vmatpush.msra.mxu0 0.0
    %1960 = vmatpush.msra.mxu0 0.0
    %1961 = vmatpush.msra.mxu0 0.0
    %1962 = vmatpush.msra.mxu0 0.0
    %v1963 = vand.u32 %v1822, 4294901760
    %1964 = vmatpush.msra.mxu0 %v1963
    %v1965 = vand.u32 %v1821, 4294901760
    %1966 = vmatpush.msra.mxu0 %v1965
    %v1967 = vand.u32 %v1820, 4294901760
    %1968 = vmatpush.msra.mxu0 %v1967
    %v1969 = vand.u32 %v1819, 4294901760
    %1970 = vmatpush.msra.mxu0 %v1969
    %v1971 = vand.u32 %v1943, 4294901760
    %v1972 = vsub.f32 %v1943, %v1971
    %v1973 = vand.u32 %v1972, 4294901760
    %v1974 = vsub.f32 %v1972, %v1973
    %v1975 = vand.u32 %v1974, 4294901760
    %1976 = vmatmul.f32.gmra.mxu0 %v1975
    %v1977 = vpop.f32.mrf.mxu0
    %v1978 = vadd.f32 0.0, %v1977
    %v1979 = vand.u32 %v1945, 4294901760
    %v1980 = vsub.f32 %v1945, %v1979
    %v1981 = vand.u32 %v1980, 4294901760
    %v1982 = vsub.f32 %v1980, %v1981
    %v1983 = vand.u32 %v1982, 4294901760
    %1984 = vmatmul.f32.gmra.mxu0 %v1983
    %v1985 = vpop.f32.mrf.mxu0
    %v1986 = vadd.f32 0.0, %v1985
    %v1987 = vand.u32 %v1947, 4294901760
    %v1988 = vsub.f32 %v1947, %v1987
    %v1989 = vand.u32 %v1988, 4294901760
    %v1990 = vsub.f32 %v1988, %v1989
    %v1991 = vand.u32 %v1990, 4294901760
    %1992 = vmatmul.f32.gmra.mxu0 %v1991
    %v1993 = vpop.f32.mrf.mxu0
    %v1994 = vadd.f32 0.0, %v1993
    %v1995 = vand.u32 %v1949, 4294901760
    %v1996 = vsub.f32 %v1949, %v1995
    %v1997 = vand.u32 %v1996, 4294901760
    %v1998 = vsub.f32 %v1996, %v1997
    %v1999 = vand.u32 %v1998, 4294901760
    %2000 = vmatmul.f32.gmra.mxu0 %v1999
    %v2001 = vpop.f32.mrf.mxu0
    %v2002 = vadd.f32 0.0, %v2001
    %2003 = vdwg.mxu0
    %2004 = vmatpush.msra.mxu0 0.0
    %2005 = vmatpush.msra.mxu0 0.0
    %2006 = vmatpush.msra.mxu0 0.0
    %2007 = vmatpush.msra.mxu0 0.0
    %2008 = vmatpush.msra.mxu0 0.0
    %2009 = vmatpush.msra.mxu0 0.0
    %2010 = vmatpush.msra.mxu0 0.0
    %2011 = vmatpush.msra.mxu0 0.0
    %2012 = vmatpush.msra.mxu0 0.0
    %2013 = vmatpush.msra.mxu0 0.0
    %2014 = vmatpush.msra.mxu0 0.0
    %2015 = vmatpush.msra.mxu0 0.0
    %v2016 = vand.u32 %v1822, 4294901760
    %v2017 = vsub.f32 %v1822, %v2016
    %v2018 = vand.u32 %v2017, 4294901760
    %v2019 = vsub.f32 %v2017, %v2018
    %v2020 = vand.u32 %v2019, 4294901760
    %2021 = vmatpush.msra.mxu0 %v2020
    %v2022 = vand.u32 %v1821, 4294901760
    %v2023 = vsub.f32 %v1821, %v2022
    %v2024 = vand.u32 %v2023, 4294901760
    %v2025 = vsub.f32 %v2023, %v2024
    %v2026 = vand.u32 %v2025, 4294901760
    %2027 = vmatpush.msra.mxu0 %v2026
    %v2028 = vand.u32 %v1820, 4294901760
    %v2029 = vsub.f32 %v1820, %v2028
    %v2030 = vand.u32 %v2029, 4294901760
    %v2031 = vsub.f32 %v2029, %v2030
    %v2032 = vand.u32 %v2031, 4294901760
    %2033 = vmatpush.msra.mxu0 %v2032
    %v2034 = vand.u32 %v1819, 4294901760
    %v2035 = vsub.f32 %v1819, %v2034
    %v2036 = vand.u32 %v2035, 4294901760
    %v2037 = vsub.f32 %v2035, %v2036
    %v2038 = vand.u32 %v2037, 4294901760
    %2039 = vmatpush.msra.mxu0 %v2038
    %v2040 = vand.u32 %v1943, 4294901760
    %2041 = vmatmul.f32.gmra.mxu0 %v2040
    %v2042 = vpop.f32.mrf.mxu0
    %v2043 = vadd.f32 %v1978, %v2042
    %v2044 = vand.u32 %v1945, 4294901760
    %2045 = vmatmul.f32.gmra.mxu0 %v2044
    %v2046 = vpop.f32.mrf.mxu0
    %v2047 = vadd.f32 %v1986, %v2046
    %v2048 = vand.u32 %v1947, 4294901760
    %2049 = vmatmul.f32.gmra.mxu0 %v2048
    %v2050 = vpop.f32.mrf.mxu0
    %v2051 = vadd.f32 %v1994, %v2050
    %v2052 = vand.u32 %v1949, 4294901760
    %2053 = vmatmul.f32.gmra.mxu0 %v2052
    %v2054 = vpop.f32.mrf.mxu0
    %v2055 = vadd.f32 %v2002, %v2054
    %2056 = vdwg.mxu0
    %2057 = vmatpush.msra.mxu0 0.0
    %2058 = vmatpush.msra.mxu0 0.0
    %2059 = vmatpush.msra.mxu0 0.0
    %2060 = vmatpush.msra.mxu0 0.0
    %2061 = vmatpush.msra.mxu0 0.0
    %2062 = vmatpush.msra.mxu0 0.0
    %2063 = vmatpush.msra.mxu0 0.0
    %2064 = vmatpush.msra.mxu0 0.0
    %2065 = vmatpush.msra.mxu0 0.0
    %2066 = vmatpush.msra.mxu0 0.0
    %2067 = vmatpush.msra.mxu0 0.0
    %2068 = vmatpush.msra.mxu0 0.0
    %v2069 = vand.u32 %v1822, 4294901760
    %v2070 = vsub.f32 %v1822, %v2069
    %2071 = vmatpush.msra.mxu0 %v2070
    %v2072 = vand.u32 %v1821, 4294901760
    %v2073 = vsub.f32 %v1821, %v2072
    %2074 = vmatpush.msra.mxu0 %v2073
    %v2075 = vand.u32 %v1820, 4294901760
    %v2076 = vsub.f32 %v1820, %v2075
    %2077 = vmatpush.msra.mxu0 %v2076
    %v2078 = vand.u32 %v1819, 4294901760
    %v2079 = vsub.f32 %v1819, %v2078
    %2080 = vmatpush.msra.mxu0 %v2079
    %v2081 = vand.u32 %v1943, 4294901760
    %v2082 = vsub.f32 %v1943, %v2081
    %2083 = vmatmul.f32.gmra.mxu0 %v2082
    %v2084 = vpop.f32.mrf.mxu0
    %v2085 = vadd.f32 %v2043, %v2084
    %v2086 = vand.u32 %v1945, 4294901760
    %v2087 = vsub.f32 %v1945, %v2086
    %2088 = vmatmul.f32.gmra.mxu0 %v2087
    %v2089 = vpop.f32.mrf.mxu0
    %v2090 = vadd.f32 %v2047, %v2089
    %v2091 = vand.u32 %v1947, 4294901760
    %v2092 = vsub.f32 %v1947, %v2091
    %2093 = vmatmul.f32.gmra.mxu0 %v2092
    %v2094 = vpop.f32.mrf.mxu0
    %v2095 = vadd.f32 %v2051, %v2094
    %v2096 = vand.u32 %v1949, 4294901760
    %v2097 = vsub.f32 %v1949, %v2096
    %2098 = vmatmul.f32.gmra.mxu0 %v2097
    %v2099 = vpop.f32.mrf.mxu0
    %v2100 = vadd.f32 %v2055, %v2099
    %2101 = vdwg.mxu0
    %2102 = vmatpush.msra.mxu0 0.0
    %2103 = vmatpush.msra.mxu0 0.0
    %2104 = vmatpush.msra.mxu0 0.0
    %2105 = vmatpush.msra.mxu0 0.0
    %2106 = vmatpush.msra.mxu0 0.0
    %2107 = vmatpush.msra.mxu0 0.0
    %2108 = vmatpush.msra.mxu0 0.0
    %2109 = vmatpush.msra.mxu0 0.0
    %2110 = vmatpush.msra.mxu0 0.0
    %2111 = vmatpush.msra.mxu0 0.0
    %2112 = vmatpush.msra.mxu0 0.0
    %2113 = vmatpush.msra.mxu0 0.0
    %v2114 = vand.u32 %v1822, 4294901760
    %2115 = vmatpush.msra.mxu0 %v2114
    %v2116 = vand.u32 %v1821, 4294901760
    %2117 = vmatpush.msra.mxu0 %v2116
    %v2118 = vand.u32 %v1820, 4294901760
    %2119 = vmatpush.msra.mxu0 %v2118
    %v2120 = vand.u32 %v1819, 4294901760
    %2121 = vmatpush.msra.mxu0 %v2120
    %v2122 = vand.u32 %v1943, 4294901760
    %v2123 = vsub.f32 %v1943, %v2122
    %v2124 = vand.u32 %v2123, 4294901760
    %2125 = vmatmul.f32.gmra.mxu0 %v2124
    %v2126 = vpop.f32.mrf.mxu0
    %v2127 = vadd.f32 %v2085, %v2126
    %v2128 = vand.u32 %v1945, 4294901760
    %v2129 = vsub.f32 %v1945, %v2128
    %v2130 = vand.u32 %v2129, 4294901760
    %2131 = vmatmul.f32.gmra.mxu0 %v2130
    %v2132 = vpop.f32.mrf.mxu0
    %v2133 = vadd.f32 %v2090, %v2132
    %v2134 = vand.u32 %v1947, 4294901760
    %v2135 = vsub.f32 %v1947, %v2134
    %v2136 = vand.u32 %v2135, 4294901760
    %2137 = vmatmul.f32.gmra.mxu0 %v2136
    %v2138 = vpop.f32.mrf.mxu0
    %v2139 = vadd.f32 %v2095, %v2138
    %v2140 = vand.u32 %v1949, 4294901760
    %v2141 = vsub.f32 %v1949, %v2140
    %v2142 = vand.u32 %v2141, 4294901760
    %2143 = vmatmul.f32.gmra.mxu0 %v2142
    %v2144 = vpop.f32.mrf.mxu0
    %v2145 = vadd.f32 %v2100, %v2144
    %2146 = vdwg.mxu0
    %2147 = vmatpush.msra.mxu0 0.0
    %2148 = vmatpush.msra.mxu0 0.0
    %2149 = vmatpush.msra.mxu0 0.0
    %2150 = vmatpush.msra.mxu0 0.0
    %2151 = vmatpush.msra.mxu0 0.0
    %2152 = vmatpush.msra.mxu0 0.0
    %2153 = vmatpush.msra.mxu0 0.0
    %2154 = vmatpush.msra.mxu0 0.0
    %2155 = vmatpush.msra.mxu0 0.0
    %2156 = vmatpush.msra.mxu0 0.0
    %2157 = vmatpush.msra.mxu0 0.0
    %2158 = vmatpush.msra.mxu0 0.0
    %v2159 = vand.u32 %v1822, 4294901760
    %v2160 = vsub.f32 %v1822, %v2159
    %v2161 = vand.u32 %v2160, 4294901760
    %2162 = vmatpush.msra.mxu0 %v2161
    %v2163 = vand.u32 %v1821, 4294901760
    %v2164 = vsub.f32 %v1821, %v2163
    %v2165 = vand.u32 %v2164, 4294901760
    %2166 = vmatpush.msra.mxu0 %v2165
    %v2167 = vand.u32 %v1820, 4294901760
    %v2168 = vsub.f32 %v1820, %v2167
    %v2169 = vand.u32 %v2168, 4294901760
    %2170 = vmatpush.msra.mxu0 %v2169
    %v2171 = vand.u32 %v1819, 4294901760
    %v2172 = vsub.f32 %v1819, %v2171
    %v2173 = vand.u32 %v2172, 4294901760
    %2174 = vmatpush.msra.mxu0 %v2173
    %v2175 = vand.u32 %v1943, 4294901760
    %2176 = vmatmul.f32.gmra.mxu0 %v2175
    %v2177 = vpop.f32.mrf.mxu0
    %v2178 = vadd.f32 %v2127, %v2177
    %v2179 = vand.u32 %v1945, 4294901760
    %2180 = vmatmul.f32.gmra.mxu0 %v2179
    %v2181 = vpop.f32.mrf.mxu0
    %v2182 = vadd.f32 %v2133, %v2181
    %v2183 = vand.u32 %v1947, 4294901760
    %2184 = vmatmul.f32.gmra.mxu0 %v2183
    %v2185 = vpop.f32.mrf.mxu0
    %v2186 = vadd.f32 %v2139, %v2185
    %v2187 = vand.u32 %v1949, 4294901760
    %2188 = vmatmul.f32.gmra.mxu0 %v2187
    %v2189 = vpop.f32.mrf.mxu0
    %v2190 = vadd.f32 %v2145, %v2189
    %2191 = vdwg.mxu0
    %2192 = vmatpush.msra.mxu0 0.0
    %2193 = vmatpush.msra.mxu0 0.0
    %2194 = vmatpush.msra.mxu0 0.0
    %2195 = vmatpush.msra.mxu0 0.0
    %2196 = vmatpush.msra.mxu0 0.0
    %2197 = vmatpush.msra.mxu0 0.0
    %2198 = vmatpush.msra.mxu0 0.0
    %2199 = vmatpush.msra.mxu0 0.0
    %2200 = vmatpush.msra.mxu0 0.0
    %2201 = vmatpush.msra.mxu0 0.0
    %2202 = vmatpush.msra.mxu0 0.0
    %2203 = vmatpush.msra.mxu0 0.0
    %v2204 = vand.u32 %v1822, 4294901760
    %2205 = vmatpush.msra.mxu0 %v2204
    %v2206 = vand.u32 %v1821, 4294901760
    %2207 = vmatpush.msra.mxu0 %v2206
    %v2208 = vand.u32 %v1820, 4294901760
    %2209 = vmatpush.msra.mxu0 %v2208
    %v2210 = vand.u32 %v1819, 4294901760
    %2211 = vmatpush.msra.mxu0 %v2210
    %v2212 = vand.u32 %v1943, 4294901760
    %2213 = vmatmul.f32.gmra.mxu0 %v2212
    %v2214 = vpop.f32.mrf.mxu0
    %v2215 = vadd.f32 %v2178, %v2214
    %v2216 = vand.u32 %v1945, 4294901760
    %2217 = vmatmul.f32.gmra.mxu0 %v2216
    %v2218 = vpop.f32.mrf.mxu0
    %v2219 = vadd.f32 %v2182, %v2218
    %v2220 = vand.u32 %v1947, 4294901760
    %2221 = vmatmul.f32.gmra.mxu0 %v2220
    %v2222 = vpop.f32.mrf.mxu0
    %v2223 = vadd.f32 %v2186, %v2222
    %v2224 = vand.u32 %v1949, 4294901760
    %2225 = vmatmul.f32.gmra.mxu0 %v2224
    %v2226 = vpop.f32.mrf.mxu0
    %v2227 = vadd.f32 %v2190, %v2226
    %2228 = vdwg.mxu0
    %v2233 = vrot.slane %v2215, 1
    %v2234 = vrot.slane %v2215, 2
    %v2235 = vrot.slane %v2215, 3
    %v2236 = vrot.slane %v2215, 4
    %v2237 = vrot.slane %v2215, 5
    %v2238 = vrot.slane %v2215, 6
    %v2239 = vrot.slane %v2215, 7
    %v2240 = vrot.slane %v2219, 1
    %v2241 = vrot.slane %v2219, 2
    %v2242 = vrot.slane %v2219, 3
    %v2243 = vrot.slane %v2219, 4
    %v2244 = vrot.slane %v2219, 5
    %v2245 = vrot.slane %v2219, 6
    %v2246 = vrot.slane %v2219, 7
    %v2247 = vrot.slane %v2223, 1
    %v2248 = vrot.slane %v2223, 2
    %v2249 = vrot.slane %v2223, 3
    %v2250 = vrot.slane %v2223, 4
    %v2251 = vrot.slane %v2223, 5
    %v2252 = vrot.slane %v2223, 6
    %v2253 = vrot.slane %v2223, 7
    %v2254 = vrot.slane %v2227, 1
    %v2255 = vrot.slane %v2227, 2
    %v2256 = vrot.slane %v2227, 3
    %v2257 = vrot.slane %v2227, 4
    %v2258 = vrot.slane %v2227, 5
    %v2259 = vrot.slane %v2227, 6
    %v2260 = vrot.slane %v2227, 7
    %2289 = vst [vmem:[#allocation2 + $0x3] sm:$0x1] %v2215
    %2290 = vst [vmem:[#allocation2 + $0x13] sm:$0x1] %v2233
    %2291 = vst [vmem:[#allocation2 + $0x23] sm:$0x1] %v2234
    %2292 = vst [vmem:[#allocation2 + $0x33] sm:$0x1] %v2235
    %2293 = vst [vmem:[#allocation2 + $0x43] sm:$0x1] %v2236
    %2294 = vst [vmem:[#allocation2 + $0x53] sm:$0x1] %v2237
    %2295 = vst [vmem:[#allocation2 + $0x63] sm:$0x1] %v2238
    %2296 = vst [vmem:[#allocation2 + $0x73] sm:$0x1] %v2239
    %2297 = vst [vmem:[#allocation2 + $0x83] sm:$0x1] %v2219
    %2298 = vst [vmem:[#allocation2 + $0x93] sm:$0x1] %v2240
    %2299 = vst [vmem:[#allocation2 + $0xa3] sm:$0x1] %v2241
    %2300 = vst [vmem:[#allocation2 + $0xb3] sm:$0x1] %v2242
    %2301 = vst [vmem:[#allocation2 + $0xc3] sm:$0x1] %v2243
    %2302 = vst [vmem:[#allocation2 + $0xd3] sm:$0x1] %v2244
    %2303 = vst [vmem:[#allocation2 + $0xe3] sm:$0x1] %v2245
    %2304 = vst [vmem:[#allocation2 + $0xf3] sm:$0x1] %v2246
    %2305 = vst [vmem:[#allocation2 + $0x103] sm:$0x1] %v2223
    %2306 = vst [vmem:[#allocation2 + $0x113] sm:$0x1] %v2247
    %2307 = vst [vmem:[#allocation2 + $0x123] sm:$0x1] %v2248
    %2308 = vst [vmem:[#allocation2 + $0x133] sm:$0x1] %v2249
    %2309 = vst [vmem:[#allocation2 + $0x143] sm:$0x1] %v2250
    %2310 = vst [vmem:[#allocation2 + $0x153] sm:$0x1] %v2251
    %2311 = vst [vmem:[#allocation2 + $0x163] sm:$0x1] %v2252
    %2312 = vst [vmem:[#allocation2 + $0x173] sm:$0x1] %v2253
    %2313 = vst [vmem:[#allocation2 + $0x183] sm:$0x1] %v2227
    %2314 = vst [vmem:[#allocation2 + $0x193] sm:$0x1] %v2254
    %2315 = vst [vmem:[#allocation2 + $0x1a3] sm:$0x1] %v2255
    %2316 = vst [vmem:[#allocation2 + $0x1b3] sm:$0x1] %v2256
    %2317 = vst [vmem:[#allocation2 + $0x1c3] sm:$0x1] %v2257
    %2318 = vst [vmem:[#allocation2 + $0x1d3] sm:$0x1] %v2258
    %2319 = vst [vmem:[#allocation2 + $0x1e3] sm:$0x1] %v2259
    %2320 = vst [vmem:[#allocation2 + $0x1f3] sm:$0x1] %v2260
    %v2321 = vld [vmem:[%s3 + $0x4] sm:$0x1]
    %v2322 = vperm.slane %v2321, 0
    %vm2323 = vcmp.eq.s32.totalorder %v27, %v2322
    %vm2324 = vcmp.eq.s32.totalorder %v28, %v2322
    %vm2325 = vcmp.eq.s32.totalorder %v263, %v2322
    %vm2326 = vcmp.eq.s32.totalorder %v264, %v2322
    %v2327 = vsel %vm2323, 1, 0
    %v2328 = vsel %vm2324, 1, 0
    %v2329 = vsel %vm2325, 1, 0
    %v2330 = vsel %vm2326, 1, 0
    %v2331 = vcvt.s32.f32 %v2327
    %v2332 = vcvt.s32.f32 %v2328
    %v2333 = vcvt.s32.f32 %v2329
    %v2334 = vcvt.s32.f32 %v2330
    %v2335 = vld [vmem:[%s2 + $0x4] sm:$0x1]
    %v2336 = vld [vmem:[%s2 + $0x14] sm:$0x1]
    %v2337 = vld [vmem:[%s2 + $0x24] sm:$0x1]
    %v2338 = vld [vmem:[%s2 + $0x34] sm:$0x1]
    %v2339 = vld [vmem:[%s2 + $0x44] sm:$0x1]
    %v2340 = vld [vmem:[%s2 + $0x54] sm:$0x1]
    %v2341 = vld [vmem:[%s2 + $0x64] sm:$0x1]
    %v2342 = vld [vmem:[%s2 + $0x74] sm:$0x1]
    %v2343 = vld [vmem:[%s2 + $0x84] sm:$0x1]
    %v2344 = vld [vmem:[%s2 + $0x94] sm:$0x1]
    %v2345 = vld [vmem:[%s2 + $0xa4] sm:$0x1]
    %v2346 = vld [vmem:[%s2 + $0xb4] sm:$0x1]
    %v2347 = vld [vmem:[%s2 + $0xc4] sm:$0x1]
    %v2348 = vld [vmem:[%s2 + $0xd4] sm:$0x1]
    %v2349 = vld [vmem:[%s2 + $0xe4] sm:$0x1]
    %v2350 = vld [vmem:[%s2 + $0xf4] sm:$0x1]
    %v2351 = vld [vmem:[%s2 + $0x104] sm:$0x1]
    %v2352 = vld [vmem:[%s2 + $0x114] sm:$0x1]
    %v2353 = vld [vmem:[%s2 + $0x124] sm:$0x1]
    %v2354 = vld [vmem:[%s2 + $0x134] sm:$0x1]
    %v2355 = vld [vmem:[%s2 + $0x144] sm:$0x1]
    %v2356 = vld [vmem:[%s2 + $0x154] sm:$0x1]
    %v2357 = vld [vmem:[%s2 + $0x164] sm:$0x1]
    %v2358 = vld [vmem:[%s2 + $0x174] sm:$0x1]
    %v2359 = vld [vmem:[%s2 + $0x184] sm:$0x1]
    %v2360 = vld [vmem:[%s2 + $0x194] sm:$0x1]
    %v2361 = vld [vmem:[%s2 + $0x1a4] sm:$0x1]
    %v2362 = vld [vmem:[%s2 + $0x1b4] sm:$0x1]
    %v2363 = vld [vmem:[%s2 + $0x1c4] sm:$0x1]
    %v2364 = vld [vmem:[%s2 + $0x1d4] sm:$0x1]
    %v2365 = vld [vmem:[%s2 + $0x1e4] sm:$0x1]
    %v2366 = vld [vmem:[%s2 + $0x1f4] sm:$0x1]
    %v2399 = vrot.slane %v2336, 7
    %v2400 = vsel %vm344, %v2399, %v2335
    %v2401 = vrot.slane %v2337, 6
    %v2402 = vsel %vm347, %v2401, %v2400
    %v2403 = vrot.slane %v2338, 5
    %v2404 = vsel %vm350, %v2403, %v2402
    %v2405 = vrot.slane %v2339, 4
    %v2406 = vsel %vm353, %v2405, %v2404
    %v2407 = vrot.slane %v2340, 3
    %v2408 = vsel %vm356, %v2407, %v2406
    %v2409 = vrot.slane %v2341, 2
    %v2410 = vsel %vm359, %v2409, %v2408
    %v2411 = vrot.slane %v2342, 1
    %v2412 = vsel %vm362, %v2411, %v2410
    %v2413 = vrot.slane %v2344, 7
    %v2414 = vsel %vm344, %v2413, %v2343
    %v2415 = vrot.slane %v2345, 6
    %v2416 = vsel %vm347, %v2415, %v2414
    %v2417 = vrot.slane %v2346, 5
    %v2418 = vsel %vm350, %v2417, %v2416
    %v2419 = vrot.slane %v2347, 4
    %v2420 = vsel %vm353, %v2419, %v2418
    %v2421 = vrot.slane %v2348, 3
    %v2422 = vsel %vm356, %v2421, %v2420
    %v2423 = vrot.slane %v2349, 2
    %v2424 = vsel %vm359, %v2423, %v2422
    %v2425 = vrot.slane %v2350, 1
    %v2426 = vsel %vm362, %v2425, %v2424
    %v2427 = vrot.slane %v2352, 7
    %v2428 = vsel %vm344, %v2427, %v2351
    %v2429 = vrot.slane %v2353, 6
    %v2430 = vsel %vm347, %v2429, %v2428
    %v2431 = vrot.slane %v2354, 5
    %v2432 = vsel %vm350, %v2431, %v2430
    %v2433 = vrot.slane %v2355, 4
    %v2434 = vsel %vm353, %v2433, %v2432
    %v2435 = vrot.slane %v2356, 3
    %v2436 = vsel %vm356, %v2435, %v2434
    %v2437 = vrot.slane %v2357, 2
    %v2438 = vsel %vm359, %v2437, %v2436
    %v2439 = vrot.slane %v2358, 1
    %v2440 = vsel %vm362, %v2439, %v2438
    %v2441 = vrot.slane %v2360, 7
    %v2442 = vsel %vm344, %v2441, %v2359
    %v2443 = vrot.slane %v2361, 6
    %v2444 = vsel %vm347, %v2443, %v2442
    %v2445 = vrot.slane %v2362, 5
    %v2446 = vsel %vm350, %v2445, %v2444
    %v2447 = vrot.slane %v2363, 4
    %v2448 = vsel %vm353, %v2447, %v2446
    %v2449 = vrot.slane %v2364, 3
    %v2450 = vsel %vm356, %v2449, %v2448
    %v2451 = vrot.slane %v2365, 2
    %v2452 = vsel %vm359, %v2451, %v2450
    %v2453 = vrot.slane %v2366, 1
    %v2454 = vsel %vm362, %v2453, %v2452
    %v2455 = vsel %vm406, %v2412, 0
    %v2457 = vsel %vm406, %v2426, 0
    %v2459 = vsel %vm406, %v2440, 0
    %v2461 = vsel %vm406, %v2454, 0
    %2463 = vmatpush.msra.mxu0 0.0
    %2464 = vmatpush.msra.mxu0 0.0
    %2465 = vmatpush.msra.mxu0 0.0
    %2466 = vmatpush.msra.mxu0 0.0
    %2467 = vmatpush.msra.mxu0 0.0
    %2468 = vmatpush.msra.mxu0 0.0
    %2469 = vmatpush.msra.mxu0 0.0
    %2470 = vmatpush.msra.mxu0 0.0
    %2471 = vmatpush.msra.mxu0 0.0
    %2472 = vmatpush.msra.mxu0 0.0
    %2473 = vmatpush.msra.mxu0 0.0
    %2474 = vmatpush.msra.mxu0 0.0
    %v2475 = vand.u32 %v2334, 4294901760
    %2476 = vmatpush.msra.mxu0 %v2475
    %v2477 = vand.u32 %v2333, 4294901760
    %2478 = vmatpush.msra.mxu0 %v2477
    %v2479 = vand.u32 %v2332, 4294901760
    %2480 = vmatpush.msra.mxu0 %v2479
    %v2481 = vand.u32 %v2331, 4294901760
    %2482 = vmatpush.msra.mxu0 %v2481
    %v2483 = vand.u32 %v2455, 4294901760
    %v2484 = vsub.f32 %v2455, %v2483
    %v2485 = vand.u32 %v2484, 4294901760
    %v2486 = vsub.f32 %v2484, %v2485
    %v2487 = vand.u32 %v2486, 4294901760
    %2488 = vmatmul.f32.gmra.mxu0 %v2487
    %v2489 = vpop.f32.mrf.mxu0
    %v2490 = vadd.f32 0.0, %v2489
    %v2491 = vand.u32 %v2457, 4294901760
    %v2492 = vsub.f32 %v2457, %v2491
    %v2493 = vand.u32 %v2492, 4294901760
    %v2494 = vsub.f32 %v2492, %v2493
    %v2495 = vand.u32 %v2494, 4294901760
    %2496 = vmatmul.f32.gmra.mxu0 %v2495
    %v2497 = vpop.f32.mrf.mxu0
    %v2498 = vadd.f32 0.0, %v2497
    %v2499 = vand.u32 %v2459, 4294901760
    %v2500 = vsub.f32 %v2459, %v2499
    %v2501 = vand.u32 %v2500, 4294901760
    %v2502 = vsub.f32 %v2500, %v2501
    %v2503 = vand.u32 %v2502, 4294901760
    %2504 = vmatmul.f32.gmra.mxu0 %v2503
    %v2505 = vpop.f32.mrf.mxu0
    %v2506 = vadd.f32 0.0, %v2505
    %v2507 = vand.u32 %v2461, 4294901760
    %v2508 = vsub.f32 %v2461, %v2507
    %v2509 = vand.u32 %v2508, 4294901760
    %v2510 = vsub.f32 %v2508, %v2509
    %v2511 = vand.u32 %v2510, 4294901760
    %2512 = vmatmul.f32.gmra.mxu0 %v2511
    %v2513 = vpop.f32.mrf.mxu0
    %v2514 = vadd.f32 0.0, %v2513
    %2515 = vdwg.mxu0
    %2516 = vmatpush.msra.mxu0 0.0
    %2517 = vmatpush.msra.mxu0 0.0
    %2518 = vmatpush.msra.mxu0 0.0
    %2519 = vmatpush.msra.mxu0 0.0
    %2520 = vmatpush.msra.mxu0 0.0
    %2521 = vmatpush.msra.mxu0 0.0
    %2522 = vmatpush.msra.mxu0 0.0
    %2523 = vmatpush.msra.mxu0 0.0
    %2524 = vmatpush.msra.mxu0 0.0
    %2525 = vmatpush.msra.mxu0 0.0
    %2526 = vmatpush.msra.mxu0 0.0
    %2527 = vmatpush.msra.mxu0 0.0
    %v2528 = vand.u32 %v2334, 4294901760
    %v2529 = vsub.f32 %v2334, %v2528
    %v2530 = vand.u32 %v2529, 4294901760
    %v2531 = vsub.f32 %v2529, %v2530
    %v2532 = vand.u32 %v2531, 4294901760
    %2533 = vmatpush.msra.mxu0 %v2532
    %v2534 = vand.u32 %v2333, 4294901760
    %v2535 = vsub.f32 %v2333, %v2534
    %v2536 = vand.u32 %v2535, 4294901760
    %v2537 = vsub.f32 %v2535, %v2536
    %v2538 = vand.u32 %v2537, 4294901760
    %2539 = vmatpush.msra.mxu0 %v2538
    %v2540 = vand.u32 %v2332, 4294901760
    %v2541 = vsub.f32 %v2332, %v2540
    %v2542 = vand.u32 %v2541, 4294901760
    %v2543 = vsub.f32 %v2541, %v2542
    %v2544 = vand.u32 %v2543, 4294901760
    %2545 = vmatpush.msra.mxu0 %v2544
    %v2546 = vand.u32 %v2331, 4294901760
    %v2547 = vsub.f32 %v2331, %v2546
    %v2548 = vand.u32 %v2547, 4294901760
    %v2549 = vsub.f32 %v2547, %v2548
    %v2550 = vand.u32 %v2549, 4294901760
    %2551 = vmatpush.msra.mxu0 %v2550
    %v2552 = vand.u32 %v2455, 4294901760
    %2553 = vmatmul.f32.gmra.mxu0 %v2552
    %v2554 = vpop.f32.mrf.mxu0
    %v2555 = vadd.f32 %v2490, %v2554
    %v2556 = vand.u32 %v2457, 4294901760
    %2557 = vmatmul.f32.gmra.mxu0 %v2556
    %v2558 = vpop.f32.mrf.mxu0
    %v2559 = vadd.f32 %v2498, %v2558
    %v2560 = vand.u32 %v2459, 4294901760
    %2561 = vmatmul.f32.gmra.mxu0 %v2560
    %v2562 = vpop.f32.mrf.mxu0
    %v2563 = vadd.f32 %v2506, %v2562
    %v2564 = vand.u32 %v2461, 4294901760
    %2565 = vmatmul.f32.gmra.mxu0 %v2564
    %v2566 = vpop.f32.mrf.mxu0
    %v2567 = vadd.f32 %v2514, %v2566
    %2568 = vdwg.mxu0
    %2569 = vmatpush.msra.mxu0 0.0
    %2570 = vmatpush.msra.mxu0 0.0
    %2571 = vmatpush.msra.mxu0 0.0
    %2572 = vmatpush.msra.mxu0 0.0
    %2573 = vmatpush.msra.mxu0 0.0
    %2574 = vmatpush.msra.mxu0 0.0
    %2575 = vmatpush.msra.mxu0 0.0
    %2576 = vmatpush.msra.mxu0 0.0
    %2577 = vmatpush.msra.mxu0 0.0
    %2578 = vmatpush.msra.mxu0 0.0
    %2579 = vmatpush.msra.mxu0 0.0
    %2580 = vmatpush.msra.mxu0 0.0
    %v2581 = vand.u32 %v2334, 4294901760
    %v2582 = vsub.f32 %v2334, %v2581
    %2583 = vmatpush.msra.mxu0 %v2582
    %v2584 = vand.u32 %v2333, 4294901760
    %v2585 = vsub.f32 %v2333, %v2584
    %2586 = vmatpush.msra.mxu0 %v2585
    %v2587 = vand.u32 %v2332, 4294901760
    %v2588 = vsub.f32 %v2332, %v2587
    %2589 = vmatpush.msra.mxu0 %v2588
    %v2590 = vand.u32 %v2331, 4294901760
    %v2591 = vsub.f32 %v2331, %v2590
    %2592 = vmatpush.msra.mxu0 %v2591
    %v2593 = vand.u32 %v2455, 4294901760
    %v2594 = vsub.f32 %v2455, %v2593
    %2595 = vmatmul.f32.gmra.mxu0 %v2594
    %v2596 = vpop.f32.mrf.mxu0
    %v2597 = vadd.f32 %v2555, %v2596
    %v2598 = vand.u32 %v2457, 4294901760
    %v2599 = vsub.f32 %v2457, %v2598
    %2600 = vmatmul.f32.gmra.mxu0 %v2599
    %v2601 = vpop.f32.mrf.mxu0
    %v2602 = vadd.f32 %v2559, %v2601
    %v2603 = vand.u32 %v2459, 4294901760
    %v2604 = vsub.f32 %v2459, %v2603
    %2605 = vmatmul.f32.gmra.mxu0 %v2604
    %v2606 = vpop.f32.mrf.mxu0
    %v2607 = vadd.f32 %v2563, %v2606
    %v2608 = vand.u32 %v2461, 4294901760
    %v2609 = vsub.f32 %v2461, %v2608
    %2610 = vmatmul.f32.gmra.mxu0 %v2609
    %v2611 = vpop.f32.mrf.mxu0
    %v2612 = vadd.f32 %v2567, %v2611
    %2613 = vdwg.mxu0
    %2614 = vmatpush.msra.mxu0 0.0
    %2615 = vmatpush.msra.mxu0 0.0
    %2616 = vmatpush.msra.mxu0 0.0
    %2617 = vmatpush.msra.mxu0 0.0
    %2618 = vmatpush.msra.mxu0 0.0
    %2619 = vmatpush.msra.mxu0 0.0
    %2620 = vmatpush.msra.mxu0 0.0
    %2621 = vmatpush.msra.mxu0 0.0
    %2622 = vmatpush.msra.mxu0 0.0
    %2623 = vmatpush.msra.mxu0 0.0
    %2624 = vmatpush.msra.mxu0 0.0
    %2625 = vmatpush.msra.mxu0 0.0
    %v2626 = vand.u32 %v2334, 4294901760
    %2627 = vmatpush.msra.mxu0 %v2626
    %v2628 = vand.u32 %v2333, 4294901760
    %2629 = vmatpush.msra.mxu0 %v2628
    %v2630 = vand.u32 %v2332, 4294901760
    %2631 = vmatpush.msra.mxu0 %v2630
    %v2632 = vand.u32 %v2331, 4294901760
    %2633 = vmatpush.msra.mxu0 %v2632
    %v2634 = vand.u32 %v2455, 4294901760
    %v2635 = vsub.f32 %v2455, %v2634
    %v2636 = vand.u32 %v2635, 4294901760
    %2637 = vmatmul.f32.gmra.mxu0 %v2636
    %v2638 = vpop.f32.mrf.mxu0
    %v2639 = vadd.f32 %v2597, %v2638
    %v2640 = vand.u32 %v2457, 4294901760
    %v2641 = vsub.f32 %v2457, %v2640
    %v2642 = vand.u32 %v2641, 4294901760
    %2643 = vmatmul.f32.gmra.mxu0 %v2642
    %v2644 = vpop.f32.mrf.mxu0
    %v2645 = vadd.f32 %v2602, %v2644
    %v2646 = vand.u32 %v2459, 4294901760
    %v2647 = vsub.f32 %v2459, %v2646
    %v2648 = vand.u32 %v2647, 4294901760
    %2649 = vmatmul.f32.gmra.mxu0 %v2648
    %v2650 = vpop.f32.mrf.mxu0
    %v2651 = vadd.f32 %v2607, %v2650
    %v2652 = vand.u32 %v2461, 4294901760
    %v2653 = vsub.f32 %v2461, %v2652
    %v2654 = vand.u32 %v2653, 4294901760
    %2655 = vmatmul.f32.gmra.mxu0 %v2654
    %v2656 = vpop.f32.mrf.mxu0
    %v2657 = vadd.f32 %v2612, %v2656
    %2658 = vdwg.mxu0
    %2659 = vmatpush.msra.mxu0 0.0
    %2660 = vmatpush.msra.mxu0 0.0
    %2661 = vmatpush.msra.mxu0 0.0
    %2662 = vmatpush.msra.mxu0 0.0
    %2663 = vmatpush.msra.mxu0 0.0
    %2664 = vmatpush.msra.mxu0 0.0
    %2665 = vmatpush.msra.mxu0 0.0
    %2666 = vmatpush.msra.mxu0 0.0
    %2667 = vmatpush.msra.mxu0 0.0
    %2668 = vmatpush.msra.mxu0 0.0
    %2669 = vmatpush.msra.mxu0 0.0
    %2670 = vmatpush.msra.mxu0 0.0
    %v2671 = vand.u32 %v2334, 4294901760
    %v2672 = vsub.f32 %v2334, %v2671
    %v2673 = vand.u32 %v2672, 4294901760
    %2674 = vmatpush.msra.mxu0 %v2673
    %v2675 = vand.u32 %v2333, 4294901760
    %v2676 = vsub.f32 %v2333, %v2675
    %v2677 = vand.u32 %v2676, 4294901760
    %2678 = vmatpush.msra.mxu0 %v2677
    %v2679 = vand.u32 %v2332, 4294901760
    %v2680 = vsub.f32 %v2332, %v2679
    %v2681 = vand.u32 %v2680, 4294901760
    %2682 = vmatpush.msra.mxu0 %v2681
    %v2683 = vand.u32 %v2331, 4294901760
    %v2684 = vsub.f32 %v2331, %v2683
    %v2685 = vand.u32 %v2684, 4294901760
    %2686 = vmatpush.msra.mxu0 %v2685
    %v2687 = vand.u32 %v2455, 4294901760
    %2688 = vmatmul.f32.gmra.mxu0 %v2687
    %v2689 = vpop.f32.mrf.mxu0
    %v2690 = vadd.f32 %v2639, %v2689
    %v2691 = vand.u32 %v2457, 4294901760
    %2692 = vmatmul.f32.gmra.mxu0 %v2691
    %v2693 = vpop.f32.mrf.mxu0
    %v2694 = vadd.f32 %v2645, %v2693
    %v2695 = vand.u32 %v2459, 4294901760
    %2696 = vmatmul.f32.gmra.mxu0 %v2695
    %v2697 = vpop.f32.mrf.mxu0
    %v2698 = vadd.f32 %v2651, %v2697
    %v2699 = vand.u32 %v2461, 4294901760
    %2700 = vmatmul.f32.gmra.mxu0 %v2699
    %v2701 = vpop.f32.mrf.mxu0
    %v2702 = vadd.f32 %v2657, %v2701
    %2703 = vdwg.mxu0
    %2704 = vmatpush.msra.mxu0 0.0
    %2705 = vmatpush.msra.mxu0 0.0
    %2706 = vmatpush.msra.mxu0 0.0
    %2707 = vmatpush.msra.mxu0 0.0
    %2708 = vmatpush.msra.mxu0 0.0
    %2709 = vmatpush.msra.mxu0 0.0
    %2710 = vmatpush.msra.mxu0 0.0
    %2711 = vmatpush.msra.mxu0 0.0
    %2712 = vmatpush.msra.mxu0 0.0
    %2713 = vmatpush.msra.mxu0 0.0
    %2714 = vmatpush.msra.mxu0 0.0
    %2715 = vmatpush.msra.mxu0 0.0
    %v2716 = vand.u32 %v2334, 4294901760
    %2717 = vmatpush.msra.mxu0 %v2716
    %v2718 = vand.u32 %v2333, 4294901760
    %2719 = vmatpush.msra.mxu0 %v2718
    %v2720 = vand.u32 %v2332, 4294901760
    %2721 = vmatpush.msra.mxu0 %v2720
    %v2722 = vand.u32 %v2331, 4294901760
    %2723 = vmatpush.msra.mxu0 %v2722
    %v2724 = vand.u32 %v2455, 4294901760
    %2725 = vmatmul.f32.gmra.mxu0 %v2724
    %v2726 = vpop.f32.mrf.mxu0
    %v2727 = vadd.f32 %v2690, %v2726
    %v2728 = vand.u32 %v2457, 4294901760
    %2729 = vmatmul.f32.gmra.mxu0 %v2728
    %v2730 = vpop.f32.mrf.mxu0
    %v2731 = vadd.f32 %v2694, %v2730
    %v2732 = vand.u32 %v2459, 4294901760
    %2733 = vmatmul.f32.gmra.mxu0 %v2732
    %v2734 = vpop.f32.mrf.mxu0
    %v2735 = vadd.f32 %v2698, %v2734
    %v2736 = vand.u32 %v2461, 4294901760
    %2737 = vmatmul.f32.gmra.mxu0 %v2736
    %v2738 = vpop.f32.mrf.mxu0
    %v2739 = vadd.f32 %v2702, %v2738
    %2740 = vdwg.mxu0
    %v2745 = vrot.slane %v2727, 1
    %v2746 = vrot.slane %v2727, 2
    %v2747 = vrot.slane %v2727, 3
    %v2748 = vrot.slane %v2727, 4
    %v2749 = vrot.slane %v2727, 5
    %v2750 = vrot.slane %v2727, 6
    %v2751 = vrot.slane %v2727, 7
    %v2752 = vrot.slane %v2731, 1
    %v2753 = vrot.slane %v2731, 2
    %v2754 = vrot.slane %v2731, 3
    %v2755 = vrot.slane %v2731, 4
    %v2756 = vrot.slane %v2731, 5
    %v2757 = vrot.slane %v2731, 6
    %v2758 = vrot.slane %v2731, 7
    %v2759 = vrot.slane %v2735, 1
    %v2760 = vrot.slane %v2735, 2
    %v2761 = vrot.slane %v2735, 3
    %v2762 = vrot.slane %v2735, 4
    %v2763 = vrot.slane %v2735, 5
    %v2764 = vrot.slane %v2735, 6
    %v2765 = vrot.slane %v2735, 7
    %v2766 = vrot.slane %v2739, 1
    %v2767 = vrot.slane %v2739, 2
    %v2768 = vrot.slane %v2739, 3
    %v2769 = vrot.slane %v2739, 4
    %v2770 = vrot.slane %v2739, 5
    %v2771 = vrot.slane %v2739, 6
    %v2772 = vrot.slane %v2739, 7
    %2801 = vst [vmem:[#allocation2 + $0x4] sm:$0x1] %v2727
    %2802 = vst [vmem:[#allocation2 + $0x14] sm:$0x1] %v2745
    %2803 = vst [vmem:[#allocation2 + $0x24] sm:$0x1] %v2746
    %2804 = vst [vmem:[#allocation2 + $0x34] sm:$0x1] %v2747
    %2805 = vst [vmem:[#allocation2 + $0x44] sm:$0x1] %v2748
    %2806 = vst [vmem:[#allocation2 + $0x54] sm:$0x1] %v2749
    %2807 = vst [vmem:[#allocation2 + $0x64] sm:$0x1] %v2750
    %2808 = vst [vmem:[#allocation2 + $0x74] sm:$0x1] %v2751
    %2809 = vst [vmem:[#allocation2 + $0x84] sm:$0x1] %v2731
    %2810 = vst [vmem:[#allocation2 + $0x94] sm:$0x1] %v2752
    %2811 = vst [vmem:[#allocation2 + $0xa4] sm:$0x1] %v2753
    %2812 = vst [vmem:[#allocation2 + $0xb4] sm:$0x1] %v2754
    %2813 = vst [vmem:[#allocation2 + $0xc4] sm:$0x1] %v2755
    %2814 = vst [vmem:[#allocation2 + $0xd4] sm:$0x1] %v2756
    %2815 = vst [vmem:[#allocation2 + $0xe4] sm:$0x1] %v2757
    %2816 = vst [vmem:[#allocation2 + $0xf4] sm:$0x1] %v2758
    %2817 = vst [vmem:[#allocation2 + $0x104] sm:$0x1] %v2735
    %2818 = vst [vmem:[#allocation2 + $0x114] sm:$0x1] %v2759
    %2819 = vst [vmem:[#allocation2 + $0x124] sm:$0x1] %v2760
    %2820 = vst [vmem:[#allocation2 + $0x134] sm:$0x1] %v2761
    %2821 = vst [vmem:[#allocation2 + $0x144] sm:$0x1] %v2762
    %2822 = vst [vmem:[#allocation2 + $0x154] sm:$0x1] %v2763
    %2823 = vst [vmem:[#allocation2 + $0x164] sm:$0x1] %v2764
    %2824 = vst [vmem:[#allocation2 + $0x174] sm:$0x1] %v2765
    %2825 = vst [vmem:[#allocation2 + $0x184] sm:$0x1] %v2739
    %2826 = vst [vmem:[#allocation2 + $0x194] sm:$0x1] %v2766
    %2827 = vst [vmem:[#allocation2 + $0x1a4] sm:$0x1] %v2767
    %2828 = vst [vmem:[#allocation2 + $0x1b4] sm:$0x1] %v2768
    %2829 = vst [vmem:[#allocation2 + $0x1c4] sm:$0x1] %v2769
    %2830 = vst [vmem:[#allocation2 + $0x1d4] sm:$0x1] %v2770
    %2831 = vst [vmem:[#allocation2 + $0x1e4] sm:$0x1] %v2771
    %2832 = vst [vmem:[#allocation2 + $0x1f4] sm:$0x1] %v2772
    %v2833 = vld [vmem:[%s3 + $0x5] sm:$0x1]
    %v2834 = vperm.slane %v2833, 0
    %vm2835 = vcmp.eq.s32.totalorder %v27, %v2834
    %vm2836 = vcmp.eq.s32.totalorder %v28, %v2834
    %vm2837 = vcmp.eq.s32.totalorder %v263, %v2834
    %vm2838 = vcmp.eq.s32.totalorder %v264, %v2834
    %v2839 = vsel %vm2835, 1, 0
    %v2840 = vsel %vm2836, 1, 0
    %v2841 = vsel %vm2837, 1, 0
    %v2842 = vsel %vm2838, 1, 0
    %v2843 = vcvt.s32.f32 %v2839
    %v2844 = vcvt.s32.f32 %v2840
    %v2845 = vcvt.s32.f32 %v2841
    %v2846 = vcvt.s32.f32 %v2842
    %v2847 = vld [vmem:[%s2 + $0x5] sm:$0x1]
    %v2848 = vld [vmem:[%s2 + $0x15] sm:$0x1]
    %v2849 = vld [vmem:[%s2 + $0x25] sm:$0x1]
    %v2850 = vld [vmem:[%s2 + $0x35] sm:$0x1]
    %v2851 = vld [vmem:[%s2 + $0x45] sm:$0x1]
    %v2852 = vld [vmem:[%s2 + $0x55] sm:$0x1]
    %v2853 = vld [vmem:[%s2 + $0x65] sm:$0x1]
    %v2854 = vld [vmem:[%s2 + $0x75] sm:$0x1]
    %v2855 = vld [vmem:[%s2 + $0x85] sm:$0x1]
    %v2856 = vld [vmem:[%s2 + $0x95] sm:$0x1]
    %v2857 = vld [vmem:[%s2 + $0xa5] sm:$0x1]
    %v2858 = vld [vmem:[%s2 + $0xb5] sm:$0x1]
    %v2859 = vld [vmem:[%s2 + $0xc5] sm:$0x1]
    %v2860 = vld [vmem:[%s2 + $0xd5] sm:$0x1]
    %v2861 = vld [vmem:[%s2 + $0xe5] sm:$0x1]
    %v2862 = vld [vmem:[%s2 + $0xf5] sm:$0x1]
    %v2863 = vld [vmem:[%s2 + $0x105] sm:$0x1]
    %v2864 = vld [vmem:[%s2 + $0x115] sm:$0x1]
    %v2865 = vld [vmem:[%s2 + $0x125] sm:$0x1]
    %v2866 = vld [vmem:[%s2 + $0x135] sm:$0x1]
    %v2867 = vld [vmem:[%s2 + $0x145] sm:$0x1]
    %v2868 = vld [vmem:[%s2 + $0x155] sm:$0x1]
    %v2869 = vld [vmem:[%s2 + $0x165] sm:$0x1]
    %v2870 = vld [vmem:[%s2 + $0x175] sm:$0x1]
    %v2871 = vld [vmem:[%s2 + $0x185] sm:$0x1]
    %v2872 = vld [vmem:[%s2 + $0x195] sm:$0x1]
    %v2873 = vld [vmem:[%s2 + $0x1a5] sm:$0x1]
    %v2874 = vld [vmem:[%s2 + $0x1b5] sm:$0x1]
    %v2875 = vld [vmem:[%s2 + $0x1c5] sm:$0x1]
    %v2876 = vld [vmem:[%s2 + $0x1d5] sm:$0x1]
    %v2877 = vld [vmem:[%s2 + $0x1e5] sm:$0x1]
    %v2878 = vld [vmem:[%s2 + $0x1f5] sm:$0x1]
    %v2911 = vrot.slane %v2848, 7
    %v2912 = vsel %vm344, %v2911, %v2847
    %v2913 = vrot.slane %v2849, 6
    %v2914 = vsel %vm347, %v2913, %v2912
    %v2915 = vrot.slane %v2850, 5
    %v2916 = vsel %vm350, %v2915, %v2914
    %v2917 = vrot.slane %v2851, 4
    %v2918 = vsel %vm353, %v2917, %v2916
    %v2919 = vrot.slane %v2852, 3
    %v2920 = vsel %vm356, %v2919, %v2918
    %v2921 = vrot.slane %v2853, 2
    %v2922 = vsel %vm359, %v2921, %v2920
    %v2923 = vrot.slane %v2854, 1
    %v2924 = vsel %vm362, %v2923, %v2922
    %v2925 = vrot.slane %v2856, 7
    %v2926 = vsel %vm344, %v2925, %v2855
    %v2927 = vrot.slane %v2857, 6
    %v2928 = vsel %vm347, %v2927, %v2926
    %v2929 = vrot.slane %v2858, 5
    %v2930 = vsel %vm350, %v2929, %v2928
    %v2931 = vrot.slane %v2859, 4
    %v2932 = vsel %vm353, %v2931, %v2930
    %v2933 = vrot.slane %v2860, 3
    %v2934 = vsel %vm356, %v2933, %v2932
    %v2935 = vrot.slane %v2861, 2
    %v2936 = vsel %vm359, %v2935, %v2934
    %v2937 = vrot.slane %v2862, 1
    %v2938 = vsel %vm362, %v2937, %v2936
    %v2939 = vrot.slane %v2864, 7
    %v2940 = vsel %vm344, %v2939, %v2863
    %v2941 = vrot.slane %v2865, 6
    %v2942 = vsel %vm347, %v2941, %v2940
    %v2943 = vrot.slane %v2866, 5
    %v2944 = vsel %vm350, %v2943, %v2942
    %v2945 = vrot.slane %v2867, 4
    %v2946 = vsel %vm353, %v2945, %v2944
    %v2947 = vrot.slane %v2868, 3
    %v2948 = vsel %vm356, %v2947, %v2946
    %v2949 = vrot.slane %v2869, 2
    %v2950 = vsel %vm359, %v2949, %v2948
    %v2951 = vrot.slane %v2870, 1
    %v2952 = vsel %vm362, %v2951, %v2950
    %v2953 = vrot.slane %v2872, 7
    %v2954 = vsel %vm344, %v2953, %v2871
    %v2955 = vrot.slane %v2873, 6
    %v2956 = vsel %vm347, %v2955, %v2954
    %v2957 = vrot.slane %v2874, 5
    %v2958 = vsel %vm350, %v2957, %v2956
    %v2959 = vrot.slane %v2875, 4
    %v2960 = vsel %vm353, %v2959, %v2958
    %v2961 = vrot.slane %v2876, 3
    %v2962 = vsel %vm356, %v2961, %v2960
    %v2963 = vrot.slane %v2877, 2
    %v2964 = vsel %vm359, %v2963, %v2962
    %v2965 = vrot.slane %v2878, 1
    %v2966 = vsel %vm362, %v2965, %v2964
    %v2967 = vsel %vm406, %v2924, 0
    %v2969 = vsel %vm406, %v2938, 0
    %v2971 = vsel %vm406, %v2952, 0
    %v2973 = vsel %vm406, %v2966, 0
    %2975 = vmatpush.msra.mxu0 0.0
    %2976 = vmatpush.msra.mxu0 0.0
    %2977 = vmatpush.msra.mxu0 0.0
    %2978 = vmatpush.msra.mxu0 0.0
    %2979 = vmatpush.msra.mxu0 0.0
    %2980 = vmatpush.msra.mxu0 0.0
    %2981 = vmatpush.msra.mxu0 0.0
    %2982 = vmatpush.msra.mxu0 0.0
    %2983 = vmatpush.msra.mxu0 0.0
    %2984 = vmatpush.msra.mxu0 0.0
    %2985 = vmatpush.msra.mxu0 0.0
    %2986 = vmatpush.msra.mxu0 0.0
    %v2987 = vand.u32 %v2846, 4294901760
    %2988 = vmatpush.msra.mxu0 %v2987
    %v2989 = vand.u32 %v2845, 4294901760
    %2990 = vmatpush.msra.mxu0 %v2989
    %v2991 = vand.u32 %v2844, 4294901760
    %2992 = vmatpush.msra.mxu0 %v2991
    %v2993 = vand.u32 %v2843, 4294901760
    %2994 = vmatpush.msra.mxu0 %v2993
    %v2995 = vand.u32 %v2967, 4294901760
    %v2996 = vsub.f32 %v2967, %v2995
    %v2997 = vand.u32 %v2996, 4294901760
    %v2998 = vsub.f32 %v2996, %v2997
    %v2999 = vand.u32 %v2998, 4294901760
    %3000 = vmatmul.f32.gmra.mxu0 %v2999
    %v3001 = vpop.f32.mrf.mxu0
    %v3002 = vadd.f32 0.0, %v3001
    %v3003 = vand.u32 %v2969, 4294901760
    %v3004 = vsub.f32 %v2969, %v3003
    %v3005 = vand.u32 %v3004, 4294901760
    %v3006 = vsub.f32 %v3004, %v3005
    %v3007 = vand.u32 %v3006, 4294901760
    %3008 = vmatmul.f32.gmra.mxu0 %v3007
    %v3009 = vpop.f32.mrf.mxu0
    %v3010 = vadd.f32 0.0, %v3009
    %v3011 = vand.u32 %v2971, 4294901760
    %v3012 = vsub.f32 %v2971, %v3011
    %v3013 = vand.u32 %v3012, 4294901760
    %v3014 = vsub.f32 %v3012, %v3013
    %v3015 = vand.u32 %v3014, 4294901760
    %3016 = vmatmul.f32.gmra.mxu0 %v3015
    %v3017 = vpop.f32.mrf.mxu0
    %v3018 = vadd.f32 0.0, %v3017
    %v3019 = vand.u32 %v2973, 4294901760
    %v3020 = vsub.f32 %v2973, %v3019
    %v3021 = vand.u32 %v3020, 4294901760
    %v3022 = vsub.f32 %v3020, %v3021
    %v3023 = vand.u32 %v3022, 4294901760
    %3024 = vmatmul.f32.gmra.mxu0 %v3023
    %v3025 = vpop.f32.mrf.mxu0
    %v3026 = vadd.f32 0.0, %v3025
    %3027 = vdwg.mxu0
    %3028 = vmatpush.msra.mxu0 0.0
    %3029 = vmatpush.msra.mxu0 0.0
    %3030 = vmatpush.msra.mxu0 0.0
    %3031 = vmatpush.msra.mxu0 0.0
    %3032 = vmatpush.msra.mxu0 0.0
    %3033 = vmatpush.msra.mxu0 0.0
    %3034 = vmatpush.msra.mxu0 0.0
    %3035 = vmatpush.msra.mxu0 0.0
    %3036 = vmatpush.msra.mxu0 0.0
    %3037 = vmatpush.msra.mxu0 0.0
    %3038 = vmatpush.msra.mxu0 0.0
    %3039 = vmatpush.msra.mxu0 0.0
    %v3040 = vand.u32 %v2846, 4294901760
    %v3041 = vsub.f32 %v2846, %v3040
    %v3042 = vand.u32 %v3041, 4294901760
    %v3043 = vsub.f32 %v3041, %v3042
    %v3044 = vand.u32 %v3043, 4294901760
    %3045 = vmatpush.msra.mxu0 %v3044
    %v3046 = vand.u32 %v2845, 4294901760
    %v3047 = vsub.f32 %v2845, %v3046
    %v3048 = vand.u32 %v3047, 4294901760
    %v3049 = vsub.f32 %v3047, %v3048
    %v3050 = vand.u32 %v3049, 4294901760
    %3051 = vmatpush.msra.mxu0 %v3050
    %v3052 = vand.u32 %v2844, 4294901760
    %v3053 = vsub.f32 %v2844, %v3052
    %v3054 = vand.u32 %v3053, 4294901760
    %v3055 = vsub.f32 %v3053, %v3054
    %v3056 = vand.u32 %v3055, 4294901760
    %3057 = vmatpush.msra.mxu0 %v3056
    %v3058 = vand.u32 %v2843, 4294901760
    %v3059 = vsub.f32 %v2843, %v3058
    %v3060 = vand.u32 %v3059, 4294901760
    %v3061 = vsub.f32 %v3059, %v3060
    %v3062 = vand.u32 %v3061, 4294901760
    %3063 = vmatpush.msra.mxu0 %v3062
    %v3064 = vand.u32 %v2967, 4294901760
    %3065 = vmatmul.f32.gmra.mxu0 %v3064
    %v3066 = vpop.f32.mrf.mxu0
    %v3067 = vadd.f32 %v3002, %v3066
    %v3068 = vand.u32 %v2969, 4294901760
    %3069 = vmatmul.f32.gmra.mxu0 %v3068
    %v3070 = vpop.f32.mrf.mxu0
    %v3071 = vadd.f32 %v3010, %v3070
    %v3072 = vand.u32 %v2971, 4294901760
    %3073 = vmatmul.f32.gmra.mxu0 %v3072
    %v3074 = vpop.f32.mrf.mxu0
    %v3075 = vadd.f32 %v3018, %v3074
    %v3076 = vand.u32 %v2973, 4294901760
    %3077 = vmatmul.f32.gmra.mxu0 %v3076
    %v3078 = vpop.f32.mrf.mxu0
    %v3079 = vadd.f32 %v3026, %v3078
    %3080 = vdwg.mxu0
    %3081 = vmatpush.msra.mxu0 0.0
    %3082 = vmatpush.msra.mxu0 0.0
    %3083 = vmatpush.msra.mxu0 0.0
    %3084 = vmatpush.msra.mxu0 0.0
    %3085 = vmatpush.msra.mxu0 0.0
    %3086 = vmatpush.msra.mxu0 0.0
    %3087 = vmatpush.msra.mxu0 0.0
    %3088 = vmatpush.msra.mxu0 0.0
    %3089 = vmatpush.msra.mxu0 0.0
    %3090 = vmatpush.msra.mxu0 0.0
    %3091 = vmatpush.msra.mxu0 0.0
    %3092 = vmatpush.msra.mxu0 0.0
    %v3093 = vand.u32 %v2846, 4294901760
    %v3094 = vsub.f32 %v2846, %v3093
    %3095 = vmatpush.msra.mxu0 %v3094
    %v3096 = vand.u32 %v2845, 4294901760
    %v3097 = vsub.f32 %v2845, %v3096
    %3098 = vmatpush.msra.mxu0 %v3097
    %v3099 = vand.u32 %v2844, 4294901760
    %v3100 = vsub.f32 %v2844, %v3099
    %3101 = vmatpush.msra.mxu0 %v3100
    %v3102 = vand.u32 %v2843, 4294901760
    %v3103 = vsub.f32 %v2843, %v3102
    %3104 = vmatpush.msra.mxu0 %v3103
    %v3105 = vand.u32 %v2967, 4294901760
    %v3106 = vsub.f32 %v2967, %v3105
    %3107 = vmatmul.f32.gmra.mxu0 %v3106
    %v3108 = vpop.f32.mrf.mxu0
    %v3109 = vadd.f32 %v3067, %v3108
    %v3110 = vand.u32 %v2969, 4294901760
    %v3111 = vsub.f32 %v2969, %v3110
    %3112 = vmatmul.f32.gmra.mxu0 %v3111
    %v3113 = vpop.f32.mrf.mxu0
    %v3114 = vadd.f32 %v3071, %v3113
    %v3115 = vand.u32 %v2971, 4294901760
    %v3116 = vsub.f32 %v2971, %v3115
    %3117 = vmatmul.f32.gmra.mxu0 %v3116
    %v3118 = vpop.f32.mrf.mxu0
    %v3119 = vadd.f32 %v3075, %v3118
    %v3120 = vand.u32 %v2973, 4294901760
    %v3121 = vsub.f32 %v2973, %v3120
    %3122 = vmatmul.f32.gmra.mxu0 %v3121
    %v3123 = vpop.f32.mrf.mxu0
    %v3124 = vadd.f32 %v3079, %v3123
    %3125 = vdwg.mxu0
    %3126 = vmatpush.msra.mxu0 0.0
    %3127 = vmatpush.msra.mxu0 0.0
    %3128 = vmatpush.msra.mxu0 0.0
    %3129 = vmatpush.msra.mxu0 0.0
    %3130 = vmatpush.msra.mxu0 0.0
    %3131 = vmatpush.msra.mxu0 0.0
    %3132 = vmatpush.msra.mxu0 0.0
    %3133 = vmatpush.msra.mxu0 0.0
    %3134 = vmatpush.msra.mxu0 0.0
    %3135 = vmatpush.msra.mxu0 0.0
    %3136 = vmatpush.msra.mxu0 0.0
    %3137 = vmatpush.msra.mxu0 0.0
    %v3138 = vand.u32 %v2846, 4294901760
    %3139 = vmatpush.msra.mxu0 %v3138
    %v3140 = vand.u32 %v2845, 4294901760
    %3141 = vmatpush.msra.mxu0 %v3140
    %v3142 = vand.u32 %v2844, 4294901760
    %3143 = vmatpush.msra.mxu0 %v3142
    %v3144 = vand.u32 %v2843, 4294901760
    %3145 = vmatpush.msra.mxu0 %v3144
    %v3146 = vand.u32 %v2967, 4294901760
    %v3147 = vsub.f32 %v2967, %v3146
    %v3148 = vand.u32 %v3147, 4294901760
    %3149 = vmatmul.f32.gmra.mxu0 %v3148
    %v3150 = vpop.f32.mrf.mxu0
    %v3151 = vadd.f32 %v3109, %v3150
    %v3152 = vand.u32 %v2969, 4294901760
    %v3153 = vsub.f32 %v2969, %v3152
    %v3154 = vand.u32 %v3153, 4294901760
    %3155 = vmatmul.f32.gmra.mxu0 %v3154
    %v3156 = vpop.f32.mrf.mxu0
    %v3157 = vadd.f32 %v3114, %v3156
    %v3158 = vand.u32 %v2971, 4294901760
    %v3159 = vsub.f32 %v2971, %v3158
    %v3160 = vand.u32 %v3159, 4294901760
    %3161 = vmatmul.f32.gmra.mxu0 %v3160
    %v3162 = vpop.f32.mrf.mxu0
    %v3163 = vadd.f32 %v3119, %v3162
    %v3164 = vand.u32 %v2973, 4294901760
    %v3165 = vsub.f32 %v2973, %v3164
    %v3166 = vand.u32 %v3165, 4294901760
    %3167 = vmatmul.f32.gmra.mxu0 %v3166
    %v3168 = vpop.f32.mrf.mxu0
    %v3169 = vadd.f32 %v3124, %v3168
    %3170 = vdwg.mxu0
    %3171 = vmatpush.msra.mxu0 0.0
    %3172 = vmatpush.msra.mxu0 0.0
    %3173 = vmatpush.msra.mxu0 0.0
    %3174 = vmatpush.msra.mxu0 0.0
    %3175 = vmatpush.msra.mxu0 0.0
    %3176 = vmatpush.msra.mxu0 0.0
    %3177 = vmatpush.msra.mxu0 0.0
    %3178 = vmatpush.msra.mxu0 0.0
    %3179 = vmatpush.msra.mxu0 0.0
    %3180 = vmatpush.msra.mxu0 0.0
    %3181 = vmatpush.msra.mxu0 0.0
    %3182 = vmatpush.msra.mxu0 0.0
    %v3183 = vand.u32 %v2846, 4294901760
    %v3184 = vsub.f32 %v2846, %v3183
    %v3185 = vand.u32 %v3184, 4294901760
    %3186 = vmatpush.msra.mxu0 %v3185
    %v3187 = vand.u32 %v2845, 4294901760
    %v3188 = vsub.f32 %v2845, %v3187
    %v3189 = vand.u32 %v3188, 4294901760
    %3190 = vmatpush.msra.mxu0 %v3189
    %v3191 = vand.u32 %v2844, 4294901760
    %v3192 = vsub.f32 %v2844, %v3191
    %v3193 = vand.u32 %v3192, 4294901760
    %3194 = vmatpush.msra.mxu0 %v3193
    %v3195 = vand.u32 %v2843, 4294901760
    %v3196 = vsub.f32 %v2843, %v3195
    %v3197 = vand.u32 %v3196, 4294901760
    %3198 = vmatpush.msra.mxu0 %v3197
    %v3199 = vand.u32 %v2967, 4294901760
    %3200 = vmatmul.f32.gmra.mxu0 %v3199
    %v3201 = vpop.f32.mrf.mxu0
    %v3202 = vadd.f32 %v3151, %v3201
    %v3203 = vand.u32 %v2969, 4294901760
    %3204 = vmatmul.f32.gmra.mxu0 %v3203
    %v3205 = vpop.f32.mrf.mxu0
    %v3206 = vadd.f32 %v3157, %v3205
    %v3207 = vand.u32 %v2971, 4294901760
    %3208 = vmatmul.f32.gmra.mxu0 %v3207
    %v3209 = vpop.f32.mrf.mxu0
    %v3210 = vadd.f32 %v3163, %v3209
    %v3211 = vand.u32 %v2973, 4294901760
    %3212 = vmatmul.f32.gmra.mxu0 %v3211
    %v3213 = vpop.f32.mrf.mxu0
    %v3214 = vadd.f32 %v3169, %v3213
    %3215 = vdwg.mxu0
    %3216 = vmatpush.msra.mxu0 0.0
    %3217 = vmatpush.msra.mxu0 0.0
    %3218 = vmatpush.msra.mxu0 0.0
    %3219 = vmatpush.msra.mxu0 0.0
    %3220 = vmatpush.msra.mxu0 0.0
    %3221 = vmatpush.msra.mxu0 0.0
    %3222 = vmatpush.msra.mxu0 0.0
    %3223 = vmatpush.msra.mxu0 0.0
    %3224 = vmatpush.msra.mxu0 0.0
    %3225 = vmatpush.msra.mxu0 0.0
    %3226 = vmatpush.msra.mxu0 0.0
    %3227 = vmatpush.msra.mxu0 0.0
    %v3228 = vand.u32 %v2846, 4294901760
    %3229 = vmatpush.msra.mxu0 %v3228
    %v3230 = vand.u32 %v2845, 4294901760
    %3231 = vmatpush.msra.mxu0 %v3230
    %v3232 = vand.u32 %v2844, 4294901760
    %3233 = vmatpush.msra.mxu0 %v3232
    %v3234 = vand.u32 %v2843, 4294901760
    %3235 = vmatpush.msra.mxu0 %v3234
    %v3236 = vand.u32 %v2967, 4294901760
    %3237 = vmatmul.f32.gmra.mxu0 %v3236
    %v3238 = vpop.f32.mrf.mxu0
    %v3239 = vadd.f32 %v3202, %v3238
    %v3240 = vand.u32 %v2969, 4294901760
    %3241 = vmatmul.f32.gmra.mxu0 %v3240
    %v3242 = vpop.f32.mrf.mxu0
    %v3243 = vadd.f32 %v3206, %v3242
    %v3244 = vand.u32 %v2971, 4294901760
    %3245 = vmatmul.f32.gmra.mxu0 %v3244
    %v3246 = vpop.f32.mrf.mxu0
    %v3247 = vadd.f32 %v3210, %v3246
    %v3248 = vand.u32 %v2973, 4294901760
    %3249 = vmatmul.f32.gmra.mxu0 %v3248
    %v3250 = vpop.f32.mrf.mxu0
    %v3251 = vadd.f32 %v3214, %v3250
    %3252 = vdwg.mxu0
    %v3257 = vrot.slane %v3239, 1
    %v3258 = vrot.slane %v3239, 2
    %v3259 = vrot.slane %v3239, 3
    %v3260 = vrot.slane %v3239, 4
    %v3261 = vrot.slane %v3239, 5
    %v3262 = vrot.slane %v3239, 6
    %v3263 = vrot.slane %v3239, 7
    %v3264 = vrot.slane %v3243, 1
    %v3265 = vrot.slane %v3243, 2
    %v3266 = vrot.slane %v3243, 3
    %v3267 = vrot.slane %v3243, 4
    %v3268 = vrot.slane %v3243, 5
    %v3269 = vrot.slane %v3243, 6
    %v3270 = vrot.slane %v3243, 7
    %v3271 = vrot.slane %v3247, 1
    %v3272 = vrot.slane %v3247, 2
    %v3273 = vrot.slane %v3247, 3
    %v3274 = vrot.slane %v3247, 4
    %v3275 = vrot.slane %v3247, 5
    %v3276 = vrot.slane %v3247, 6
    %v3277 = vrot.slane %v3247, 7
    %v3278 = vrot.slane %v3251, 1
    %v3279 = vrot.slane %v3251, 2
    %v3280 = vrot.slane %v3251, 3
    %v3281 = vrot.slane %v3251, 4
    %v3282 = vrot.slane %v3251, 5
    %v3283 = vrot.slane %v3251, 6
    %v3284 = vrot.slane %v3251, 7
    %3313 = vst [vmem:[#allocation2 + $0x5] sm:$0x1] %v3239
    %3314 = vst [vmem:[#allocation2 + $0x15] sm:$0x1] %v3257
    %3315 = vst [vmem:[#allocation2 + $0x25] sm:$0x1] %v3258
    %3316 = vst [vmem:[#allocation2 + $0x35] sm:$0x1] %v3259
    %3317 = vst [vmem:[#allocation2 + $0x45] sm:$0x1] %v3260
    %3318 = vst [vmem:[#allocation2 + $0x55] sm:$0x1] %v3261
    %3319 = vst [vmem:[#allocation2 + $0x65] sm:$0x1] %v3262
    %3320 = vst [vmem:[#allocation2 + $0x75] sm:$0x1] %v3263
    %3321 = vst [vmem:[#allocation2 + $0x85] sm:$0x1] %v3243
    %3322 = vst [vmem:[#allocation2 + $0x95] sm:$0x1] %v3264
    %3323 = vst [vmem:[#allocation2 + $0xa5] sm:$0x1] %v3265
    %3324 = vst [vmem:[#allocation2 + $0xb5] sm:$0x1] %v3266
    %3325 = vst [vmem:[#allocation2 + $0xc5] sm:$0x1] %v3267
    %3326 = vst [vmem:[#allocation2 + $0xd5] sm:$0x1] %v3268
    %3327 = vst [vmem:[#allocation2 + $0xe5] sm:$0x1] %v3269
    %3328 = vst [vmem:[#allocation2 + $0xf5] sm:$0x1] %v3270
    %3329 = vst [vmem:[#allocation2 + $0x105] sm:$0x1] %v3247
    %3330 = vst [vmem:[#allocation2 + $0x115] sm:$0x1] %v3271
    %3331 = vst [vmem:[#allocation2 + $0x125] sm:$0x1] %v3272
    %3332 = vst [vmem:[#allocation2 + $0x135] sm:$0x1] %v3273
    %3333 = vst [vmem:[#allocation2 + $0x145] sm:$0x1] %v3274
    %3334 = vst [vmem:[#allocation2 + $0x155] sm:$0x1] %v3275
    %3335 = vst [vmem:[#allocation2 + $0x165] sm:$0x1] %v3276
    %3336 = vst [vmem:[#allocation2 + $0x175] sm:$0x1] %v3277
    %3337 = vst [vmem:[#allocation2 + $0x185] sm:$0x1] %v3251
    %3338 = vst [vmem:[#allocation2 + $0x195] sm:$0x1] %v3278
    %3339 = vst [vmem:[#allocation2 + $0x1a5] sm:$0x1] %v3279
    %3340 = vst [vmem:[#allocation2 + $0x1b5] sm:$0x1] %v3280
    %3341 = vst [vmem:[#allocation2 + $0x1c5] sm:$0x1] %v3281
    %3342 = vst [vmem:[#allocation2 + $0x1d5] sm:$0x1] %v3282
    %3343 = vst [vmem:[#allocation2 + $0x1e5] sm:$0x1] %v3283
    %3344 = vst [vmem:[#allocation2 + $0x1f5] sm:$0x1] %v3284
    %v3345 = vld [vmem:[%s3 + $0x6] sm:$0x1]
    %v3346 = vperm.slane %v3345, 0
    %vm3347 = vcmp.eq.s32.totalorder %v27, %v3346
    %vm3348 = vcmp.eq.s32.totalorder %v28, %v3346
    %vm3349 = vcmp.eq.s32.totalorder %v263, %v3346
    %vm3350 = vcmp.eq.s32.totalorder %v264, %v3346
    %v3351 = vsel %vm3347, 1, 0
    %v3352 = vsel %vm3348, 1, 0
    %v3353 = vsel %vm3349, 1, 0
    %v3354 = vsel %vm3350, 1, 0
    %v3355 = vcvt.s32.f32 %v3351
    %v3356 = vcvt.s32.f32 %v3352
    %v3357 = vcvt.s32.f32 %v3353
    %v3358 = vcvt.s32.f32 %v3354
    %v3359 = vld [vmem:[%s2 + $0x6] sm:$0x1]
    %v3360 = vld [vmem:[%s2 + $0x16] sm:$0x1]
    %v3361 = vld [vmem:[%s2 + $0x26] sm:$0x1]
    %v3362 = vld [vmem:[%s2 + $0x36] sm:$0x1]
    %v3363 = vld [vmem:[%s2 + $0x46] sm:$0x1]
    %v3364 = vld [vmem:[%s2 + $0x56] sm:$0x1]
    %v3365 = vld [vmem:[%s2 + $0x66] sm:$0x1]
    %v3366 = vld [vmem:[%s2 + $0x76] sm:$0x1]
    %v3367 = vld [vmem:[%s2 + $0x86] sm:$0x1]
    %v3368 = vld [vmem:[%s2 + $0x96] sm:$0x1]
    %v3369 = vld [vmem:[%s2 + $0xa6] sm:$0x1]
    %v3370 = vld [vmem:[%s2 + $0xb6] sm:$0x1]
    %v3371 = vld [vmem:[%s2 + $0xc6] sm:$0x1]
    %v3372 = vld [vmem:[%s2 + $0xd6] sm:$0x1]
    %v3373 = vld [vmem:[%s2 + $0xe6] sm:$0x1]
    %v3374 = vld [vmem:[%s2 + $0xf6] sm:$0x1]
    %v3375 = vld [vmem:[%s2 + $0x106] sm:$0x1]
    %v3376 = vld [vmem:[%s2 + $0x116] sm:$0x1]
    %v3377 = vld [vmem:[%s2 + $0x126] sm:$0x1]
    %v3378 = vld [vmem:[%s2 + $0x136] sm:$0x1]
    %v3379 = vld [vmem:[%s2 + $0x146] sm:$0x1]
    %v3380 = vld [vmem:[%s2 + $0x156] sm:$0x1]
    %v3381 = vld [vmem:[%s2 + $0x166] sm:$0x1]
    %v3382 = vld [vmem:[%s2 + $0x176] sm:$0x1]
    %v3383 = vld [vmem:[%s2 + $0x186] sm:$0x1]
    %v3384 = vld [vmem:[%s2 + $0x196] sm:$0x1]
    %v3385 = vld [vmem:[%s2 + $0x1a6] sm:$0x1]
    %v3386 = vld [vmem:[%s2 + $0x1b6] sm:$0x1]
    %v3387 = vld [vmem:[%s2 + $0x1c6] sm:$0x1]
    %v3388 = vld [vmem:[%s2 + $0x1d6] sm:$0x1]
    %v3389 = vld [vmem:[%s2 + $0x1e6] sm:$0x1]
    %v3390 = vld [vmem:[%s2 + $0x1f6] sm:$0x1]
    %v3423 = vrot.slane %v3360, 7
    %v3424 = vsel %vm344, %v3423, %v3359
    %v3425 = vrot.slane %v3361, 6
    %v3426 = vsel %vm347, %v3425, %v3424
    %v3427 = vrot.slane %v3362, 5
    %v3428 = vsel %vm350, %v3427, %v3426
    %v3429 = vrot.slane %v3363, 4
    %v3430 = vsel %vm353, %v3429, %v3428
    %v3431 = vrot.slane %v3364, 3
    %v3432 = vsel %vm356, %v3431, %v3430
    %v3433 = vrot.slane %v3365, 2
    %v3434 = vsel %vm359, %v3433, %v3432
    %v3435 = vrot.slane %v3366, 1
    %v3436 = vsel %vm362, %v3435, %v3434
    %v3437 = vrot.slane %v3368, 7
    %v3438 = vsel %vm344, %v3437, %v3367
    %v3439 = vrot.slane %v3369, 6
    %v3440 = vsel %vm347, %v3439, %v3438
    %v3441 = vrot.slane %v3370, 5
    %v3442 = vsel %vm350, %v3441, %v3440
    %v3443 = vrot.slane %v3371, 4
    %v3444 = vsel %vm353, %v3443, %v3442
    %v3445 = vrot.slane %v3372, 3
    %v3446 = vsel %vm356, %v3445, %v3444
    %v3447 = vrot.slane %v3373, 2
    %v3448 = vsel %vm359, %v3447, %v3446
    %v3449 = vrot.slane %v3374, 1
    %v3450 = vsel %vm362, %v3449, %v3448
    %v3451 = vrot.slane %v3376, 7
    %v3452 = vsel %vm344, %v3451, %v3375
    %v3453 = vrot.slane %v3377, 6
    %v3454 = vsel %vm347, %v3453, %v3452
    %v3455 = vrot.slane %v3378, 5
    %v3456 = vsel %vm350, %v3455, %v3454
    %v3457 = vrot.slane %v3379, 4
    %v3458 = vsel %vm353, %v3457, %v3456
    %v3459 = vrot.slane %v3380, 3
    %v3460 = vsel %vm356, %v3459, %v3458
    %v3461 = vrot.slane %v3381, 2
    %v3462 = vsel %vm359, %v3461, %v3460
    %v3463 = vrot.slane %v3382, 1
    %v3464 = vsel %vm362, %v3463, %v3462
    %v3465 = vrot.slane %v3384, 7
    %v3466 = vsel %vm344, %v3465, %v3383
    %v3467 = vrot.slane %v3385, 6
    %v3468 = vsel %vm347, %v3467, %v3466
    %v3469 = vrot.slane %v3386, 5
    %v3470 = vsel %vm350, %v3469, %v3468
    %v3471 = vrot.slane %v3387, 4
    %v3472 = vsel %vm353, %v3471, %v3470
    %v3473 = vrot.slane %v3388, 3
    %v3474 = vsel %vm356, %v3473, %v3472
    %v3475 = vrot.slane %v3389, 2
    %v3476 = vsel %vm359, %v3475, %v3474
    %v3477 = vrot.slane %v3390, 1
    %v3478 = vsel %vm362, %v3477, %v3476
    %v3479 = vsel %vm406, %v3436, 0
    %v3481 = vsel %vm406, %v3450, 0
    %v3483 = vsel %vm406, %v3464, 0
    %v3485 = vsel %vm406, %v3478, 0
    %3487 = vmatpush.msra.mxu0 0.0
    %3488 = vmatpush.msra.mxu0 0.0
    %3489 = vmatpush.msra.mxu0 0.0
    %3490 = vmatpush.msra.mxu0 0.0
    %3491 = vmatpush.msra.mxu0 0.0
    %3492 = vmatpush.msra.mxu0 0.0
    %3493 = vmatpush.msra.mxu0 0.0
    %3494 = vmatpush.msra.mxu0 0.0
    %3495 = vmatpush.msra.mxu0 0.0
    %3496 = vmatpush.msra.mxu0 0.0
    %3497 = vmatpush.msra.mxu0 0.0
    %3498 = vmatpush.msra.mxu0 0.0
    %v3499 = vand.u32 %v3358, 4294901760
    %3500 = vmatpush.msra.mxu0 %v3499
    %v3501 = vand.u32 %v3357, 4294901760
    %3502 = vmatpush.msra.mxu0 %v3501
    %v3503 = vand.u32 %v3356, 4294901760
    %3504 = vmatpush.msra.mxu0 %v3503
    %v3505 = vand.u32 %v3355, 4294901760
    %3506 = vmatpush.msra.mxu0 %v3505
    %v3507 = vand.u32 %v3479, 4294901760
    %v3508 = vsub.f32 %v3479, %v3507
    %v3509 = vand.u32 %v3508, 4294901760
    %v3510 = vsub.f32 %v3508, %v3509
    %v3511 = vand.u32 %v3510, 4294901760
    %3512 = vmatmul.f32.gmra.mxu0 %v3511
    %v3513 = vpop.f32.mrf.mxu0
    %v3514 = vadd.f32 0.0, %v3513
    %v3515 = vand.u32 %v3481, 4294901760
    %v3516 = vsub.f32 %v3481, %v3515
    %v3517 = vand.u32 %v3516, 4294901760
    %v3518 = vsub.f32 %v3516, %v3517
    %v3519 = vand.u32 %v3518, 4294901760
    %3520 = vmatmul.f32.gmra.mxu0 %v3519
    %v3521 = vpop.f32.mrf.mxu0
    %v3522 = vadd.f32 0.0, %v3521
    %v3523 = vand.u32 %v3483, 4294901760
    %v3524 = vsub.f32 %v3483, %v3523
    %v3525 = vand.u32 %v3524, 4294901760
    %v3526 = vsub.f32 %v3524, %v3525
    %v3527 = vand.u32 %v3526, 4294901760
    %3528 = vmatmul.f32.gmra.mxu0 %v3527
    %v3529 = vpop.f32.mrf.mxu0
    %v3530 = vadd.f32 0.0, %v3529
    %v3531 = vand.u32 %v3485, 4294901760
    %v3532 = vsub.f32 %v3485, %v3531
    %v3533 = vand.u32 %v3532, 4294901760
    %v3534 = vsub.f32 %v3532, %v3533
    %v3535 = vand.u32 %v3534, 4294901760
    %3536 = vmatmul.f32.gmra.mxu0 %v3535
    %v3537 = vpop.f32.mrf.mxu0
    %v3538 = vadd.f32 0.0, %v3537
    %3539 = vdwg.mxu0
    %3540 = vmatpush.msra.mxu0 0.0
    %3541 = vmatpush.msra.mxu0 0.0
    %3542 = vmatpush.msra.mxu0 0.0
    %3543 = vmatpush.msra.mxu0 0.0
    %3544 = vmatpush.msra.mxu0 0.0
    %3545 = vmatpush.msra.mxu0 0.0
    %3546 = vmatpush.msra.mxu0 0.0
    %3547 = vmatpush.msra.mxu0 0.0
    %3548 = vmatpush.msra.mxu0 0.0
    %3549 = vmatpush.msra.mxu0 0.0
    %3550 = vmatpush.msra.mxu0 0.0
    %3551 = vmatpush.msra.mxu0 0.0
    %v3552 = vand.u32 %v3358, 4294901760
    %v3553 = vsub.f32 %v3358, %v3552
    %v3554 = vand.u32 %v3553, 4294901760
    %v3555 = vsub.f32 %v3553, %v3554
    %v3556 = vand.u32 %v3555, 4294901760
    %3557 = vmatpush.msra.mxu0 %v3556
    %v3558 = vand.u32 %v3357, 4294901760
    %v3559 = vsub.f32 %v3357, %v3558
    %v3560 = vand.u32 %v3559, 4294901760
    %v3561 = vsub.f32 %v3559, %v3560
    %v3562 = vand.u32 %v3561, 4294901760
    %3563 = vmatpush.msra.mxu0 %v3562
    %v3564 = vand.u32 %v3356, 4294901760
    %v3565 = vsub.f32 %v3356, %v3564
    %v3566 = vand.u32 %v3565, 4294901760
    %v3567 = vsub.f32 %v3565, %v3566
    %v3568 = vand.u32 %v3567, 4294901760
    %3569 = vmatpush.msra.mxu0 %v3568
    %v3570 = vand.u32 %v3355, 4294901760
    %v3571 = vsub.f32 %v3355, %v3570
    %v3572 = vand.u32 %v3571, 4294901760
    %v3573 = vsub.f32 %v3571, %v3572
    %v3574 = vand.u32 %v3573, 4294901760
    %3575 = vmatpush.msra.mxu0 %v3574
    %v3576 = vand.u32 %v3479, 4294901760
    %3577 = vmatmul.f32.gmra.mxu0 %v3576
    %v3578 = vpop.f32.mrf.mxu0
    %v3579 = vadd.f32 %v3514, %v3578
    %v3580 = vand.u32 %v3481, 4294901760
    %3581 = vmatmul.f32.gmra.mxu0 %v3580
    %v3582 = vpop.f32.mrf.mxu0
    %v3583 = vadd.f32 %v3522, %v3582
    %v3584 = vand.u32 %v3483, 4294901760
    %3585 = vmatmul.f32.gmra.mxu0 %v3584
    %v3586 = vpop.f32.mrf.mxu0
    %v3587 = vadd.f32 %v3530, %v3586
    %v3588 = vand.u32 %v3485, 4294901760
    %3589 = vmatmul.f32.gmra.mxu0 %v3588
    %v3590 = vpop.f32.mrf.mxu0
    %v3591 = vadd.f32 %v3538, %v3590
    %3592 = vdwg.mxu0
    %3593 = vmatpush.msra.mxu0 0.0
    %3594 = vmatpush.msra.mxu0 0.0
    %3595 = vmatpush.msra.mxu0 0.0
    %3596 = vmatpush.msra.mxu0 0.0
    %3597 = vmatpush.msra.mxu0 0.0
    %3598 = vmatpush.msra.mxu0 0.0
    %3599 = vmatpush.msra.mxu0 0.0
    %3600 = vmatpush.msra.mxu0 0.0
    %3601 = vmatpush.msra.mxu0 0.0
    %3602 = vmatpush.msra.mxu0 0.0
    %3603 = vmatpush.msra.mxu0 0.0
    %3604 = vmatpush.msra.mxu0 0.0
    %v3605 = vand.u32 %v3358, 4294901760
    %v3606 = vsub.f32 %v3358, %v3605
    %3607 = vmatpush.msra.mxu0 %v3606
    %v3608 = vand.u32 %v3357, 4294901760
    %v3609 = vsub.f32 %v3357, %v3608
    %3610 = vmatpush.msra.mxu0 %v3609
    %v3611 = vand.u32 %v3356, 4294901760
    %v3612 = vsub.f32 %v3356, %v3611
    %3613 = vmatpush.msra.mxu0 %v3612
    %v3614 = vand.u32 %v3355, 4294901760
    %v3615 = vsub.f32 %v3355, %v3614
    %3616 = vmatpush.msra.mxu0 %v3615
    %v3617 = vand.u32 %v3479, 4294901760
    %v3618 = vsub.f32 %v3479, %v3617
    %3619 = vmatmul.f32.gmra.mxu0 %v3618
    %v3620 = vpop.f32.mrf.mxu0
    %v3621 = vadd.f32 %v3579, %v3620
    %v3622 = vand.u32 %v3481, 4294901760
    %v3623 = vsub.f32 %v3481, %v3622
    %3624 = vmatmul.f32.gmra.mxu0 %v3623
    %v3625 = vpop.f32.mrf.mxu0
    %v3626 = vadd.f32 %v3583, %v3625
    %v3627 = vand.u32 %v3483, 4294901760
    %v3628 = vsub.f32 %v3483, %v3627
    %3629 = vmatmul.f32.gmra.mxu0 %v3628
    %v3630 = vpop.f32.mrf.mxu0
    %v3631 = vadd.f32 %v3587, %v3630
    %v3632 = vand.u32 %v3485, 4294901760
    %v3633 = vsub.f32 %v3485, %v3632
    %3634 = vmatmul.f32.gmra.mxu0 %v3633
    %v3635 = vpop.f32.mrf.mxu0
    %v3636 = vadd.f32 %v3591, %v3635
    %3637 = vdwg.mxu0
    %3638 = vmatpush.msra.mxu0 0.0
    %3639 = vmatpush.msra.mxu0 0.0
    %3640 = vmatpush.msra.mxu0 0.0
    %3641 = vmatpush.msra.mxu0 0.0
    %3642 = vmatpush.msra.mxu0 0.0
    %3643 = vmatpush.msra.mxu0 0.0
    %3644 = vmatpush.msra.mxu0 0.0
    %3645 = vmatpush.msra.mxu0 0.0
    %3646 = vmatpush.msra.mxu0 0.0
    %3647 = vmatpush.msra.mxu0 0.0
    %3648 = vmatpush.msra.mxu0 0.0
    %3649 = vmatpush.msra.mxu0 0.0
    %v3650 = vand.u32 %v3358, 4294901760
    %3651 = vmatpush.msra.mxu0 %v3650
    %v3652 = vand.u32 %v3357, 4294901760
    %3653 = vmatpush.msra.mxu0 %v3652
    %v3654 = vand.u32 %v3356, 4294901760
    %3655 = vmatpush.msra.mxu0 %v3654
    %v3656 = vand.u32 %v3355, 4294901760
    %3657 = vmatpush.msra.mxu0 %v3656
    %v3658 = vand.u32 %v3479, 4294901760
    %v3659 = vsub.f32 %v3479, %v3658
    %v3660 = vand.u32 %v3659, 4294901760
    %3661 = vmatmul.f32.gmra.mxu0 %v3660
    %v3662 = vpop.f32.mrf.mxu0
    %v3663 = vadd.f32 %v3621, %v3662
    %v3664 = vand.u32 %v3481, 4294901760
    %v3665 = vsub.f32 %v3481, %v3664
    %v3666 = vand.u32 %v3665, 4294901760
    %3667 = vmatmul.f32.gmra.mxu0 %v3666
    %v3668 = vpop.f32.mrf.mxu0
    %v3669 = vadd.f32 %v3626, %v3668
    %v3670 = vand.u32 %v3483, 4294901760
    %v3671 = vsub.f32 %v3483, %v3670
    %v3672 = vand.u32 %v3671, 4294901760
    %3673 = vmatmul.f32.gmra.mxu0 %v3672
    %v3674 = vpop.f32.mrf.mxu0
    %v3675 = vadd.f32 %v3631, %v3674
    %v3676 = vand.u32 %v3485, 4294901760
    %v3677 = vsub.f32 %v3485, %v3676
    %v3678 = vand.u32 %v3677, 4294901760
    %3679 = vmatmul.f32.gmra.mxu0 %v3678
    %v3680 = vpop.f32.mrf.mxu0
    %v3681 = vadd.f32 %v3636, %v3680
    %3682 = vdwg.mxu0
    %3683 = vmatpush.msra.mxu0 0.0
    %3684 = vmatpush.msra.mxu0 0.0
    %3685 = vmatpush.msra.mxu0 0.0
    %3686 = vmatpush.msra.mxu0 0.0
    %3687 = vmatpush.msra.mxu0 0.0
    %3688 = vmatpush.msra.mxu0 0.0
    %3689 = vmatpush.msra.mxu0 0.0
    %3690 = vmatpush.msra.mxu0 0.0
    %3691 = vmatpush.msra.mxu0 0.0
    %3692 = vmatpush.msra.mxu0 0.0
    %3693 = vmatpush.msra.mxu0 0.0
    %3694 = vmatpush.msra.mxu0 0.0
    %v3695 = vand.u32 %v3358, 4294901760
    %v3696 = vsub.f32 %v3358, %v3695
    %v3697 = vand.u32 %v3696, 4294901760
    %3698 = vmatpush.msra.mxu0 %v3697
    %v3699 = vand.u32 %v3357, 4294901760
    %v3700 = vsub.f32 %v3357, %v3699
    %v3701 = vand.u32 %v3700, 4294901760
    %3702 = vmatpush.msra.mxu0 %v3701
    %v3703 = vand.u32 %v3356, 4294901760
    %v3704 = vsub.f32 %v3356, %v3703
    %v3705 = vand.u32 %v3704, 4294901760
    %3706 = vmatpush.msra.mxu0 %v3705
    %v3707 = vand.u32 %v3355, 4294901760
    %v3708 = vsub.f32 %v3355, %v3707
    %v3709 = vand.u32 %v3708, 4294901760
    %3710 = vmatpush.msra.mxu0 %v3709
    %v3711 = vand.u32 %v3479, 4294901760
    %3712 = vmatmul.f32.gmra.mxu0 %v3711
    %v3713 = vpop.f32.mrf.mxu0
    %v3714 = vadd.f32 %v3663, %v3713
    %v3715 = vand.u32 %v3481, 4294901760
    %3716 = vmatmul.f32.gmra.mxu0 %v3715
    %v3717 = vpop.f32.mrf.mxu0
    %v3718 = vadd.f32 %v3669, %v3717
    %v3719 = vand.u32 %v3483, 4294901760
    %3720 = vmatmul.f32.gmra.mxu0 %v3719
    %v3721 = vpop.f32.mrf.mxu0
    %v3722 = vadd.f32 %v3675, %v3721
    %v3723 = vand.u32 %v3485, 4294901760
    %3724 = vmatmul.f32.gmra.mxu0 %v3723
    %v3725 = vpop.f32.mrf.mxu0
    %v3726 = vadd.f32 %v3681, %v3725
    %3727 = vdwg.mxu0
    %3728 = vmatpush.msra.mxu0 0.0
    %3729 = vmatpush.msra.mxu0 0.0
    %3730 = vmatpush.msra.mxu0 0.0
    %3731 = vmatpush.msra.mxu0 0.0
    %3732 = vmatpush.msra.mxu0 0.0
    %3733 = vmatpush.msra.mxu0 0.0
    %3734 = vmatpush.msra.mxu0 0.0
    %3735 = vmatpush.msra.mxu0 0.0
    %3736 = vmatpush.msra.mxu0 0.0
    %3737 = vmatpush.msra.mxu0 0.0
    %3738 = vmatpush.msra.mxu0 0.0
    %3739 = vmatpush.msra.mxu0 0.0
    %v3740 = vand.u32 %v3358, 4294901760
    %3741 = vmatpush.msra.mxu0 %v3740
    %v3742 = vand.u32 %v3357, 4294901760
    %3743 = vmatpush.msra.mxu0 %v3742
    %v3744 = vand.u32 %v3356, 4294901760
    %3745 = vmatpush.msra.mxu0 %v3744
    %v3746 = vand.u32 %v3355, 4294901760
    %3747 = vmatpush.msra.mxu0 %v3746
    %v3748 = vand.u32 %v3479, 4294901760
    %3749 = vmatmul.f32.gmra.mxu0 %v3748
    %v3750 = vpop.f32.mrf.mxu0
    %v3751 = vadd.f32 %v3714, %v3750
    %v3752 = vand.u32 %v3481, 4294901760
    %3753 = vmatmul.f32.gmra.mxu0 %v3752
    %v3754 = vpop.f32.mrf.mxu0
    %v3755 = vadd.f32 %v3718, %v3754
    %v3756 = vand.u32 %v3483, 4294901760
    %3757 = vmatmul.f32.gmra.mxu0 %v3756
    %v3758 = vpop.f32.mrf.mxu0
    %v3759 = vadd.f32 %v3722, %v3758
    %v3760 = vand.u32 %v3485, 4294901760
    %3761 = vmatmul.f32.gmra.mxu0 %v3760
    %v3762 = vpop.f32.mrf.mxu0
    %v3763 = vadd.f32 %v3726, %v3762
    %3764 = vdwg.mxu0
    %v3769 = vrot.slane %v3751, 1
    %v3770 = vrot.slane %v3751, 2
    %v3771 = vrot.slane %v3751, 3
    %v3772 = vrot.slane %v3751, 4
    %v3773 = vrot.slane %v3751, 5
    %v3774 = vrot.slane %v3751, 6
    %v3775 = vrot.slane %v3751, 7
    %v3776 = vrot.slane %v3755, 1
    %v3777 = vrot.slane %v3755, 2
    %v3778 = vrot.slane %v3755, 3
    %v3779 = vrot.slane %v3755, 4
    %v3780 = vrot.slane %v3755, 5
    %v3781 = vrot.slane %v3755, 6
    %v3782 = vrot.slane %v3755, 7
    %v3783 = vrot.slane %v3759, 1
    %v3784 = vrot.slane %v3759, 2
    %v3785 = vrot.slane %v3759, 3
    %v3786 = vrot.slane %v3759, 4
    %v3787 = vrot.slane %v3759, 5
    %v3788 = vrot.slane %v3759, 6
    %v3789 = vrot.slane %v3759, 7
    %v3790 = vrot.slane %v3763, 1
    %v3791 = vrot.slane %v3763, 2
    %v3792 = vrot.slane %v3763, 3
    %v3793 = vrot.slane %v3763, 4
    %v3794 = vrot.slane %v3763, 5
    %v3795 = vrot.slane %v3763, 6
    %v3796 = vrot.slane %v3763, 7
    %3825 = vst [vmem:[#allocation2 + $0x6] sm:$0x1] %v3751
    %3826 = vst [vmem:[#allocation2 + $0x16] sm:$0x1] %v3769
    %3827 = vst [vmem:[#allocation2 + $0x26] sm:$0x1] %v3770
    %3828 = vst [vmem:[#allocation2 + $0x36] sm:$0x1] %v3771
    %3829 = vst [vmem:[#allocation2 + $0x46] sm:$0x1] %v3772
    %3830 = vst [vmem:[#allocation2 + $0x56] sm:$0x1] %v3773
    %3831 = vst [vmem:[#allocation2 + $0x66] sm:$0x1] %v3774
    %3832 = vst [vmem:[#allocation2 + $0x76] sm:$0x1] %v3775
    %3833 = vst [vmem:[#allocation2 + $0x86] sm:$0x1] %v3755
    %3834 = vst [vmem:[#allocation2 + $0x96] sm:$0x1] %v3776
    %3835 = vst [vmem:[#allocation2 + $0xa6] sm:$0x1] %v3777
    %3836 = vst [vmem:[#allocation2 + $0xb6] sm:$0x1] %v3778
    %3837 = vst [vmem:[#allocation2 + $0xc6] sm:$0x1] %v3779
    %3838 = vst [vmem:[#allocation2 + $0xd6] sm:$0x1] %v3780
    %3839 = vst [vmem:[#allocation2 + $0xe6] sm:$0x1] %v3781
    %3840 = vst [vmem:[#allocation2 + $0xf6] sm:$0x1] %v3782
    %3841 = vst [vmem:[#allocation2 + $0x106] sm:$0x1] %v3759
    %3842 = vst [vmem:[#allocation2 + $0x116] sm:$0x1] %v3783
    %3843 = vst [vmem:[#allocation2 + $0x126] sm:$0x1] %v3784
    %3844 = vst [vmem:[#allocation2 + $0x136] sm:$0x1] %v3785
    %3845 = vst [vmem:[#allocation2 + $0x146] sm:$0x1] %v3786
    %3846 = vst [vmem:[#allocation2 + $0x156] sm:$0x1] %v3787
    %3847 = vst [vmem:[#allocation2 + $0x166] sm:$0x1] %v3788
    %3848 = vst [vmem:[#allocation2 + $0x176] sm:$0x1] %v3789
    %3849 = vst [vmem:[#allocation2 + $0x186] sm:$0x1] %v3763
    %3850 = vst [vmem:[#allocation2 + $0x196] sm:$0x1] %v3790
    %3851 = vst [vmem:[#allocation2 + $0x1a6] sm:$0x1] %v3791
    %3852 = vst [vmem:[#allocation2 + $0x1b6] sm:$0x1] %v3792
    %3853 = vst [vmem:[#allocation2 + $0x1c6] sm:$0x1] %v3793
    %3854 = vst [vmem:[#allocation2 + $0x1d6] sm:$0x1] %v3794
    %3855 = vst [vmem:[#allocation2 + $0x1e6] sm:$0x1] %v3795
    %3856 = vst [vmem:[#allocation2 + $0x1f6] sm:$0x1] %v3796
    %v3857 = vld [vmem:[%s3 + $0x7] sm:$0x1]
    %v3858 = vperm.slane %v3857, 0
    %vm3859 = vcmp.eq.s32.totalorder %v27, %v3858
    %vm3860 = vcmp.eq.s32.totalorder %v28, %v3858
    %vm3861 = vcmp.eq.s32.totalorder %v263, %v3858
    %vm3862 = vcmp.eq.s32.totalorder %v264, %v3858
    %v3863 = vsel %vm3859, 1, 0
    %v3864 = vsel %vm3860, 1, 0
    %v3865 = vsel %vm3861, 1, 0
    %v3866 = vsel %vm3862, 1, 0
    %v3867 = vcvt.s32.f32 %v3863
    %v3868 = vcvt.s32.f32 %v3864
    %v3869 = vcvt.s32.f32 %v3865
    %v3870 = vcvt.s32.f32 %v3866
    %v3871 = vld [vmem:[%s2 + $0x7] sm:$0x1]
    %v3872 = vld [vmem:[%s2 + $0x17] sm:$0x1]
    %v3873 = vld [vmem:[%s2 + $0x27] sm:$0x1]
    %v3874 = vld [vmem:[%s2 + $0x37] sm:$0x1]
    %v3875 = vld [vmem:[%s2 + $0x47] sm:$0x1]
    %v3876 = vld [vmem:[%s2 + $0x57] sm:$0x1]
    %v3877 = vld [vmem:[%s2 + $0x67] sm:$0x1]
    %v3878 = vld [vmem:[%s2 + $0x77] sm:$0x1]
    %v3879 = vld [vmem:[%s2 + $0x87] sm:$0x1]
    %v3880 = vld [vmem:[%s2 + $0x97] sm:$0x1]
    %v3881 = vld [vmem:[%s2 + $0xa7] sm:$0x1]
    %v3882 = vld [vmem:[%s2 + $0xb7] sm:$0x1]
    %v3883 = vld [vmem:[%s2 + $0xc7] sm:$0x1]
    %v3884 = vld [vmem:[%s2 + $0xd7] sm:$0x1]
    %v3885 = vld [vmem:[%s2 + $0xe7] sm:$0x1]
    %v3886 = vld [vmem:[%s2 + $0xf7] sm:$0x1]
    %v3887 = vld [vmem:[%s2 + $0x107] sm:$0x1]
    %v3888 = vld [vmem:[%s2 + $0x117] sm:$0x1]
    %v3889 = vld [vmem:[%s2 + $0x127] sm:$0x1]
    %v3890 = vld [vmem:[%s2 + $0x137] sm:$0x1]
    %v3891 = vld [vmem:[%s2 + $0x147] sm:$0x1]
    %v3892 = vld [vmem:[%s2 + $0x157] sm:$0x1]
    %v3893 = vld [vmem:[%s2 + $0x167] sm:$0x1]
    %v3894 = vld [vmem:[%s2 + $0x177] sm:$0x1]
    %v3895 = vld [vmem:[%s2 + $0x187] sm:$0x1]
    %v3896 = vld [vmem:[%s2 + $0x197] sm:$0x1]
    %v3897 = vld [vmem:[%s2 + $0x1a7] sm:$0x1]
    %v3898 = vld [vmem:[%s2 + $0x1b7] sm:$0x1]
    %v3899 = vld [vmem:[%s2 + $0x1c7] sm:$0x1]
    %v3900 = vld [vmem:[%s2 + $0x1d7] sm:$0x1]
    %v3901 = vld [vmem:[%s2 + $0x1e7] sm:$0x1]
    %v3902 = vld [vmem:[%s2 + $0x1f7] sm:$0x1]
    %v3935 = vrot.slane %v3872, 7
    %v3936 = vsel %vm344, %v3935, %v3871
    %v3937 = vrot.slane %v3873, 6
    %v3938 = vsel %vm347, %v3937, %v3936
    %v3939 = vrot.slane %v3874, 5
    %v3940 = vsel %vm350, %v3939, %v3938
    %v3941 = vrot.slane %v3875, 4
    %v3942 = vsel %vm353, %v3941, %v3940
    %v3943 = vrot.slane %v3876, 3
    %v3944 = vsel %vm356, %v3943, %v3942
    %v3945 = vrot.slane %v3877, 2
    %v3946 = vsel %vm359, %v3945, %v3944
    %v3947 = vrot.slane %v3878, 1
    %v3948 = vsel %vm362, %v3947, %v3946
    %v3949 = vrot.slane %v3880, 7
    %v3950 = vsel %vm344, %v3949, %v3879
    %v3951 = vrot.slane %v3881, 6
    %v3952 = vsel %vm347, %v3951, %v3950
    %v3953 = vrot.slane %v3882, 5
    %v3954 = vsel %vm350, %v3953, %v3952
    %v3955 = vrot.slane %v3883, 4
    %v3956 = vsel %vm353, %v3955, %v3954
    %v3957 = vrot.slane %v3884, 3
    %v3958 = vsel %vm356, %v3957, %v3956
    %v3959 = vrot.slane %v3885, 2
    %v3960 = vsel %vm359, %v3959, %v3958
    %v3961 = vrot.slane %v3886, 1
    %v3962 = vsel %vm362, %v3961, %v3960
    %v3963 = vrot.slane %v3888, 7
    %v3964 = vsel %vm344, %v3963, %v3887
    %v3965 = vrot.slane %v3889, 6
    %v3966 = vsel %vm347, %v3965, %v3964
    %v3967 = vrot.slane %v3890, 5
    %v3968 = vsel %vm350, %v3967, %v3966
    %v3969 = vrot.slane %v3891, 4
    %v3970 = vsel %vm353, %v3969, %v3968
    %v3971 = vrot.slane %v3892, 3
    %v3972 = vsel %vm356, %v3971, %v3970
    %v3973 = vrot.slane %v3893, 2
    %v3974 = vsel %vm359, %v3973, %v3972
    %v3975 = vrot.slane %v3894, 1
    %v3976 = vsel %vm362, %v3975, %v3974
    %v3977 = vrot.slane %v3896, 7
    %v3978 = vsel %vm344, %v3977, %v3895
    %v3979 = vrot.slane %v3897, 6
    %v3980 = vsel %vm347, %v3979, %v3978
    %v3981 = vrot.slane %v3898, 5
    %v3982 = vsel %vm350, %v3981, %v3980
    %v3983 = vrot.slane %v3899, 4
    %v3984 = vsel %vm353, %v3983, %v3982
    %v3985 = vrot.slane %v3900, 3
    %v3986 = vsel %vm356, %v3985, %v3984
    %v3987 = vrot.slane %v3901, 2
    %v3988 = vsel %vm359, %v3987, %v3986
    %v3989 = vrot.slane %v3902, 1
    %v3990 = vsel %vm362, %v3989, %v3988
    %v3991 = vsel %vm406, %v3948, 0
    %v3993 = vsel %vm406, %v3962, 0
    %v3995 = vsel %vm406, %v3976, 0
    %v3997 = vsel %vm406, %v3990, 0
    %3999 = vmatpush.msra.mxu0 0.0
    %4000 = vmatpush.msra.mxu0 0.0
    %4001 = vmatpush.msra.mxu0 0.0
    %4002 = vmatpush.msra.mxu0 0.0
    %4003 = vmatpush.msra.mxu0 0.0
    %4004 = vmatpush.msra.mxu0 0.0
    %4005 = vmatpush.msra.mxu0 0.0
    %4006 = vmatpush.msra.mxu0 0.0
    %4007 = vmatpush.msra.mxu0 0.0
    %4008 = vmatpush.msra.mxu0 0.0
    %4009 = vmatpush.msra.mxu0 0.0
    %4010 = vmatpush.msra.mxu0 0.0
    %v4011 = vand.u32 %v3870, 4294901760
    %4012 = vmatpush.msra.mxu0 %v4011
    %v4013 = vand.u32 %v3869, 4294901760
    %4014 = vmatpush.msra.mxu0 %v4013
    %v4015 = vand.u32 %v3868, 4294901760
    %4016 = vmatpush.msra.mxu0 %v4015
    %v4017 = vand.u32 %v3867, 4294901760
    %4018 = vmatpush.msra.mxu0 %v4017
    %v4019 = vand.u32 %v3991, 4294901760
    %v4020 = vsub.f32 %v3991, %v4019
    %v4021 = vand.u32 %v4020, 4294901760
    %v4022 = vsub.f32 %v4020, %v4021
    %v4023 = vand.u32 %v4022, 4294901760
    %4024 = vmatmul.f32.gmra.mxu0 %v4023
    %v4025 = vpop.f32.mrf.mxu0
    %v4026 = vadd.f32 0.0, %v4025
    %v4027 = vand.u32 %v3993, 4294901760
    %v4028 = vsub.f32 %v3993, %v4027
    %v4029 = vand.u32 %v4028, 4294901760
    %v4030 = vsub.f32 %v4028, %v4029
    %v4031 = vand.u32 %v4030, 4294901760
    %4032 = vmatmul.f32.gmra.mxu0 %v4031
    %v4033 = vpop.f32.mrf.mxu0
    %v4034 = vadd.f32 0.0, %v4033
    %v4035 = vand.u32 %v3995, 4294901760
    %v4036 = vsub.f32 %v3995, %v4035
    %v4037 = vand.u32 %v4036, 4294901760
    %v4038 = vsub.f32 %v4036, %v4037
    %v4039 = vand.u32 %v4038, 4294901760
    %4040 = vmatmul.f32.gmra.mxu0 %v4039
    %v4041 = vpop.f32.mrf.mxu0
    %v4042 = vadd.f32 0.0, %v4041
    %v4043 = vand.u32 %v3997, 4294901760
    %v4044 = vsub.f32 %v3997, %v4043
    %v4045 = vand.u32 %v4044, 4294901760
    %v4046 = vsub.f32 %v4044, %v4045
    %v4047 = vand.u32 %v4046, 4294901760
    %4048 = vmatmul.f32.gmra.mxu0 %v4047
    %v4049 = vpop.f32.mrf.mxu0
    %v4050 = vadd.f32 0.0, %v4049
    %4051 = vdwg.mxu0
    %4052 = vmatpush.msra.mxu0 0.0
    %4053 = vmatpush.msra.mxu0 0.0
    %4054 = vmatpush.msra.mxu0 0.0
    %4055 = vmatpush.msra.mxu0 0.0
    %4056 = vmatpush.msra.mxu0 0.0
    %4057 = vmatpush.msra.mxu0 0.0
    %4058 = vmatpush.msra.mxu0 0.0
    %4059 = vmatpush.msra.mxu0 0.0
    %4060 = vmatpush.msra.mxu0 0.0
    %4061 = vmatpush.msra.mxu0 0.0
    %4062 = vmatpush.msra.mxu0 0.0
    %4063 = vmatpush.msra.mxu0 0.0
    %v4064 = vand.u32 %v3870, 4294901760
    %v4065 = vsub.f32 %v3870, %v4064
    %v4066 = vand.u32 %v4065, 4294901760
    %v4067 = vsub.f32 %v4065, %v4066
    %v4068 = vand.u32 %v4067, 4294901760
    %4069 = vmatpush.msra.mxu0 %v4068
    %v4070 = vand.u32 %v3869, 4294901760
    %v4071 = vsub.f32 %v3869, %v4070
    %v4072 = vand.u32 %v4071, 4294901760
    %v4073 = vsub.f32 %v4071, %v4072
    %v4074 = vand.u32 %v4073, 4294901760
    %4075 = vmatpush.msra.mxu0 %v4074
    %v4076 = vand.u32 %v3868, 4294901760
    %v4077 = vsub.f32 %v3868, %v4076
    %v4078 = vand.u32 %v4077, 4294901760
    %v4079 = vsub.f32 %v4077, %v4078
    %v4080 = vand.u32 %v4079, 4294901760
    %4081 = vmatpush.msra.mxu0 %v4080
    %v4082 = vand.u32 %v3867, 4294901760
    %v4083 = vsub.f32 %v3867, %v4082
    %v4084 = vand.u32 %v4083, 4294901760
    %v4085 = vsub.f32 %v4083, %v4084
    %v4086 = vand.u32 %v4085, 4294901760
    %4087 = vmatpush.msra.mxu0 %v4086
    %v4088 = vand.u32 %v3991, 4294901760
    %4089 = vmatmul.f32.gmra.mxu0 %v4088
    %v4090 = vpop.f32.mrf.mxu0
    %v4091 = vadd.f32 %v4026, %v4090
    %v4092 = vand.u32 %v3993, 4294901760
    %4093 = vmatmul.f32.gmra.mxu0 %v4092
    %v4094 = vpop.f32.mrf.mxu0
    %v4095 = vadd.f32 %v4034, %v4094
    %v4096 = vand.u32 %v3995, 4294901760
    %4097 = vmatmul.f32.gmra.mxu0 %v4096
    %v4098 = vpop.f32.mrf.mxu0
    %v4099 = vadd.f32 %v4042, %v4098
    %v4100 = vand.u32 %v3997, 4294901760
    %4101 = vmatmul.f32.gmra.mxu0 %v4100
    %v4102 = vpop.f32.mrf.mxu0
    %v4103 = vadd.f32 %v4050, %v4102
    %4104 = vdwg.mxu0
    %4105 = vmatpush.msra.mxu0 0.0
    %4106 = vmatpush.msra.mxu0 0.0
    %4107 = vmatpush.msra.mxu0 0.0
    %4108 = vmatpush.msra.mxu0 0.0
    %4109 = vmatpush.msra.mxu0 0.0
    %4110 = vmatpush.msra.mxu0 0.0
    %4111 = vmatpush.msra.mxu0 0.0
    %4112 = vmatpush.msra.mxu0 0.0
    %4113 = vmatpush.msra.mxu0 0.0
    %4114 = vmatpush.msra.mxu0 0.0
    %4115 = vmatpush.msra.mxu0 0.0
    %4116 = vmatpush.msra.mxu0 0.0
    %v4117 = vand.u32 %v3870, 4294901760
    %v4118 = vsub.f32 %v3870, %v4117
    %4119 = vmatpush.msra.mxu0 %v4118
    %v4120 = vand.u32 %v3869, 4294901760
    %v4121 = vsub.f32 %v3869, %v4120
    %4122 = vmatpush.msra.mxu0 %v4121
    %v4123 = vand.u32 %v3868, 4294901760
    %v4124 = vsub.f32 %v3868, %v4123
    %4125 = vmatpush.msra.mxu0 %v4124
    %v4126 = vand.u32 %v3867, 4294901760
    %v4127 = vsub.f32 %v3867, %v4126
    %4128 = vmatpush.msra.mxu0 %v4127
    %v4129 = vand.u32 %v3991, 4294901760
    %v4130 = vsub.f32 %v3991, %v4129
    %4131 = vmatmul.f32.gmra.mxu0 %v4130
    %v4132 = vpop.f32.mrf.mxu0
    %v4133 = vadd.f32 %v4091, %v4132
    %v4134 = vand.u32 %v3993, 4294901760
    %v4135 = vsub.f32 %v3993, %v4134
    %4136 = vmatmul.f32.gmra.mxu0 %v4135
    %v4137 = vpop.f32.mrf.mxu0
    %v4138 = vadd.f32 %v4095, %v4137
    %v4139 = vand.u32 %v3995, 4294901760
    %v4140 = vsub.f32 %v3995, %v4139
    %4141 = vmatmul.f32.gmra.mxu0 %v4140
    %v4142 = vpop.f32.mrf.mxu0
    %v4143 = vadd.f32 %v4099, %v4142
    %v4144 = vand.u32 %v3997, 4294901760
    %v4145 = vsub.f32 %v3997, %v4144
    %4146 = vmatmul.f32.gmra.mxu0 %v4145
    %v4147 = vpop.f32.mrf.mxu0
    %v4148 = vadd.f32 %v4103, %v4147
    %4149 = vdwg.mxu0
    %4150 = vmatpush.msra.mxu0 0.0
    %4151 = vmatpush.msra.mxu0 0.0
    %4152 = vmatpush.msra.mxu0 0.0
    %4153 = vmatpush.msra.mxu0 0.0
    %4154 = vmatpush.msra.mxu0 0.0
    %4155 = vmatpush.msra.mxu0 0.0
    %4156 = vmatpush.msra.mxu0 0.0
    %4157 = vmatpush.msra.mxu0 0.0
    %4158 = vmatpush.msra.mxu0 0.0
    %4159 = vmatpush.msra.mxu0 0.0
    %4160 = vmatpush.msra.mxu0 0.0
    %4161 = vmatpush.msra.mxu0 0.0
    %v4162 = vand.u32 %v3870, 4294901760
    %4163 = vmatpush.msra.mxu0 %v4162
    %v4164 = vand.u32 %v3869, 4294901760
    %4165 = vmatpush.msra.mxu0 %v4164
    %v4166 = vand.u32 %v3868, 4294901760
    %4167 = vmatpush.msra.mxu0 %v4166
    %v4168 = vand.u32 %v3867, 4294901760
    %4169 = vmatpush.msra.mxu0 %v4168
    %v4170 = vand.u32 %v3991, 4294901760
    %v4171 = vsub.f32 %v3991, %v4170
    %v4172 = vand.u32 %v4171, 4294901760
    %4173 = vmatmul.f32.gmra.mxu0 %v4172
    %v4174 = vpop.f32.mrf.mxu0
    %v4175 = vadd.f32 %v4133, %v4174
    %v4176 = vand.u32 %v3993, 4294901760
    %v4177 = vsub.f32 %v3993, %v4176
    %v4178 = vand.u32 %v4177, 4294901760
    %4179 = vmatmul.f32.gmra.mxu0 %v4178
    %v4180 = vpop.f32.mrf.mxu0
    %v4181 = vadd.f32 %v4138, %v4180
    %v4182 = vand.u32 %v3995, 4294901760
    %v4183 = vsub.f32 %v3995, %v4182
    %v4184 = vand.u32 %v4183, 4294901760
    %4185 = vmatmul.f32.gmra.mxu0 %v4184
    %v4186 = vpop.f32.mrf.mxu0
    %v4187 = vadd.f32 %v4143, %v4186
    %v4188 = vand.u32 %v3997, 4294901760
    %v4189 = vsub.f32 %v3997, %v4188
    %v4190 = vand.u32 %v4189, 4294901760
    %4191 = vmatmul.f32.gmra.mxu0 %v4190
    %v4192 = vpop.f32.mrf.mxu0
    %v4193 = vadd.f32 %v4148, %v4192
    %4194 = vdwg.mxu0
    %4195 = vmatpush.msra.mxu0 0.0
    %4196 = vmatpush.msra.mxu0 0.0
    %4197 = vmatpush.msra.mxu0 0.0
    %4198 = vmatpush.msra.mxu0 0.0
    %4199 = vmatpush.msra.mxu0 0.0
    %4200 = vmatpush.msra.mxu0 0.0
    %4201 = vmatpush.msra.mxu0 0.0
    %4202 = vmatpush.msra.mxu0 0.0
    %4203 = vmatpush.msra.mxu0 0.0
    %4204 = vmatpush.msra.mxu0 0.0
    %4205 = vmatpush.msra.mxu0 0.0
    %4206 = vmatpush.msra.mxu0 0.0
    %v4207 = vand.u32 %v3870, 4294901760
    %v4208 = vsub.f32 %v3870, %v4207
    %v4209 = vand.u32 %v4208, 4294901760
    %4210 = vmatpush.msra.mxu0 %v4209
    %v4211 = vand.u32 %v3869, 4294901760
    %v4212 = vsub.f32 %v3869, %v4211
    %v4213 = vand.u32 %v4212, 4294901760
    %4214 = vmatpush.msra.mxu0 %v4213
    %v4215 = vand.u32 %v3868, 4294901760
    %v4216 = vsub.f32 %v3868, %v4215
    %v4217 = vand.u32 %v4216, 4294901760
    %4218 = vmatpush.msra.mxu0 %v4217
    %v4219 = vand.u32 %v3867, 4294901760
    %v4220 = vsub.f32 %v3867, %v4219
    %v4221 = vand.u32 %v4220, 4294901760
    %4222 = vmatpush.msra.mxu0 %v4221
    %v4223 = vand.u32 %v3991, 4294901760
    %4224 = vmatmul.f32.gmra.mxu0 %v4223
    %v4225 = vpop.f32.mrf.mxu0
    %v4226 = vadd.f32 %v4175, %v4225
    %v4227 = vand.u32 %v3993, 4294901760
    %4228 = vmatmul.f32.gmra.mxu0 %v4227
    %v4229 = vpop.f32.mrf.mxu0
    %v4230 = vadd.f32 %v4181, %v4229
    %v4231 = vand.u32 %v3995, 4294901760
    %4232 = vmatmul.f32.gmra.mxu0 %v4231
    %v4233 = vpop.f32.mrf.mxu0
    %v4234 = vadd.f32 %v4187, %v4233
    %v4235 = vand.u32 %v3997, 4294901760
    %4236 = vmatmul.f32.gmra.mxu0 %v4235
    %v4237 = vpop.f32.mrf.mxu0
    %v4238 = vadd.f32 %v4193, %v4237
    %4239 = vdwg.mxu0
    %4240 = vmatpush.msra.mxu0 0.0
    %4241 = vmatpush.msra.mxu0 0.0
    %4242 = vmatpush.msra.mxu0 0.0
    %4243 = vmatpush.msra.mxu0 0.0
    %4244 = vmatpush.msra.mxu0 0.0
    %4245 = vmatpush.msra.mxu0 0.0
    %4246 = vmatpush.msra.mxu0 0.0
    %4247 = vmatpush.msra.mxu0 0.0
    %4248 = vmatpush.msra.mxu0 0.0
    %4249 = vmatpush.msra.mxu0 0.0
    %4250 = vmatpush.msra.mxu0 0.0
    %4251 = vmatpush.msra.mxu0 0.0
    %v4252 = vand.u32 %v3870, 4294901760
    %4253 = vmatpush.msra.mxu0 %v4252
    %v4254 = vand.u32 %v3869, 4294901760
    %4255 = vmatpush.msra.mxu0 %v4254
    %v4256 = vand.u32 %v3868, 4294901760
    %4257 = vmatpush.msra.mxu0 %v4256
    %v4258 = vand.u32 %v3867, 4294901760
    %4259 = vmatpush.msra.mxu0 %v4258
    %v4260 = vand.u32 %v3991, 4294901760
    %4261 = vmatmul.f32.gmra.mxu0 %v4260
    %v4262 = vpop.f32.mrf.mxu0
    %v4263 = vadd.f32 %v4226, %v4262
    %v4264 = vand.u32 %v3993, 4294901760
    %4265 = vmatmul.f32.gmra.mxu0 %v4264
    %v4266 = vpop.f32.mrf.mxu0
    %v4267 = vadd.f32 %v4230, %v4266
    %v4268 = vand.u32 %v3995, 4294901760
    %4269 = vmatmul.f32.gmra.mxu0 %v4268
    %v4270 = vpop.f32.mrf.mxu0
    %v4271 = vadd.f32 %v4234, %v4270
    %v4272 = vand.u32 %v3997, 4294901760
    %4273 = vmatmul.f32.gmra.mxu0 %v4272
    %v4274 = vpop.f32.mrf.mxu0
    %v4275 = vadd.f32 %v4238, %v4274
    %4276 = vdwg.mxu0
    %v4281 = vrot.slane %v4263, 1
    %v4282 = vrot.slane %v4263, 2
    %v4283 = vrot.slane %v4263, 3
    %v4284 = vrot.slane %v4263, 4
    %v4285 = vrot.slane %v4263, 5
    %v4286 = vrot.slane %v4263, 6
    %v4287 = vrot.slane %v4263, 7
    %v4288 = vrot.slane %v4267, 1
    %v4289 = vrot.slane %v4267, 2
    %v4290 = vrot.slane %v4267, 3
    %v4291 = vrot.slane %v4267, 4
    %v4292 = vrot.slane %v4267, 5
    %v4293 = vrot.slane %v4267, 6
    %v4294 = vrot.slane %v4267, 7
    %v4295 = vrot.slane %v4271, 1
    %v4296 = vrot.slane %v4271, 2
    %v4297 = vrot.slane %v4271, 3
    %v4298 = vrot.slane %v4271, 4
    %v4299 = vrot.slane %v4271, 5
    %v4300 = vrot.slane %v4271, 6
    %v4301 = vrot.slane %v4271, 7
    %v4302 = vrot.slane %v4275, 1
    %v4303 = vrot.slane %v4275, 2
    %v4304 = vrot.slane %v4275, 3
    %v4305 = vrot.slane %v4275, 4
    %v4306 = vrot.slane %v4275, 5
    %v4307 = vrot.slane %v4275, 6
    %v4308 = vrot.slane %v4275, 7
    %4337 = vst [vmem:[#allocation2 + $0x7] sm:$0x1] %v4263
    %4338 = vst [vmem:[#allocation2 + $0x17] sm:$0x1] %v4281
    %4339 = vst [vmem:[#allocation2 + $0x27] sm:$0x1] %v4282
    %4340 = vst [vmem:[#allocation2 + $0x37] sm:$0x1] %v4283
    %4341 = vst [vmem:[#allocation2 + $0x47] sm:$0x1] %v4284
    %4342 = vst [vmem:[#allocation2 + $0x57] sm:$0x1] %v4285
    %4343 = vst [vmem:[#allocation2 + $0x67] sm:$0x1] %v4286
    %4344 = vst [vmem:[#allocation2 + $0x77] sm:$0x1] %v4287
    %4345 = vst [vmem:[#allocation2 + $0x87] sm:$0x1] %v4267
    %4346 = vst [vmem:[#allocation2 + $0x97] sm:$0x1] %v4288
    %4347 = vst [vmem:[#allocation2 + $0xa7] sm:$0x1] %v4289
    %4348 = vst [vmem:[#allocation2 + $0xb7] sm:$0x1] %v4290
    %4349 = vst [vmem:[#allocation2 + $0xc7] sm:$0x1] %v4291
    %4350 = vst [vmem:[#allocation2 + $0xd7] sm:$0x1] %v4292
    %4351 = vst [vmem:[#allocation2 + $0xe7] sm:$0x1] %v4293
    %4352 = vst [vmem:[#allocation2 + $0xf7] sm:$0x1] %v4294
    %4353 = vst [vmem:[#allocation2 + $0x107] sm:$0x1] %v4271
    %4354 = vst [vmem:[#allocation2 + $0x117] sm:$0x1] %v4295
    %4355 = vst [vmem:[#allocation2 + $0x127] sm:$0x1] %v4296
    %4356 = vst [vmem:[#allocation2 + $0x137] sm:$0x1] %v4297
    %4357 = vst [vmem:[#allocation2 + $0x147] sm:$0x1] %v4298
    %4358 = vst [vmem:[#allocation2 + $0x157] sm:$0x1] %v4299
    %4359 = vst [vmem:[#allocation2 + $0x167] sm:$0x1] %v4300
    %4360 = vst [vmem:[#allocation2 + $0x177] sm:$0x1] %v4301
    %4361 = vst [vmem:[#allocation2 + $0x187] sm:$0x1] %v4275
    %4362 = vst [vmem:[#allocation2 + $0x197] sm:$0x1] %v4302
    %4363 = vst [vmem:[#allocation2 + $0x1a7] sm:$0x1] %v4303
    %4364 = vst [vmem:[#allocation2 + $0x1b7] sm:$0x1] %v4304
    %4365 = vst [vmem:[#allocation2 + $0x1c7] sm:$0x1] %v4305
    %4366 = vst [vmem:[#allocation2 + $0x1d7] sm:$0x1] %v4306
    %4367 = vst [vmem:[#allocation2 + $0x1e7] sm:$0x1] %v4307
    %4368 = vst [vmem:[#allocation2 + $0x1f7] sm:$0x1] %v4308
    %v4369 = vld [vmem:[%s3 + $0x8] sm:$0x1]
    %v4370 = vperm.slane %v4369, 0
    %vm4371 = vcmp.eq.s32.totalorder %v27, %v4370
    %vm4372 = vcmp.eq.s32.totalorder %v28, %v4370
    %vm4373 = vcmp.eq.s32.totalorder %v263, %v4370
    %vm4374 = vcmp.eq.s32.totalorder %v264, %v4370
    %v4375 = vsel %vm4371, 1, 0
    %v4376 = vsel %vm4372, 1, 0
    %v4377 = vsel %vm4373, 1, 0
    %v4378 = vsel %vm4374, 1, 0
    %v4379 = vcvt.s32.f32 %v4375
    %v4380 = vcvt.s32.f32 %v4376
    %v4381 = vcvt.s32.f32 %v4377
    %v4382 = vcvt.s32.f32 %v4378
    %v4383 = vld [vmem:[%s2 + $0x8] sm:$0x1]
    %v4384 = vld [vmem:[%s2 + $0x18] sm:$0x1]
    %v4385 = vld [vmem:[%s2 + $0x28] sm:$0x1]
    %v4386 = vld [vmem:[%s2 + $0x38] sm:$0x1]
    %v4387 = vld [vmem:[%s2 + $0x48] sm:$0x1]
    %v4388 = vld [vmem:[%s2 + $0x58] sm:$0x1]
    %v4389 = vld [vmem:[%s2 + $0x68] sm:$0x1]
    %v4390 = vld [vmem:[%s2 + $0x78] sm:$0x1]
    %v4391 = vld [vmem:[%s2 + $0x88] sm:$0x1]
    %v4392 = vld [vmem:[%s2 + $0x98] sm:$0x1]
    %v4393 = vld [vmem:[%s2 + $0xa8] sm:$0x1]
    %v4394 = vld [vmem:[%s2 + $0xb8] sm:$0x1]
    %v4395 = vld [vmem:[%s2 + $0xc8] sm:$0x1]
    %v4396 = vld [vmem:[%s2 + $0xd8] sm:$0x1]
    %v4397 = vld [vmem:[%s2 + $0xe8] sm:$0x1]
    %v4398 = vld [vmem:[%s2 + $0xf8] sm:$0x1]
    %v4399 = vld [vmem:[%s2 + $0x108] sm:$0x1]
    %v4400 = vld [vmem:[%s2 + $0x118] sm:$0x1]
    %v4401 = vld [vmem:[%s2 + $0x128] sm:$0x1]
    %v4402 = vld [vmem:[%s2 + $0x138] sm:$0x1]
    %v4403 = vld [vmem:[%s2 + $0x148] sm:$0x1]
    %v4404 = vld [vmem:[%s2 + $0x158] sm:$0x1]
    %v4405 = vld [vmem:[%s2 + $0x168] sm:$0x1]
    %v4406 = vld [vmem:[%s2 + $0x178] sm:$0x1]
    %v4407 = vld [vmem:[%s2 + $0x188] sm:$0x1]
    %v4408 = vld [vmem:[%s2 + $0x198] sm:$0x1]
    %v4409 = vld [vmem:[%s2 + $0x1a8] sm:$0x1]
    %v4410 = vld [vmem:[%s2 + $0x1b8] sm:$0x1]
    %v4411 = vld [vmem:[%s2 + $0x1c8] sm:$0x1]
    %v4412 = vld [vmem:[%s2 + $0x1d8] sm:$0x1]
    %v4413 = vld [vmem:[%s2 + $0x1e8] sm:$0x1]
    %v4414 = vld [vmem:[%s2 + $0x1f8] sm:$0x1]
    %v4447 = vrot.slane %v4384, 7
    %v4448 = vsel %vm344, %v4447, %v4383
    %v4449 = vrot.slane %v4385, 6
    %v4450 = vsel %vm347, %v4449, %v4448
    %v4451 = vrot.slane %v4386, 5
    %v4452 = vsel %vm350, %v4451, %v4450
    %v4453 = vrot.slane %v4387, 4
    %v4454 = vsel %vm353, %v4453, %v4452
    %v4455 = vrot.slane %v4388, 3
    %v4456 = vsel %vm356, %v4455, %v4454
    %v4457 = vrot.slane %v4389, 2
    %v4458 = vsel %vm359, %v4457, %v4456
    %v4459 = vrot.slane %v4390, 1
    %v4460 = vsel %vm362, %v4459, %v4458
    %v4461 = vrot.slane %v4392, 7
    %v4462 = vsel %vm344, %v4461, %v4391
    %v4463 = vrot.slane %v4393, 6
    %v4464 = vsel %vm347, %v4463, %v4462
    %v4465 = vrot.slane %v4394, 5
    %v4466 = vsel %vm350, %v4465, %v4464
    %v4467 = vrot.slane %v4395, 4
    %v4468 = vsel %vm353, %v4467, %v4466
    %v4469 = vrot.slane %v4396, 3
    %v4470 = vsel %vm356, %v4469, %v4468
    %v4471 = vrot.slane %v4397, 2
    %v4472 = vsel %vm359, %v4471, %v4470
    %v4473 = vrot.slane %v4398, 1
    %v4474 = vsel %vm362, %v4473, %v4472
    %v4475 = vrot.slane %v4400, 7
    %v4476 = vsel %vm344, %v4475, %v4399
    %v4477 = vrot.slane %v4401, 6
    %v4478 = vsel %vm347, %v4477, %v4476
    %v4479 = vrot.slane %v4402, 5
    %v4480 = vsel %vm350, %v4479, %v4478
    %v4481 = vrot.slane %v4403, 4
    %v4482 = vsel %vm353, %v4481, %v4480
    %v4483 = vrot.slane %v4404, 3
    %v4484 = vsel %vm356, %v4483, %v4482
    %v4485 = vrot.slane %v4405, 2
    %v4486 = vsel %vm359, %v4485, %v4484
    %v4487 = vrot.slane %v4406, 1
    %v4488 = vsel %vm362, %v4487, %v4486
    %v4489 = vrot.slane %v4408, 7
    %v4490 = vsel %vm344, %v4489, %v4407
    %v4491 = vrot.slane %v4409, 6
    %v4492 = vsel %vm347, %v4491, %v4490
    %v4493 = vrot.slane %v4410, 5
    %v4494 = vsel %vm350, %v4493, %v4492
    %v4495 = vrot.slane %v4411, 4
    %v4496 = vsel %vm353, %v4495, %v4494
    %v4497 = vrot.slane %v4412, 3
    %v4498 = vsel %vm356, %v4497, %v4496
    %v4499 = vrot.slane %v4413, 2
    %v4500 = vsel %vm359, %v4499, %v4498
    %v4501 = vrot.slane %v4414, 1
    %v4502 = vsel %vm362, %v4501, %v4500
    %v4503 = vsel %vm406, %v4460, 0
    %v4505 = vsel %vm406, %v4474, 0
    %v4507 = vsel %vm406, %v4488, 0
    %v4509 = vsel %vm406, %v4502, 0
    %4511 = vmatpush.msra.mxu0 0.0
    %4512 = vmatpush.msra.mxu0 0.0
    %4513 = vmatpush.msra.mxu0 0.0
    %4514 = vmatpush.msra.mxu0 0.0
    %4515 = vmatpush.msra.mxu0 0.0
    %4516 = vmatpush.msra.mxu0 0.0
    %4517 = vmatpush.msra.mxu0 0.0
    %4518 = vmatpush.msra.mxu0 0.0
    %4519 = vmatpush.msra.mxu0 0.0
    %4520 = vmatpush.msra.mxu0 0.0
    %4521 = vmatpush.msra.mxu0 0.0
    %4522 = vmatpush.msra.mxu0 0.0
    %v4523 = vand.u32 %v4382, 4294901760
    %4524 = vmatpush.msra.mxu0 %v4523
    %v4525 = vand.u32 %v4381, 4294901760
    %4526 = vmatpush.msra.mxu0 %v4525
    %v4527 = vand.u32 %v4380, 4294901760
    %4528 = vmatpush.msra.mxu0 %v4527
    %v4529 = vand.u32 %v4379, 4294901760
    %4530 = vmatpush.msra.mxu0 %v4529
    %v4531 = vand.u32 %v4503, 4294901760
    %v4532 = vsub.f32 %v4503, %v4531
    %v4533 = vand.u32 %v4532, 4294901760
    %v4534 = vsub.f32 %v4532, %v4533
    %v4535 = vand.u32 %v4534, 4294901760
    %4536 = vmatmul.f32.gmra.mxu0 %v4535
    %v4537 = vpop.f32.mrf.mxu0
    %v4538 = vadd.f32 0.0, %v4537
    %v4539 = vand.u32 %v4505, 4294901760
    %v4540 = vsub.f32 %v4505, %v4539
    %v4541 = vand.u32 %v4540, 4294901760
    %v4542 = vsub.f32 %v4540, %v4541
    %v4543 = vand.u32 %v4542, 4294901760
    %4544 = vmatmul.f32.gmra.mxu0 %v4543
    %v4545 = vpop.f32.mrf.mxu0
    %v4546 = vadd.f32 0.0, %v4545
    %v4547 = vand.u32 %v4507, 4294901760
    %v4548 = vsub.f32 %v4507, %v4547
    %v4549 = vand.u32 %v4548, 4294901760
    %v4550 = vsub.f32 %v4548, %v4549
    %v4551 = vand.u32 %v4550, 4294901760
    %4552 = vmatmul.f32.gmra.mxu0 %v4551
    %v4553 = vpop.f32.mrf.mxu0
    %v4554 = vadd.f32 0.0, %v4553
    %v4555 = vand.u32 %v4509, 4294901760
    %v4556 = vsub.f32 %v4509, %v4555
    %v4557 = vand.u32 %v4556, 4294901760
    %v4558 = vsub.f32 %v4556, %v4557
    %v4559 = vand.u32 %v4558, 4294901760
    %4560 = vmatmul.f32.gmra.mxu0 %v4559
    %v4561 = vpop.f32.mrf.mxu0
    %v4562 = vadd.f32 0.0, %v4561
    %4563 = vdwg.mxu0
    %4564 = vmatpush.msra.mxu0 0.0
    %4565 = vmatpush.msra.mxu0 0.0
    %4566 = vmatpush.msra.mxu0 0.0
    %4567 = vmatpush.msra.mxu0 0.0
    %4568 = vmatpush.msra.mxu0 0.0
    %4569 = vmatpush.msra.mxu0 0.0
    %4570 = vmatpush.msra.mxu0 0.0
    %4571 = vmatpush.msra.mxu0 0.0
    %4572 = vmatpush.msra.mxu0 0.0
    %4573 = vmatpush.msra.mxu0 0.0
    %4574 = vmatpush.msra.mxu0 0.0
    %4575 = vmatpush.msra.mxu0 0.0
    %v4576 = vand.u32 %v4382, 4294901760
    %v4577 = vsub.f32 %v4382, %v4576
    %v4578 = vand.u32 %v4577, 4294901760
    %v4579 = vsub.f32 %v4577, %v4578
    %v4580 = vand.u32 %v4579, 4294901760
    %4581 = vmatpush.msra.mxu0 %v4580
    %v4582 = vand.u32 %v4381, 4294901760
    %v4583 = vsub.f32 %v4381, %v4582
    %v4584 = vand.u32 %v4583, 4294901760
    %v4585 = vsub.f32 %v4583, %v4584
    %v4586 = vand.u32 %v4585, 4294901760
    %4587 = vmatpush.msra.mxu0 %v4586
    %v4588 = vand.u32 %v4380, 4294901760
    %v4589 = vsub.f32 %v4380, %v4588
    %v4590 = vand.u32 %v4589, 4294901760
    %v4591 = vsub.f32 %v4589, %v4590
    %v4592 = vand.u32 %v4591, 4294901760
    %4593 = vmatpush.msra.mxu0 %v4592
    %v4594 = vand.u32 %v4379, 4294901760
    %v4595 = vsub.f32 %v4379, %v4594
    %v4596 = vand.u32 %v4595, 4294901760
    %v4597 = vsub.f32 %v4595, %v4596
    %v4598 = vand.u32 %v4597, 4294901760
    %4599 = vmatpush.msra.mxu0 %v4598
    %v4600 = vand.u32 %v4503, 4294901760
    %4601 = vmatmul.f32.gmra.mxu0 %v4600
    %v4602 = vpop.f32.mrf.mxu0
    %v4603 = vadd.f32 %v4538, %v4602
    %v4604 = vand.u32 %v4505, 4294901760
    %4605 = vmatmul.f32.gmra.mxu0 %v4604
    %v4606 = vpop.f32.mrf.mxu0
    %v4607 = vadd.f32 %v4546, %v4606
    %v4608 = vand.u32 %v4507, 4294901760
    %4609 = vmatmul.f32.gmra.mxu0 %v4608
    %v4610 = vpop.f32.mrf.mxu0
    %v4611 = vadd.f32 %v4554, %v4610
    %v4612 = vand.u32 %v4509, 4294901760
    %4613 = vmatmul.f32.gmra.mxu0 %v4612
    %v4614 = vpop.f32.mrf.mxu0
    %v4615 = vadd.f32 %v4562, %v4614
    %4616 = vdwg.mxu0
    %4617 = vmatpush.msra.mxu0 0.0
    %4618 = vmatpush.msra.mxu0 0.0
    %4619 = vmatpush.msra.mxu0 0.0
    %4620 = vmatpush.msra.mxu0 0.0
    %4621 = vmatpush.msra.mxu0 0.0
    %4622 = vmatpush.msra.mxu0 0.0
    %4623 = vmatpush.msra.mxu0 0.0
    %4624 = vmatpush.msra.mxu0 0.0
    %4625 = vmatpush.msra.mxu0 0.0
    %4626 = vmatpush.msra.mxu0 0.0
    %4627 = vmatpush.msra.mxu0 0.0
    %4628 = vmatpush.msra.mxu0 0.0
    %v4629 = vand.u32 %v4382, 4294901760
    %v4630 = vsub.f32 %v4382, %v4629
    %4631 = vmatpush.msra.mxu0 %v4630
    %v4632 = vand.u32 %v4381, 4294901760
    %v4633 = vsub.f32 %v4381, %v4632
    %4634 = vmatpush.msra.mxu0 %v4633
    %v4635 = vand.u32 %v4380, 4294901760
    %v4636 = vsub.f32 %v4380, %v4635
    %4637 = vmatpush.msra.mxu0 %v4636
    %v4638 = vand.u32 %v4379, 4294901760
    %v4639 = vsub.f32 %v4379, %v4638
    %4640 = vmatpush.msra.mxu0 %v4639
    %v4641 = vand.u32 %v4503, 4294901760
    %v4642 = vsub.f32 %v4503, %v4641
    %4643 = vmatmul.f32.gmra.mxu0 %v4642
    %v4644 = vpop.f32.mrf.mxu0
    %v4645 = vadd.f32 %v4603, %v4644
    %v4646 = vand.u32 %v4505, 4294901760
    %v4647 = vsub.f32 %v4505, %v4646
    %4648 = vmatmul.f32.gmra.mxu0 %v4647
    %v4649 = vpop.f32.mrf.mxu0
    %v4650 = vadd.f32 %v4607, %v4649
    %v4651 = vand.u32 %v4507, 4294901760
    %v4652 = vsub.f32 %v4507, %v4651
    %4653 = vmatmul.f32.gmra.mxu0 %v4652
    %v4654 = vpop.f32.mrf.mxu0
    %v4655 = vadd.f32 %v4611, %v4654
    %v4656 = vand.u32 %v4509, 4294901760
    %v4657 = vsub.f32 %v4509, %v4656
    %4658 = vmatmul.f32.gmra.mxu0 %v4657
    %v4659 = vpop.f32.mrf.mxu0
    %v4660 = vadd.f32 %v4615, %v4659
    %4661 = vdwg.mxu0
    %4662 = vmatpush.msra.mxu0 0.0
    %4663 = vmatpush.msra.mxu0 0.0
    %4664 = vmatpush.msra.mxu0 0.0
    %4665 = vmatpush.msra.mxu0 0.0
    %4666 = vmatpush.msra.mxu0 0.0
    %4667 = vmatpush.msra.mxu0 0.0
    %4668 = vmatpush.msra.mxu0 0.0
    %4669 = vmatpush.msra.mxu0 0.0
    %4670 = vmatpush.msra.mxu0 0.0
    %4671 = vmatpush.msra.mxu0 0.0
    %4672 = vmatpush.msra.mxu0 0.0
    %4673 = vmatpush.msra.mxu0 0.0
    %v4674 = vand.u32 %v4382, 4294901760
    %4675 = vmatpush.msra.mxu0 %v4674
    %v4676 = vand.u32 %v4381, 4294901760
    %4677 = vmatpush.msra.mxu0 %v4676
    %v4678 = vand.u32 %v4380, 4294901760
    %4679 = vmatpush.msra.mxu0 %v4678
    %v4680 = vand.u32 %v4379, 4294901760
    %4681 = vmatpush.msra.mxu0 %v4680
    %v4682 = vand.u32 %v4503, 4294901760
    %v4683 = vsub.f32 %v4503, %v4682
    %v4684 = vand.u32 %v4683, 4294901760
    %4685 = vmatmul.f32.gmra.mxu0 %v4684
    %v4686 = vpop.f32.mrf.mxu0
    %v4687 = vadd.f32 %v4645, %v4686
    %v4688 = vand.u32 %v4505, 4294901760
    %v4689 = vsub.f32 %v4505, %v4688
    %v4690 = vand.u32 %v4689, 4294901760
    %4691 = vmatmul.f32.gmra.mxu0 %v4690
    %v4692 = vpop.f32.mrf.mxu0
    %v4693 = vadd.f32 %v4650, %v4692
    %v4694 = vand.u32 %v4507, 4294901760
    %v4695 = vsub.f32 %v4507, %v4694
    %v4696 = vand.u32 %v4695, 4294901760
    %4697 = vmatmul.f32.gmra.mxu0 %v4696
    %v4698 = vpop.f32.mrf.mxu0
    %v4699 = vadd.f32 %v4655, %v4698
    %v4700 = vand.u32 %v4509, 4294901760
    %v4701 = vsub.f32 %v4509, %v4700
    %v4702 = vand.u32 %v4701, 4294901760
    %4703 = vmatmul.f32.gmra.mxu0 %v4702
    %v4704 = vpop.f32.mrf.mxu0
    %v4705 = vadd.f32 %v4660, %v4704
    %4706 = vdwg.mxu0
    %4707 = vmatpush.msra.mxu0 0.0
    %4708 = vmatpush.msra.mxu0 0.0
    %4709 = vmatpush.msra.mxu0 0.0
    %4710 = vmatpush.msra.mxu0 0.0
    %4711 = vmatpush.msra.mxu0 0.0
    %4712 = vmatpush.msra.mxu0 0.0
    %4713 = vmatpush.msra.mxu0 0.0
    %4714 = vmatpush.msra.mxu0 0.0
    %4715 = vmatpush.msra.mxu0 0.0
    %4716 = vmatpush.msra.mxu0 0.0
    %4717 = vmatpush.msra.mxu0 0.0
    %4718 = vmatpush.msra.mxu0 0.0
    %v4719 = vand.u32 %v4382, 4294901760
    %v4720 = vsub.f32 %v4382, %v4719
    %v4721 = vand.u32 %v4720, 4294901760
    %4722 = vmatpush.msra.mxu0 %v4721
    %v4723 = vand.u32 %v4381, 4294901760
    %v4724 = vsub.f32 %v4381, %v4723
    %v4725 = vand.u32 %v4724, 4294901760
    %4726 = vmatpush.msra.mxu0 %v4725
    %v4727 = vand.u32 %v4380, 4294901760
    %v4728 = vsub.f32 %v4380, %v4727
    %v4729 = vand.u32 %v4728, 4294901760
    %4730 = vmatpush.msra.mxu0 %v4729
    %v4731 = vand.u32 %v4379, 4294901760
    %v4732 = vsub.f32 %v4379, %v4731
    %v4733 = vand.u32 %v4732, 4294901760
    %4734 = vmatpush.msra.mxu0 %v4733
    %v4735 = vand.u32 %v4503, 4294901760
    %4736 = vmatmul.f32.gmra.mxu0 %v4735
    %v4737 = vpop.f32.mrf.mxu0
    %v4738 = vadd.f32 %v4687, %v4737
    %v4739 = vand.u32 %v4505, 4294901760
    %4740 = vmatmul.f32.gmra.mxu0 %v4739
    %v4741 = vpop.f32.mrf.mxu0
    %v4742 = vadd.f32 %v4693, %v4741
    %v4743 = vand.u32 %v4507, 4294901760
    %4744 = vmatmul.f32.gmra.mxu0 %v4743
    %v4745 = vpop.f32.mrf.mxu0
    %v4746 = vadd.f32 %v4699, %v4745
    %v4747 = vand.u32 %v4509, 4294901760
    %4748 = vmatmul.f32.gmra.mxu0 %v4747
    %v4749 = vpop.f32.mrf.mxu0
    %v4750 = vadd.f32 %v4705, %v4749
    %4751 = vdwg.mxu0
    %4752 = vmatpush.msra.mxu0 0.0
    %4753 = vmatpush.msra.mxu0 0.0
    %4754 = vmatpush.msra.mxu0 0.0
    %4755 = vmatpush.msra.mxu0 0.0
    %4756 = vmatpush.msra.mxu0 0.0
    %4757 = vmatpush.msra.mxu0 0.0
    %4758 = vmatpush.msra.mxu0 0.0
    %4759 = vmatpush.msra.mxu0 0.0
    %4760 = vmatpush.msra.mxu0 0.0
    %4761 = vmatpush.msra.mxu0 0.0
    %4762 = vmatpush.msra.mxu0 0.0
    %4763 = vmatpush.msra.mxu0 0.0
    %v4764 = vand.u32 %v4382, 4294901760
    %4765 = vmatpush.msra.mxu0 %v4764
    %v4766 = vand.u32 %v4381, 4294901760
    %4767 = vmatpush.msra.mxu0 %v4766
    %v4768 = vand.u32 %v4380, 4294901760
    %4769 = vmatpush.msra.mxu0 %v4768
    %v4770 = vand.u32 %v4379, 4294901760
    %4771 = vmatpush.msra.mxu0 %v4770
    %v4772 = vand.u32 %v4503, 4294901760
    %4773 = vmatmul.f32.gmra.mxu0 %v4772
    %v4774 = vpop.f32.mrf.mxu0
    %v4775 = vadd.f32 %v4738, %v4774
    %v4776 = vand.u32 %v4505, 4294901760
    %4777 = vmatmul.f32.gmra.mxu0 %v4776
    %v4778 = vpop.f32.mrf.mxu0
    %v4779 = vadd.f32 %v4742, %v4778
    %v4780 = vand.u32 %v4507, 4294901760
    %4781 = vmatmul.f32.gmra.mxu0 %v4780
    %v4782 = vpop.f32.mrf.mxu0
    %v4783 = vadd.f32 %v4746, %v4782
    %v4784 = vand.u32 %v4509, 4294901760
    %4785 = vmatmul.f32.gmra.mxu0 %v4784
    %v4786 = vpop.f32.mrf.mxu0
    %v4787 = vadd.f32 %v4750, %v4786
    %4788 = vdwg.mxu0
    %v4793 = vrot.slane %v4775, 1
    %v4794 = vrot.slane %v4775, 2
    %v4795 = vrot.slane %v4775, 3
    %v4796 = vrot.slane %v4775, 4
    %v4797 = vrot.slane %v4775, 5
    %v4798 = vrot.slane %v4775, 6
    %v4799 = vrot.slane %v4775, 7
    %v4800 = vrot.slane %v4779, 1
    %v4801 = vrot.slane %v4779, 2
    %v4802 = vrot.slane %v4779, 3
    %v4803 = vrot.slane %v4779, 4
    %v4804 = vrot.slane %v4779, 5
    %v4805 = vrot.slane %v4779, 6
    %v4806 = vrot.slane %v4779, 7
    %v4807 = vrot.slane %v4783, 1
    %v4808 = vrot.slane %v4783, 2
    %v4809 = vrot.slane %v4783, 3
    %v4810 = vrot.slane %v4783, 4
    %v4811 = vrot.slane %v4783, 5
    %v4812 = vrot.slane %v4783, 6
    %v4813 = vrot.slane %v4783, 7
    %v4814 = vrot.slane %v4787, 1
    %v4815 = vrot.slane %v4787, 2
    %v4816 = vrot.slane %v4787, 3
    %v4817 = vrot.slane %v4787, 4
    %v4818 = vrot.slane %v4787, 5
    %v4819 = vrot.slane %v4787, 6
    %v4820 = vrot.slane %v4787, 7
    %4849 = vst [vmem:[#allocation2 + $0x8] sm:$0x1] %v4775
    %4850 = vst [vmem:[#allocation2 + $0x18] sm:$0x1] %v4793
    %4851 = vst [vmem:[#allocation2 + $0x28] sm:$0x1] %v4794
    %4852 = vst [vmem:[#allocation2 + $0x38] sm:$0x1] %v4795
    %4853 = vst [vmem:[#allocation2 + $0x48] sm:$0x1] %v4796
    %4854 = vst [vmem:[#allocation2 + $0x58] sm:$0x1] %v4797
    %4855 = vst [vmem:[#allocation2 + $0x68] sm:$0x1] %v4798
    %4856 = vst [vmem:[#allocation2 + $0x78] sm:$0x1] %v4799
    %4857 = vst [vmem:[#allocation2 + $0x88] sm:$0x1] %v4779
    %4858 = vst [vmem:[#allocation2 + $0x98] sm:$0x1] %v4800
    %4859 = vst [vmem:[#allocation2 + $0xa8] sm:$0x1] %v4801
    %4860 = vst [vmem:[#allocation2 + $0xb8] sm:$0x1] %v4802
    %4861 = vst [vmem:[#allocation2 + $0xc8] sm:$0x1] %v4803
    %4862 = vst [vmem:[#allocation2 + $0xd8] sm:$0x1] %v4804
    %4863 = vst [vmem:[#allocation2 + $0xe8] sm:$0x1] %v4805
    %4864 = vst [vmem:[#allocation2 + $0xf8] sm:$0x1] %v4806
    %4865 = vst [vmem:[#allocation2 + $0x108] sm:$0x1] %v4783
    %4866 = vst [vmem:[#allocation2 + $0x118] sm:$0x1] %v4807
    %4867 = vst [vmem:[#allocation2 + $0x128] sm:$0x1] %v4808
    %4868 = vst [vmem:[#allocation2 + $0x138] sm:$0x1] %v4809
    %4869 = vst [vmem:[#allocation2 + $0x148] sm:$0x1] %v4810
    %4870 = vst [vmem:[#allocation2 + $0x158] sm:$0x1] %v4811
    %4871 = vst [vmem:[#allocation2 + $0x168] sm:$0x1] %v4812
    %4872 = vst [vmem:[#allocation2 + $0x178] sm:$0x1] %v4813
    %4873 = vst [vmem:[#allocation2 + $0x188] sm:$0x1] %v4787
    %4874 = vst [vmem:[#allocation2 + $0x198] sm:$0x1] %v4814
    %4875 = vst [vmem:[#allocation2 + $0x1a8] sm:$0x1] %v4815
    %4876 = vst [vmem:[#allocation2 + $0x1b8] sm:$0x1] %v4816
    %4877 = vst [vmem:[#allocation2 + $0x1c8] sm:$0x1] %v4817
    %4878 = vst [vmem:[#allocation2 + $0x1d8] sm:$0x1] %v4818
    %4879 = vst [vmem:[#allocation2 + $0x1e8] sm:$0x1] %v4819
    %4880 = vst [vmem:[#allocation2 + $0x1f8] sm:$0x1] %v4820
    %v4881 = vld [vmem:[%s3 + $0x9] sm:$0x1]
    %v4882 = vperm.slane %v4881, 0
    %vm4883 = vcmp.eq.s32.totalorder %v27, %v4882
    %vm4884 = vcmp.eq.s32.totalorder %v28, %v4882
    %vm4885 = vcmp.eq.s32.totalorder %v263, %v4882
    %vm4886 = vcmp.eq.s32.totalorder %v264, %v4882
    %v4887 = vsel %vm4883, 1, 0
    %v4888 = vsel %vm4884, 1, 0
    %v4889 = vsel %vm4885, 1, 0
    %v4890 = vsel %vm4886, 1, 0
    %v4891 = vcvt.s32.f32 %v4887
    %v4892 = vcvt.s32.f32 %v4888
    %v4893 = vcvt.s32.f32 %v4889
    %v4894 = vcvt.s32.f32 %v4890
    %v4895 = vld [vmem:[%s2 + $0x9] sm:$0x1]
    %v4896 = vld [vmem:[%s2 + $0x19] sm:$0x1]
    %v4897 = vld [vmem:[%s2 + $0x29] sm:$0x1]
    %v4898 = vld [vmem:[%s2 + $0x39] sm:$0x1]
    %v4899 = vld [vmem:[%s2 + $0x49] sm:$0x1]
    %v4900 = vld [vmem:[%s2 + $0x59] sm:$0x1]
    %v4901 = vld [vmem:[%s2 + $0x69] sm:$0x1]
    %v4902 = vld [vmem:[%s2 + $0x79] sm:$0x1]
    %v4903 = vld [vmem:[%s2 + $0x89] sm:$0x1]
    %v4904 = vld [vmem:[%s2 + $0x99] sm:$0x1]
    %v4905 = vld [vmem:[%s2 + $0xa9] sm:$0x1]
    %v4906 = vld [vmem:[%s2 + $0xb9] sm:$0x1]
    %v4907 = vld [vmem:[%s2 + $0xc9] sm:$0x1]
    %v4908 = vld [vmem:[%s2 + $0xd9] sm:$0x1]
    %v4909 = vld [vmem:[%s2 + $0xe9] sm:$0x1]
    %v4910 = vld [vmem:[%s2 + $0xf9] sm:$0x1]
    %v4911 = vld [vmem:[%s2 + $0x109] sm:$0x1]
    %v4912 = vld [vmem:[%s2 + $0x119] sm:$0x1]
    %v4913 = vld [vmem:[%s2 + $0x129] sm:$0x1]
    %v4914 = vld [vmem:[%s2 + $0x139] sm:$0x1]
    %v4915 = vld [vmem:[%s2 + $0x149] sm:$0x1]
    %v4916 = vld [vmem:[%s2 + $0x159] sm:$0x1]
    %v4917 = vld [vmem:[%s2 + $0x169] sm:$0x1]
    %v4918 = vld [vmem:[%s2 + $0x179] sm:$0x1]
    %v4919 = vld [vmem:[%s2 + $0x189] sm:$0x1]
    %v4920 = vld [vmem:[%s2 + $0x199] sm:$0x1]
    %v4921 = vld [vmem:[%s2 + $0x1a9] sm:$0x1]
    %v4922 = vld [vmem:[%s2 + $0x1b9] sm:$0x1]
    %v4923 = vld [vmem:[%s2 + $0x1c9] sm:$0x1]
    %v4924 = vld [vmem:[%s2 + $0x1d9] sm:$0x1]
    %v4925 = vld [vmem:[%s2 + $0x1e9] sm:$0x1]
    %v4926 = vld [vmem:[%s2 + $0x1f9] sm:$0x1]
    %v4959 = vrot.slane %v4896, 7
    %v4960 = vsel %vm344, %v4959, %v4895
    %v4961 = vrot.slane %v4897, 6
    %v4962 = vsel %vm347, %v4961, %v4960
    %v4963 = vrot.slane %v4898, 5
    %v4964 = vsel %vm350, %v4963, %v4962
    %v4965 = vrot.slane %v4899, 4
    %v4966 = vsel %vm353, %v4965, %v4964
    %v4967 = vrot.slane %v4900, 3
    %v4968 = vsel %vm356, %v4967, %v4966
    %v4969 = vrot.slane %v4901, 2
    %v4970 = vsel %vm359, %v4969, %v4968
    %v4971 = vrot.slane %v4902, 1
    %v4972 = vsel %vm362, %v4971, %v4970
    %v4973 = vrot.slane %v4904, 7
    %v4974 = vsel %vm344, %v4973, %v4903
    %v4975 = vrot.slane %v4905, 6
    %v4976 = vsel %vm347, %v4975, %v4974
    %v4977 = vrot.slane %v4906, 5
    %v4978 = vsel %vm350, %v4977, %v4976
    %v4979 = vrot.slane %v4907, 4
    %v4980 = vsel %vm353, %v4979, %v4978
    %v4981 = vrot.slane %v4908, 3
    %v4982 = vsel %vm356, %v4981, %v4980
    %v4983 = vrot.slane %v4909, 2
    %v4984 = vsel %vm359, %v4983, %v4982
    %v4985 = vrot.slane %v4910, 1
    %v4986 = vsel %vm362, %v4985, %v4984
    %v4987 = vrot.slane %v4912, 7
    %v4988 = vsel %vm344, %v4987, %v4911
    %v4989 = vrot.slane %v4913, 6
    %v4990 = vsel %vm347, %v4989, %v4988
    %v4991 = vrot.slane %v4914, 5
    %v4992 = vsel %vm350, %v4991, %v4990
    %v4993 = vrot.slane %v4915, 4
    %v4994 = vsel %vm353, %v4993, %v4992
    %v4995 = vrot.slane %v4916, 3
    %v4996 = vsel %vm356, %v4995, %v4994
    %v4997 = vrot.slane %v4917, 2
    %v4998 = vsel %vm359, %v4997, %v4996
    %v4999 = vrot.slane %v4918, 1
    %v5000 = vsel %vm362, %v4999, %v4998
    %v5001 = vrot.slane %v4920, 7
    %v5002 = vsel %vm344, %v5001, %v4919
    %v5003 = vrot.slane %v4921, 6
    %v5004 = vsel %vm347, %v5003, %v5002
    %v5005 = vrot.slane %v4922, 5
    %v5006 = vsel %vm350, %v5005, %v5004
    %v5007 = vrot.slane %v4923, 4
    %v5008 = vsel %vm353, %v5007, %v5006
    %v5009 = vrot.slane %v4924, 3
    %v5010 = vsel %vm356, %v5009, %v5008
    %v5011 = vrot.slane %v4925, 2
    %v5012 = vsel %vm359, %v5011, %v5010
    %v5013 = vrot.slane %v4926, 1
    %v5014 = vsel %vm362, %v5013, %v5012
    %v5015 = vsel %vm406, %v4972, 0
    %v5017 = vsel %vm406, %v4986, 0
    %v5019 = vsel %vm406, %v5000, 0
    %v5021 = vsel %vm406, %v5014, 0
    %5023 = vmatpush.msra.mxu0 0.0
    %5024 = vmatpush.msra.mxu0 0.0
    %5025 = vmatpush.msra.mxu0 0.0
    %5026 = vmatpush.msra.mxu0 0.0
    %5027 = vmatpush.msra.mxu0 0.0
    %5028 = vmatpush.msra.mxu0 0.0
    %5029 = vmatpush.msra.mxu0 0.0
    %5030 = vmatpush.msra.mxu0 0.0
    %5031 = vmatpush.msra.mxu0 0.0
    %5032 = vmatpush.msra.mxu0 0.0
    %5033 = vmatpush.msra.mxu0 0.0
    %5034 = vmatpush.msra.mxu0 0.0
    %v5035 = vand.u32 %v4894, 4294901760
    %5036 = vmatpush.msra.mxu0 %v5035
    %v5037 = vand.u32 %v4893, 4294901760
    %5038 = vmatpush.msra.mxu0 %v5037
    %v5039 = vand.u32 %v4892, 4294901760
    %5040 = vmatpush.msra.mxu0 %v5039
    %v5041 = vand.u32 %v4891, 4294901760
    %5042 = vmatpush.msra.mxu0 %v5041
    %v5043 = vand.u32 %v5015, 4294901760
    %v5044 = vsub.f32 %v5015, %v5043
    %v5045 = vand.u32 %v5044, 4294901760
    %v5046 = vsub.f32 %v5044, %v5045
    %v5047 = vand.u32 %v5046, 4294901760
    %5048 = vmatmul.f32.gmra.mxu0 %v5047
    %v5049 = vpop.f32.mrf.mxu0
    %v5050 = vadd.f32 0.0, %v5049
    %v5051 = vand.u32 %v5017, 4294901760
    %v5052 = vsub.f32 %v5017, %v5051
    %v5053 = vand.u32 %v5052, 4294901760
    %v5054 = vsub.f32 %v5052, %v5053
    %v5055 = vand.u32 %v5054, 4294901760
    %5056 = vmatmul.f32.gmra.mxu0 %v5055
    %v5057 = vpop.f32.mrf.mxu0
    %v5058 = vadd.f32 0.0, %v5057
    %v5059 = vand.u32 %v5019, 4294901760
    %v5060 = vsub.f32 %v5019, %v5059
    %v5061 = vand.u32 %v5060, 4294901760
    %v5062 = vsub.f32 %v5060, %v5061
    %v5063 = vand.u32 %v5062, 4294901760
    %5064 = vmatmul.f32.gmra.mxu0 %v5063
    %v5065 = vpop.f32.mrf.mxu0
    %v5066 = vadd.f32 0.0, %v5065
    %v5067 = vand.u32 %v5021, 4294901760
    %v5068 = vsub.f32 %v5021, %v5067
    %v5069 = vand.u32 %v5068, 4294901760
    %v5070 = vsub.f32 %v5068, %v5069
    %v5071 = vand.u32 %v5070, 4294901760
    %5072 = vmatmul.f32.gmra.mxu0 %v5071
    %v5073 = vpop.f32.mrf.mxu0
    %v5074 = vadd.f32 0.0, %v5073
    %5075 = vdwg.mxu0
    %5076 = vmatpush.msra.mxu0 0.0
    %5077 = vmatpush.msra.mxu0 0.0
    %5078 = vmatpush.msra.mxu0 0.0
    %5079 = vmatpush.msra.mxu0 0.0
    %5080 = vmatpush.msra.mxu0 0.0
    %5081 = vmatpush.msra.mxu0 0.0
    %5082 = vmatpush.msra.mxu0 0.0
    %5083 = vmatpush.msra.mxu0 0.0
    %5084 = vmatpush.msra.mxu0 0.0
    %5085 = vmatpush.msra.mxu0 0.0
    %5086 = vmatpush.msra.mxu0 0.0
    %5087 = vmatpush.msra.mxu0 0.0
    %v5088 = vand.u32 %v4894, 4294901760
    %v5089 = vsub.f32 %v4894, %v5088
    %v5090 = vand.u32 %v5089, 4294901760
    %v5091 = vsub.f32 %v5089, %v5090
    %v5092 = vand.u32 %v5091, 4294901760
    %5093 = vmatpush.msra.mxu0 %v5092
    %v5094 = vand.u32 %v4893, 4294901760
    %v5095 = vsub.f32 %v4893, %v5094
    %v5096 = vand.u32 %v5095, 4294901760
    %v5097 = vsub.f32 %v5095, %v5096
    %v5098 = vand.u32 %v5097, 4294901760
    %5099 = vmatpush.msra.mxu0 %v5098
    %v5100 = vand.u32 %v4892, 4294901760
    %v5101 = vsub.f32 %v4892, %v5100
    %v5102 = vand.u32 %v5101, 4294901760
    %v5103 = vsub.f32 %v5101, %v5102
    %v5104 = vand.u32 %v5103, 4294901760
    %5105 = vmatpush.msra.mxu0 %v5104
    %v5106 = vand.u32 %v4891, 4294901760
    %v5107 = vsub.f32 %v4891, %v5106
    %v5108 = vand.u32 %v5107, 4294901760
    %v5109 = vsub.f32 %v5107, %v5108
    %v5110 = vand.u32 %v5109, 4294901760
    %5111 = vmatpush.msra.mxu0 %v5110
    %v5112 = vand.u32 %v5015, 4294901760
    %5113 = vmatmul.f32.gmra.mxu0 %v5112
    %v5114 = vpop.f32.mrf.mxu0
    %v5115 = vadd.f32 %v5050, %v5114
    %v5116 = vand.u32 %v5017, 4294901760
    %5117 = vmatmul.f32.gmra.mxu0 %v5116
    %v5118 = vpop.f32.mrf.mxu0
    %v5119 = vadd.f32 %v5058, %v5118
    %v5120 = vand.u32 %v5019, 4294901760
    %5121 = vmatmul.f32.gmra.mxu0 %v5120
    %v5122 = vpop.f32.mrf.mxu0
    %v5123 = vadd.f32 %v5066, %v5122
    %v5124 = vand.u32 %v5021, 4294901760
    %5125 = vmatmul.f32.gmra.mxu0 %v5124
    %v5126 = vpop.f32.mrf.mxu0
    %v5127 = vadd.f32 %v5074, %v5126
    %5128 = vdwg.mxu0
    %5129 = vmatpush.msra.mxu0 0.0
    %5130 = vmatpush.msra.mxu0 0.0
    %5131 = vmatpush.msra.mxu0 0.0
    %5132 = vmatpush.msra.mxu0 0.0
    %5133 = vmatpush.msra.mxu0 0.0
    %5134 = vmatpush.msra.mxu0 0.0
    %5135 = vmatpush.msra.mxu0 0.0
    %5136 = vmatpush.msra.mxu0 0.0
    %5137 = vmatpush.msra.mxu0 0.0
    %5138 = vmatpush.msra.mxu0 0.0
    %5139 = vmatpush.msra.mxu0 0.0
    %5140 = vmatpush.msra.mxu0 0.0
    %v5141 = vand.u32 %v4894, 4294901760
    %v5142 = vsub.f32 %v4894, %v5141
    %5143 = vmatpush.msra.mxu0 %v5142
    %v5144 = vand.u32 %v4893, 4294901760
    %v5145 = vsub.f32 %v4893, %v5144
    %5146 = vmatpush.msra.mxu0 %v5145
    %v5147 = vand.u32 %v4892, 4294901760
    %v5148 = vsub.f32 %v4892, %v5147
    %5149 = vmatpush.msra.mxu0 %v5148
    %v5150 = vand.u32 %v4891, 4294901760
    %v5151 = vsub.f32 %v4891, %v5150
    %5152 = vmatpush.msra.mxu0 %v5151
    %v5153 = vand.u32 %v5015, 4294901760
    %v5154 = vsub.f32 %v5015, %v5153
    %5155 = vmatmul.f32.gmra.mxu0 %v5154
    %v5156 = vpop.f32.mrf.mxu0
    %v5157 = vadd.f32 %v5115, %v5156
    %v5158 = vand.u32 %v5017, 4294901760
    %v5159 = vsub.f32 %v5017, %v5158
    %5160 = vmatmul.f32.gmra.mxu0 %v5159
    %v5161 = vpop.f32.mrf.mxu0
    %v5162 = vadd.f32 %v5119, %v5161
    %v5163 = vand.u32 %v5019, 4294901760
    %v5164 = vsub.f32 %v5019, %v5163
    %5165 = vmatmul.f32.gmra.mxu0 %v5164
    %v5166 = vpop.f32.mrf.mxu0
    %v5167 = vadd.f32 %v5123, %v5166
    %v5168 = vand.u32 %v5021, 4294901760
    %v5169 = vsub.f32 %v5021, %v5168
    %5170 = vmatmul.f32.gmra.mxu0 %v5169
    %v5171 = vpop.f32.mrf.mxu0
    %v5172 = vadd.f32 %v5127, %v5171
    %5173 = vdwg.mxu0
    %5174 = vmatpush.msra.mxu0 0.0
    %5175 = vmatpush.msra.mxu0 0.0
    %5176 = vmatpush.msra.mxu0 0.0
    %5177 = vmatpush.msra.mxu0 0.0
    %5178 = vmatpush.msra.mxu0 0.0
    %5179 = vmatpush.msra.mxu0 0.0
    %5180 = vmatpush.msra.mxu0 0.0
    %5181 = vmatpush.msra.mxu0 0.0
    %5182 = vmatpush.msra.mxu0 0.0
    %5183 = vmatpush.msra.mxu0 0.0
    %5184 = vmatpush.msra.mxu0 0.0
    %5185 = vmatpush.msra.mxu0 0.0
    %v5186 = vand.u32 %v4894, 4294901760
    %5187 = vmatpush.msra.mxu0 %v5186
    %v5188 = vand.u32 %v4893, 4294901760
    %5189 = vmatpush.msra.mxu0 %v5188
    %v5190 = vand.u32 %v4892, 4294901760
    %5191 = vmatpush.msra.mxu0 %v5190
    %v5192 = vand.u32 %v4891, 4294901760
    %5193 = vmatpush.msra.mxu0 %v5192
    %v5194 = vand.u32 %v5015, 4294901760
    %v5195 = vsub.f32 %v5015, %v5194
    %v5196 = vand.u32 %v5195, 4294901760
    %5197 = vmatmul.f32.gmra.mxu0 %v5196
    %v5198 = vpop.f32.mrf.mxu0
    %v5199 = vadd.f32 %v5157, %v5198
    %v5200 = vand.u32 %v5017, 4294901760
    %v5201 = vsub.f32 %v5017, %v5200
    %v5202 = vand.u32 %v5201, 4294901760
    %5203 = vmatmul.f32.gmra.mxu0 %v5202
    %v5204 = vpop.f32.mrf.mxu0
    %v5205 = vadd.f32 %v5162, %v5204
    %v5206 = vand.u32 %v5019, 4294901760
    %v5207 = vsub.f32 %v5019, %v5206
    %v5208 = vand.u32 %v5207, 4294901760
    %5209 = vmatmul.f32.gmra.mxu0 %v5208
    %v5210 = vpop.f32.mrf.mxu0
    %v5211 = vadd.f32 %v5167, %v5210
    %v5212 = vand.u32 %v5021, 4294901760
    %v5213 = vsub.f32 %v5021, %v5212
    %v5214 = vand.u32 %v5213, 4294901760
    %5215 = vmatmul.f32.gmra.mxu0 %v5214
    %v5216 = vpop.f32.mrf.mxu0
    %v5217 = vadd.f32 %v5172, %v5216
    %5218 = vdwg.mxu0
    %5219 = vmatpush.msra.mxu0 0.0
    %5220 = vmatpush.msra.mxu0 0.0
    %5221 = vmatpush.msra.mxu0 0.0
    %5222 = vmatpush.msra.mxu0 0.0
    %5223 = vmatpush.msra.mxu0 0.0
    %5224 = vmatpush.msra.mxu0 0.0
    %5225 = vmatpush.msra.mxu0 0.0
    %5226 = vmatpush.msra.mxu0 0.0
    %5227 = vmatpush.msra.mxu0 0.0
    %5228 = vmatpush.msra.mxu0 0.0
    %5229 = vmatpush.msra.mxu0 0.0
    %5230 = vmatpush.msra.mxu0 0.0
    %v5231 = vand.u32 %v4894, 4294901760
    %v5232 = vsub.f32 %v4894, %v5231
    %v5233 = vand.u32 %v5232, 4294901760
    %5234 = vmatpush.msra.mxu0 %v5233
    %v5235 = vand.u32 %v4893, 4294901760
    %v5236 = vsub.f32 %v4893, %v5235
    %v5237 = vand.u32 %v5236, 4294901760
    %5238 = vmatpush.msra.mxu0 %v5237
    %v5239 = vand.u32 %v4892, 4294901760
    %v5240 = vsub.f32 %v4892, %v5239
    %v5241 = vand.u32 %v5240, 4294901760
    %5242 = vmatpush.msra.mxu0 %v5241
    %v5243 = vand.u32 %v4891, 4294901760
    %v5244 = vsub.f32 %v4891, %v5243
    %v5245 = vand.u32 %v5244, 4294901760
    %5246 = vmatpush.msra.mxu0 %v5245
    %v5247 = vand.u32 %v5015, 4294901760
    %5248 = vmatmul.f32.gmra.mxu0 %v5247
    %v5249 = vpop.f32.mrf.mxu0
    %v5250 = vadd.f32 %v5199, %v5249
    %v5251 = vand.u32 %v5017, 4294901760
    %5252 = vmatmul.f32.gmra.mxu0 %v5251
    %v5253 = vpop.f32.mrf.mxu0
    %v5254 = vadd.f32 %v5205, %v5253
    %v5255 = vand.u32 %v5019, 4294901760
    %5256 = vmatmul.f32.gmra.mxu0 %v5255
    %v5257 = vpop.f32.mrf.mxu0
    %v5258 = vadd.f32 %v5211, %v5257
    %v5259 = vand.u32 %v5021, 4294901760
    %5260 = vmatmul.f32.gmra.mxu0 %v5259
    %v5261 = vpop.f32.mrf.mxu0
    %v5262 = vadd.f32 %v5217, %v5261
    %5263 = vdwg.mxu0
    %5264 = vmatpush.msra.mxu0 0.0
    %5265 = vmatpush.msra.mxu0 0.0
    %5266 = vmatpush.msra.mxu0 0.0
    %5267 = vmatpush.msra.mxu0 0.0
    %5268 = vmatpush.msra.mxu0 0.0
    %5269 = vmatpush.msra.mxu0 0.0
    %5270 = vmatpush.msra.mxu0 0.0
    %5271 = vmatpush.msra.mxu0 0.0
    %5272 = vmatpush.msra.mxu0 0.0
    %5273 = vmatpush.msra.mxu0 0.0
    %5274 = vmatpush.msra.mxu0 0.0
    %5275 = vmatpush.msra.mxu0 0.0
    %v5276 = vand.u32 %v4894, 4294901760
    %5277 = vmatpush.msra.mxu0 %v5276
    %v5278 = vand.u32 %v4893, 4294901760
    %5279 = vmatpush.msra.mxu0 %v5278
    %v5280 = vand.u32 %v4892, 4294901760
    %5281 = vmatpush.msra.mxu0 %v5280
    %v5282 = vand.u32 %v4891, 4294901760
    %5283 = vmatpush.msra.mxu0 %v5282
    %v5284 = vand.u32 %v5015, 4294901760
    %5285 = vmatmul.f32.gmra.mxu0 %v5284
    %v5286 = vpop.f32.mrf.mxu0
    %v5287 = vadd.f32 %v5250, %v5286
    %v5288 = vand.u32 %v5017, 4294901760
    %5289 = vmatmul.f32.gmra.mxu0 %v5288
    %v5290 = vpop.f32.mrf.mxu0
    %v5291 = vadd.f32 %v5254, %v5290
    %v5292 = vand.u32 %v5019, 4294901760
    %5293 = vmatmul.f32.gmra.mxu0 %v5292
    %v5294 = vpop.f32.mrf.mxu0
    %v5295 = vadd.f32 %v5258, %v5294
    %v5296 = vand.u32 %v5021, 4294901760
    %5297 = vmatmul.f32.gmra.mxu0 %v5296
    %v5298 = vpop.f32.mrf.mxu0
    %v5299 = vadd.f32 %v5262, %v5298
    %5300 = vdwg.mxu0
    %v5305 = vrot.slane %v5287, 1
    %v5306 = vrot.slane %v5287, 2
    %v5307 = vrot.slane %v5287, 3
    %v5308 = vrot.slane %v5287, 4
    %v5309 = vrot.slane %v5287, 5
    %v5310 = vrot.slane %v5287, 6
    %v5311 = vrot.slane %v5287, 7
    %v5312 = vrot.slane %v5291, 1
    %v5313 = vrot.slane %v5291, 2
    %v5314 = vrot.slane %v5291, 3
    %v5315 = vrot.slane %v5291, 4
    %v5316 = vrot.slane %v5291, 5
    %v5317 = vrot.slane %v5291, 6
    %v5318 = vrot.slane %v5291, 7
    %v5319 = vrot.slane %v5295, 1
    %v5320 = vrot.slane %v5295, 2
    %v5321 = vrot.slane %v5295, 3
    %v5322 = vrot.slane %v5295, 4
    %v5323 = vrot.slane %v5295, 5
    %v5324 = vrot.slane %v5295, 6
    %v5325 = vrot.slane %v5295, 7
    %v5326 = vrot.slane %v5299, 1
    %v5327 = vrot.slane %v5299, 2
    %v5328 = vrot.slane %v5299, 3
    %v5329 = vrot.slane %v5299, 4
    %v5330 = vrot.slane %v5299, 5
    %v5331 = vrot.slane %v5299, 6
    %v5332 = vrot.slane %v5299, 7
    %5361 = vst [vmem:[#allocation2 + $0x9] sm:$0x1] %v5287
    %5362 = vst [vmem:[#allocation2 + $0x19] sm:$0x1] %v5305
    %5363 = vst [vmem:[#allocation2 + $0x29] sm:$0x1] %v5306
    %5364 = vst [vmem:[#allocation2 + $0x39] sm:$0x1] %v5307
    %5365 = vst [vmem:[#allocation2 + $0x49] sm:$0x1] %v5308
    %5366 = vst [vmem:[#allocation2 + $0x59] sm:$0x1] %v5309
    %5367 = vst [vmem:[#allocation2 + $0x69] sm:$0x1] %v5310
    %5368 = vst [vmem:[#allocation2 + $0x79] sm:$0x1] %v5311
    %5369 = vst [vmem:[#allocation2 + $0x89] sm:$0x1] %v5291
    %5370 = vst [vmem:[#allocation2 + $0x99] sm:$0x1] %v5312
    %5371 = vst [vmem:[#allocation2 + $0xa9] sm:$0x1] %v5313
    %5372 = vst [vmem:[#allocation2 + $0xb9] sm:$0x1] %v5314
    %5373 = vst [vmem:[#allocation2 + $0xc9] sm:$0x1] %v5315
    %5374 = vst [vmem:[#allocation2 + $0xd9] sm:$0x1] %v5316
    %5375 = vst [vmem:[#allocation2 + $0xe9] sm:$0x1] %v5317
    %5376 = vst [vmem:[#allocation2 + $0xf9] sm:$0x1] %v5318
    %5377 = vst [vmem:[#allocation2 + $0x109] sm:$0x1] %v5295
    %5378 = vst [vmem:[#allocation2 + $0x119] sm:$0x1] %v5319
    %5379 = vst [vmem:[#allocation2 + $0x129] sm:$0x1] %v5320
    %5380 = vst [vmem:[#allocation2 + $0x139] sm:$0x1] %v5321
    %5381 = vst [vmem:[#allocation2 + $0x149] sm:$0x1] %v5322
    %5382 = vst [vmem:[#allocation2 + $0x159] sm:$0x1] %v5323
    %5383 = vst [vmem:[#allocation2 + $0x169] sm:$0x1] %v5324
    %5384 = vst [vmem:[#allocation2 + $0x179] sm:$0x1] %v5325
    %5385 = vst [vmem:[#allocation2 + $0x189] sm:$0x1] %v5299
    %5386 = vst [vmem:[#allocation2 + $0x199] sm:$0x1] %v5326
    %5387 = vst [vmem:[#allocation2 + $0x1a9] sm:$0x1] %v5327
    %5388 = vst [vmem:[#allocation2 + $0x1b9] sm:$0x1] %v5328
    %5389 = vst [vmem:[#allocation2 + $0x1c9] sm:$0x1] %v5329
    %5390 = vst [vmem:[#allocation2 + $0x1d9] sm:$0x1] %v5330
    %5391 = vst [vmem:[#allocation2 + $0x1e9] sm:$0x1] %v5331
    %5392 = vst [vmem:[#allocation2 + $0x1f9] sm:$0x1] %v5332
    %v5393 = vld [vmem:[%s3 + $0xa] sm:$0x1]
    %v5394 = vperm.slane %v5393, 0
    %vm5395 = vcmp.eq.s32.totalorder %v27, %v5394
    %vm5396 = vcmp.eq.s32.totalorder %v28, %v5394
    %vm5397 = vcmp.eq.s32.totalorder %v263, %v5394
    %vm5398 = vcmp.eq.s32.totalorder %v264, %v5394
    %v5399 = vsel %vm5395, 1, 0
    %v5400 = vsel %vm5396, 1, 0
    %v5401 = vsel %vm5397, 1, 0
    %v5402 = vsel %vm5398, 1, 0
    %v5403 = vcvt.s32.f32 %v5399
    %v5404 = vcvt.s32.f32 %v5400
    %v5405 = vcvt.s32.f32 %v5401
    %v5406 = vcvt.s32.f32 %v5402
    %v5407 = vld [vmem:[%s2 + $0xa] sm:$0x1]
    %v5408 = vld [vmem:[%s2 + $0x1a] sm:$0x1]
    %v5409 = vld [vmem:[%s2 + $0x2a] sm:$0x1]
    %v5410 = vld [vmem:[%s2 + $0x3a] sm:$0x1]
    %v5411 = vld [vmem:[%s2 + $0x4a] sm:$0x1]
    %v5412 = vld [vmem:[%s2 + $0x5a] sm:$0x1]
    %v5413 = vld [vmem:[%s2 + $0x6a] sm:$0x1]
    %v5414 = vld [vmem:[%s2 + $0x7a] sm:$0x1]
    %v5415 = vld [vmem:[%s2 + $0x8a] sm:$0x1]
    %v5416 = vld [vmem:[%s2 + $0x9a] sm:$0x1]
    %v5417 = vld [vmem:[%s2 + $0xaa] sm:$0x1]
    %v5418 = vld [vmem:[%s2 + $0xba] sm:$0x1]
    %v5419 = vld [vmem:[%s2 + $0xca] sm:$0x1]
    %v5420 = vld [vmem:[%s2 + $0xda] sm:$0x1]
    %v5421 = vld [vmem:[%s2 + $0xea] sm:$0x1]
    %v5422 = vld [vmem:[%s2 + $0xfa] sm:$0x1]
    %v5423 = vld [vmem:[%s2 + $0x10a] sm:$0x1]
    %v5424 = vld [vmem:[%s2 + $0x11a] sm:$0x1]
    %v5425 = vld [vmem:[%s2 + $0x12a] sm:$0x1]
    %v5426 = vld [vmem:[%s2 + $0x13a] sm:$0x1]
    %v5427 = vld [vmem:[%s2 + $0x14a] sm:$0x1]
    %v5428 = vld [vmem:[%s2 + $0x15a] sm:$0x1]
    %v5429 = vld [vmem:[%s2 + $0x16a] sm:$0x1]
    %v5430 = vld [vmem:[%s2 + $0x17a] sm:$0x1]
    %v5431 = vld [vmem:[%s2 + $0x18a] sm:$0x1]
    %v5432 = vld [vmem:[%s2 + $0x19a] sm:$0x1]
    %v5433 = vld [vmem:[%s2 + $0x1aa] sm:$0x1]
    %v5434 = vld [vmem:[%s2 + $0x1ba] sm:$0x1]
    %v5435 = vld [vmem:[%s2 + $0x1ca] sm:$0x1]
    %v5436 = vld [vmem:[%s2 + $0x1da] sm:$0x1]
    %v5437 = vld [vmem:[%s2 + $0x1ea] sm:$0x1]
    %v5438 = vld [vmem:[%s2 + $0x1fa] sm:$0x1]
    %v5471 = vrot.slane %v5408, 7
    %v5472 = vsel %vm344, %v5471, %v5407
    %v5473 = vrot.slane %v5409, 6
    %v5474 = vsel %vm347, %v5473, %v5472
    %v5475 = vrot.slane %v5410, 5
    %v5476 = vsel %vm350, %v5475, %v5474
    %v5477 = vrot.slane %v5411, 4
    %v5478 = vsel %vm353, %v5477, %v5476
    %v5479 = vrot.slane %v5412, 3
    %v5480 = vsel %vm356, %v5479, %v5478
    %v5481 = vrot.slane %v5413, 2
    %v5482 = vsel %vm359, %v5481, %v5480
    %v5483 = vrot.slane %v5414, 1
    %v5484 = vsel %vm362, %v5483, %v5482
    %v5485 = vrot.slane %v5416, 7
    %v5486 = vsel %vm344, %v5485, %v5415
    %v5487 = vrot.slane %v5417, 6
    %v5488 = vsel %vm347, %v5487, %v5486
    %v5489 = vrot.slane %v5418, 5
    %v5490 = vsel %vm350, %v5489, %v5488
    %v5491 = vrot.slane %v5419, 4
    %v5492 = vsel %vm353, %v5491, %v5490
    %v5493 = vrot.slane %v5420, 3
    %v5494 = vsel %vm356, %v5493, %v5492
    %v5495 = vrot.slane %v5421, 2
    %v5496 = vsel %vm359, %v5495, %v5494
    %v5497 = vrot.slane %v5422, 1
    %v5498 = vsel %vm362, %v5497, %v5496
    %v5499 = vrot.slane %v5424, 7
    %v5500 = vsel %vm344, %v5499, %v5423
    %v5501 = vrot.slane %v5425, 6
    %v5502 = vsel %vm347, %v5501, %v5500
    %v5503 = vrot.slane %v5426, 5
    %v5504 = vsel %vm350, %v5503, %v5502
    %v5505 = vrot.slane %v5427, 4
    %v5506 = vsel %vm353, %v5505, %v5504
    %v5507 = vrot.slane %v5428, 3
    %v5508 = vsel %vm356, %v5507, %v5506
    %v5509 = vrot.slane %v5429, 2
    %v5510 = vsel %vm359, %v5509, %v5508
    %v5511 = vrot.slane %v5430, 1
    %v5512 = vsel %vm362, %v5511, %v5510
    %v5513 = vrot.slane %v5432, 7
    %v5514 = vsel %vm344, %v5513, %v5431
    %v5515 = vrot.slane %v5433, 6
    %v5516 = vsel %vm347, %v5515, %v5514
    %v5517 = vrot.slane %v5434, 5
    %v5518 = vsel %vm350, %v5517, %v5516
    %v5519 = vrot.slane %v5435, 4
    %v5520 = vsel %vm353, %v5519, %v5518
    %v5521 = vrot.slane %v5436, 3
    %v5522 = vsel %vm356, %v5521, %v5520
    %v5523 = vrot.slane %v5437, 2
    %v5524 = vsel %vm359, %v5523, %v5522
    %v5525 = vrot.slane %v5438, 1
    %v5526 = vsel %vm362, %v5525, %v5524
    %v5527 = vsel %vm406, %v5484, 0
    %v5529 = vsel %vm406, %v5498, 0
    %v5531 = vsel %vm406, %v5512, 0
    %v5533 = vsel %vm406, %v5526, 0
    %5535 = vmatpush.msra.mxu0 0.0
    %5536 = vmatpush.msra.mxu0 0.0
    %5537 = vmatpush.msra.mxu0 0.0
    %5538 = vmatpush.msra.mxu0 0.0
    %5539 = vmatpush.msra.mxu0 0.0
    %5540 = vmatpush.msra.mxu0 0.0
    %5541 = vmatpush.msra.mxu0 0.0
    %5542 = vmatpush.msra.mxu0 0.0
    %5543 = vmatpush.msra.mxu0 0.0
    %5544 = vmatpush.msra.mxu0 0.0
    %5545 = vmatpush.msra.mxu0 0.0
    %5546 = vmatpush.msra.mxu0 0.0
    %v5547 = vand.u32 %v5406, 4294901760
    %5548 = vmatpush.msra.mxu0 %v5547
    %v5549 = vand.u32 %v5405, 4294901760
    %5550 = vmatpush.msra.mxu0 %v5549
    %v5551 = vand.u32 %v5404, 4294901760
    %5552 = vmatpush.msra.mxu0 %v5551
    %v5553 = vand.u32 %v5403, 4294901760
    %5554 = vmatpush.msra.mxu0 %v5553
    %v5555 = vand.u32 %v5527, 4294901760
    %v5556 = vsub.f32 %v5527, %v5555
    %v5557 = vand.u32 %v5556, 4294901760
    %v5558 = vsub.f32 %v5556, %v5557
    %v5559 = vand.u32 %v5558, 4294901760
    %5560 = vmatmul.f32.gmra.mxu0 %v5559
    %v5561 = vpop.f32.mrf.mxu0
    %v5562 = vadd.f32 0.0, %v5561
    %v5563 = vand.u32 %v5529, 4294901760
    %v5564 = vsub.f32 %v5529, %v5563
    %v5565 = vand.u32 %v5564, 4294901760
    %v5566 = vsub.f32 %v5564, %v5565
    %v5567 = vand.u32 %v5566, 4294901760
    %5568 = vmatmul.f32.gmra.mxu0 %v5567
    %v5569 = vpop.f32.mrf.mxu0
    %v5570 = vadd.f32 0.0, %v5569
    %v5571 = vand.u32 %v5531, 4294901760
    %v5572 = vsub.f32 %v5531, %v5571
    %v5573 = vand.u32 %v5572, 4294901760
    %v5574 = vsub.f32 %v5572, %v5573
    %v5575 = vand.u32 %v5574, 4294901760
    %5576 = vmatmul.f32.gmra.mxu0 %v5575
    %v5577 = vpop.f32.mrf.mxu0
    %v5578 = vadd.f32 0.0, %v5577
    %v5579 = vand.u32 %v5533, 4294901760
    %v5580 = vsub.f32 %v5533, %v5579
    %v5581 = vand.u32 %v5580, 4294901760
    %v5582 = vsub.f32 %v5580, %v5581
    %v5583 = vand.u32 %v5582, 4294901760
    %5584 = vmatmul.f32.gmra.mxu0 %v5583
    %v5585 = vpop.f32.mrf.mxu0
    %v5586 = vadd.f32 0.0, %v5585
    %5587 = vdwg.mxu0
    %5588 = vmatpush.msra.mxu0 0.0
    %5589 = vmatpush.msra.mxu0 0.0
    %5590 = vmatpush.msra.mxu0 0.0
    %5591 = vmatpush.msra.mxu0 0.0
    %5592 = vmatpush.msra.mxu0 0.0
    %5593 = vmatpush.msra.mxu0 0.0
    %5594 = vmatpush.msra.mxu0 0.0
    %5595 = vmatpush.msra.mxu0 0.0
    %5596 = vmatpush.msra.mxu0 0.0
    %5597 = vmatpush.msra.mxu0 0.0
    %5598 = vmatpush.msra.mxu0 0.0
    %5599 = vmatpush.msra.mxu0 0.0
    %v5600 = vand.u32 %v5406, 4294901760
    %v5601 = vsub.f32 %v5406, %v5600
    %v5602 = vand.u32 %v5601, 4294901760
    %v5603 = vsub.f32 %v5601, %v5602
    %v5604 = vand.u32 %v5603, 4294901760
    %5605 = vmatpush.msra.mxu0 %v5604
    %v5606 = vand.u32 %v5405, 4294901760
    %v5607 = vsub.f32 %v5405, %v5606
    %v5608 = vand.u32 %v5607, 4294901760
    %v5609 = vsub.f32 %v5607, %v5608
    %v5610 = vand.u32 %v5609, 4294901760
    %5611 = vmatpush.msra.mxu0 %v5610
    %v5612 = vand.u32 %v5404, 4294901760
    %v5613 = vsub.f32 %v5404, %v5612
    %v5614 = vand.u32 %v5613, 4294901760
    %v5615 = vsub.f32 %v5613, %v5614
    %v5616 = vand.u32 %v5615, 4294901760
    %5617 = vmatpush.msra.mxu0 %v5616
    %v5618 = vand.u32 %v5403, 4294901760
    %v5619 = vsub.f32 %v5403, %v5618
    %v5620 = vand.u32 %v5619, 4294901760
    %v5621 = vsub.f32 %v5619, %v5620
    %v5622 = vand.u32 %v5621, 4294901760
    %5623 = vmatpush.msra.mxu0 %v5622
    %v5624 = vand.u32 %v5527, 4294901760
    %5625 = vmatmul.f32.gmra.mxu0 %v5624
    %v5626 = vpop.f32.mrf.mxu0
    %v5627 = vadd.f32 %v5562, %v5626
    %v5628 = vand.u32 %v5529, 4294901760
    %5629 = vmatmul.f32.gmra.mxu0 %v5628
    %v5630 = vpop.f32.mrf.mxu0
    %v5631 = vadd.f32 %v5570, %v5630
    %v5632 = vand.u32 %v5531, 4294901760
    %5633 = vmatmul.f32.gmra.mxu0 %v5632
    %v5634 = vpop.f32.mrf.mxu0
    %v5635 = vadd.f32 %v5578, %v5634
    %v5636 = vand.u32 %v5533, 4294901760
    %5637 = vmatmul.f32.gmra.mxu0 %v5636
    %v5638 = vpop.f32.mrf.mxu0
    %v5639 = vadd.f32 %v5586, %v5638
    %5640 = vdwg.mxu0
    %5641 = vmatpush.msra.mxu0 0.0
    %5642 = vmatpush.msra.mxu0 0.0
    %5643 = vmatpush.msra.mxu0 0.0
    %5644 = vmatpush.msra.mxu0 0.0
    %5645 = vmatpush.msra.mxu0 0.0
    %5646 = vmatpush.msra.mxu0 0.0
    %5647 = vmatpush.msra.mxu0 0.0
    %5648 = vmatpush.msra.mxu0 0.0
    %5649 = vmatpush.msra.mxu0 0.0
    %5650 = vmatpush.msra.mxu0 0.0
    %5651 = vmatpush.msra.mxu0 0.0
    %5652 = vmatpush.msra.mxu0 0.0
    %v5653 = vand.u32 %v5406, 4294901760
    %v5654 = vsub.f32 %v5406, %v5653
    %5655 = vmatpush.msra.mxu0 %v5654
    %v5656 = vand.u32 %v5405, 4294901760
    %v5657 = vsub.f32 %v5405, %v5656
    %5658 = vmatpush.msra.mxu0 %v5657
    %v5659 = vand.u32 %v5404, 4294901760
    %v5660 = vsub.f32 %v5404, %v5659
    %5661 = vmatpush.msra.mxu0 %v5660
    %v5662 = vand.u32 %v5403, 4294901760
    %v5663 = vsub.f32 %v5403, %v5662
    %5664 = vmatpush.msra.mxu0 %v5663
    %v5665 = vand.u32 %v5527, 4294901760
    %v5666 = vsub.f32 %v5527, %v5665
    %5667 = vmatmul.f32.gmra.mxu0 %v5666
    %v5668 = vpop.f32.mrf.mxu0
    %v5669 = vadd.f32 %v5627, %v5668
    %v5670 = vand.u32 %v5529, 4294901760
    %v5671 = vsub.f32 %v5529, %v5670
    %5672 = vmatmul.f32.gmra.mxu0 %v5671
    %v5673 = vpop.f32.mrf.mxu0
    %v5674 = vadd.f32 %v5631, %v5673
    %v5675 = vand.u32 %v5531, 4294901760
    %v5676 = vsub.f32 %v5531, %v5675
    %5677 = vmatmul.f32.gmra.mxu0 %v5676
    %v5678 = vpop.f32.mrf.mxu0
    %v5679 = vadd.f32 %v5635, %v5678
    %v5680 = vand.u32 %v5533, 4294901760
    %v5681 = vsub.f32 %v5533, %v5680
    %5682 = vmatmul.f32.gmra.mxu0 %v5681
    %v5683 = vpop.f32.mrf.mxu0
    %v5684 = vadd.f32 %v5639, %v5683
    %5685 = vdwg.mxu0
    %5686 = vmatpush.msra.mxu0 0.0
    %5687 = vmatpush.msra.mxu0 0.0
    %5688 = vmatpush.msra.mxu0 0.0
    %5689 = vmatpush.msra.mxu0 0.0
    %5690 = vmatpush.msra.mxu0 0.0
    %5691 = vmatpush.msra.mxu0 0.0
    %5692 = vmatpush.msra.mxu0 0.0
    %5693 = vmatpush.msra.mxu0 0.0
    %5694 = vmatpush.msra.mxu0 0.0
    %5695 = vmatpush.msra.mxu0 0.0
    %5696 = vmatpush.msra.mxu0 0.0
    %5697 = vmatpush.msra.mxu0 0.0
    %v5698 = vand.u32 %v5406, 4294901760
    %5699 = vmatpush.msra.mxu0 %v5698
    %v5700 = vand.u32 %v5405, 4294901760
    %5701 = vmatpush.msra.mxu0 %v5700
    %v5702 = vand.u32 %v5404, 4294901760
    %5703 = vmatpush.msra.mxu0 %v5702
    %v5704 = vand.u32 %v5403, 4294901760
    %5705 = vmatpush.msra.mxu0 %v5704
    %v5706 = vand.u32 %v5527, 4294901760
    %v5707 = vsub.f32 %v5527, %v5706
    %v5708 = vand.u32 %v5707, 4294901760
    %5709 = vmatmul.f32.gmra.mxu0 %v5708
    %v5710 = vpop.f32.mrf.mxu0
    %v5711 = vadd.f32 %v5669, %v5710
    %v5712 = vand.u32 %v5529, 4294901760
    %v5713 = vsub.f32 %v5529, %v5712
    %v5714 = vand.u32 %v5713, 4294901760
    %5715 = vmatmul.f32.gmra.mxu0 %v5714
    %v5716 = vpop.f32.mrf.mxu0
    %v5717 = vadd.f32 %v5674, %v5716
    %v5718 = vand.u32 %v5531, 4294901760
    %v5719 = vsub.f32 %v5531, %v5718
    %v5720 = vand.u32 %v5719, 4294901760
    %5721 = vmatmul.f32.gmra.mxu0 %v5720
    %v5722 = vpop.f32.mrf.mxu0
    %v5723 = vadd.f32 %v5679, %v5722
    %v5724 = vand.u32 %v5533, 4294901760
    %v5725 = vsub.f32 %v5533, %v5724
    %v5726 = vand.u32 %v5725, 4294901760
    %5727 = vmatmul.f32.gmra.mxu0 %v5726
    %v5728 = vpop.f32.mrf.mxu0
    %v5729 = vadd.f32 %v5684, %v5728
    %5730 = vdwg.mxu0
    %5731 = vmatpush.msra.mxu0 0.0
    %5732 = vmatpush.msra.mxu0 0.0
    %5733 = vmatpush.msra.mxu0 0.0
    %5734 = vmatpush.msra.mxu0 0.0
    %5735 = vmatpush.msra.mxu0 0.0
    %5736 = vmatpush.msra.mxu0 0.0
    %5737 = vmatpush.msra.mxu0 0.0
    %5738 = vmatpush.msra.mxu0 0.0
    %5739 = vmatpush.msra.mxu0 0.0
    %5740 = vmatpush.msra.mxu0 0.0
    %5741 = vmatpush.msra.mxu0 0.0
    %5742 = vmatpush.msra.mxu0 0.0
    %v5743 = vand.u32 %v5406, 4294901760
    %v5744 = vsub.f32 %v5406, %v5743
    %v5745 = vand.u32 %v5744, 4294901760
    %5746 = vmatpush.msra.mxu0 %v5745
    %v5747 = vand.u32 %v5405, 4294901760
    %v5748 = vsub.f32 %v5405, %v5747
    %v5749 = vand.u32 %v5748, 4294901760
    %5750 = vmatpush.msra.mxu0 %v5749
    %v5751 = vand.u32 %v5404, 4294901760
    %v5752 = vsub.f32 %v5404, %v5751
    %v5753 = vand.u32 %v5752, 4294901760
    %5754 = vmatpush.msra.mxu0 %v5753
    %v5755 = vand.u32 %v5403, 4294901760
    %v5756 = vsub.f32 %v5403, %v5755
    %v5757 = vand.u32 %v5756, 4294901760
    %5758 = vmatpush.msra.mxu0 %v5757
    %v5759 = vand.u32 %v5527, 4294901760
    %5760 = vmatmul.f32.gmra.mxu0 %v5759
    %v5761 = vpop.f32.mrf.mxu0
    %v5762 = vadd.f32 %v5711, %v5761
    %v5763 = vand.u32 %v5529, 4294901760
    %5764 = vmatmul.f32.gmra.mxu0 %v5763
    %v5765 = vpop.f32.mrf.mxu0
    %v5766 = vadd.f32 %v5717, %v5765
    %v5767 = vand.u32 %v5531, 4294901760
    %5768 = vmatmul.f32.gmra.mxu0 %v5767
    %v5769 = vpop.f32.mrf.mxu0
    %v5770 = vadd.f32 %v5723, %v5769
    %v5771 = vand.u32 %v5533, 4294901760
    %5772 = vmatmul.f32.gmra.mxu0 %v5771
    %v5773 = vpop.f32.mrf.mxu0
    %v5774 = vadd.f32 %v5729, %v5773
    %5775 = vdwg.mxu0
    %5776 = vmatpush.msra.mxu0 0.0
    %5777 = vmatpush.msra.mxu0 0.0
    %5778 = vmatpush.msra.mxu0 0.0
    %5779 = vmatpush.msra.mxu0 0.0
    %5780 = vmatpush.msra.mxu0 0.0
    %5781 = vmatpush.msra.mxu0 0.0
    %5782 = vmatpush.msra.mxu0 0.0
    %5783 = vmatpush.msra.mxu0 0.0
    %5784 = vmatpush.msra.mxu0 0.0
    %5785 = vmatpush.msra.mxu0 0.0
    %5786 = vmatpush.msra.mxu0 0.0
    %5787 = vmatpush.msra.mxu0 0.0
    %v5788 = vand.u32 %v5406, 4294901760
    %5789 = vmatpush.msra.mxu0 %v5788
    %v5790 = vand.u32 %v5405, 4294901760
    %5791 = vmatpush.msra.mxu0 %v5790
    %v5792 = vand.u32 %v5404, 4294901760
    %5793 = vmatpush.msra.mxu0 %v5792
    %v5794 = vand.u32 %v5403, 4294901760
    %5795 = vmatpush.msra.mxu0 %v5794
    %v5796 = vand.u32 %v5527, 4294901760
    %5797 = vmatmul.f32.gmra.mxu0 %v5796
    %v5798 = vpop.f32.mrf.mxu0
    %v5799 = vadd.f32 %v5762, %v5798
    %v5800 = vand.u32 %v5529, 4294901760
    %5801 = vmatmul.f32.gmra.mxu0 %v5800
    %v5802 = vpop.f32.mrf.mxu0
    %v5803 = vadd.f32 %v5766, %v5802
    %v5804 = vand.u32 %v5531, 4294901760
    %5805 = vmatmul.f32.gmra.mxu0 %v5804
    %v5806 = vpop.f32.mrf.mxu0
    %v5807 = vadd.f32 %v5770, %v5806
    %v5808 = vand.u32 %v5533, 4294901760
    %5809 = vmatmul.f32.gmra.mxu0 %v5808
    %v5810 = vpop.f32.mrf.mxu0
    %v5811 = vadd.f32 %v5774, %v5810
    %5812 = vdwg.mxu0
    %v5817 = vrot.slane %v5799, 1
    %v5818 = vrot.slane %v5799, 2
    %v5819 = vrot.slane %v5799, 3
    %v5820 = vrot.slane %v5799, 4
    %v5821 = vrot.slane %v5799, 5
    %v5822 = vrot.slane %v5799, 6
    %v5823 = vrot.slane %v5799, 7
    %v5824 = vrot.slane %v5803, 1
    %v5825 = vrot.slane %v5803, 2
    %v5826 = vrot.slane %v5803, 3
    %v5827 = vrot.slane %v5803, 4
    %v5828 = vrot.slane %v5803, 5
    %v5829 = vrot.slane %v5803, 6
    %v5830 = vrot.slane %v5803, 7
    %v5831 = vrot.slane %v5807, 1
    %v5832 = vrot.slane %v5807, 2
    %v5833 = vrot.slane %v5807, 3
    %v5834 = vrot.slane %v5807, 4
    %v5835 = vrot.slane %v5807, 5
    %v5836 = vrot.slane %v5807, 6
    %v5837 = vrot.slane %v5807, 7
    %v5838 = vrot.slane %v5811, 1
    %v5839 = vrot.slane %v5811, 2
    %v5840 = vrot.slane %v5811, 3
    %v5841 = vrot.slane %v5811, 4
    %v5842 = vrot.slane %v5811, 5
    %v5843 = vrot.slane %v5811, 6
    %v5844 = vrot.slane %v5811, 7
    %5873 = vst [vmem:[#allocation2 + $0xa] sm:$0x1] %v5799
    %5874 = vst [vmem:[#allocation2 + $0x1a] sm:$0x1] %v5817
    %5875 = vst [vmem:[#allocation2 + $0x2a] sm:$0x1] %v5818
    %5876 = vst [vmem:[#allocation2 + $0x3a] sm:$0x1] %v5819
    %5877 = vst [vmem:[#allocation2 + $0x4a] sm:$0x1] %v5820
    %5878 = vst [vmem:[#allocation2 + $0x5a] sm:$0x1] %v5821
    %5879 = vst [vmem:[#allocation2 + $0x6a] sm:$0x1] %v5822
    %5880 = vst [vmem:[#allocation2 + $0x7a] sm:$0x1] %v5823
    %5881 = vst [vmem:[#allocation2 + $0x8a] sm:$0x1] %v5803
    %5882 = vst [vmem:[#allocation2 + $0x9a] sm:$0x1] %v5824
    %5883 = vst [vmem:[#allocation2 + $0xaa] sm:$0x1] %v5825
    %5884 = vst [vmem:[#allocation2 + $0xba] sm:$0x1] %v5826
    %5885 = vst [vmem:[#allocation2 + $0xca] sm:$0x1] %v5827
    %5886 = vst [vmem:[#allocation2 + $0xda] sm:$0x1] %v5828
    %5887 = vst [vmem:[#allocation2 + $0xea] sm:$0x1] %v5829
    %5888 = vst [vmem:[#allocation2 + $0xfa] sm:$0x1] %v5830
    %5889 = vst [vmem:[#allocation2 + $0x10a] sm:$0x1] %v5807
    %5890 = vst [vmem:[#allocation2 + $0x11a] sm:$0x1] %v5831
    %5891 = vst [vmem:[#allocation2 + $0x12a] sm:$0x1] %v5832
    %5892 = vst [vmem:[#allocation2 + $0x13a] sm:$0x1] %v5833
    %5893 = vst [vmem:[#allocation2 + $0x14a] sm:$0x1] %v5834
    %5894 = vst [vmem:[#allocation2 + $0x15a] sm:$0x1] %v5835
    %5895 = vst [vmem:[#allocation2 + $0x16a] sm:$0x1] %v5836
    %5896 = vst [vmem:[#allocation2 + $0x17a] sm:$0x1] %v5837
    %5897 = vst [vmem:[#allocation2 + $0x18a] sm:$0x1] %v5811
    %5898 = vst [vmem:[#allocation2 + $0x19a] sm:$0x1] %v5838
    %5899 = vst [vmem:[#allocation2 + $0x1aa] sm:$0x1] %v5839
    %5900 = vst [vmem:[#allocation2 + $0x1ba] sm:$0x1] %v5840
    %5901 = vst [vmem:[#allocation2 + $0x1ca] sm:$0x1] %v5841
    %5902 = vst [vmem:[#allocation2 + $0x1da] sm:$0x1] %v5842
    %5903 = vst [vmem:[#allocation2 + $0x1ea] sm:$0x1] %v5843
    %5904 = vst [vmem:[#allocation2 + $0x1fa] sm:$0x1] %v5844
    %v5905 = vld [vmem:[%s3 + $0xb] sm:$0x1]
    %v5906 = vperm.slane %v5905, 0
    %vm5907 = vcmp.eq.s32.totalorder %v27, %v5906
    %vm5908 = vcmp.eq.s32.totalorder %v28, %v5906
    %vm5909 = vcmp.eq.s32.totalorder %v263, %v5906
    %vm5910 = vcmp.eq.s32.totalorder %v264, %v5906
    %v5911 = vsel %vm5907, 1, 0
    %v5912 = vsel %vm5908, 1, 0
    %v5913 = vsel %vm5909, 1, 0
    %v5914 = vsel %vm5910, 1, 0
    %v5915 = vcvt.s32.f32 %v5911
    %v5916 = vcvt.s32.f32 %v5912
    %v5917 = vcvt.s32.f32 %v5913
    %v5918 = vcvt.s32.f32 %v5914
    %v5919 = vld [vmem:[%s2 + $0xb] sm:$0x1]
    %v5920 = vld [vmem:[%s2 + $0x1b] sm:$0x1]
    %v5921 = vld [vmem:[%s2 + $0x2b] sm:$0x1]
    %v5922 = vld [vmem:[%s2 + $0x3b] sm:$0x1]
    %v5923 = vld [vmem:[%s2 + $0x4b] sm:$0x1]
    %v5924 = vld [vmem:[%s2 + $0x5b] sm:$0x1]
    %v5925 = vld [vmem:[%s2 + $0x6b] sm:$0x1]
    %v5926 = vld [vmem:[%s2 + $0x7b] sm:$0x1]
    %v5927 = vld [vmem:[%s2 + $0x8b] sm:$0x1]
    %v5928 = vld [vmem:[%s2 + $0x9b] sm:$0x1]
    %v5929 = vld [vmem:[%s2 + $0xab] sm:$0x1]
    %v5930 = vld [vmem:[%s2 + $0xbb] sm:$0x1]
    %v5931 = vld [vmem:[%s2 + $0xcb] sm:$0x1]
    %v5932 = vld [vmem:[%s2 + $0xdb] sm:$0x1]
    %v5933 = vld [vmem:[%s2 + $0xeb] sm:$0x1]
    %v5934 = vld [vmem:[%s2 + $0xfb] sm:$0x1]
    %v5935 = vld [vmem:[%s2 + $0x10b] sm:$0x1]
    %v5936 = vld [vmem:[%s2 + $0x11b] sm:$0x1]
    %v5937 = vld [vmem:[%s2 + $0x12b] sm:$0x1]
    %v5938 = vld [vmem:[%s2 + $0x13b] sm:$0x1]
    %v5939 = vld [vmem:[%s2 + $0x14b] sm:$0x1]
    %v5940 = vld [vmem:[%s2 + $0x15b] sm:$0x1]
    %v5941 = vld [vmem:[%s2 + $0x16b] sm:$0x1]
    %v5942 = vld [vmem:[%s2 + $0x17b] sm:$0x1]
    %v5943 = vld [vmem:[%s2 + $0x18b] sm:$0x1]
    %v5944 = vld [vmem:[%s2 + $0x19b] sm:$0x1]
    %v5945 = vld [vmem:[%s2 + $0x1ab] sm:$0x1]
    %v5946 = vld [vmem:[%s2 + $0x1bb] sm:$0x1]
    %v5947 = vld [vmem:[%s2 + $0x1cb] sm:$0x1]
    %v5948 = vld [vmem:[%s2 + $0x1db] sm:$0x1]
    %v5949 = vld [vmem:[%s2 + $0x1eb] sm:$0x1]
    %v5950 = vld [vmem:[%s2 + $0x1fb] sm:$0x1]
    %v5983 = vrot.slane %v5920, 7
    %v5984 = vsel %vm344, %v5983, %v5919
    %v5985 = vrot.slane %v5921, 6
    %v5986 = vsel %vm347, %v5985, %v5984
    %v5987 = vrot.slane %v5922, 5
    %v5988 = vsel %vm350, %v5987, %v5986
    %v5989 = vrot.slane %v5923, 4
    %v5990 = vsel %vm353, %v5989, %v5988
    %v5991 = vrot.slane %v5924, 3
    %v5992 = vsel %vm356, %v5991, %v5990
    %v5993 = vrot.slane %v5925, 2
    %v5994 = vsel %vm359, %v5993, %v5992
    %v5995 = vrot.slane %v5926, 1
    %v5996 = vsel %vm362, %v5995, %v5994
    %v5997 = vrot.slane %v5928, 7
    %v5998 = vsel %vm344, %v5997, %v5927
    %v5999 = vrot.slane %v5929, 6
    %v6000 = vsel %vm347, %v5999, %v5998
    %v6001 = vrot.slane %v5930, 5
    %v6002 = vsel %vm350, %v6001, %v6000
    %v6003 = vrot.slane %v5931, 4
    %v6004 = vsel %vm353, %v6003, %v6002
    %v6005 = vrot.slane %v5932, 3
    %v6006 = vsel %vm356, %v6005, %v6004
    %v6007 = vrot.slane %v5933, 2
    %v6008 = vsel %vm359, %v6007, %v6006
    %v6009 = vrot.slane %v5934, 1
    %v6010 = vsel %vm362, %v6009, %v6008
    %v6011 = vrot.slane %v5936, 7
    %v6012 = vsel %vm344, %v6011, %v5935
    %v6013 = vrot.slane %v5937, 6
    %v6014 = vsel %vm347, %v6013, %v6012
    %v6015 = vrot.slane %v5938, 5
    %v6016 = vsel %vm350, %v6015, %v6014
    %v6017 = vrot.slane %v5939, 4
    %v6018 = vsel %vm353, %v6017, %v6016
    %v6019 = vrot.slane %v5940, 3
    %v6020 = vsel %vm356, %v6019, %v6018
    %v6021 = vrot.slane %v5941, 2
    %v6022 = vsel %vm359, %v6021, %v6020
    %v6023 = vrot.slane %v5942, 1
    %v6024 = vsel %vm362, %v6023, %v6022
    %v6025 = vrot.slane %v5944, 7
    %v6026 = vsel %vm344, %v6025, %v5943
    %v6027 = vrot.slane %v5945, 6
    %v6028 = vsel %vm347, %v6027, %v6026
    %v6029 = vrot.slane %v5946, 5
    %v6030 = vsel %vm350, %v6029, %v6028
    %v6031 = vrot.slane %v5947, 4
    %v6032 = vsel %vm353, %v6031, %v6030
    %v6033 = vrot.slane %v5948, 3
    %v6034 = vsel %vm356, %v6033, %v6032
    %v6035 = vrot.slane %v5949, 2
    %v6036 = vsel %vm359, %v6035, %v6034
    %v6037 = vrot.slane %v5950, 1
    %v6038 = vsel %vm362, %v6037, %v6036
    %v6039 = vsel %vm406, %v5996, 0
    %v6041 = vsel %vm406, %v6010, 0
    %v6043 = vsel %vm406, %v6024, 0
    %v6045 = vsel %vm406, %v6038, 0
    %6047 = vmatpush.msra.mxu0 0.0
    %6048 = vmatpush.msra.mxu0 0.0
    %6049 = vmatpush.msra.mxu0 0.0
    %6050 = vmatpush.msra.mxu0 0.0
    %6051 = vmatpush.msra.mxu0 0.0
    %6052 = vmatpush.msra.mxu0 0.0
    %6053 = vmatpush.msra.mxu0 0.0
    %6054 = vmatpush.msra.mxu0 0.0
    %6055 = vmatpush.msra.mxu0 0.0
    %6056 = vmatpush.msra.mxu0 0.0
    %6057 = vmatpush.msra.mxu0 0.0
    %6058 = vmatpush.msra.mxu0 0.0
    %v6059 = vand.u32 %v5918, 4294901760
    %6060 = vmatpush.msra.mxu0 %v6059
    %v6061 = vand.u32 %v5917, 4294901760
    %6062 = vmatpush.msra.mxu0 %v6061
    %v6063 = vand.u32 %v5916, 4294901760
    %6064 = vmatpush.msra.mxu0 %v6063
    %v6065 = vand.u32 %v5915, 4294901760
    %6066 = vmatpush.msra.mxu0 %v6065
    %v6067 = vand.u32 %v6039, 4294901760
    %v6068 = vsub.f32 %v6039, %v6067
    %v6069 = vand.u32 %v6068, 4294901760
    %v6070 = vsub.f32 %v6068, %v6069
    %v6071 = vand.u32 %v6070, 4294901760
    %6072 = vmatmul.f32.gmra.mxu0 %v6071
    %v6073 = vpop.f32.mrf.mxu0
    %v6074 = vadd.f32 0.0, %v6073
    %v6075 = vand.u32 %v6041, 4294901760
    %v6076 = vsub.f32 %v6041, %v6075
    %v6077 = vand.u32 %v6076, 4294901760
    %v6078 = vsub.f32 %v6076, %v6077
    %v6079 = vand.u32 %v6078, 4294901760
    %6080 = vmatmul.f32.gmra.mxu0 %v6079
    %v6081 = vpop.f32.mrf.mxu0
    %v6082 = vadd.f32 0.0, %v6081
    %v6083 = vand.u32 %v6043, 4294901760
    %v6084 = vsub.f32 %v6043, %v6083
    %v6085 = vand.u32 %v6084, 4294901760
    %v6086 = vsub.f32 %v6084, %v6085
    %v6087 = vand.u32 %v6086, 4294901760
    %6088 = vmatmul.f32.gmra.mxu0 %v6087
    %v6089 = vpop.f32.mrf.mxu0
    %v6090 = vadd.f32 0.0, %v6089
    %v6091 = vand.u32 %v6045, 4294901760
    %v6092 = vsub.f32 %v6045, %v6091
    %v6093 = vand.u32 %v6092, 4294901760
    %v6094 = vsub.f32 %v6092, %v6093
    %v6095 = vand.u32 %v6094, 4294901760
    %6096 = vmatmul.f32.gmra.mxu0 %v6095
    %v6097 = vpop.f32.mrf.mxu0
    %v6098 = vadd.f32 0.0, %v6097
    %6099 = vdwg.mxu0
    %6100 = vmatpush.msra.mxu0 0.0
    %6101 = vmatpush.msra.mxu0 0.0
    %6102 = vmatpush.msra.mxu0 0.0
    %6103 = vmatpush.msra.mxu0 0.0
    %6104 = vmatpush.msra.mxu0 0.0
    %6105 = vmatpush.msra.mxu0 0.0
    %6106 = vmatpush.msra.mxu0 0.0
    %6107 = vmatpush.msra.mxu0 0.0
    %6108 = vmatpush.msra.mxu0 0.0
    %6109 = vmatpush.msra.mxu0 0.0
    %6110 = vmatpush.msra.mxu0 0.0
    %6111 = vmatpush.msra.mxu0 0.0
    %v6112 = vand.u32 %v5918, 4294901760
    %v6113 = vsub.f32 %v5918, %v6112
    %v6114 = vand.u32 %v6113, 4294901760
    %v6115 = vsub.f32 %v6113, %v6114
    %v6116 = vand.u32 %v6115, 4294901760
    %6117 = vmatpush.msra.mxu0 %v6116
    %v6118 = vand.u32 %v5917, 4294901760
    %v6119 = vsub.f32 %v5917, %v6118
    %v6120 = vand.u32 %v6119, 4294901760
    %v6121 = vsub.f32 %v6119, %v6120
    %v6122 = vand.u32 %v6121, 4294901760
    %6123 = vmatpush.msra.mxu0 %v6122
    %v6124 = vand.u32 %v5916, 4294901760
    %v6125 = vsub.f32 %v5916, %v6124
    %v6126 = vand.u32 %v6125, 4294901760
    %v6127 = vsub.f32 %v6125, %v6126
    %v6128 = vand.u32 %v6127, 4294901760
    %6129 = vmatpush.msra.mxu0 %v6128
    %v6130 = vand.u32 %v5915, 4294901760
    %v6131 = vsub.f32 %v5915, %v6130
    %v6132 = vand.u32 %v6131, 4294901760
    %v6133 = vsub.f32 %v6131, %v6132
    %v6134 = vand.u32 %v6133, 4294901760
    %6135 = vmatpush.msra.mxu0 %v6134
    %v6136 = vand.u32 %v6039, 4294901760
    %6137 = vmatmul.f32.gmra.mxu0 %v6136
    %v6138 = vpop.f32.mrf.mxu0
    %v6139 = vadd.f32 %v6074, %v6138
    %v6140 = vand.u32 %v6041, 4294901760
    %6141 = vmatmul.f32.gmra.mxu0 %v6140
    %v6142 = vpop.f32.mrf.mxu0
    %v6143 = vadd.f32 %v6082, %v6142
    %v6144 = vand.u32 %v6043, 4294901760
    %6145 = vmatmul.f32.gmra.mxu0 %v6144
    %v6146 = vpop.f32.mrf.mxu0
    %v6147 = vadd.f32 %v6090, %v6146
    %v6148 = vand.u32 %v6045, 4294901760
    %6149 = vmatmul.f32.gmra.mxu0 %v6148
    %v6150 = vpop.f32.mrf.mxu0
    %v6151 = vadd.f32 %v6098, %v6150
    %6152 = vdwg.mxu0
    %6153 = vmatpush.msra.mxu0 0.0
    %6154 = vmatpush.msra.mxu0 0.0
    %6155 = vmatpush.msra.mxu0 0.0
    %6156 = vmatpush.msra.mxu0 0.0
    %6157 = vmatpush.msra.mxu0 0.0
    %6158 = vmatpush.msra.mxu0 0.0
    %6159 = vmatpush.msra.mxu0 0.0
    %6160 = vmatpush.msra.mxu0 0.0
    %6161 = vmatpush.msra.mxu0 0.0
    %6162 = vmatpush.msra.mxu0 0.0
    %6163 = vmatpush.msra.mxu0 0.0
    %6164 = vmatpush.msra.mxu0 0.0
    %v6165 = vand.u32 %v5918, 4294901760
    %v6166 = vsub.f32 %v5918, %v6165
    %6167 = vmatpush.msra.mxu0 %v6166
    %v6168 = vand.u32 %v5917, 4294901760
    %v6169 = vsub.f32 %v5917, %v6168
    %6170 = vmatpush.msra.mxu0 %v6169
    %v6171 = vand.u32 %v5916, 4294901760
    %v6172 = vsub.f32 %v5916, %v6171
    %6173 = vmatpush.msra.mxu0 %v6172
    %v6174 = vand.u32 %v5915, 4294901760
    %v6175 = vsub.f32 %v5915, %v6174
    %6176 = vmatpush.msra.mxu0 %v6175
    %v6177 = vand.u32 %v6039, 4294901760
    %v6178 = vsub.f32 %v6039, %v6177
    %6179 = vmatmul.f32.gmra.mxu0 %v6178
    %v6180 = vpop.f32.mrf.mxu0
    %v6181 = vadd.f32 %v6139, %v6180
    %v6182 = vand.u32 %v6041, 4294901760
    %v6183 = vsub.f32 %v6041, %v6182
    %6184 = vmatmul.f32.gmra.mxu0 %v6183
    %v6185 = vpop.f32.mrf.mxu0
    %v6186 = vadd.f32 %v6143, %v6185
    %v6187 = vand.u32 %v6043, 4294901760
    %v6188 = vsub.f32 %v6043, %v6187
    %6189 = vmatmul.f32.gmra.mxu0 %v6188
    %v6190 = vpop.f32.mrf.mxu0
    %v6191 = vadd.f32 %v6147, %v6190
    %v6192 = vand.u32 %v6045, 4294901760
    %v6193 = vsub.f32 %v6045, %v6192
    %6194 = vmatmul.f32.gmra.mxu0 %v6193
    %v6195 = vpop.f32.mrf.mxu0
    %v6196 = vadd.f32 %v6151, %v6195
    %6197 = vdwg.mxu0
    %6198 = vmatpush.msra.mxu0 0.0
    %6199 = vmatpush.msra.mxu0 0.0
    %6200 = vmatpush.msra.mxu0 0.0
    %6201 = vmatpush.msra.mxu0 0.0
    %6202 = vmatpush.msra.mxu0 0.0
    %6203 = vmatpush.msra.mxu0 0.0
    %6204 = vmatpush.msra.mxu0 0.0
    %6205 = vmatpush.msra.mxu0 0.0
    %6206 = vmatpush.msra.mxu0 0.0
    %6207 = vmatpush.msra.mxu0 0.0
    %6208 = vmatpush.msra.mxu0 0.0
    %6209 = vmatpush.msra.mxu0 0.0
    %v6210 = vand.u32 %v5918, 4294901760
    %6211 = vmatpush.msra.mxu0 %v6210
    %v6212 = vand.u32 %v5917, 4294901760
    %6213 = vmatpush.msra.mxu0 %v6212
    %v6214 = vand.u32 %v5916, 4294901760
    %6215 = vmatpush.msra.mxu0 %v6214
    %v6216 = vand.u32 %v5915, 4294901760
    %6217 = vmatpush.msra.mxu0 %v6216
    %v6218 = vand.u32 %v6039, 4294901760
    %v6219 = vsub.f32 %v6039, %v6218
    %v6220 = vand.u32 %v6219, 4294901760
    %6221 = vmatmul.f32.gmra.mxu0 %v6220
    %v6222 = vpop.f32.mrf.mxu0
    %v6223 = vadd.f32 %v6181, %v6222
    %v6224 = vand.u32 %v6041, 4294901760
    %v6225 = vsub.f32 %v6041, %v6224
    %v6226 = vand.u32 %v6225, 4294901760
    %6227 = vmatmul.f32.gmra.mxu0 %v6226
    %v6228 = vpop.f32.mrf.mxu0
    %v6229 = vadd.f32 %v6186, %v6228
    %v6230 = vand.u32 %v6043, 4294901760
    %v6231 = vsub.f32 %v6043, %v6230
    %v6232 = vand.u32 %v6231, 4294901760
    %6233 = vmatmul.f32.gmra.mxu0 %v6232
    %v6234 = vpop.f32.mrf.mxu0
    %v6235 = vadd.f32 %v6191, %v6234
    %v6236 = vand.u32 %v6045, 4294901760
    %v6237 = vsub.f32 %v6045, %v6236
    %v6238 = vand.u32 %v6237, 4294901760
    %6239 = vmatmul.f32.gmra.mxu0 %v6238
    %v6240 = vpop.f32.mrf.mxu0
    %v6241 = vadd.f32 %v6196, %v6240
    %6242 = vdwg.mxu0
    %6243 = vmatpush.msra.mxu0 0.0
    %6244 = vmatpush.msra.mxu0 0.0
    %6245 = vmatpush.msra.mxu0 0.0
    %6246 = vmatpush.msra.mxu0 0.0
    %6247 = vmatpush.msra.mxu0 0.0
    %6248 = vmatpush.msra.mxu0 0.0
    %6249 = vmatpush.msra.mxu0 0.0
    %6250 = vmatpush.msra.mxu0 0.0
    %6251 = vmatpush.msra.mxu0 0.0
    %6252 = vmatpush.msra.mxu0 0.0
    %6253 = vmatpush.msra.mxu0 0.0
    %6254 = vmatpush.msra.mxu0 0.0
    %v6255 = vand.u32 %v5918, 4294901760
    %v6256 = vsub.f32 %v5918, %v6255
    %v6257 = vand.u32 %v6256, 4294901760
    %6258 = vmatpush.msra.mxu0 %v6257
    %v6259 = vand.u32 %v5917, 4294901760
    %v6260 = vsub.f32 %v5917, %v6259
    %v6261 = vand.u32 %v6260, 4294901760
    %6262 = vmatpush.msra.mxu0 %v6261
    %v6263 = vand.u32 %v5916, 4294901760
    %v6264 = vsub.f32 %v5916, %v6263
    %v6265 = vand.u32 %v6264, 4294901760
    %6266 = vmatpush.msra.mxu0 %v6265
    %v6267 = vand.u32 %v5915, 4294901760
    %v6268 = vsub.f32 %v5915, %v6267
    %v6269 = vand.u32 %v6268, 4294901760
    %6270 = vmatpush.msra.mxu0 %v6269
    %v6271 = vand.u32 %v6039, 4294901760
    %6272 = vmatmul.f32.gmra.mxu0 %v6271
    %v6273 = vpop.f32.mrf.mxu0
    %v6274 = vadd.f32 %v6223, %v6273
    %v6275 = vand.u32 %v6041, 4294901760
    %6276 = vmatmul.f32.gmra.mxu0 %v6275
    %v6277 = vpop.f32.mrf.mxu0
    %v6278 = vadd.f32 %v6229, %v6277
    %v6279 = vand.u32 %v6043, 4294901760
    %6280 = vmatmul.f32.gmra.mxu0 %v6279
    %v6281 = vpop.f32.mrf.mxu0
    %v6282 = vadd.f32 %v6235, %v6281
    %v6283 = vand.u32 %v6045, 4294901760
    %6284 = vmatmul.f32.gmra.mxu0 %v6283
    %v6285 = vpop.f32.mrf.mxu0
    %v6286 = vadd.f32 %v6241, %v6285
    %6287 = vdwg.mxu0
    %6288 = vmatpush.msra.mxu0 0.0
    %6289 = vmatpush.msra.mxu0 0.0
    %6290 = vmatpush.msra.mxu0 0.0
    %6291 = vmatpush.msra.mxu0 0.0
    %6292 = vmatpush.msra.mxu0 0.0
    %6293 = vmatpush.msra.mxu0 0.0
    %6294 = vmatpush.msra.mxu0 0.0
    %6295 = vmatpush.msra.mxu0 0.0
    %6296 = vmatpush.msra.mxu0 0.0
    %6297 = vmatpush.msra.mxu0 0.0
    %6298 = vmatpush.msra.mxu0 0.0
    %6299 = vmatpush.msra.mxu0 0.0
    %v6300 = vand.u32 %v5918, 4294901760
    %6301 = vmatpush.msra.mxu0 %v6300
    %v6302 = vand.u32 %v5917, 4294901760
    %6303 = vmatpush.msra.mxu0 %v6302
    %v6304 = vand.u32 %v5916, 4294901760
    %6305 = vmatpush.msra.mxu0 %v6304
    %v6306 = vand.u32 %v5915, 4294901760
    %6307 = vmatpush.msra.mxu0 %v6306
    %v6308 = vand.u32 %v6039, 4294901760
    %6309 = vmatmul.f32.gmra.mxu0 %v6308
    %v6310 = vpop.f32.mrf.mxu0
    %v6311 = vadd.f32 %v6274, %v6310
    %v6312 = vand.u32 %v6041, 4294901760
    %6313 = vmatmul.f32.gmra.mxu0 %v6312
    %v6314 = vpop.f32.mrf.mxu0
    %v6315 = vadd.f32 %v6278, %v6314
    %v6316 = vand.u32 %v6043, 4294901760
    %6317 = vmatmul.f32.gmra.mxu0 %v6316
    %v6318 = vpop.f32.mrf.mxu0
    %v6319 = vadd.f32 %v6282, %v6318
    %v6320 = vand.u32 %v6045, 4294901760
    %6321 = vmatmul.f32.gmra.mxu0 %v6320
    %v6322 = vpop.f32.mrf.mxu0
    %v6323 = vadd.f32 %v6286, %v6322
    %6324 = vdwg.mxu0
    %v6329 = vrot.slane %v6311, 1
    %v6330 = vrot.slane %v6311, 2
    %v6331 = vrot.slane %v6311, 3
    %v6332 = vrot.slane %v6311, 4
    %v6333 = vrot.slane %v6311, 5
    %v6334 = vrot.slane %v6311, 6
    %v6335 = vrot.slane %v6311, 7
    %v6336 = vrot.slane %v6315, 1
    %v6337 = vrot.slane %v6315, 2
    %v6338 = vrot.slane %v6315, 3
    %v6339 = vrot.slane %v6315, 4
    %v6340 = vrot.slane %v6315, 5
    %v6341 = vrot.slane %v6315, 6
    %v6342 = vrot.slane %v6315, 7
    %v6343 = vrot.slane %v6319, 1
    %v6344 = vrot.slane %v6319, 2
    %v6345 = vrot.slane %v6319, 3
    %v6346 = vrot.slane %v6319, 4
    %v6347 = vrot.slane %v6319, 5
    %v6348 = vrot.slane %v6319, 6
    %v6349 = vrot.slane %v6319, 7
    %v6350 = vrot.slane %v6323, 1
    %v6351 = vrot.slane %v6323, 2
    %v6352 = vrot.slane %v6323, 3
    %v6353 = vrot.slane %v6323, 4
    %v6354 = vrot.slane %v6323, 5
    %v6355 = vrot.slane %v6323, 6
    %v6356 = vrot.slane %v6323, 7
    %6385 = vst [vmem:[#allocation2 + $0xb] sm:$0x1] %v6311
    %6386 = vst [vmem:[#allocation2 + $0x1b] sm:$0x1] %v6329
    %6387 = vst [vmem:[#allocation2 + $0x2b] sm:$0x1] %v6330
    %6388 = vst [vmem:[#allocation2 + $0x3b] sm:$0x1] %v6331
    %6389 = vst [vmem:[#allocation2 + $0x4b] sm:$0x1] %v6332
    %6390 = vst [vmem:[#allocation2 + $0x5b] sm:$0x1] %v6333
    %6391 = vst [vmem:[#allocation2 + $0x6b] sm:$0x1] %v6334
    %6392 = vst [vmem:[#allocation2 + $0x7b] sm:$0x1] %v6335
    %6393 = vst [vmem:[#allocation2 + $0x8b] sm:$0x1] %v6315
    %6394 = vst [vmem:[#allocation2 + $0x9b] sm:$0x1] %v6336
    %6395 = vst [vmem:[#allocation2 + $0xab] sm:$0x1] %v6337
    %6396 = vst [vmem:[#allocation2 + $0xbb] sm:$0x1] %v6338
    %6397 = vst [vmem:[#allocation2 + $0xcb] sm:$0x1] %v6339
    %6398 = vst [vmem:[#allocation2 + $0xdb] sm:$0x1] %v6340
    %6399 = vst [vmem:[#allocation2 + $0xeb] sm:$0x1] %v6341
    %6400 = vst [vmem:[#allocation2 + $0xfb] sm:$0x1] %v6342
    %6401 = vst [vmem:[#allocation2 + $0x10b] sm:$0x1] %v6319
    %6402 = vst [vmem:[#allocation2 + $0x11b] sm:$0x1] %v6343
    %6403 = vst [vmem:[#allocation2 + $0x12b] sm:$0x1] %v6344
    %6404 = vst [vmem:[#allocation2 + $0x13b] sm:$0x1] %v6345
    %6405 = vst [vmem:[#allocation2 + $0x14b] sm:$0x1] %v6346
    %6406 = vst [vmem:[#allocation2 + $0x15b] sm:$0x1] %v6347
    %6407 = vst [vmem:[#allocation2 + $0x16b] sm:$0x1] %v6348
    %6408 = vst [vmem:[#allocation2 + $0x17b] sm:$0x1] %v6349
    %6409 = vst [vmem:[#allocation2 + $0x18b] sm:$0x1] %v6323
    %6410 = vst [vmem:[#allocation2 + $0x19b] sm:$0x1] %v6350
    %6411 = vst [vmem:[#allocation2 + $0x1ab] sm:$0x1] %v6351
    %6412 = vst [vmem:[#allocation2 + $0x1bb] sm:$0x1] %v6352
    %6413 = vst [vmem:[#allocation2 + $0x1cb] sm:$0x1] %v6353
    %6414 = vst [vmem:[#allocation2 + $0x1db] sm:$0x1] %v6354
    %6415 = vst [vmem:[#allocation2 + $0x1eb] sm:$0x1] %v6355
    %6416 = vst [vmem:[#allocation2 + $0x1fb] sm:$0x1] %v6356
    %v6417 = vld [vmem:[%s3 + $0xc] sm:$0x1]
    %v6418 = vperm.slane %v6417, 0
    %vm6419 = vcmp.eq.s32.totalorder %v27, %v6418
    %vm6420 = vcmp.eq.s32.totalorder %v28, %v6418
    %vm6421 = vcmp.eq.s32.totalorder %v263, %v6418
    %vm6422 = vcmp.eq.s32.totalorder %v264, %v6418
    %v6423 = vsel %vm6419, 1, 0
    %v6424 = vsel %vm6420, 1, 0
    %v6425 = vsel %vm6421, 1, 0
    %v6426 = vsel %vm6422, 1, 0
    %v6427 = vcvt.s32.f32 %v6423
    %v6428 = vcvt.s32.f32 %v6424
    %v6429 = vcvt.s32.f32 %v6425
    %v6430 = vcvt.s32.f32 %v6426
    %v6431 = vld [vmem:[%s2 + $0xc] sm:$0x1]
    %v6432 = vld [vmem:[%s2 + $0x1c] sm:$0x1]
    %v6433 = vld [vmem:[%s2 + $0x2c] sm:$0x1]
    %v6434 = vld [vmem:[%s2 + $0x3c] sm:$0x1]
    %v6435 = vld [vmem:[%s2 + $0x4c] sm:$0x1]
    %v6436 = vld [vmem:[%s2 + $0x5c] sm:$0x1]
    %v6437 = vld [vmem:[%s2 + $0x6c] sm:$0x1]
    %v6438 = vld [vmem:[%s2 + $0x7c] sm:$0x1]
    %v6439 = vld [vmem:[%s2 + $0x8c] sm:$0x1]
    %v6440 = vld [vmem:[%s2 + $0x9c] sm:$0x1]
    %v6441 = vld [vmem:[%s2 + $0xac] sm:$0x1]
    %v6442 = vld [vmem:[%s2 + $0xbc] sm:$0x1]
    %v6443 = vld [vmem:[%s2 + $0xcc] sm:$0x1]
    %v6444 = vld [vmem:[%s2 + $0xdc] sm:$0x1]
    %v6445 = vld [vmem:[%s2 + $0xec] sm:$0x1]
    %v6446 = vld [vmem:[%s2 + $0xfc] sm:$0x1]
    %v6447 = vld [vmem:[%s2 + $0x10c] sm:$0x1]
    %v6448 = vld [vmem:[%s2 + $0x11c] sm:$0x1]
    %v6449 = vld [vmem:[%s2 + $0x12c] sm:$0x1]
    %v6450 = vld [vmem:[%s2 + $0x13c] sm:$0x1]
    %v6451 = vld [vmem:[%s2 + $0x14c] sm:$0x1]
    %v6452 = vld [vmem:[%s2 + $0x15c] sm:$0x1]
    %v6453 = vld [vmem:[%s2 + $0x16c] sm:$0x1]
    %v6454 = vld [vmem:[%s2 + $0x17c] sm:$0x1]
    %v6455 = vld [vmem:[%s2 + $0x18c] sm:$0x1]
    %v6456 = vld [vmem:[%s2 + $0x19c] sm:$0x1]
    %v6457 = vld [vmem:[%s2 + $0x1ac] sm:$0x1]
    %v6458 = vld [vmem:[%s2 + $0x1bc] sm:$0x1]
    %v6459 = vld [vmem:[%s2 + $0x1cc] sm:$0x1]
    %v6460 = vld [vmem:[%s2 + $0x1dc] sm:$0x1]
    %v6461 = vld [vmem:[%s2 + $0x1ec] sm:$0x1]
    %v6462 = vld [vmem:[%s2 + $0x1fc] sm:$0x1]
    %v6495 = vrot.slane %v6432, 7
    %v6496 = vsel %vm344, %v6495, %v6431
    %v6497 = vrot.slane %v6433, 6
    %v6498 = vsel %vm347, %v6497, %v6496
    %v6499 = vrot.slane %v6434, 5
    %v6500 = vsel %vm350, %v6499, %v6498
    %v6501 = vrot.slane %v6435, 4
    %v6502 = vsel %vm353, %v6501, %v6500
    %v6503 = vrot.slane %v6436, 3
    %v6504 = vsel %vm356, %v6503, %v6502
    %v6505 = vrot.slane %v6437, 2
    %v6506 = vsel %vm359, %v6505, %v6504
    %v6507 = vrot.slane %v6438, 1
    %v6508 = vsel %vm362, %v6507, %v6506
    %v6509 = vrot.slane %v6440, 7
    %v6510 = vsel %vm344, %v6509, %v6439
    %v6511 = vrot.slane %v6441, 6
    %v6512 = vsel %vm347, %v6511, %v6510
    %v6513 = vrot.slane %v6442, 5
    %v6514 = vsel %vm350, %v6513, %v6512
    %v6515 = vrot.slane %v6443, 4
    %v6516 = vsel %vm353, %v6515, %v6514
    %v6517 = vrot.slane %v6444, 3
    %v6518 = vsel %vm356, %v6517, %v6516
    %v6519 = vrot.slane %v6445, 2
    %v6520 = vsel %vm359, %v6519, %v6518
    %v6521 = vrot.slane %v6446, 1
    %v6522 = vsel %vm362, %v6521, %v6520
    %v6523 = vrot.slane %v6448, 7
    %v6524 = vsel %vm344, %v6523, %v6447
    %v6525 = vrot.slane %v6449, 6
    %v6526 = vsel %vm347, %v6525, %v6524
    %v6527 = vrot.slane %v6450, 5
    %v6528 = vsel %vm350, %v6527, %v6526
    %v6529 = vrot.slane %v6451, 4
    %v6530 = vsel %vm353, %v6529, %v6528
    %v6531 = vrot.slane %v6452, 3
    %v6532 = vsel %vm356, %v6531, %v6530
    %v6533 = vrot.slane %v6453, 2
    %v6534 = vsel %vm359, %v6533, %v6532
    %v6535 = vrot.slane %v6454, 1
    %v6536 = vsel %vm362, %v6535, %v6534
    %v6537 = vrot.slane %v6456, 7
    %v6538 = vsel %vm344, %v6537, %v6455
    %v6539 = vrot.slane %v6457, 6
    %v6540 = vsel %vm347, %v6539, %v6538
    %v6541 = vrot.slane %v6458, 5
    %v6542 = vsel %vm350, %v6541, %v6540
    %v6543 = vrot.slane %v6459, 4
    %v6544 = vsel %vm353, %v6543, %v6542
    %v6545 = vrot.slane %v6460, 3
    %v6546 = vsel %vm356, %v6545, %v6544
    %v6547 = vrot.slane %v6461, 2
    %v6548 = vsel %vm359, %v6547, %v6546
    %v6549 = vrot.slane %v6462, 1
    %v6550 = vsel %vm362, %v6549, %v6548
    %v6551 = vsel %vm406, %v6508, 0
    %v6553 = vsel %vm406, %v6522, 0
    %v6555 = vsel %vm406, %v6536, 0
    %v6557 = vsel %vm406, %v6550, 0
    %6559 = vmatpush.msra.mxu0 0.0
    %6560 = vmatpush.msra.mxu0 0.0
    %6561 = vmatpush.msra.mxu0 0.0
    %6562 = vmatpush.msra.mxu0 0.0
    %6563 = vmatpush.msra.mxu0 0.0
    %6564 = vmatpush.msra.mxu0 0.0
    %6565 = vmatpush.msra.mxu0 0.0
    %6566 = vmatpush.msra.mxu0 0.0
    %6567 = vmatpush.msra.mxu0 0.0
    %6568 = vmatpush.msra.mxu0 0.0
    %6569 = vmatpush.msra.mxu0 0.0
    %6570 = vmatpush.msra.mxu0 0.0
    %v6571 = vand.u32 %v6430, 4294901760
    %6572 = vmatpush.msra.mxu0 %v6571
    %v6573 = vand.u32 %v6429, 4294901760
    %6574 = vmatpush.msra.mxu0 %v6573
    %v6575 = vand.u32 %v6428, 4294901760
    %6576 = vmatpush.msra.mxu0 %v6575
    %v6577 = vand.u32 %v6427, 4294901760
    %6578 = vmatpush.msra.mxu0 %v6577
    %v6579 = vand.u32 %v6551, 4294901760
    %v6580 = vsub.f32 %v6551, %v6579
    %v6581 = vand.u32 %v6580, 4294901760
    %v6582 = vsub.f32 %v6580, %v6581
    %v6583 = vand.u32 %v6582, 4294901760
    %6584 = vmatmul.f32.gmra.mxu0 %v6583
    %v6585 = vpop.f32.mrf.mxu0
    %v6586 = vadd.f32 0.0, %v6585
    %v6587 = vand.u32 %v6553, 4294901760
    %v6588 = vsub.f32 %v6553, %v6587
    %v6589 = vand.u32 %v6588, 4294901760
    %v6590 = vsub.f32 %v6588, %v6589
    %v6591 = vand.u32 %v6590, 4294901760
    %6592 = vmatmul.f32.gmra.mxu0 %v6591
    %v6593 = vpop.f32.mrf.mxu0
    %v6594 = vadd.f32 0.0, %v6593
    %v6595 = vand.u32 %v6555, 4294901760
    %v6596 = vsub.f32 %v6555, %v6595
    %v6597 = vand.u32 %v6596, 4294901760
    %v6598 = vsub.f32 %v6596, %v6597
    %v6599 = vand.u32 %v6598, 4294901760
    %6600 = vmatmul.f32.gmra.mxu0 %v6599
    %v6601 = vpop.f32.mrf.mxu0
    %v6602 = vadd.f32 0.0, %v6601
    %v6603 = vand.u32 %v6557, 4294901760
    %v6604 = vsub.f32 %v6557, %v6603
    %v6605 = vand.u32 %v6604, 4294901760
    %v6606 = vsub.f32 %v6604, %v6605
    %v6607 = vand.u32 %v6606, 4294901760
    %6608 = vmatmul.f32.gmra.mxu0 %v6607
    %v6609 = vpop.f32.mrf.mxu0
    %v6610 = vadd.f32 0.0, %v6609
    %6611 = vdwg.mxu0
    %6612 = vmatpush.msra.mxu0 0.0
    %6613 = vmatpush.msra.mxu0 0.0
    %6614 = vmatpush.msra.mxu0 0.0
    %6615 = vmatpush.msra.mxu0 0.0
    %6616 = vmatpush.msra.mxu0 0.0
    %6617 = vmatpush.msra.mxu0 0.0
    %6618 = vmatpush.msra.mxu0 0.0
    %6619 = vmatpush.msra.mxu0 0.0
    %6620 = vmatpush.msra.mxu0 0.0
    %6621 = vmatpush.msra.mxu0 0.0
    %6622 = vmatpush.msra.mxu0 0.0
    %6623 = vmatpush.msra.mxu0 0.0
    %v6624 = vand.u32 %v6430, 4294901760
    %v6625 = vsub.f32 %v6430, %v6624
    %v6626 = vand.u32 %v6625, 4294901760
    %v6627 = vsub.f32 %v6625, %v6626
    %v6628 = vand.u32 %v6627, 4294901760
    %6629 = vmatpush.msra.mxu0 %v6628
    %v6630 = vand.u32 %v6429, 4294901760
    %v6631 = vsub.f32 %v6429, %v6630
    %v6632 = vand.u32 %v6631, 4294901760
    %v6633 = vsub.f32 %v6631, %v6632
    %v6634 = vand.u32 %v6633, 4294901760
    %6635 = vmatpush.msra.mxu0 %v6634
    %v6636 = vand.u32 %v6428, 4294901760
    %v6637 = vsub.f32 %v6428, %v6636
    %v6638 = vand.u32 %v6637, 4294901760
    %v6639 = vsub.f32 %v6637, %v6638
    %v6640 = vand.u32 %v6639, 4294901760
    %6641 = vmatpush.msra.mxu0 %v6640
    %v6642 = vand.u32 %v6427, 4294901760
    %v6643 = vsub.f32 %v6427, %v6642
    %v6644 = vand.u32 %v6643, 4294901760
    %v6645 = vsub.f32 %v6643, %v6644
    %v6646 = vand.u32 %v6645, 4294901760
    %6647 = vmatpush.msra.mxu0 %v6646
    %v6648 = vand.u32 %v6551, 4294901760
    %6649 = vmatmul.f32.gmra.mxu0 %v6648
    %v6650 = vpop.f32.mrf.mxu0
    %v6651 = vadd.f32 %v6586, %v6650
    %v6652 = vand.u32 %v6553, 4294901760
    %6653 = vmatmul.f32.gmra.mxu0 %v6652
    %v6654 = vpop.f32.mrf.mxu0
    %v6655 = vadd.f32 %v6594, %v6654
    %v6656 = vand.u32 %v6555, 4294901760
    %6657 = vmatmul.f32.gmra.mxu0 %v6656
    %v6658 = vpop.f32.mrf.mxu0
    %v6659 = vadd.f32 %v6602, %v6658
    %v6660 = vand.u32 %v6557, 4294901760
    %6661 = vmatmul.f32.gmra.mxu0 %v6660
    %v6662 = vpop.f32.mrf.mxu0
    %v6663 = vadd.f32 %v6610, %v6662
    %6664 = vdwg.mxu0
    %6665 = vmatpush.msra.mxu0 0.0
    %6666 = vmatpush.msra.mxu0 0.0
    %6667 = vmatpush.msra.mxu0 0.0
    %6668 = vmatpush.msra.mxu0 0.0
    %6669 = vmatpush.msra.mxu0 0.0
    %6670 = vmatpush.msra.mxu0 0.0
    %6671 = vmatpush.msra.mxu0 0.0
    %6672 = vmatpush.msra.mxu0 0.0
    %6673 = vmatpush.msra.mxu0 0.0
    %6674 = vmatpush.msra.mxu0 0.0
    %6675 = vmatpush.msra.mxu0 0.0
    %6676 = vmatpush.msra.mxu0 0.0
    %v6677 = vand.u32 %v6430, 4294901760
    %v6678 = vsub.f32 %v6430, %v6677
    %6679 = vmatpush.msra.mxu0 %v6678
    %v6680 = vand.u32 %v6429, 4294901760
    %v6681 = vsub.f32 %v6429, %v6680
    %6682 = vmatpush.msra.mxu0 %v6681
    %v6683 = vand.u32 %v6428, 4294901760
    %v6684 = vsub.f32 %v6428, %v6683
    %6685 = vmatpush.msra.mxu0 %v6684
    %v6686 = vand.u32 %v6427, 4294901760
    %v6687 = vsub.f32 %v6427, %v6686
    %6688 = vmatpush.msra.mxu0 %v6687
    %v6689 = vand.u32 %v6551, 4294901760
    %v6690 = vsub.f32 %v6551, %v6689
    %6691 = vmatmul.f32.gmra.mxu0 %v6690
    %v6692 = vpop.f32.mrf.mxu0
    %v6693 = vadd.f32 %v6651, %v6692
    %v6694 = vand.u32 %v6553, 4294901760
    %v6695 = vsub.f32 %v6553, %v6694
    %6696 = vmatmul.f32.gmra.mxu0 %v6695
    %v6697 = vpop.f32.mrf.mxu0
    %v6698 = vadd.f32 %v6655, %v6697
    %v6699 = vand.u32 %v6555, 4294901760
    %v6700 = vsub.f32 %v6555, %v6699
    %6701 = vmatmul.f32.gmra.mxu0 %v6700
    %v6702 = vpop.f32.mrf.mxu0
    %v6703 = vadd.f32 %v6659, %v6702
    %v6704 = vand.u32 %v6557, 4294901760
    %v6705 = vsub.f32 %v6557, %v6704
    %6706 = vmatmul.f32.gmra.mxu0 %v6705
    %v6707 = vpop.f32.mrf.mxu0
    %v6708 = vadd.f32 %v6663, %v6707
    %6709 = vdwg.mxu0
    %6710 = vmatpush.msra.mxu0 0.0
    %6711 = vmatpush.msra.mxu0 0.0
    %6712 = vmatpush.msra.mxu0 0.0
    %6713 = vmatpush.msra.mxu0 0.0
    %6714 = vmatpush.msra.mxu0 0.0
    %6715 = vmatpush.msra.mxu0 0.0
    %6716 = vmatpush.msra.mxu0 0.0
    %6717 = vmatpush.msra.mxu0 0.0
    %6718 = vmatpush.msra.mxu0 0.0
    %6719 = vmatpush.msra.mxu0 0.0
    %6720 = vmatpush.msra.mxu0 0.0
    %6721 = vmatpush.msra.mxu0 0.0
    %v6722 = vand.u32 %v6430, 4294901760
    %6723 = vmatpush.msra.mxu0 %v6722
    %v6724 = vand.u32 %v6429, 4294901760
    %6725 = vmatpush.msra.mxu0 %v6724
    %v6726 = vand.u32 %v6428, 4294901760
    %6727 = vmatpush.msra.mxu0 %v6726
    %v6728 = vand.u32 %v6427, 4294901760
    %6729 = vmatpush.msra.mxu0 %v6728
    %v6730 = vand.u32 %v6551, 4294901760
    %v6731 = vsub.f32 %v6551, %v6730
    %v6732 = vand.u32 %v6731, 4294901760
    %6733 = vmatmul.f32.gmra.mxu0 %v6732
    %v6734 = vpop.f32.mrf.mxu0
    %v6735 = vadd.f32 %v6693, %v6734
    %v6736 = vand.u32 %v6553, 4294901760
    %v6737 = vsub.f32 %v6553, %v6736
    %v6738 = vand.u32 %v6737, 4294901760
    %6739 = vmatmul.f32.gmra.mxu0 %v6738
    %v6740 = vpop.f32.mrf.mxu0
    %v6741 = vadd.f32 %v6698, %v6740
    %v6742 = vand.u32 %v6555, 4294901760
    %v6743 = vsub.f32 %v6555, %v6742
    %v6744 = vand.u32 %v6743, 4294901760
    %6745 = vmatmul.f32.gmra.mxu0 %v6744
    %v6746 = vpop.f32.mrf.mxu0
    %v6747 = vadd.f32 %v6703, %v6746
    %v6748 = vand.u32 %v6557, 4294901760
    %v6749 = vsub.f32 %v6557, %v6748
    %v6750 = vand.u32 %v6749, 4294901760
    %6751 = vmatmul.f32.gmra.mxu0 %v6750
    %v6752 = vpop.f32.mrf.mxu0
    %v6753 = vadd.f32 %v6708, %v6752
    %6754 = vdwg.mxu0
    %6755 = vmatpush.msra.mxu0 0.0
    %6756 = vmatpush.msra.mxu0 0.0
    %6757 = vmatpush.msra.mxu0 0.0
    %6758 = vmatpush.msra.mxu0 0.0
    %6759 = vmatpush.msra.mxu0 0.0
    %6760 = vmatpush.msra.mxu0 0.0
    %6761 = vmatpush.msra.mxu0 0.0
    %6762 = vmatpush.msra.mxu0 0.0
    %6763 = vmatpush.msra.mxu0 0.0
    %6764 = vmatpush.msra.mxu0 0.0
    %6765 = vmatpush.msra.mxu0 0.0
    %6766 = vmatpush.msra.mxu0 0.0
    %v6767 = vand.u32 %v6430, 4294901760
    %v6768 = vsub.f32 %v6430, %v6767
    %v6769 = vand.u32 %v6768, 4294901760
    %6770 = vmatpush.msra.mxu0 %v6769
    %v6771 = vand.u32 %v6429, 4294901760
    %v6772 = vsub.f32 %v6429, %v6771
    %v6773 = vand.u32 %v6772, 4294901760
    %6774 = vmatpush.msra.mxu0 %v6773
    %v6775 = vand.u32 %v6428, 4294901760
    %v6776 = vsub.f32 %v6428, %v6775
    %v6777 = vand.u32 %v6776, 4294901760
    %6778 = vmatpush.msra.mxu0 %v6777
    %v6779 = vand.u32 %v6427, 4294901760
    %v6780 = vsub.f32 %v6427, %v6779
    %v6781 = vand.u32 %v6780, 4294901760
    %6782 = vmatpush.msra.mxu0 %v6781
    %v6783 = vand.u32 %v6551, 4294901760
    %6784 = vmatmul.f32.gmra.mxu0 %v6783
    %v6785 = vpop.f32.mrf.mxu0
    %v6786 = vadd.f32 %v6735, %v6785
    %v6787 = vand.u32 %v6553, 4294901760
    %6788 = vmatmul.f32.gmra.mxu0 %v6787
    %v6789 = vpop.f32.mrf.mxu0
    %v6790 = vadd.f32 %v6741, %v6789
    %v6791 = vand.u32 %v6555, 4294901760
    %6792 = vmatmul.f32.gmra.mxu0 %v6791
    %v6793 = vpop.f32.mrf.mxu0
    %v6794 = vadd.f32 %v6747, %v6793
    %v6795 = vand.u32 %v6557, 4294901760
    %6796 = vmatmul.f32.gmra.mxu0 %v6795
    %v6797 = vpop.f32.mrf.mxu0
    %v6798 = vadd.f32 %v6753, %v6797
    %6799 = vdwg.mxu0
    %6800 = vmatpush.msra.mxu0 0.0
    %6801 = vmatpush.msra.mxu0 0.0
    %6802 = vmatpush.msra.mxu0 0.0
    %6803 = vmatpush.msra.mxu0 0.0
    %6804 = vmatpush.msra.mxu0 0.0
    %6805 = vmatpush.msra.mxu0 0.0
    %6806 = vmatpush.msra.mxu0 0.0
    %6807 = vmatpush.msra.mxu0 0.0
    %6808 = vmatpush.msra.mxu0 0.0
    %6809 = vmatpush.msra.mxu0 0.0
    %6810 = vmatpush.msra.mxu0 0.0
    %6811 = vmatpush.msra.mxu0 0.0
    %v6812 = vand.u32 %v6430, 4294901760
    %6813 = vmatpush.msra.mxu0 %v6812
    %v6814 = vand.u32 %v6429, 4294901760
    %6815 = vmatpush.msra.mxu0 %v6814
    %v6816 = vand.u32 %v6428, 4294901760
    %6817 = vmatpush.msra.mxu0 %v6816
    %v6818 = vand.u32 %v6427, 4294901760
    %6819 = vmatpush.msra.mxu0 %v6818
    %v6820 = vand.u32 %v6551, 4294901760
    %6821 = vmatmul.f32.gmra.mxu0 %v6820
    %v6822 = vpop.f32.mrf.mxu0
    %v6823 = vadd.f32 %v6786, %v6822
    %v6824 = vand.u32 %v6553, 4294901760
    %6825 = vmatmul.f32.gmra.mxu0 %v6824
    %v6826 = vpop.f32.mrf.mxu0
    %v6827 = vadd.f32 %v6790, %v6826
    %v6828 = vand.u32 %v6555, 4294901760
    %6829 = vmatmul.f32.gmra.mxu0 %v6828
    %v6830 = vpop.f32.mrf.mxu0
    %v6831 = vadd.f32 %v6794, %v6830
    %v6832 = vand.u32 %v6557, 4294901760
    %6833 = vmatmul.f32.gmra.mxu0 %v6832
    %v6834 = vpop.f32.mrf.mxu0
    %v6835 = vadd.f32 %v6798, %v6834
    %6836 = vdwg.mxu0
    %v6841 = vrot.slane %v6823, 1
    %v6842 = vrot.slane %v6823, 2
    %v6843 = vrot.slane %v6823, 3
    %v6844 = vrot.slane %v6823, 4
    %v6845 = vrot.slane %v6823, 5
    %v6846 = vrot.slane %v6823, 6
    %v6847 = vrot.slane %v6823, 7
    %v6848 = vrot.slane %v6827, 1
    %v6849 = vrot.slane %v6827, 2
    %v6850 = vrot.slane %v6827, 3
    %v6851 = vrot.slane %v6827, 4
    %v6852 = vrot.slane %v6827, 5
    %v6853 = vrot.slane %v6827, 6
    %v6854 = vrot.slane %v6827, 7
    %v6855 = vrot.slane %v6831, 1
    %v6856 = vrot.slane %v6831, 2
    %v6857 = vrot.slane %v6831, 3
    %v6858 = vrot.slane %v6831, 4
    %v6859 = vrot.slane %v6831, 5
    %v6860 = vrot.slane %v6831, 6
    %v6861 = vrot.slane %v6831, 7
    %v6862 = vrot.slane %v6835, 1
    %v6863 = vrot.slane %v6835, 2
    %v6864 = vrot.slane %v6835, 3
    %v6865 = vrot.slane %v6835, 4
    %v6866 = vrot.slane %v6835, 5
    %v6867 = vrot.slane %v6835, 6
    %v6868 = vrot.slane %v6835, 7
    %6897 = vst [vmem:[#allocation2 + $0xc] sm:$0x1] %v6823
    %6898 = vst [vmem:[#allocation2 + $0x1c] sm:$0x1] %v6841
    %6899 = vst [vmem:[#allocation2 + $0x2c] sm:$0x1] %v6842
    %6900 = vst [vmem:[#allocation2 + $0x3c] sm:$0x1] %v6843
    %6901 = vst [vmem:[#allocation2 + $0x4c] sm:$0x1] %v6844
    %6902 = vst [vmem:[#allocation2 + $0x5c] sm:$0x1] %v6845
    %6903 = vst [vmem:[#allocation2 + $0x6c] sm:$0x1] %v6846
    %6904 = vst [vmem:[#allocation2 + $0x7c] sm:$0x1] %v6847
    %6905 = vst [vmem:[#allocation2 + $0x8c] sm:$0x1] %v6827
    %6906 = vst [vmem:[#allocation2 + $0x9c] sm:$0x1] %v6848
    %6907 = vst [vmem:[#allocation2 + $0xac] sm:$0x1] %v6849
    %6908 = vst [vmem:[#allocation2 + $0xbc] sm:$0x1] %v6850
    %6909 = vst [vmem:[#allocation2 + $0xcc] sm:$0x1] %v6851
    %6910 = vst [vmem:[#allocation2 + $0xdc] sm:$0x1] %v6852
    %6911 = vst [vmem:[#allocation2 + $0xec] sm:$0x1] %v6853
    %6912 = vst [vmem:[#allocation2 + $0xfc] sm:$0x1] %v6854
    %6913 = vst [vmem:[#allocation2 + $0x10c] sm:$0x1] %v6831
    %6914 = vst [vmem:[#allocation2 + $0x11c] sm:$0x1] %v6855
    %6915 = vst [vmem:[#allocation2 + $0x12c] sm:$0x1] %v6856
    %6916 = vst [vmem:[#allocation2 + $0x13c] sm:$0x1] %v6857
    %6917 = vst [vmem:[#allocation2 + $0x14c] sm:$0x1] %v6858
    %6918 = vst [vmem:[#allocation2 + $0x15c] sm:$0x1] %v6859
    %6919 = vst [vmem:[#allocation2 + $0x16c] sm:$0x1] %v6860
    %6920 = vst [vmem:[#allocation2 + $0x17c] sm:$0x1] %v6861
    %6921 = vst [vmem:[#allocation2 + $0x18c] sm:$0x1] %v6835
    %6922 = vst [vmem:[#allocation2 + $0x19c] sm:$0x1] %v6862
    %6923 = vst [vmem:[#allocation2 + $0x1ac] sm:$0x1] %v6863
    %6924 = vst [vmem:[#allocation2 + $0x1bc] sm:$0x1] %v6864
    %6925 = vst [vmem:[#allocation2 + $0x1cc] sm:$0x1] %v6865
    %6926 = vst [vmem:[#allocation2 + $0x1dc] sm:$0x1] %v6866
    %6927 = vst [vmem:[#allocation2 + $0x1ec] sm:$0x1] %v6867
    %6928 = vst [vmem:[#allocation2 + $0x1fc] sm:$0x1] %v6868
    %v6929 = vld [vmem:[%s3 + $0xd] sm:$0x1]
    %v6930 = vperm.slane %v6929, 0
    %vm6931 = vcmp.eq.s32.totalorder %v27, %v6930
    %vm6932 = vcmp.eq.s32.totalorder %v28, %v6930
    %vm6933 = vcmp.eq.s32.totalorder %v263, %v6930
    %vm6934 = vcmp.eq.s32.totalorder %v264, %v6930
    %v6935 = vsel %vm6931, 1, 0
    %v6936 = vsel %vm6932, 1, 0
    %v6937 = vsel %vm6933, 1, 0
    %v6938 = vsel %vm6934, 1, 0
    %v6939 = vcvt.s32.f32 %v6935
    %v6940 = vcvt.s32.f32 %v6936
    %v6941 = vcvt.s32.f32 %v6937
    %v6942 = vcvt.s32.f32 %v6938
    %v6943 = vld [vmem:[%s2 + $0xd] sm:$0x1]
    %v6944 = vld [vmem:[%s2 + $0x1d] sm:$0x1]
    %v6945 = vld [vmem:[%s2 + $0x2d] sm:$0x1]
    %v6946 = vld [vmem:[%s2 + $0x3d] sm:$0x1]
    %v6947 = vld [vmem:[%s2 + $0x4d] sm:$0x1]
    %v6948 = vld [vmem:[%s2 + $0x5d] sm:$0x1]
    %v6949 = vld [vmem:[%s2 + $0x6d] sm:$0x1]
    %v6950 = vld [vmem:[%s2 + $0x7d] sm:$0x1]
    %v6951 = vld [vmem:[%s2 + $0x8d] sm:$0x1]
    %v6952 = vld [vmem:[%s2 + $0x9d] sm:$0x1]
    %v6953 = vld [vmem:[%s2 + $0xad] sm:$0x1]
    %v6954 = vld [vmem:[%s2 + $0xbd] sm:$0x1]
    %v6955 = vld [vmem:[%s2 + $0xcd] sm:$0x1]
    %v6956 = vld [vmem:[%s2 + $0xdd] sm:$0x1]
    %v6957 = vld [vmem:[%s2 + $0xed] sm:$0x1]
    %v6958 = vld [vmem:[%s2 + $0xfd] sm:$0x1]
    %v6959 = vld [vmem:[%s2 + $0x10d] sm:$0x1]
    %v6960 = vld [vmem:[%s2 + $0x11d] sm:$0x1]
    %v6961 = vld [vmem:[%s2 + $0x12d] sm:$0x1]
    %v6962 = vld [vmem:[%s2 + $0x13d] sm:$0x1]
    %v6963 = vld [vmem:[%s2 + $0x14d] sm:$0x1]
    %v6964 = vld [vmem:[%s2 + $0x15d] sm:$0x1]
    %v6965 = vld [vmem:[%s2 + $0x16d] sm:$0x1]
    %v6966 = vld [vmem:[%s2 + $0x17d] sm:$0x1]
    %v6967 = vld [vmem:[%s2 + $0x18d] sm:$0x1]
    %v6968 = vld [vmem:[%s2 + $0x19d] sm:$0x1]
    %v6969 = vld [vmem:[%s2 + $0x1ad] sm:$0x1]
    %v6970 = vld [vmem:[%s2 + $0x1bd] sm:$0x1]
    %v6971 = vld [vmem:[%s2 + $0x1cd] sm:$0x1]
    %v6972 = vld [vmem:[%s2 + $0x1dd] sm:$0x1]
    %v6973 = vld [vmem:[%s2 + $0x1ed] sm:$0x1]
    %v6974 = vld [vmem:[%s2 + $0x1fd] sm:$0x1]
    %v7007 = vrot.slane %v6944, 7
    %v7008 = vsel %vm344, %v7007, %v6943
    %v7009 = vrot.slane %v6945, 6
    %v7010 = vsel %vm347, %v7009, %v7008
    %v7011 = vrot.slane %v6946, 5
    %v7012 = vsel %vm350, %v7011, %v7010
    %v7013 = vrot.slane %v6947, 4
    %v7014 = vsel %vm353, %v7013, %v7012
    %v7015 = vrot.slane %v6948, 3
    %v7016 = vsel %vm356, %v7015, %v7014
    %v7017 = vrot.slane %v6949, 2
    %v7018 = vsel %vm359, %v7017, %v7016
    %v7019 = vrot.slane %v6950, 1
    %v7020 = vsel %vm362, %v7019, %v7018
    %v7021 = vrot.slane %v6952, 7
    %v7022 = vsel %vm344, %v7021, %v6951
    %v7023 = vrot.slane %v6953, 6
    %v7024 = vsel %vm347, %v7023, %v7022
    %v7025 = vrot.slane %v6954, 5
    %v7026 = vsel %vm350, %v7025, %v7024
    %v7027 = vrot.slane %v6955, 4
    %v7028 = vsel %vm353, %v7027, %v7026
    %v7029 = vrot.slane %v6956, 3
    %v7030 = vsel %vm356, %v7029, %v7028
    %v7031 = vrot.slane %v6957, 2
    %v7032 = vsel %vm359, %v7031, %v7030
    %v7033 = vrot.slane %v6958, 1
    %v7034 = vsel %vm362, %v7033, %v7032
    %v7035 = vrot.slane %v6960, 7
    %v7036 = vsel %vm344, %v7035, %v6959
    %v7037 = vrot.slane %v6961, 6
    %v7038 = vsel %vm347, %v7037, %v7036
    %v7039 = vrot.slane %v6962, 5
    %v7040 = vsel %vm350, %v7039, %v7038
    %v7041 = vrot.slane %v6963, 4
    %v7042 = vsel %vm353, %v7041, %v7040
    %v7043 = vrot.slane %v6964, 3
    %v7044 = vsel %vm356, %v7043, %v7042
    %v7045 = vrot.slane %v6965, 2
    %v7046 = vsel %vm359, %v7045, %v7044
    %v7047 = vrot.slane %v6966, 1
    %v7048 = vsel %vm362, %v7047, %v7046
    %v7049 = vrot.slane %v6968, 7
    %v7050 = vsel %vm344, %v7049, %v6967
    %v7051 = vrot.slane %v6969, 6
    %v7052 = vsel %vm347, %v7051, %v7050
    %v7053 = vrot.slane %v6970, 5
    %v7054 = vsel %vm350, %v7053, %v7052
    %v7055 = vrot.slane %v6971, 4
    %v7056 = vsel %vm353, %v7055, %v7054
    %v7057 = vrot.slane %v6972, 3
    %v7058 = vsel %vm356, %v7057, %v7056
    %v7059 = vrot.slane %v6973, 2
    %v7060 = vsel %vm359, %v7059, %v7058
    %v7061 = vrot.slane %v6974, 1
    %v7062 = vsel %vm362, %v7061, %v7060
    %v7063 = vsel %vm406, %v7020, 0
    %v7065 = vsel %vm406, %v7034, 0
    %v7067 = vsel %vm406, %v7048, 0
    %v7069 = vsel %vm406, %v7062, 0
    %7071 = vmatpush.msra.mxu0 0.0
    %7072 = vmatpush.msra.mxu0 0.0
    %7073 = vmatpush.msra.mxu0 0.0
    %7074 = vmatpush.msra.mxu0 0.0
    %7075 = vmatpush.msra.mxu0 0.0
    %7076 = vmatpush.msra.mxu0 0.0
    %7077 = vmatpush.msra.mxu0 0.0
    %7078 = vmatpush.msra.mxu0 0.0
    %7079 = vmatpush.msra.mxu0 0.0
    %7080 = vmatpush.msra.mxu0 0.0
    %7081 = vmatpush.msra.mxu0 0.0
    %7082 = vmatpush.msra.mxu0 0.0
    %v7083 = vand.u32 %v6942, 4294901760
    %7084 = vmatpush.msra.mxu0 %v7083
    %v7085 = vand.u32 %v6941, 4294901760
    %7086 = vmatpush.msra.mxu0 %v7085
    %v7087 = vand.u32 %v6940, 4294901760
    %7088 = vmatpush.msra.mxu0 %v7087
    %v7089 = vand.u32 %v6939, 4294901760
    %7090 = vmatpush.msra.mxu0 %v7089
    %v7091 = vand.u32 %v7063, 4294901760
    %v7092 = vsub.f32 %v7063, %v7091
    %v7093 = vand.u32 %v7092, 4294901760
    %v7094 = vsub.f32 %v7092, %v7093
    %v7095 = vand.u32 %v7094, 4294901760
    %7096 = vmatmul.f32.gmra.mxu0 %v7095
    %v7097 = vpop.f32.mrf.mxu0
    %v7098 = vadd.f32 0.0, %v7097
    %v7099 = vand.u32 %v7065, 4294901760
    %v7100 = vsub.f32 %v7065, %v7099
    %v7101 = vand.u32 %v7100, 4294901760
    %v7102 = vsub.f32 %v7100, %v7101
    %v7103 = vand.u32 %v7102, 4294901760
    %7104 = vmatmul.f32.gmra.mxu0 %v7103
    %v7105 = vpop.f32.mrf.mxu0
    %v7106 = vadd.f32 0.0, %v7105
    %v7107 = vand.u32 %v7067, 4294901760
    %v7108 = vsub.f32 %v7067, %v7107
    %v7109 = vand.u32 %v7108, 4294901760
    %v7110 = vsub.f32 %v7108, %v7109
    %v7111 = vand.u32 %v7110, 4294901760
    %7112 = vmatmul.f32.gmra.mxu0 %v7111
    %v7113 = vpop.f32.mrf.mxu0
    %v7114 = vadd.f32 0.0, %v7113
    %v7115 = vand.u32 %v7069, 4294901760
    %v7116 = vsub.f32 %v7069, %v7115
    %v7117 = vand.u32 %v7116, 4294901760
    %v7118 = vsub.f32 %v7116, %v7117
    %v7119 = vand.u32 %v7118, 4294901760
    %7120 = vmatmul.f32.gmra.mxu0 %v7119
    %v7121 = vpop.f32.mrf.mxu0
    %v7122 = vadd.f32 0.0, %v7121
    %7123 = vdwg.mxu0
    %7124 = vmatpush.msra.mxu0 0.0
    %7125 = vmatpush.msra.mxu0 0.0
    %7126 = vmatpush.msra.mxu0 0.0
    %7127 = vmatpush.msra.mxu0 0.0
    %7128 = vmatpush.msra.mxu0 0.0
    %7129 = vmatpush.msra.mxu0 0.0
    %7130 = vmatpush.msra.mxu0 0.0
    %7131 = vmatpush.msra.mxu0 0.0
    %7132 = vmatpush.msra.mxu0 0.0
    %7133 = vmatpush.msra.mxu0 0.0
    %7134 = vmatpush.msra.mxu0 0.0
    %7135 = vmatpush.msra.mxu0 0.0
    %v7136 = vand.u32 %v6942, 4294901760
    %v7137 = vsub.f32 %v6942, %v7136
    %v7138 = vand.u32 %v7137, 4294901760
    %v7139 = vsub.f32 %v7137, %v7138
    %v7140 = vand.u32 %v7139, 4294901760
    %7141 = vmatpush.msra.mxu0 %v7140
    %v7142 = vand.u32 %v6941, 4294901760
    %v7143 = vsub.f32 %v6941, %v7142
    %v7144 = vand.u32 %v7143, 4294901760
    %v7145 = vsub.f32 %v7143, %v7144
    %v7146 = vand.u32 %v7145, 4294901760
    %7147 = vmatpush.msra.mxu0 %v7146
    %v7148 = vand.u32 %v6940, 4294901760
    %v7149 = vsub.f32 %v6940, %v7148
    %v7150 = vand.u32 %v7149, 4294901760
    %v7151 = vsub.f32 %v7149, %v7150
    %v7152 = vand.u32 %v7151, 4294901760
    %7153 = vmatpush.msra.mxu0 %v7152
    %v7154 = vand.u32 %v6939, 4294901760
    %v7155 = vsub.f32 %v6939, %v7154
    %v7156 = vand.u32 %v7155, 4294901760
    %v7157 = vsub.f32 %v7155, %v7156
    %v7158 = vand.u32 %v7157, 4294901760
    %7159 = vmatpush.msra.mxu0 %v7158
    %v7160 = vand.u32 %v7063, 4294901760
    %7161 = vmatmul.f32.gmra.mxu0 %v7160
    %v7162 = vpop.f32.mrf.mxu0
    %v7163 = vadd.f32 %v7098, %v7162
    %v7164 = vand.u32 %v7065, 4294901760
    %7165 = vmatmul.f32.gmra.mxu0 %v7164
    %v7166 = vpop.f32.mrf.mxu0
    %v7167 = vadd.f32 %v7106, %v7166
    %v7168 = vand.u32 %v7067, 4294901760
    %7169 = vmatmul.f32.gmra.mxu0 %v7168
    %v7170 = vpop.f32.mrf.mxu0
    %v7171 = vadd.f32 %v7114, %v7170
    %v7172 = vand.u32 %v7069, 4294901760
    %7173 = vmatmul.f32.gmra.mxu0 %v7172
    %v7174 = vpop.f32.mrf.mxu0
    %v7175 = vadd.f32 %v7122, %v7174
    %7176 = vdwg.mxu0
    %7177 = vmatpush.msra.mxu0 0.0
    %7178 = vmatpush.msra.mxu0 0.0
    %7179 = vmatpush.msra.mxu0 0.0
    %7180 = vmatpush.msra.mxu0 0.0
    %7181 = vmatpush.msra.mxu0 0.0
    %7182 = vmatpush.msra.mxu0 0.0
    %7183 = vmatpush.msra.mxu0 0.0
    %7184 = vmatpush.msra.mxu0 0.0
    %7185 = vmatpush.msra.mxu0 0.0
    %7186 = vmatpush.msra.mxu0 0.0
    %7187 = vmatpush.msra.mxu0 0.0
    %7188 = vmatpush.msra.mxu0 0.0
    %v7189 = vand.u32 %v6942, 4294901760
    %v7190 = vsub.f32 %v6942, %v7189
    %7191 = vmatpush.msra.mxu0 %v7190
    %v7192 = vand.u32 %v6941, 4294901760
    %v7193 = vsub.f32 %v6941, %v7192
    %7194 = vmatpush.msra.mxu0 %v7193
    %v7195 = vand.u32 %v6940, 4294901760
    %v7196 = vsub.f32 %v6940, %v7195
    %7197 = vmatpush.msra.mxu0 %v7196
    %v7198 = vand.u32 %v6939, 4294901760
    %v7199 = vsub.f32 %v6939, %v7198
    %7200 = vmatpush.msra.mxu0 %v7199
    %v7201 = vand.u32 %v7063, 4294901760
    %v7202 = vsub.f32 %v7063, %v7201
    %7203 = vmatmul.f32.gmra.mxu0 %v7202
    %v7204 = vpop.f32.mrf.mxu0
    %v7205 = vadd.f32 %v7163, %v7204
    %v7206 = vand.u32 %v7065, 4294901760
    %v7207 = vsub.f32 %v7065, %v7206
    %7208 = vmatmul.f32.gmra.mxu0 %v7207
    %v7209 = vpop.f32.mrf.mxu0
    %v7210 = vadd.f32 %v7167, %v7209
    %v7211 = vand.u32 %v7067, 4294901760
    %v7212 = vsub.f32 %v7067, %v7211
    %7213 = vmatmul.f32.gmra.mxu0 %v7212
    %v7214 = vpop.f32.mrf.mxu0
    %v7215 = vadd.f32 %v7171, %v7214
    %v7216 = vand.u32 %v7069, 4294901760
    %v7217 = vsub.f32 %v7069, %v7216
    %7218 = vmatmul.f32.gmra.mxu0 %v7217
    %v7219 = vpop.f32.mrf.mxu0
    %v7220 = vadd.f32 %v7175, %v7219
    %7221 = vdwg.mxu0
    %7222 = vmatpush.msra.mxu0 0.0
    %7223 = vmatpush.msra.mxu0 0.0
    %7224 = vmatpush.msra.mxu0 0.0
    %7225 = vmatpush.msra.mxu0 0.0
    %7226 = vmatpush.msra.mxu0 0.0
    %7227 = vmatpush.msra.mxu0 0.0
    %7228 = vmatpush.msra.mxu0 0.0
    %7229 = vmatpush.msra.mxu0 0.0
    %7230 = vmatpush.msra.mxu0 0.0
    %7231 = vmatpush.msra.mxu0 0.0
    %7232 = vmatpush.msra.mxu0 0.0
    %7233 = vmatpush.msra.mxu0 0.0
    %v7234 = vand.u32 %v6942, 4294901760
    %7235 = vmatpush.msra.mxu0 %v7234
    %v7236 = vand.u32 %v6941, 4294901760
    %7237 = vmatpush.msra.mxu0 %v7236
    %v7238 = vand.u32 %v6940, 4294901760
    %7239 = vmatpush.msra.mxu0 %v7238
    %v7240 = vand.u32 %v6939, 4294901760
    %7241 = vmatpush.msra.mxu0 %v7240
    %v7242 = vand.u32 %v7063, 4294901760
    %v7243 = vsub.f32 %v7063, %v7242
    %v7244 = vand.u32 %v7243, 4294901760
    %7245 = vmatmul.f32.gmra.mxu0 %v7244
    %v7246 = vpop.f32.mrf.mxu0
    %v7247 = vadd.f32 %v7205, %v7246
    %v7248 = vand.u32 %v7065, 4294901760
    %v7249 = vsub.f32 %v7065, %v7248
    %v7250 = vand.u32 %v7249, 4294901760
    %7251 = vmatmul.f32.gmra.mxu0 %v7250
    %v7252 = vpop.f32.mrf.mxu0
    %v7253 = vadd.f32 %v7210, %v7252
    %v7254 = vand.u32 %v7067, 4294901760
    %v7255 = vsub.f32 %v7067, %v7254
    %v7256 = vand.u32 %v7255, 4294901760
    %7257 = vmatmul.f32.gmra.mxu0 %v7256
    %v7258 = vpop.f32.mrf.mxu0
    %v7259 = vadd.f32 %v7215, %v7258
    %v7260 = vand.u32 %v7069, 4294901760
    %v7261 = vsub.f32 %v7069, %v7260
    %v7262 = vand.u32 %v7261, 4294901760
    %7263 = vmatmul.f32.gmra.mxu0 %v7262
    %v7264 = vpop.f32.mrf.mxu0
    %v7265 = vadd.f32 %v7220, %v7264
    %7266 = vdwg.mxu0
    %7267 = vmatpush.msra.mxu0 0.0
    %7268 = vmatpush.msra.mxu0 0.0
    %7269 = vmatpush.msra.mxu0 0.0
    %7270 = vmatpush.msra.mxu0 0.0
    %7271 = vmatpush.msra.mxu0 0.0
    %7272 = vmatpush.msra.mxu0 0.0
    %7273 = vmatpush.msra.mxu0 0.0
    %7274 = vmatpush.msra.mxu0 0.0
    %7275 = vmatpush.msra.mxu0 0.0
    %7276 = vmatpush.msra.mxu0 0.0
    %7277 = vmatpush.msra.mxu0 0.0
    %7278 = vmatpush.msra.mxu0 0.0
    %v7279 = vand.u32 %v6942, 4294901760
    %v7280 = vsub.f32 %v6942, %v7279
    %v7281 = vand.u32 %v7280, 4294901760
    %7282 = vmatpush.msra.mxu0 %v7281
    %v7283 = vand.u32 %v6941, 4294901760
    %v7284 = vsub.f32 %v6941, %v7283
    %v7285 = vand.u32 %v7284, 4294901760
    %7286 = vmatpush.msra.mxu0 %v7285
    %v7287 = vand.u32 %v6940, 4294901760
    %v7288 = vsub.f32 %v6940, %v7287
    %v7289 = vand.u32 %v7288, 4294901760
    %7290 = vmatpush.msra.mxu0 %v7289
    %v7291 = vand.u32 %v6939, 4294901760
    %v7292 = vsub.f32 %v6939, %v7291
    %v7293 = vand.u32 %v7292, 4294901760
    %7294 = vmatpush.msra.mxu0 %v7293
    %v7295 = vand.u32 %v7063, 4294901760
    %7296 = vmatmul.f32.gmra.mxu0 %v7295
    %v7297 = vpop.f32.mrf.mxu0
    %v7298 = vadd.f32 %v7247, %v7297
    %v7299 = vand.u32 %v7065, 4294901760
    %7300 = vmatmul.f32.gmra.mxu0 %v7299
    %v7301 = vpop.f32.mrf.mxu0
    %v7302 = vadd.f32 %v7253, %v7301
    %v7303 = vand.u32 %v7067, 4294901760
    %7304 = vmatmul.f32.gmra.mxu0 %v7303
    %v7305 = vpop.f32.mrf.mxu0
    %v7306 = vadd.f32 %v7259, %v7305
    %v7307 = vand.u32 %v7069, 4294901760
    %7308 = vmatmul.f32.gmra.mxu0 %v7307
    %v7309 = vpop.f32.mrf.mxu0
    %v7310 = vadd.f32 %v7265, %v7309
    %7311 = vdwg.mxu0
    %7312 = vmatpush.msra.mxu0 0.0
    %7313 = vmatpush.msra.mxu0 0.0
    %7314 = vmatpush.msra.mxu0 0.0
    %7315 = vmatpush.msra.mxu0 0.0
    %7316 = vmatpush.msra.mxu0 0.0
    %7317 = vmatpush.msra.mxu0 0.0
    %7318 = vmatpush.msra.mxu0 0.0
    %7319 = vmatpush.msra.mxu0 0.0
    %7320 = vmatpush.msra.mxu0 0.0
    %7321 = vmatpush.msra.mxu0 0.0
    %7322 = vmatpush.msra.mxu0 0.0
    %7323 = vmatpush.msra.mxu0 0.0
    %v7324 = vand.u32 %v6942, 4294901760
    %7325 = vmatpush.msra.mxu0 %v7324
    %v7326 = vand.u32 %v6941, 4294901760
    %7327 = vmatpush.msra.mxu0 %v7326
    %v7328 = vand.u32 %v6940, 4294901760
    %7329 = vmatpush.msra.mxu0 %v7328
    %v7330 = vand.u32 %v6939, 4294901760
    %7331 = vmatpush.msra.mxu0 %v7330
    %v7332 = vand.u32 %v7063, 4294901760
    %7333 = vmatmul.f32.gmra.mxu0 %v7332
    %v7334 = vpop.f32.mrf.mxu0
    %v7335 = vadd.f32 %v7298, %v7334
    %v7336 = vand.u32 %v7065, 4294901760
    %7337 = vmatmul.f32.gmra.mxu0 %v7336
    %v7338 = vpop.f32.mrf.mxu0
    %v7339 = vadd.f32 %v7302, %v7338
    %v7340 = vand.u32 %v7067, 4294901760
    %7341 = vmatmul.f32.gmra.mxu0 %v7340
    %v7342 = vpop.f32.mrf.mxu0
    %v7343 = vadd.f32 %v7306, %v7342
    %v7344 = vand.u32 %v7069, 4294901760
    %7345 = vmatmul.f32.gmra.mxu0 %v7344
    %v7346 = vpop.f32.mrf.mxu0
    %v7347 = vadd.f32 %v7310, %v7346
    %7348 = vdwg.mxu0
    %v7353 = vrot.slane %v7335, 1
    %v7354 = vrot.slane %v7335, 2
    %v7355 = vrot.slane %v7335, 3
    %v7356 = vrot.slane %v7335, 4
    %v7357 = vrot.slane %v7335, 5
    %v7358 = vrot.slane %v7335, 6
    %v7359 = vrot.slane %v7335, 7
    %v7360 = vrot.slane %v7339, 1
    %v7361 = vrot.slane %v7339, 2
    %v7362 = vrot.slane %v7339, 3
    %v7363 = vrot.slane %v7339, 4
    %v7364 = vrot.slane %v7339, 5
    %v7365 = vrot.slane %v7339, 6
    %v7366 = vrot.slane %v7339, 7
    %v7367 = vrot.slane %v7343, 1
    %v7368 = vrot.slane %v7343, 2
    %v7369 = vrot.slane %v7343, 3
    %v7370 = vrot.slane %v7343, 4
    %v7371 = vrot.slane %v7343, 5
    %v7372 = vrot.slane %v7343, 6
    %v7373 = vrot.slane %v7343, 7
    %v7374 = vrot.slane %v7347, 1
    %v7375 = vrot.slane %v7347, 2
    %v7376 = vrot.slane %v7347, 3
    %v7377 = vrot.slane %v7347, 4
    %v7378 = vrot.slane %v7347, 5
    %v7379 = vrot.slane %v7347, 6
    %v7380 = vrot.slane %v7347, 7
    %7409 = vst [vmem:[#allocation2 + $0xd] sm:$0x1] %v7335
    %7410 = vst [vmem:[#allocation2 + $0x1d] sm:$0x1] %v7353
    %7411 = vst [vmem:[#allocation2 + $0x2d] sm:$0x1] %v7354
    %7412 = vst [vmem:[#allocation2 + $0x3d] sm:$0x1] %v7355
    %7413 = vst [vmem:[#allocation2 + $0x4d] sm:$0x1] %v7356
    %7414 = vst [vmem:[#allocation2 + $0x5d] sm:$0x1] %v7357
    %7415 = vst [vmem:[#allocation2 + $0x6d] sm:$0x1] %v7358
    %7416 = vst [vmem:[#allocation2 + $0x7d] sm:$0x1] %v7359
    %7417 = vst [vmem:[#allocation2 + $0x8d] sm:$0x1] %v7339
    %7418 = vst [vmem:[#allocation2 + $0x9d] sm:$0x1] %v7360
    %7419 = vst [vmem:[#allocation2 + $0xad] sm:$0x1] %v7361
    %7420 = vst [vmem:[#allocation2 + $0xbd] sm:$0x1] %v7362
    %7421 = vst [vmem:[#allocation2 + $0xcd] sm:$0x1] %v7363
    %7422 = vst [vmem:[#allocation2 + $0xdd] sm:$0x1] %v7364
    %7423 = vst [vmem:[#allocation2 + $0xed] sm:$0x1] %v7365
    %7424 = vst [vmem:[#allocation2 + $0xfd] sm:$0x1] %v7366
    %7425 = vst [vmem:[#allocation2 + $0x10d] sm:$0x1] %v7343
    %7426 = vst [vmem:[#allocation2 + $0x11d] sm:$0x1] %v7367
    %7427 = vst [vmem:[#allocation2 + $0x12d] sm:$0x1] %v7368
    %7428 = vst [vmem:[#allocation2 + $0x13d] sm:$0x1] %v7369
    %7429 = vst [vmem:[#allocation2 + $0x14d] sm:$0x1] %v7370
    %7430 = vst [vmem:[#allocation2 + $0x15d] sm:$0x1] %v7371
    %7431 = vst [vmem:[#allocation2 + $0x16d] sm:$0x1] %v7372
    %7432 = vst [vmem:[#allocation2 + $0x17d] sm:$0x1] %v7373
    %7433 = vst [vmem:[#allocation2 + $0x18d] sm:$0x1] %v7347
    %7434 = vst [vmem:[#allocation2 + $0x19d] sm:$0x1] %v7374
    %7435 = vst [vmem:[#allocation2 + $0x1ad] sm:$0x1] %v7375
    %7436 = vst [vmem:[#allocation2 + $0x1bd] sm:$0x1] %v7376
    %7437 = vst [vmem:[#allocation2 + $0x1cd] sm:$0x1] %v7377
    %7438 = vst [vmem:[#allocation2 + $0x1dd] sm:$0x1] %v7378
    %7439 = vst [vmem:[#allocation2 + $0x1ed] sm:$0x1] %v7379
    %7440 = vst [vmem:[#allocation2 + $0x1fd] sm:$0x1] %v7380
    %v7441 = vld [vmem:[%s3 + $0xe] sm:$0x1]
    %v7442 = vperm.slane %v7441, 0
    %vm7443 = vcmp.eq.s32.totalorder %v27, %v7442
    %vm7444 = vcmp.eq.s32.totalorder %v28, %v7442
    %vm7445 = vcmp.eq.s32.totalorder %v263, %v7442
    %vm7446 = vcmp.eq.s32.totalorder %v264, %v7442
    %v7447 = vsel %vm7443, 1, 0
    %v7448 = vsel %vm7444, 1, 0
    %v7449 = vsel %vm7445, 1, 0
    %v7450 = vsel %vm7446, 1, 0
    %v7451 = vcvt.s32.f32 %v7447
    %v7452 = vcvt.s32.f32 %v7448
    %v7453 = vcvt.s32.f32 %v7449
    %v7454 = vcvt.s32.f32 %v7450
    %v7455 = vld [vmem:[%s2 + $0xe] sm:$0x1]
    %v7456 = vld [vmem:[%s2 + $0x1e] sm:$0x1]
    %v7457 = vld [vmem:[%s2 + $0x2e] sm:$0x1]
    %v7458 = vld [vmem:[%s2 + $0x3e] sm:$0x1]
    %v7459 = vld [vmem:[%s2 + $0x4e] sm:$0x1]
    %v7460 = vld [vmem:[%s2 + $0x5e] sm:$0x1]
    %v7461 = vld [vmem:[%s2 + $0x6e] sm:$0x1]
    %v7462 = vld [vmem:[%s2 + $0x7e] sm:$0x1]
    %v7463 = vld [vmem:[%s2 + $0x8e] sm:$0x1]
    %v7464 = vld [vmem:[%s2 + $0x9e] sm:$0x1]
    %v7465 = vld [vmem:[%s2 + $0xae] sm:$0x1]
    %v7466 = vld [vmem:[%s2 + $0xbe] sm:$0x1]
    %v7467 = vld [vmem:[%s2 + $0xce] sm:$0x1]
    %v7468 = vld [vmem:[%s2 + $0xde] sm:$0x1]
    %v7469 = vld [vmem:[%s2 + $0xee] sm:$0x1]
    %v7470 = vld [vmem:[%s2 + $0xfe] sm:$0x1]
    %v7471 = vld [vmem:[%s2 + $0x10e] sm:$0x1]
    %v7472 = vld [vmem:[%s2 + $0x11e] sm:$0x1]
    %v7473 = vld [vmem:[%s2 + $0x12e] sm:$0x1]
    %v7474 = vld [vmem:[%s2 + $0x13e] sm:$0x1]
    %v7475 = vld [vmem:[%s2 + $0x14e] sm:$0x1]
    %v7476 = vld [vmem:[%s2 + $0x15e] sm:$0x1]
    %v7477 = vld [vmem:[%s2 + $0x16e] sm:$0x1]
    %v7478 = vld [vmem:[%s2 + $0x17e] sm:$0x1]
    %v7479 = vld [vmem:[%s2 + $0x18e] sm:$0x1]
    %v7480 = vld [vmem:[%s2 + $0x19e] sm:$0x1]
    %v7481 = vld [vmem:[%s2 + $0x1ae] sm:$0x1]
    %v7482 = vld [vmem:[%s2 + $0x1be] sm:$0x1]
    %v7483 = vld [vmem:[%s2 + $0x1ce] sm:$0x1]
    %v7484 = vld [vmem:[%s2 + $0x1de] sm:$0x1]
    %v7485 = vld [vmem:[%s2 + $0x1ee] sm:$0x1]
    %v7486 = vld [vmem:[%s2 + $0x1fe] sm:$0x1]
    %v7519 = vrot.slane %v7456, 7
    %v7520 = vsel %vm344, %v7519, %v7455
    %v7521 = vrot.slane %v7457, 6
    %v7522 = vsel %vm347, %v7521, %v7520
    %v7523 = vrot.slane %v7458, 5
    %v7524 = vsel %vm350, %v7523, %v7522
    %v7525 = vrot.slane %v7459, 4
    %v7526 = vsel %vm353, %v7525, %v7524
    %v7527 = vrot.slane %v7460, 3
    %v7528 = vsel %vm356, %v7527, %v7526
    %v7529 = vrot.slane %v7461, 2
    %v7530 = vsel %vm359, %v7529, %v7528
    %v7531 = vrot.slane %v7462, 1
    %v7532 = vsel %vm362, %v7531, %v7530
    %v7533 = vrot.slane %v7464, 7
    %v7534 = vsel %vm344, %v7533, %v7463
    %v7535 = vrot.slane %v7465, 6
    %v7536 = vsel %vm347, %v7535, %v7534
    %v7537 = vrot.slane %v7466, 5
    %v7538 = vsel %vm350, %v7537, %v7536
    %v7539 = vrot.slane %v7467, 4
    %v7540 = vsel %vm353, %v7539, %v7538
    %v7541 = vrot.slane %v7468, 3
    %v7542 = vsel %vm356, %v7541, %v7540
    %v7543 = vrot.slane %v7469, 2
    %v7544 = vsel %vm359, %v7543, %v7542
    %v7545 = vrot.slane %v7470, 1
    %v7546 = vsel %vm362, %v7545, %v7544
    %v7547 = vrot.slane %v7472, 7
    %v7548 = vsel %vm344, %v7547, %v7471
    %v7549 = vrot.slane %v7473, 6
    %v7550 = vsel %vm347, %v7549, %v7548
    %v7551 = vrot.slane %v7474, 5
    %v7552 = vsel %vm350, %v7551, %v7550
    %v7553 = vrot.slane %v7475, 4
    %v7554 = vsel %vm353, %v7553, %v7552
    %v7555 = vrot.slane %v7476, 3
    %v7556 = vsel %vm356, %v7555, %v7554
    %v7557 = vrot.slane %v7477, 2
    %v7558 = vsel %vm359, %v7557, %v7556
    %v7559 = vrot.slane %v7478, 1
    %v7560 = vsel %vm362, %v7559, %v7558
    %v7561 = vrot.slane %v7480, 7
    %v7562 = vsel %vm344, %v7561, %v7479
    %v7563 = vrot.slane %v7481, 6
    %v7564 = vsel %vm347, %v7563, %v7562
    %v7565 = vrot.slane %v7482, 5
    %v7566 = vsel %vm350, %v7565, %v7564
    %v7567 = vrot.slane %v7483, 4
    %v7568 = vsel %vm353, %v7567, %v7566
    %v7569 = vrot.slane %v7484, 3
    %v7570 = vsel %vm356, %v7569, %v7568
    %v7571 = vrot.slane %v7485, 2
    %v7572 = vsel %vm359, %v7571, %v7570
    %v7573 = vrot.slane %v7486, 1
    %v7574 = vsel %vm362, %v7573, %v7572
    %v7575 = vsel %vm406, %v7532, 0
    %v7577 = vsel %vm406, %v7546, 0
    %v7579 = vsel %vm406, %v7560, 0
    %v7581 = vsel %vm406, %v7574, 0
    %7583 = vmatpush.msra.mxu0 0.0
    %7584 = vmatpush.msra.mxu0 0.0
    %7585 = vmatpush.msra.mxu0 0.0
    %7586 = vmatpush.msra.mxu0 0.0
    %7587 = vmatpush.msra.mxu0 0.0
    %7588 = vmatpush.msra.mxu0 0.0
    %7589 = vmatpush.msra.mxu0 0.0
    %7590 = vmatpush.msra.mxu0 0.0
    %7591 = vmatpush.msra.mxu0 0.0
    %7592 = vmatpush.msra.mxu0 0.0
    %7593 = vmatpush.msra.mxu0 0.0
    %7594 = vmatpush.msra.mxu0 0.0
    %v7595 = vand.u32 %v7454, 4294901760
    %7596 = vmatpush.msra.mxu0 %v7595
    %v7597 = vand.u32 %v7453, 4294901760
    %7598 = vmatpush.msra.mxu0 %v7597
    %v7599 = vand.u32 %v7452, 4294901760
    %7600 = vmatpush.msra.mxu0 %v7599
    %v7601 = vand.u32 %v7451, 4294901760
    %7602 = vmatpush.msra.mxu0 %v7601
    %v7603 = vand.u32 %v7575, 4294901760
    %v7604 = vsub.f32 %v7575, %v7603
    %v7605 = vand.u32 %v7604, 4294901760
    %v7606 = vsub.f32 %v7604, %v7605
    %v7607 = vand.u32 %v7606, 4294901760
    %7608 = vmatmul.f32.gmra.mxu0 %v7607
    %v7609 = vpop.f32.mrf.mxu0
    %v7610 = vadd.f32 0.0, %v7609
    %v7611 = vand.u32 %v7577, 4294901760
    %v7612 = vsub.f32 %v7577, %v7611
    %v7613 = vand.u32 %v7612, 4294901760
    %v7614 = vsub.f32 %v7612, %v7613
    %v7615 = vand.u32 %v7614, 4294901760
    %7616 = vmatmul.f32.gmra.mxu0 %v7615
    %v7617 = vpop.f32.mrf.mxu0
    %v7618 = vadd.f32 0.0, %v7617
    %v7619 = vand.u32 %v7579, 4294901760
    %v7620 = vsub.f32 %v7579, %v7619
    %v7621 = vand.u32 %v7620, 4294901760
    %v7622 = vsub.f32 %v7620, %v7621
    %v7623 = vand.u32 %v7622, 4294901760
    %7624 = vmatmul.f32.gmra.mxu0 %v7623
    %v7625 = vpop.f32.mrf.mxu0
    %v7626 = vadd.f32 0.0, %v7625
    %v7627 = vand.u32 %v7581, 4294901760
    %v7628 = vsub.f32 %v7581, %v7627
    %v7629 = vand.u32 %v7628, 4294901760
    %v7630 = vsub.f32 %v7628, %v7629
    %v7631 = vand.u32 %v7630, 4294901760
    %7632 = vmatmul.f32.gmra.mxu0 %v7631
    %v7633 = vpop.f32.mrf.mxu0
    %v7634 = vadd.f32 0.0, %v7633
    %7635 = vdwg.mxu0
    %7636 = vmatpush.msra.mxu0 0.0
    %7637 = vmatpush.msra.mxu0 0.0
    %7638 = vmatpush.msra.mxu0 0.0
    %7639 = vmatpush.msra.mxu0 0.0
    %7640 = vmatpush.msra.mxu0 0.0
    %7641 = vmatpush.msra.mxu0 0.0
    %7642 = vmatpush.msra.mxu0 0.0
    %7643 = vmatpush.msra.mxu0 0.0
    %7644 = vmatpush.msra.mxu0 0.0
    %7645 = vmatpush.msra.mxu0 0.0
    %7646 = vmatpush.msra.mxu0 0.0
    %7647 = vmatpush.msra.mxu0 0.0
    %v7648 = vand.u32 %v7454, 4294901760
    %v7649 = vsub.f32 %v7454, %v7648
    %v7650 = vand.u32 %v7649, 4294901760
    %v7651 = vsub.f32 %v7649, %v7650
    %v7652 = vand.u32 %v7651, 4294901760
    %7653 = vmatpush.msra.mxu0 %v7652
    %v7654 = vand.u32 %v7453, 4294901760
    %v7655 = vsub.f32 %v7453, %v7654
    %v7656 = vand.u32 %v7655, 4294901760
    %v7657 = vsub.f32 %v7655, %v7656
    %v7658 = vand.u32 %v7657, 4294901760
    %7659 = vmatpush.msra.mxu0 %v7658
    %v7660 = vand.u32 %v7452, 4294901760
    %v7661 = vsub.f32 %v7452, %v7660
    %v7662 = vand.u32 %v7661, 4294901760
    %v7663 = vsub.f32 %v7661, %v7662
    %v7664 = vand.u32 %v7663, 4294901760
    %7665 = vmatpush.msra.mxu0 %v7664
    %v7666 = vand.u32 %v7451, 4294901760
    %v7667 = vsub.f32 %v7451, %v7666
    %v7668 = vand.u32 %v7667, 4294901760
    %v7669 = vsub.f32 %v7667, %v7668
    %v7670 = vand.u32 %v7669, 4294901760
    %7671 = vmatpush.msra.mxu0 %v7670
    %v7672 = vand.u32 %v7575, 4294901760
    %7673 = vmatmul.f32.gmra.mxu0 %v7672
    %v7674 = vpop.f32.mrf.mxu0
    %v7675 = vadd.f32 %v7610, %v7674
    %v7676 = vand.u32 %v7577, 4294901760
    %7677 = vmatmul.f32.gmra.mxu0 %v7676
    %v7678 = vpop.f32.mrf.mxu0
    %v7679 = vadd.f32 %v7618, %v7678
    %v7680 = vand.u32 %v7579, 4294901760
    %7681 = vmatmul.f32.gmra.mxu0 %v7680
    %v7682 = vpop.f32.mrf.mxu0
    %v7683 = vadd.f32 %v7626, %v7682
    %v7684 = vand.u32 %v7581, 4294901760
    %7685 = vmatmul.f32.gmra.mxu0 %v7684
    %v7686 = vpop.f32.mrf.mxu0
    %v7687 = vadd.f32 %v7634, %v7686
    %7688 = vdwg.mxu0
    %7689 = vmatpush.msra.mxu0 0.0
    %7690 = vmatpush.msra.mxu0 0.0
    %7691 = vmatpush.msra.mxu0 0.0
    %7692 = vmatpush.msra.mxu0 0.0
    %7693 = vmatpush.msra.mxu0 0.0
    %7694 = vmatpush.msra.mxu0 0.0
    %7695 = vmatpush.msra.mxu0 0.0
    %7696 = vmatpush.msra.mxu0 0.0
    %7697 = vmatpush.msra.mxu0 0.0
    %7698 = vmatpush.msra.mxu0 0.0
    %7699 = vmatpush.msra.mxu0 0.0
    %7700 = vmatpush.msra.mxu0 0.0
    %v7701 = vand.u32 %v7454, 4294901760
    %v7702 = vsub.f32 %v7454, %v7701
    %7703 = vmatpush.msra.mxu0 %v7702
    %v7704 = vand.u32 %v7453, 4294901760
    %v7705 = vsub.f32 %v7453, %v7704
    %7706 = vmatpush.msra.mxu0 %v7705
    %v7707 = vand.u32 %v7452, 4294901760
    %v7708 = vsub.f32 %v7452, %v7707
    %7709 = vmatpush.msra.mxu0 %v7708
    %v7710 = vand.u32 %v7451, 4294901760
    %v7711 = vsub.f32 %v7451, %v7710
    %7712 = vmatpush.msra.mxu0 %v7711
    %v7713 = vand.u32 %v7575, 4294901760
    %v7714 = vsub.f32 %v7575, %v7713
    %7715 = vmatmul.f32.gmra.mxu0 %v7714
    %v7716 = vpop.f32.mrf.mxu0
    %v7717 = vadd.f32 %v7675, %v7716
    %v7718 = vand.u32 %v7577, 4294901760
    %v7719 = vsub.f32 %v7577, %v7718
    %7720 = vmatmul.f32.gmra.mxu0 %v7719
    %v7721 = vpop.f32.mrf.mxu0
    %v7722 = vadd.f32 %v7679, %v7721
    %v7723 = vand.u32 %v7579, 4294901760
    %v7724 = vsub.f32 %v7579, %v7723
    %7725 = vmatmul.f32.gmra.mxu0 %v7724
    %v7726 = vpop.f32.mrf.mxu0
    %v7727 = vadd.f32 %v7683, %v7726
    %v7728 = vand.u32 %v7581, 4294901760
    %v7729 = vsub.f32 %v7581, %v7728
    %7730 = vmatmul.f32.gmra.mxu0 %v7729
    %v7731 = vpop.f32.mrf.mxu0
    %v7732 = vadd.f32 %v7687, %v7731
    %7733 = vdwg.mxu0
    %7734 = vmatpush.msra.mxu0 0.0
    %7735 = vmatpush.msra.mxu0 0.0
    %7736 = vmatpush.msra.mxu0 0.0
    %7737 = vmatpush.msra.mxu0 0.0
    %7738 = vmatpush.msra.mxu0 0.0
    %7739 = vmatpush.msra.mxu0 0.0
    %7740 = vmatpush.msra.mxu0 0.0
    %7741 = vmatpush.msra.mxu0 0.0
    %7742 = vmatpush.msra.mxu0 0.0
    %7743 = vmatpush.msra.mxu0 0.0
    %7744 = vmatpush.msra.mxu0 0.0
    %7745 = vmatpush.msra.mxu0 0.0
    %v7746 = vand.u32 %v7454, 4294901760
    %7747 = vmatpush.msra.mxu0 %v7746
    %v7748 = vand.u32 %v7453, 4294901760
    %7749 = vmatpush.msra.mxu0 %v7748
    %v7750 = vand.u32 %v7452, 4294901760
    %7751 = vmatpush.msra.mxu0 %v7750
    %v7752 = vand.u32 %v7451, 4294901760
    %7753 = vmatpush.msra.mxu0 %v7752
    %v7754 = vand.u32 %v7575, 4294901760
    %v7755 = vsub.f32 %v7575, %v7754
    %v7756 = vand.u32 %v7755, 4294901760
    %7757 = vmatmul.f32.gmra.mxu0 %v7756
    %v7758 = vpop.f32.mrf.mxu0
    %v7759 = vadd.f32 %v7717, %v7758
    %v7760 = vand.u32 %v7577, 4294901760
    %v7761 = vsub.f32 %v7577, %v7760
    %v7762 = vand.u32 %v7761, 4294901760
    %7763 = vmatmul.f32.gmra.mxu0 %v7762
    %v7764 = vpop.f32.mrf.mxu0
    %v7765 = vadd.f32 %v7722, %v7764
    %v7766 = vand.u32 %v7579, 4294901760
    %v7767 = vsub.f32 %v7579, %v7766
    %v7768 = vand.u32 %v7767, 4294901760
    %7769 = vmatmul.f32.gmra.mxu0 %v7768
    %v7770 = vpop.f32.mrf.mxu0
    %v7771 = vadd.f32 %v7727, %v7770
    %v7772 = vand.u32 %v7581, 4294901760
    %v7773 = vsub.f32 %v7581, %v7772
    %v7774 = vand.u32 %v7773, 4294901760
    %7775 = vmatmul.f32.gmra.mxu0 %v7774
    %v7776 = vpop.f32.mrf.mxu0
    %v7777 = vadd.f32 %v7732, %v7776
    %7778 = vdwg.mxu0
    %7779 = vmatpush.msra.mxu0 0.0
    %7780 = vmatpush.msra.mxu0 0.0
    %7781 = vmatpush.msra.mxu0 0.0
    %7782 = vmatpush.msra.mxu0 0.0
    %7783 = vmatpush.msra.mxu0 0.0
    %7784 = vmatpush.msra.mxu0 0.0
    %7785 = vmatpush.msra.mxu0 0.0
    %7786 = vmatpush.msra.mxu0 0.0
    %7787 = vmatpush.msra.mxu0 0.0
    %7788 = vmatpush.msra.mxu0 0.0
    %7789 = vmatpush.msra.mxu0 0.0
    %7790 = vmatpush.msra.mxu0 0.0
    %v7791 = vand.u32 %v7454, 4294901760
    %v7792 = vsub.f32 %v7454, %v7791
    %v7793 = vand.u32 %v7792, 4294901760
    %7794 = vmatpush.msra.mxu0 %v7793
    %v7795 = vand.u32 %v7453, 4294901760
    %v7796 = vsub.f32 %v7453, %v7795
    %v7797 = vand.u32 %v7796, 4294901760
    %7798 = vmatpush.msra.mxu0 %v7797
    %v7799 = vand.u32 %v7452, 4294901760
    %v7800 = vsub.f32 %v7452, %v7799
    %v7801 = vand.u32 %v7800, 4294901760
    %7802 = vmatpush.msra.mxu0 %v7801
    %v7803 = vand.u32 %v7451, 4294901760
    %v7804 = vsub.f32 %v7451, %v7803
    %v7805 = vand.u32 %v7804, 4294901760
    %7806 = vmatpush.msra.mxu0 %v7805
    %v7807 = vand.u32 %v7575, 4294901760
    %7808 = vmatmul.f32.gmra.mxu0 %v7807
    %v7809 = vpop.f32.mrf.mxu0
    %v7810 = vadd.f32 %v7759, %v7809
    %v7811 = vand.u32 %v7577, 4294901760
    %7812 = vmatmul.f32.gmra.mxu0 %v7811
    %v7813 = vpop.f32.mrf.mxu0
    %v7814 = vadd.f32 %v7765, %v7813
    %v7815 = vand.u32 %v7579, 4294901760
    %7816 = vmatmul.f32.gmra.mxu0 %v7815
    %v7817 = vpop.f32.mrf.mxu0
    %v7818 = vadd.f32 %v7771, %v7817
    %v7819 = vand.u32 %v7581, 4294901760
    %7820 = vmatmul.f32.gmra.mxu0 %v7819
    %v7821 = vpop.f32.mrf.mxu0
    %v7822 = vadd.f32 %v7777, %v7821
    %7823 = vdwg.mxu0
    %7824 = vmatpush.msra.mxu0 0.0
    %7825 = vmatpush.msra.mxu0 0.0
    %7826 = vmatpush.msra.mxu0 0.0
    %7827 = vmatpush.msra.mxu0 0.0
    %7828 = vmatpush.msra.mxu0 0.0
    %7829 = vmatpush.msra.mxu0 0.0
    %7830 = vmatpush.msra.mxu0 0.0
    %7831 = vmatpush.msra.mxu0 0.0
    %7832 = vmatpush.msra.mxu0 0.0
    %7833 = vmatpush.msra.mxu0 0.0
    %7834 = vmatpush.msra.mxu0 0.0
    %7835 = vmatpush.msra.mxu0 0.0
    %v7836 = vand.u32 %v7454, 4294901760
    %7837 = vmatpush.msra.mxu0 %v7836
    %v7838 = vand.u32 %v7453, 4294901760
    %7839 = vmatpush.msra.mxu0 %v7838
    %v7840 = vand.u32 %v7452, 4294901760
    %7841 = vmatpush.msra.mxu0 %v7840
    %v7842 = vand.u32 %v7451, 4294901760
    %7843 = vmatpush.msra.mxu0 %v7842
    %v7844 = vand.u32 %v7575, 4294901760
    %7845 = vmatmul.f32.gmra.mxu0 %v7844
    %v7846 = vpop.f32.mrf.mxu0
    %v7847 = vadd.f32 %v7810, %v7846
    %v7848 = vand.u32 %v7577, 4294901760
    %7849 = vmatmul.f32.gmra.mxu0 %v7848
    %v7850 = vpop.f32.mrf.mxu0
    %v7851 = vadd.f32 %v7814, %v7850
    %v7852 = vand.u32 %v7579, 4294901760
    %7853 = vmatmul.f32.gmra.mxu0 %v7852
    %v7854 = vpop.f32.mrf.mxu0
    %v7855 = vadd.f32 %v7818, %v7854
    %v7856 = vand.u32 %v7581, 4294901760
    %7857 = vmatmul.f32.gmra.mxu0 %v7856
    %v7858 = vpop.f32.mrf.mxu0
    %v7859 = vadd.f32 %v7822, %v7858
    %7860 = vdwg.mxu0
    %v7865 = vrot.slane %v7847, 1
    %v7866 = vrot.slane %v7847, 2
    %v7867 = vrot.slane %v7847, 3
    %v7868 = vrot.slane %v7847, 4
    %v7869 = vrot.slane %v7847, 5
    %v7870 = vrot.slane %v7847, 6
    %v7871 = vrot.slane %v7847, 7
    %v7872 = vrot.slane %v7851, 1
    %v7873 = vrot.slane %v7851, 2
    %v7874 = vrot.slane %v7851, 3
    %v7875 = vrot.slane %v7851, 4
    %v7876 = vrot.slane %v7851, 5
    %v7877 = vrot.slane %v7851, 6
    %v7878 = vrot.slane %v7851, 7
    %v7879 = vrot.slane %v7855, 1
    %v7880 = vrot.slane %v7855, 2
    %v7881 = vrot.slane %v7855, 3
    %v7882 = vrot.slane %v7855, 4
    %v7883 = vrot.slane %v7855, 5
    %v7884 = vrot.slane %v7855, 6
    %v7885 = vrot.slane %v7855, 7
    %v7886 = vrot.slane %v7859, 1
    %v7887 = vrot.slane %v7859, 2
    %v7888 = vrot.slane %v7859, 3
    %v7889 = vrot.slane %v7859, 4
    %v7890 = vrot.slane %v7859, 5
    %v7891 = vrot.slane %v7859, 6
    %v7892 = vrot.slane %v7859, 7
    %7921 = vst [vmem:[#allocation2 + $0xe] sm:$0x1] %v7847
    %7922 = vst [vmem:[#allocation2 + $0x1e] sm:$0x1] %v7865
    %7923 = vst [vmem:[#allocation2 + $0x2e] sm:$0x1] %v7866
    %7924 = vst [vmem:[#allocation2 + $0x3e] sm:$0x1] %v7867
    %7925 = vst [vmem:[#allocation2 + $0x4e] sm:$0x1] %v7868
    %7926 = vst [vmem:[#allocation2 + $0x5e] sm:$0x1] %v7869
    %7927 = vst [vmem:[#allocation2 + $0x6e] sm:$0x1] %v7870
    %7928 = vst [vmem:[#allocation2 + $0x7e] sm:$0x1] %v7871
    %7929 = vst [vmem:[#allocation2 + $0x8e] sm:$0x1] %v7851
    %7930 = vst [vmem:[#allocation2 + $0x9e] sm:$0x1] %v7872
    %7931 = vst [vmem:[#allocation2 + $0xae] sm:$0x1] %v7873
    %7932 = vst [vmem:[#allocation2 + $0xbe] sm:$0x1] %v7874
    %7933 = vst [vmem:[#allocation2 + $0xce] sm:$0x1] %v7875
    %7934 = vst [vmem:[#allocation2 + $0xde] sm:$0x1] %v7876
    %7935 = vst [vmem:[#allocation2 + $0xee] sm:$0x1] %v7877
    %7936 = vst [vmem:[#allocation2 + $0xfe] sm:$0x1] %v7878
    %7937 = vst [vmem:[#allocation2 + $0x10e] sm:$0x1] %v7855
    %7938 = vst [vmem:[#allocation2 + $0x11e] sm:$0x1] %v7879
    %7939 = vst [vmem:[#allocation2 + $0x12e] sm:$0x1] %v7880
    %7940 = vst [vmem:[#allocation2 + $0x13e] sm:$0x1] %v7881
    %7941 = vst [vmem:[#allocation2 + $0x14e] sm:$0x1] %v7882
    %7942 = vst [vmem:[#allocation2 + $0x15e] sm:$0x1] %v7883
    %7943 = vst [vmem:[#allocation2 + $0x16e] sm:$0x1] %v7884
    %7944 = vst [vmem:[#allocation2 + $0x17e] sm:$0x1] %v7885
    %7945 = vst [vmem:[#allocation2 + $0x18e] sm:$0x1] %v7859
    %7946 = vst [vmem:[#allocation2 + $0x19e] sm:$0x1] %v7886
    %7947 = vst [vmem:[#allocation2 + $0x1ae] sm:$0x1] %v7887
    %7948 = vst [vmem:[#allocation2 + $0x1be] sm:$0x1] %v7888
    %7949 = vst [vmem:[#allocation2 + $0x1ce] sm:$0x1] %v7889
    %7950 = vst [vmem:[#allocation2 + $0x1de] sm:$0x1] %v7890
    %7951 = vst [vmem:[#allocation2 + $0x1ee] sm:$0x1] %v7891
    %7952 = vst [vmem:[#allocation2 + $0x1fe] sm:$0x1] %v7892
    %v7953 = vld [vmem:[%s3 + $0xf] sm:$0x1]
    %v7954 = vperm.slane %v7953, 0
    %vm7955 = vcmp.eq.s32.totalorder %v27, %v7954
    %vm7956 = vcmp.eq.s32.totalorder %v28, %v7954
    %vm7957 = vcmp.eq.s32.totalorder %v263, %v7954
    %vm7958 = vcmp.eq.s32.totalorder %v264, %v7954
    %v7959 = vsel %vm7955, 1, 0
    %v7960 = vsel %vm7956, 1, 0
    %v7961 = vsel %vm7957, 1, 0
    %v7962 = vsel %vm7958, 1, 0
    %v7963 = vcvt.s32.f32 %v7959
    %v7964 = vcvt.s32.f32 %v7960
    %v7965 = vcvt.s32.f32 %v7961
    %v7966 = vcvt.s32.f32 %v7962
    %v7967 = vld [vmem:[%s2 + $0xf] sm:$0x1]
    %v7968 = vld [vmem:[%s2 + $0x1f] sm:$0x1]
    %v7969 = vld [vmem:[%s2 + $0x2f] sm:$0x1]
    %v7970 = vld [vmem:[%s2 + $0x3f] sm:$0x1]
    %v7971 = vld [vmem:[%s2 + $0x4f] sm:$0x1]
    %v7972 = vld [vmem:[%s2 + $0x5f] sm:$0x1]
    %v7973 = vld [vmem:[%s2 + $0x6f] sm:$0x1]
    %v7974 = vld [vmem:[%s2 + $0x7f] sm:$0x1]
    %v7975 = vld [vmem:[%s2 + $0x8f] sm:$0x1]
    %v7976 = vld [vmem:[%s2 + $0x9f] sm:$0x1]
    %v7977 = vld [vmem:[%s2 + $0xaf] sm:$0x1]
    %v7978 = vld [vmem:[%s2 + $0xbf] sm:$0x1]
    %v7979 = vld [vmem:[%s2 + $0xcf] sm:$0x1]
    %v7980 = vld [vmem:[%s2 + $0xdf] sm:$0x1]
    %v7981 = vld [vmem:[%s2 + $0xef] sm:$0x1]
    %v7982 = vld [vmem:[%s2 + $0xff] sm:$0x1]
    %v7983 = vld [vmem:[%s2 + $0x10f] sm:$0x1]
    %v7984 = vld [vmem:[%s2 + $0x11f] sm:$0x1]
    %v7985 = vld [vmem:[%s2 + $0x12f] sm:$0x1]
    %v7986 = vld [vmem:[%s2 + $0x13f] sm:$0x1]
    %v7987 = vld [vmem:[%s2 + $0x14f] sm:$0x1]
    %v7988 = vld [vmem:[%s2 + $0x15f] sm:$0x1]
    %v7989 = vld [vmem:[%s2 + $0x16f] sm:$0x1]
    %v7990 = vld [vmem:[%s2 + $0x17f] sm:$0x1]
    %v7991 = vld [vmem:[%s2 + $0x18f] sm:$0x1]
    %v7992 = vld [vmem:[%s2 + $0x19f] sm:$0x1]
    %v7993 = vld [vmem:[%s2 + $0x1af] sm:$0x1]
    %v7994 = vld [vmem:[%s2 + $0x1bf] sm:$0x1]
    %v7995 = vld [vmem:[%s2 + $0x1cf] sm:$0x1]
    %v7996 = vld [vmem:[%s2 + $0x1df] sm:$0x1]
    %v7997 = vld [vmem:[%s2 + $0x1ef] sm:$0x1]
    %v7998 = vld [vmem:[%s2 + $0x1ff] sm:$0x1]
    %v8031 = vrot.slane %v7968, 7
    %v8032 = vsel %vm344, %v8031, %v7967
    %v8033 = vrot.slane %v7969, 6
    %v8034 = vsel %vm347, %v8033, %v8032
    %v8035 = vrot.slane %v7970, 5
    %v8036 = vsel %vm350, %v8035, %v8034
    %v8037 = vrot.slane %v7971, 4
    %v8038 = vsel %vm353, %v8037, %v8036
    %v8039 = vrot.slane %v7972, 3
    %v8040 = vsel %vm356, %v8039, %v8038
    %v8041 = vrot.slane %v7973, 2
    %v8042 = vsel %vm359, %v8041, %v8040
    %v8043 = vrot.slane %v7974, 1
    %v8044 = vsel %vm362, %v8043, %v8042
    %v8045 = vrot.slane %v7976, 7
    %v8046 = vsel %vm344, %v8045, %v7975
    %v8047 = vrot.slane %v7977, 6
    %v8048 = vsel %vm347, %v8047, %v8046
    %v8049 = vrot.slane %v7978, 5
    %v8050 = vsel %vm350, %v8049, %v8048
    %v8051 = vrot.slane %v7979, 4
    %v8052 = vsel %vm353, %v8051, %v8050
    %v8053 = vrot.slane %v7980, 3
    %v8054 = vsel %vm356, %v8053, %v8052
    %v8055 = vrot.slane %v7981, 2
    %v8056 = vsel %vm359, %v8055, %v8054
    %v8057 = vrot.slane %v7982, 1
    %v8058 = vsel %vm362, %v8057, %v8056
    %v8059 = vrot.slane %v7984, 7
    %v8060 = vsel %vm344, %v8059, %v7983
    %v8061 = vrot.slane %v7985, 6
    %v8062 = vsel %vm347, %v8061, %v8060
    %v8063 = vrot.slane %v7986, 5
    %v8064 = vsel %vm350, %v8063, %v8062
    %v8065 = vrot.slane %v7987, 4
    %v8066 = vsel %vm353, %v8065, %v8064
    %v8067 = vrot.slane %v7988, 3
    %v8068 = vsel %vm356, %v8067, %v8066
    %v8069 = vrot.slane %v7989, 2
    %v8070 = vsel %vm359, %v8069, %v8068
    %v8071 = vrot.slane %v7990, 1
    %v8072 = vsel %vm362, %v8071, %v8070
    %v8073 = vrot.slane %v7992, 7
    %v8074 = vsel %vm344, %v8073, %v7991
    %v8075 = vrot.slane %v7993, 6
    %v8076 = vsel %vm347, %v8075, %v8074
    %v8077 = vrot.slane %v7994, 5
    %v8078 = vsel %vm350, %v8077, %v8076
    %v8079 = vrot.slane %v7995, 4
    %v8080 = vsel %vm353, %v8079, %v8078
    %v8081 = vrot.slane %v7996, 3
    %v8082 = vsel %vm356, %v8081, %v8080
    %v8083 = vrot.slane %v7997, 2
    %v8084 = vsel %vm359, %v8083, %v8082
    %v8085 = vrot.slane %v7998, 1
    %v8086 = vsel %vm362, %v8085, %v8084
    %v8087 = vsel %vm406, %v8044, 0
    %v8089 = vsel %vm406, %v8058, 0
    %v8091 = vsel %vm406, %v8072, 0
    %v8093 = vsel %vm406, %v8086, 0
    %8095 = vmatpush.msra.mxu0 0.0
    %8096 = vmatpush.msra.mxu0 0.0
    %8097 = vmatpush.msra.mxu0 0.0
    %8098 = vmatpush.msra.mxu0 0.0
    %8099 = vmatpush.msra.mxu0 0.0
    %8100 = vmatpush.msra.mxu0 0.0
    %8101 = vmatpush.msra.mxu0 0.0
    %8102 = vmatpush.msra.mxu0 0.0
    %8103 = vmatpush.msra.mxu0 0.0
    %8104 = vmatpush.msra.mxu0 0.0
    %8105 = vmatpush.msra.mxu0 0.0
    %8106 = vmatpush.msra.mxu0 0.0
    %v8107 = vand.u32 %v7966, 4294901760
    %8108 = vmatpush.msra.mxu0 %v8107
    %v8109 = vand.u32 %v7965, 4294901760
    %8110 = vmatpush.msra.mxu0 %v8109
    %v8111 = vand.u32 %v7964, 4294901760
    %8112 = vmatpush.msra.mxu0 %v8111
    %v8113 = vand.u32 %v7963, 4294901760
    %8114 = vmatpush.msra.mxu0 %v8113
    %v8115 = vand.u32 %v8087, 4294901760
    %v8116 = vsub.f32 %v8087, %v8115
    %v8117 = vand.u32 %v8116, 4294901760
    %v8118 = vsub.f32 %v8116, %v8117
    %v8119 = vand.u32 %v8118, 4294901760
    %8120 = vmatmul.f32.gmra.mxu0 %v8119
    %v8121 = vpop.f32.mrf.mxu0
    %v8122 = vadd.f32 0.0, %v8121
    %v8123 = vand.u32 %v8089, 4294901760
    %v8124 = vsub.f32 %v8089, %v8123
    %v8125 = vand.u32 %v8124, 4294901760
    %v8126 = vsub.f32 %v8124, %v8125
    %v8127 = vand.u32 %v8126, 4294901760
    %8128 = vmatmul.f32.gmra.mxu0 %v8127
    %v8129 = vpop.f32.mrf.mxu0
    %v8130 = vadd.f32 0.0, %v8129
    %v8131 = vand.u32 %v8091, 4294901760
    %v8132 = vsub.f32 %v8091, %v8131
    %v8133 = vand.u32 %v8132, 4294901760
    %v8134 = vsub.f32 %v8132, %v8133
    %v8135 = vand.u32 %v8134, 4294901760
    %8136 = vmatmul.f32.gmra.mxu0 %v8135
    %v8137 = vpop.f32.mrf.mxu0
    %v8138 = vadd.f32 0.0, %v8137
    %v8139 = vand.u32 %v8093, 4294901760
    %v8140 = vsub.f32 %v8093, %v8139
    %v8141 = vand.u32 %v8140, 4294901760
    %v8142 = vsub.f32 %v8140, %v8141
    %v8143 = vand.u32 %v8142, 4294901760
    %8144 = vmatmul.f32.gmra.mxu0 %v8143
    %v8145 = vpop.f32.mrf.mxu0
    %v8146 = vadd.f32 0.0, %v8145
    %8147 = vdwg.mxu0
    %8148 = vmatpush.msra.mxu0 0.0
    %8149 = vmatpush.msra.mxu0 0.0
    %8150 = vmatpush.msra.mxu0 0.0
    %8151 = vmatpush.msra.mxu0 0.0
    %8152 = vmatpush.msra.mxu0 0.0
    %8153 = vmatpush.msra.mxu0 0.0
    %8154 = vmatpush.msra.mxu0 0.0
    %8155 = vmatpush.msra.mxu0 0.0
    %8156 = vmatpush.msra.mxu0 0.0
    %8157 = vmatpush.msra.mxu0 0.0
    %8158 = vmatpush.msra.mxu0 0.0
    %8159 = vmatpush.msra.mxu0 0.0
    %v8160 = vand.u32 %v7966, 4294901760
    %v8161 = vsub.f32 %v7966, %v8160
    %v8162 = vand.u32 %v8161, 4294901760
    %v8163 = vsub.f32 %v8161, %v8162
    %v8164 = vand.u32 %v8163, 4294901760
    %8165 = vmatpush.msra.mxu0 %v8164
    %v8166 = vand.u32 %v7965, 4294901760
    %v8167 = vsub.f32 %v7965, %v8166
    %v8168 = vand.u32 %v8167, 4294901760
    %v8169 = vsub.f32 %v8167, %v8168
    %v8170 = vand.u32 %v8169, 4294901760
    %8171 = vmatpush.msra.mxu0 %v8170
    %v8172 = vand.u32 %v7964, 4294901760
    %v8173 = vsub.f32 %v7964, %v8172
    %v8174 = vand.u32 %v8173, 4294901760
    %v8175 = vsub.f32 %v8173, %v8174
    %v8176 = vand.u32 %v8175, 4294901760
    %8177 = vmatpush.msra.mxu0 %v8176
    %v8178 = vand.u32 %v7963, 4294901760
    %v8179 = vsub.f32 %v7963, %v8178
    %v8180 = vand.u32 %v8179, 4294901760
    %v8181 = vsub.f32 %v8179, %v8180
    %v8182 = vand.u32 %v8181, 4294901760
    %8183 = vmatpush.msra.mxu0 %v8182
    %v8184 = vand.u32 %v8087, 4294901760
    %8185 = vmatmul.f32.gmra.mxu0 %v8184
    %v8186 = vpop.f32.mrf.mxu0
    %v8187 = vadd.f32 %v8122, %v8186
    %v8188 = vand.u32 %v8089, 4294901760
    %8189 = vmatmul.f32.gmra.mxu0 %v8188
    %v8190 = vpop.f32.mrf.mxu0
    %v8191 = vadd.f32 %v8130, %v8190
    %v8192 = vand.u32 %v8091, 4294901760
    %8193 = vmatmul.f32.gmra.mxu0 %v8192
    %v8194 = vpop.f32.mrf.mxu0
    %v8195 = vadd.f32 %v8138, %v8194
    %v8196 = vand.u32 %v8093, 4294901760
    %8197 = vmatmul.f32.gmra.mxu0 %v8196
    %v8198 = vpop.f32.mrf.mxu0
    %v8199 = vadd.f32 %v8146, %v8198
    %8200 = vdwg.mxu0
    %8201 = vmatpush.msra.mxu0 0.0
    %8202 = vmatpush.msra.mxu0 0.0
    %8203 = vmatpush.msra.mxu0 0.0
    %8204 = vmatpush.msra.mxu0 0.0
    %8205 = vmatpush.msra.mxu0 0.0
    %8206 = vmatpush.msra.mxu0 0.0
    %8207 = vmatpush.msra.mxu0 0.0
    %8208 = vmatpush.msra.mxu0 0.0
    %8209 = vmatpush.msra.mxu0 0.0
    %8210 = vmatpush.msra.mxu0 0.0
    %8211 = vmatpush.msra.mxu0 0.0
    %8212 = vmatpush.msra.mxu0 0.0
    %v8213 = vand.u32 %v7966, 4294901760
    %v8214 = vsub.f32 %v7966, %v8213
    %8215 = vmatpush.msra.mxu0 %v8214
    %v8216 = vand.u32 %v7965, 4294901760
    %v8217 = vsub.f32 %v7965, %v8216
    %8218 = vmatpush.msra.mxu0 %v8217
    %v8219 = vand.u32 %v7964, 4294901760
    %v8220 = vsub.f32 %v7964, %v8219
    %8221 = vmatpush.msra.mxu0 %v8220
    %v8222 = vand.u32 %v7963, 4294901760
    %v8223 = vsub.f32 %v7963, %v8222
    %8224 = vmatpush.msra.mxu0 %v8223
    %v8225 = vand.u32 %v8087, 4294901760
    %v8226 = vsub.f32 %v8087, %v8225
    %8227 = vmatmul.f32.gmra.mxu0 %v8226
    %v8228 = vpop.f32.mrf.mxu0
    %v8229 = vadd.f32 %v8187, %v8228
    %v8230 = vand.u32 %v8089, 4294901760
    %v8231 = vsub.f32 %v8089, %v8230
    %8232 = vmatmul.f32.gmra.mxu0 %v8231
    %v8233 = vpop.f32.mrf.mxu0
    %v8234 = vadd.f32 %v8191, %v8233
    %v8235 = vand.u32 %v8091, 4294901760
    %v8236 = vsub.f32 %v8091, %v8235
    %8237 = vmatmul.f32.gmra.mxu0 %v8236
    %v8238 = vpop.f32.mrf.mxu0
    %v8239 = vadd.f32 %v8195, %v8238
    %v8240 = vand.u32 %v8093, 4294901760
    %v8241 = vsub.f32 %v8093, %v8240
    %8242 = vmatmul.f32.gmra.mxu0 %v8241
    %v8243 = vpop.f32.mrf.mxu0
    %v8244 = vadd.f32 %v8199, %v8243
    %8245 = vdwg.mxu0
    %8246 = vmatpush.msra.mxu0 0.0
    %8247 = vmatpush.msra.mxu0 0.0
    %8248 = vmatpush.msra.mxu0 0.0
    %8249 = vmatpush.msra.mxu0 0.0
    %8250 = vmatpush.msra.mxu0 0.0
    %8251 = vmatpush.msra.mxu0 0.0
    %8252 = vmatpush.msra.mxu0 0.0
    %8253 = vmatpush.msra.mxu0 0.0
    %8254 = vmatpush.msra.mxu0 0.0
    %8255 = vmatpush.msra.mxu0 0.0
    %8256 = vmatpush.msra.mxu0 0.0
    %8257 = vmatpush.msra.mxu0 0.0
    %v8258 = vand.u32 %v7966, 4294901760
    %8259 = vmatpush.msra.mxu0 %v8258
    %v8260 = vand.u32 %v7965, 4294901760
    %8261 = vmatpush.msra.mxu0 %v8260
    %v8262 = vand.u32 %v7964, 4294901760
    %8263 = vmatpush.msra.mxu0 %v8262
    %v8264 = vand.u32 %v7963, 4294901760
    %8265 = vmatpush.msra.mxu0 %v8264
    %v8266 = vand.u32 %v8087, 4294901760
    %v8267 = vsub.f32 %v8087, %v8266
    %v8268 = vand.u32 %v8267, 4294901760
    %8269 = vmatmul.f32.gmra.mxu0 %v8268
    %v8270 = vpop.f32.mrf.mxu0
    %v8271 = vadd.f32 %v8229, %v8270
    %v8272 = vand.u32 %v8089, 4294901760
    %v8273 = vsub.f32 %v8089, %v8272
    %v8274 = vand.u32 %v8273, 4294901760
    %8275 = vmatmul.f32.gmra.mxu0 %v8274
    %v8276 = vpop.f32.mrf.mxu0
    %v8277 = vadd.f32 %v8234, %v8276
    %v8278 = vand.u32 %v8091, 4294901760
    %v8279 = vsub.f32 %v8091, %v8278
    %v8280 = vand.u32 %v8279, 4294901760
    %8281 = vmatmul.f32.gmra.mxu0 %v8280
    %v8282 = vpop.f32.mrf.mxu0
    %v8283 = vadd.f32 %v8239, %v8282
    %v8284 = vand.u32 %v8093, 4294901760
    %v8285 = vsub.f32 %v8093, %v8284
    %v8286 = vand.u32 %v8285, 4294901760
    %8287 = vmatmul.f32.gmra.mxu0 %v8286
    %v8288 = vpop.f32.mrf.mxu0
    %v8289 = vadd.f32 %v8244, %v8288
    %8290 = vdwg.mxu0
    %8291 = vmatpush.msra.mxu0 0.0
    %8292 = vmatpush.msra.mxu0 0.0
    %8293 = vmatpush.msra.mxu0 0.0
    %8294 = vmatpush.msra.mxu0 0.0
    %8295 = vmatpush.msra.mxu0 0.0
    %8296 = vmatpush.msra.mxu0 0.0
    %8297 = vmatpush.msra.mxu0 0.0
    %8298 = vmatpush.msra.mxu0 0.0
    %8299 = vmatpush.msra.mxu0 0.0
    %8300 = vmatpush.msra.mxu0 0.0
    %8301 = vmatpush.msra.mxu0 0.0
    %8302 = vmatpush.msra.mxu0 0.0
    %v8303 = vand.u32 %v7966, 4294901760
    %v8304 = vsub.f32 %v7966, %v8303
    %v8305 = vand.u32 %v8304, 4294901760
    %8306 = vmatpush.msra.mxu0 %v8305
    %v8307 = vand.u32 %v7965, 4294901760
    %v8308 = vsub.f32 %v7965, %v8307
    %v8309 = vand.u32 %v8308, 4294901760
    %8310 = vmatpush.msra.mxu0 %v8309
    %v8311 = vand.u32 %v7964, 4294901760
    %v8312 = vsub.f32 %v7964, %v8311
    %v8313 = vand.u32 %v8312, 4294901760
    %8314 = vmatpush.msra.mxu0 %v8313
    %v8315 = vand.u32 %v7963, 4294901760
    %v8316 = vsub.f32 %v7963, %v8315
    %v8317 = vand.u32 %v8316, 4294901760
    %8318 = vmatpush.msra.mxu0 %v8317
    %v8319 = vand.u32 %v8087, 4294901760
    %8320 = vmatmul.f32.gmra.mxu0 %v8319
    %v8321 = vpop.f32.mrf.mxu0
    %v8322 = vadd.f32 %v8271, %v8321
    %v8323 = vand.u32 %v8089, 4294901760
    %8324 = vmatmul.f32.gmra.mxu0 %v8323
    %v8325 = vpop.f32.mrf.mxu0
    %v8326 = vadd.f32 %v8277, %v8325
    %v8327 = vand.u32 %v8091, 4294901760
    %8328 = vmatmul.f32.gmra.mxu0 %v8327
    %v8329 = vpop.f32.mrf.mxu0
    %v8330 = vadd.f32 %v8283, %v8329
    %v8331 = vand.u32 %v8093, 4294901760
    %8332 = vmatmul.f32.gmra.mxu0 %v8331
    %v8333 = vpop.f32.mrf.mxu0
    %v8334 = vadd.f32 %v8289, %v8333
    %8335 = vdwg.mxu0
    %8336 = vmatpush.msra.mxu0 0.0
    %8337 = vmatpush.msra.mxu0 0.0
    %8338 = vmatpush.msra.mxu0 0.0
    %8339 = vmatpush.msra.mxu0 0.0
    %8340 = vmatpush.msra.mxu0 0.0
    %8341 = vmatpush.msra.mxu0 0.0
    %8342 = vmatpush.msra.mxu0 0.0
    %8343 = vmatpush.msra.mxu0 0.0
    %8344 = vmatpush.msra.mxu0 0.0
    %8345 = vmatpush.msra.mxu0 0.0
    %8346 = vmatpush.msra.mxu0 0.0
    %8347 = vmatpush.msra.mxu0 0.0
    %v8348 = vand.u32 %v7966, 4294901760
    %8349 = vmatpush.msra.mxu0 %v8348
    %v8350 = vand.u32 %v7965, 4294901760
    %8351 = vmatpush.msra.mxu0 %v8350
    %v8352 = vand.u32 %v7964, 4294901760
    %8353 = vmatpush.msra.mxu0 %v8352
    %v8354 = vand.u32 %v7963, 4294901760
    %8355 = vmatpush.msra.mxu0 %v8354
    %v8356 = vand.u32 %v8087, 4294901760
    %8357 = vmatmul.f32.gmra.mxu0 %v8356
    %v8358 = vpop.f32.mrf.mxu0
    %v8359 = vadd.f32 %v8322, %v8358
    %v8360 = vand.u32 %v8089, 4294901760
    %8361 = vmatmul.f32.gmra.mxu0 %v8360
    %v8362 = vpop.f32.mrf.mxu0
    %v8363 = vadd.f32 %v8326, %v8362
    %v8364 = vand.u32 %v8091, 4294901760
    %8365 = vmatmul.f32.gmra.mxu0 %v8364
    %v8366 = vpop.f32.mrf.mxu0
    %v8367 = vadd.f32 %v8330, %v8366
    %v8368 = vand.u32 %v8093, 4294901760
    %8369 = vmatmul.f32.gmra.mxu0 %v8368
    %v8370 = vpop.f32.mrf.mxu0
    %v8371 = vadd.f32 %v8334, %v8370
    %8372 = vdwg.mxu0
    %v8377 = vrot.slane %v8359, 1
    %v8378 = vrot.slane %v8359, 2
    %v8379 = vrot.slane %v8359, 3
    %v8380 = vrot.slane %v8359, 4
    %v8381 = vrot.slane %v8359, 5
    %v8382 = vrot.slane %v8359, 6
    %v8383 = vrot.slane %v8359, 7
    %v8384 = vrot.slane %v8363, 1
    %v8385 = vrot.slane %v8363, 2
    %v8386 = vrot.slane %v8363, 3
    %v8387 = vrot.slane %v8363, 4
    %v8388 = vrot.slane %v8363, 5
    %v8389 = vrot.slane %v8363, 6
    %v8390 = vrot.slane %v8363, 7
    %v8391 = vrot.slane %v8367, 1
    %v8392 = vrot.slane %v8367, 2
    %v8393 = vrot.slane %v8367, 3
    %v8394 = vrot.slane %v8367, 4
    %v8395 = vrot.slane %v8367, 5
    %v8396 = vrot.slane %v8367, 6
    %v8397 = vrot.slane %v8367, 7
    %v8398 = vrot.slane %v8371, 1
    %v8399 = vrot.slane %v8371, 2
    %v8400 = vrot.slane %v8371, 3
    %v8401 = vrot.slane %v8371, 4
    %v8402 = vrot.slane %v8371, 5
    %v8403 = vrot.slane %v8371, 6
    %v8404 = vrot.slane %v8371, 7
    %8433 = vst [vmem:[#allocation2 + $0xf] sm:$0x1] %v8359
    %8434 = vst [vmem:[#allocation2 + $0x1f] sm:$0x1] %v8377
    %8435 = vst [vmem:[#allocation2 + $0x2f] sm:$0x1] %v8378
    %8436 = vst [vmem:[#allocation2 + $0x3f] sm:$0x1] %v8379
    %8437 = vst [vmem:[#allocation2 + $0x4f] sm:$0x1] %v8380
    %8438 = vst [vmem:[#allocation2 + $0x5f] sm:$0x1] %v8381
    %8439 = vst [vmem:[#allocation2 + $0x6f] sm:$0x1] %v8382
    %8440 = vst [vmem:[#allocation2 + $0x7f] sm:$0x1] %v8383
    %8441 = vst [vmem:[#allocation2 + $0x8f] sm:$0x1] %v8363
    %8442 = vst [vmem:[#allocation2 + $0x9f] sm:$0x1] %v8384
    %8443 = vst [vmem:[#allocation2 + $0xaf] sm:$0x1] %v8385
    %8444 = vst [vmem:[#allocation2 + $0xbf] sm:$0x1] %v8386
    %8445 = vst [vmem:[#allocation2 + $0xcf] sm:$0x1] %v8387
    %8446 = vst [vmem:[#allocation2 + $0xdf] sm:$0x1] %v8388
    %8447 = vst [vmem:[#allocation2 + $0xef] sm:$0x1] %v8389
    %8448 = vst [vmem:[#allocation2 + $0xff] sm:$0x1] %v8390
    %8449 = vst [vmem:[#allocation2 + $0x10f] sm:$0x1] %v8367
    %8450 = vst [vmem:[#allocation2 + $0x11f] sm:$0x1] %v8391
    %8451 = vst [vmem:[#allocation2 + $0x12f] sm:$0x1] %v8392
    %8452 = vst [vmem:[#allocation2 + $0x13f] sm:$0x1] %v8393
    %8453 = vst [vmem:[#allocation2 + $0x14f] sm:$0x1] %v8394
    %8454 = vst [vmem:[#allocation2 + $0x15f] sm:$0x1] %v8395
    %8455 = vst [vmem:[#allocation2 + $0x16f] sm:$0x1] %v8396
    %8456 = vst [vmem:[#allocation2 + $0x17f] sm:$0x1] %v8397
    %8457 = vst [vmem:[#allocation2 + $0x18f] sm:$0x1] %v8371
    %8458 = vst [vmem:[#allocation2 + $0x19f] sm:$0x1] %v8398
    %8459 = vst [vmem:[#allocation2 + $0x1af] sm:$0x1] %v8399
    %8460 = vst [vmem:[#allocation2 + $0x1bf] sm:$0x1] %v8400
    %8461 = vst [vmem:[#allocation2 + $0x1cf] sm:$0x1] %v8401
    %8462 = vst [vmem:[#allocation2 + $0x1df] sm:$0x1] %v8402
    %8463 = vst [vmem:[#allocation2 + $0x1ef] sm:$0x1] %v8403
    %8464 = vst [vmem:[#allocation2 + $0x1ff] sm:$0x1] %v8404
  $region13: #{ctc_loss_with_label_priors.1} parent=0 // pred_fallthru
    _
  %p8465 = scmp.eq.s32.totalorder 0, 0
  // Predicated region
  $region14: #{ctc_loss_with_label_priors.1} parent=0 // pred_check
    %p8466 = pneg %p8465
  $region15: #{ctc_loss_with_label_priors.1} parent=0 // pred_check_branch
    %8468 = sbr.rel (%p8466) target = $region17
  $region16: #{ctc_loss_with_label_priors.1} parent=0 // pred_region
    %v8469 = vld [vmem:[#allocation2] sm:$0xff]
    %v8470 = vld [vmem:[#allocation2 + $0x8] sm:$0xff]
    %vm8471 = vcmp.eq.s32.totalorder %v30, 0
    %vm8472 = vcmp.eq.s32.totalorder %v30, 1
    %vm8473 = vcmp.gt.s32.totalorder %v239, 1
    %vm8474 = vcmp.gt.s32.totalorder %v240, 1
    %vm8475 = vmand %vm8472, %vm8473
    %vm8476 = vmand %vm8472, %vm8474
    %vm8477 = vmor %vm8471, %vm8475
    %vm8478 = vmor %vm8471, %vm8476
    %v8479 = vsel %vm8477, %v8469, -1e+30
    %v8480 = vsel %vm8478, %v8470, -1e+30
    %v8481 = vsel %vm241, %v8479, -1e+30
    %v8482 = vsel %vm242, %v8480, -1e+30
    %8483 = vst [vmem:[#allocation3] sm:$0xff] %v8481
    %8484 = vst [vmem:[#allocation3 + $0x8] sm:$0xff] %v8482
  $region17: #{ctc_loss_with_label_priors.1} parent=0 // pred_fallthru
    _
  %s8485 = scalar_select %p8465, 1, 0
  %s8486 = ssub.s32 %s236, %s258
  %p8487 = scmp.lt.s32.totalorder %s8486, 32
  %s8488 = scalar_select %p8487, %s8486, 32
  %p8489 = scmp.gt.s32.totalorder %s8488, 0
  %s8490 = scalar_select %p8489, %s8488, 0
  %v8491 = vld [vmem:[#allocation3] sm:$0xff]
  %v8492 = vld [vmem:[#allocation3 + $0x8] sm:$0xff]
  // While loop
  $region18: #{ctc_loss_with_label_priors.1} parent=0 // loop_pre_header
    _
  $region19: #{ctc_loss_with_label_priors.1} parent=0 // loop_header
    %s8494 = sphi %s8485, %s8496
    %p8495 = scmp.ge.s32.totalorder %s8494, %s8490
    %v8499 = vphi %v8491, %v8558
    %v8500 = vphi %v8492, %v8559
  $region20: #{ctc_loss_with_label_priors.1} parent=0 // loop_header_branch
    %8498 = sbr.rel (%p8495) target = $region24
  $region21: #{ctc_loss_with_label_priors.1} parent=0 // loop_body
    %s8501 = smul.u32 %s8494, 16
    %s8502 = scalar_lea.vmem [#allocation2], %s8501
    %v8503 = vld [vmem:[%s8502] sm:$0xff]
    %v8504 = vld [vmem:[%s8502 + $0x8] sm:$0xff]
    %vm8505 = vcmp.ge.s32.totalorder %v30, 1
    %8506 = vrot.lane.b32.xlu0 %v8499, 1
    %v8507 = vpop.permute.xlu0 %8506
    %8508 = vrot.lane.b32.xlu0 %v8500, 1
    %v8509 = vpop.permute.xlu0 %8508
    %v8510 = vsel %vm8505, %v8507, -1e+30
    %v8511 = vsel %vm8505, %v8509, -1e+30
    %8512 = vrot.lane.b32.xlu0 %v8499, 2
    %v8513 = vpop.permute.xlu0 %8512
    %8514 = vrot.lane.b32.xlu0 %v8500, 2
    %v8515 = vpop.permute.xlu0 %8514
    %v8516 = vsel %vm256, %v8513, -1e+30
    %v8517 = vsel %vm257, %v8515, -1e+30
    %v8518 = vmax.f32 %v8499, %v8510
    %v8519 = vmax.f32 %v8500, %v8511
    %v8520 = vmax.f32 %v8518, %v8516
    %v8521 = vmax.f32 %v8519, %v8517
    %v8522 = vsub.f32 %v8499, %v8520
    %v8523 = vsub.f32 %v8500, %v8521
    %v8524 = vmul.f32 %v8522, 1.442695
    %v8525 = vpow.pop %v8524
    %v8526 = vmul.f32 %v8523, 1.442695
    %v8527 = vpow.pop %v8526
    %v8528 = vsub.f32 %v8510, %v8520
    %v8529 = vsub.f32 %v8511, %v8521
    %v8530 = vmul.f32 %v8528, 1.442695
    %v8531 = vpow.pop %v8530
    %v8532 = vmul.f32 %v8529, 1.442695
    %v8533 = vpow.pop %v8532
    %v8534 = vadd.f32 %v8525, %v8531
    %v8535 = vadd.f32 %v8527, %v8533
    %v8536 = vsub.f32 %v8516, %v8520
    %v8537 = vsub.f32 %v8517, %v8521
    %v8538 = vmul.f32 %v8536, 1.442695
    %v8539 = vpow.pop %v8538
    %v8540 = vmul.f32 %v8537, 1.442695
    %v8541 = vpow.pop %v8540
    %v8542 = vadd.f32 %v8534, %v8539
    %v8543 = vadd.f32 %v8535, %v8541
    %v8544 = vlog2.pop %v8542
    %v8545 = vmul.f32 %v8544, 0.6931472
    %v8546 = vlog2.pop %v8543
    %v8547 = vmul.f32 %v8546, 0.6931472
    %v8548 = vadd.f32 %v8520, %v8545
    %v8549 = vadd.f32 %v8521, %v8547
    %v8550 = vadd.f32 %v8548, %v8503
    %v8551 = vadd.f32 %v8549, %v8504
    %v8552 = vsel %vm241, %v8550, -1e+30
    %v8553 = vsel %vm242, %v8551, -1e+30
    %s8554 = sadd.s32 %s258, %s8494
    %v8555 = vstv %s8554
    %vm8556 = vcmp.lt.s32.totalorder %v8555, %v230
    %vm8557 = vcmp.lt.s32.totalorder %v8555, %v231
    %v8558 = vsel %vm8556, %v8552, %v8499
    %v8559 = vsel %vm8557, %v8553, %v8500
  $region22: #{ctc_loss_with_label_priors.1} parent=0 // loop_footer
    %s8496 = sadd.s32 %s8494, 1
  $region23: #{ctc_loss_with_label_priors.1} parent=0 // loop_footer_branch
    %8493 = sbr.rel target = $region19
  $region24: #{ctc_loss_with_label_priors.1} parent=0 // loop_exit
    _
  %8560 = vst [vmem:[#allocation3] sm:$0xff] %v8499
  %8561 = vst [vmem:[#allocation3 + $0x8] sm:$0xff] %v8500
  // Predicated region
  $region25: #{ctc_loss_with_label_priors.1} parent=0 // pred_check
    %p8562 = pneg %p8465
  $region26: #{ctc_loss_with_label_priors.1} parent=0 // pred_check_branch
    %8564 = sbr.rel (%p8562) target = $region28
  $region27: #{ctc_loss_with_label_priors.1} parent=0 // pred_region
    %vm8565 = vcmp.eq.s32.totalorder %v30, %v237
    %vm8566 = vcmp.eq.s32.totalorder %v30, %v238
    %v8567 = vsub.s32 %v239, 2
    %v8568 = vsub.s32 %v240, 2
    %vm8569 = vcmp.eq.s32.totalorder %v30, %v8567
    %vm8570 = vcmp.eq.s32.totalorder %v30, %v8568
    %vm8571 = vmor %vm8565, %vm8569
    %vm8572 = vmor %vm8566, %vm8570
    %v8573 = vsel %vm8571, %v8499, -1e+30
    %v8574 = vsel %vm8572, %v8500, -1e+30
    %8575 = vmax.xlane.f32.xlu0 %v8573
    %v8576 = vpop.xlane.xlu0 %8575
    %8577 = vmax.xlane.f32.xlu0 %v8574
    %v8578 = vpop.xlane.xlu0 %8577
    %v8579 = vsub.f32 %v8573, %v8576
    %v8580 = vsub.f32 %v8574, %v8578
    %v8581 = vmul.f32 %v8579, 1.442695
    %v8582 = vpow.pop %v8581
    %v8583 = vmul.f32 %v8580, 1.442695
    %v8584 = vpow.pop %v8583
    %8585 = vadd.xlane.f32.xlu0 %v8582
    %v8586 = vpop.xlane.xlu0 %8585
    %8587 = vadd.xlane.f32.xlu0 %v8584
    %v8588 = vpop.xlane.xlu0 %8587
    %v8589 = vlog2.pop %v8586
    %v8590 = vmul.f32 %v8589, 0.6931472
    %v8591 = vlog2.pop %v8588
    %v8592 = vmul.f32 %v8591, 0.6931472
    %v8593 = vadd.f32 %v8576, %v8590
    %v8594 = vadd.f32 %v8578, %v8592
    %v8595 = vsub.f32 0.0, %v8593
    %v8596 = vsub.f32 0.0, %v8594
    %8597 = vst [vmem:[%s4] sm:$0xff] %v8595
    %8598 = vst [vmem:[%s4 + $0x8] sm:$0xff] %v8596
  $region28: #{ctc_loss_with_label_priors.1} parent=0 // pred_fallthru
    _
  // Predicated region
  $region29: #{ctc_loss_with_label_priors.1} parent=0 // pred_check
    _
  $region30: #{ctc_loss_with_label_priors.1} parent=0 // pred_check_branch
    %8600 = sbr.rel (0) target = $region32
  $region31: #{ctc_loss_with_label_priors.1} parent=0 // pred_region
    _
  $region32: #{ctc_loss_with_label_priors.1} parent=0 // pred_fallthru
    _
  // Predicated region
  $region33: #{ctc_loss_with_label_priors.1} parent=0 // pred_check
    _
  $region34: #{ctc_loss_with_label_priors.1} parent=0 // pred_check_branch
    %8602 = sbr.rel (0) target = $region36
  $region35: #{ctc_loss_with_label_priors.1} parent=0 // pred_region
    _
  $region36: #{ctc_loss_with_label_priors.1} parent=0 // pred_fallthru
    _

</llo_original>
